<compile_context>
chip_gen: v7x
topology: tpu7x:2x2x1
jax: 0.10.0
libtpu: 0.0.40
codegen_flags: <defaults>
</compile_context>

<pallas_src>
import functools

import jax
import jax.numpy as jnp
import numpy as np
from jax.experimental import pallas as pl
from jax.experimental.pallas import tpu as pltpu

EPS = 1e-5
MAX_TILE_ROWS = 512        # 512-row tiles reach ~85%+ of HBM roofline (measured)


# ----------------------------------------------------------------------------
# small helpers
# ----------------------------------------------------------------------------
def _round_up(x, m):
  return (x + m - 1) // m * m


def _pick_tile(rows):
  return int(min(MAX_TILE_ROWS, _round_up(rows, 16)))


def _pad_last(a, to):
  pad = to - a.shape[-1]
  if pad == 0:
    return a
  widths = [(0, 0)] * (a.ndim - 1) + [(0, pad)]
  return jnp.pad(a, widths)


def _pad2(m, rows, cols):
  return jnp.pad(m, ((0, rows - m.shape[0]), (0, cols - m.shape[1])))


def _row_spec(tile_r, c):
  return pl.BlockSpec((tile_r, c), lambda i: (i, 0))


def _full_spec(shape):
  return pl.BlockSpec(shape, lambda *_: (0,) * len(shape))


def _stats_spec(c):
  return pl.BlockSpec((1, 2, c), lambda i: (i, 0, 0))


def _cparams():
  return pltpu.CompilerParams(
      dimension_semantics=("parallel",),
      vmem_limit_bytes=64 * 1024 * 1024)


def _finalize_bn(partial_stats, count, gamma, beta, c_pad):
  """Reduce per-tile (sum, sum_sq) partials -> per-channel affine scale/shift."""
  s = jnp.sum(partial_stats, axis=0)                       # (2, C)
  mean = s[0] / count
  var = jnp.maximum(s[1] / count - mean * mean, 0.0)
  g = _pad_last(gamma.astype(jnp.float32).reshape(1, -1), c_pad)
  b = _pad_last(beta.astype(jnp.float32).reshape(1, -1), c_pad)
  scale = g * jax.lax.rsqrt(var + EPS)                     # (1, C)
  shift = b - mean * scale
  return scale, shift


# ----------------------------------------------------------------------------
# Pallas kernels
# ----------------------------------------------------------------------------
def _conv_stats_kernel(x_ref, w_ref, y_ref, stats_ref, *, true_rows, tile_r):
  """Row-tiled 1x1 conv (matmul) + per-tile (sum, sum_sq) partials."""
  i = pl.program_id(0)
  row = jax.lax.broadcasted_iota(jnp.int32, (tile_r, 1), 0) + i * tile_r
  valid = row < true_rows
  y = jnp.dot(x_ref[...], w_ref[...], preferred_element_type=jnp.float32)
  y = jnp.where(valid, y, 0.0)                 # zero OOB rows of partial tile
  y_ref[...] = y.astype(y_ref.dtype)
  stats_ref[:, 0:1, :] = jnp.sum(y, axis=0, keepdims=True)[None]
  stats_ref[:, 1:2, :] = jnp.sum(y * y, axis=0, keepdims=True)[None]


def _conv3x3_stats_kernel(y1p_ref, s1_ref, b1_ref, w2_ref, inmask_ref,
                          outmask_ref, y2_ref, stats_ref, t_ref, *, wp, h_out):
  """relu(bn1(y1)) then 3x3 conv as 9 accumulated MXU matmuls (one image)."""
  z = y1p_ref[0].astype(jnp.float32)                        # (Hp*Wp, C)
  t = jnp.maximum(z * s1_ref[...] + b1_ref[...], 0.0) * inmask_ref[...]
  t_ref[...] = t                                            # keep in VMEM
  n_out = h_out * wp
  c = w2_ref.shape[-1]
  acc = jnp.zeros((n_out, c), jnp.float32)
  for k in range(9):                                        # taps (dy, dx)
    dy, dx = k // 3, k % 3
    off = dy * wp + dx
    tap = t_ref[pl.ds(off, n_out), :].astype(jnp.bfloat16)
    acc = acc + jnp.dot(tap, w2_ref[k], preferred_element_type=jnp.float32)
  y2_ref[0] = acc.astype(y2_ref.dtype)
  am = acc * outmask_ref[...]                 # drop the 2 junk width columns
  stats_ref[:, 0:1, :] = jnp.sum(am, axis=0, keepdims=True)[None]
  stats_ref[:, 1:2, :] = jnp.sum(am * am, axis=0, keepdims=True)[None]


def _bnrelu_conv_stats_kernel(y2_ref, s2_ref, b2_ref, w3_ref, y3_ref, st3_ref,
                              *, true_rows, tile_r):
  """relu(bn2(y2)) @ w3 per row tile, plus BN3 stat partials."""
  i = pl.program_id(0)
  row = jax.lax.broadcasted_iota(jnp.int32, (tile_r, 1), 0) + i * tile_r
  valid = row < true_rows
  t = jnp.maximum(y2_ref[...].astype(jnp.float32) * s2_ref[...] + b2_ref[...],
                  0.0).astype(jnp.bfloat16)
  y = jnp.dot(t, w3_ref[...], preferred_element_type=jnp.float32)
  y = jnp.where(valid, y, 0.0)
  y3_ref[...] = y.astype(y3_ref.dtype)
  st3_ref[:, 0:1, :] = jnp.sum(y, axis=0, keepdims=True)[None]
  st3_ref[:, 1:2, :] = jnp.sum(y * y, axis=0, keepdims=True)[None]


def _bnrelu_conv_ds_stats_kernel(y2_ref, s2_ref, b2_ref, w3_ref, xd_ref, wd_ref,
                                 y3_ref, yd_ref, st3_ref, std_ref,
                                 *, true_rows, tile_r):
  """Main-path conv3 plus the 1x1 downsample conv, with stat partials."""
  i = pl.program_id(0)
  row = jax.lax.broadcasted_iota(jnp.int32, (tile_r, 1), 0) + i * tile_r
  valid = row < true_rows
  t = jnp.maximum(y2_ref[...].astype(jnp.float32) * s2_ref[...] + b2_ref[...],
                  0.0).astype(jnp.bfloat16)
  y = jnp.dot(t, w3_ref[...], preferred_element_type=jnp.float32)
  y = jnp.where(valid, y, 0.0)
  y3_ref[...] = y.astype(y3_ref.dtype)
  st3_ref[:, 0:1, :] = jnp.sum(y, axis=0, keepdims=True)[None]
  st3_ref[:, 1:2, :] = jnp.sum(y * y, axis=0, keepdims=True)[None]
  yd = jnp.dot(xd_ref[...], wd_ref[...], preferred_element_type=jnp.float32)
  yd = jnp.where(valid, yd, 0.0)
  yd_ref[...] = yd.astype(yd_ref.dtype)
  std_ref[:, 0:1, :] = jnp.sum(yd, axis=0, keepdims=True)[None]
  std_ref[:, 1:2, :] = jnp.sum(yd * yd, axis=0, keepdims=True)[None]


def _final_identity_kernel(y3_ref, s3_ref, b3_ref, res_ref, o_ref):
  y = y3_ref[...].astype(jnp.float32) * s3_ref[...] + b3_ref[...]
  o_ref[...] = jnp.maximum(y + res_ref[...].astype(jnp.float32), 0.0)


def _final_downsample_kernel(y3_ref, s3_ref, b3_ref, yd_ref, sd_ref, bd_ref,
                             o_ref):
  y = y3_ref[...].astype(jnp.float32) * s3_ref[...] + b3_ref[...]
  r = yd_ref[...].astype(jnp.float32) * sd_ref[...] + bd_ref[...]
  o_ref[...] = jnp.maximum(y + r, 0.0)


# ----------------------------------------------------------------------------
# glue (plain JAX): fallback im2col for strided 3x3 (rare path)
# ----------------------------------------------------------------------------
def _im2col_3x3(x, stride):
  # x: (N, H, W, C) -> (N, Ho, Wo, 9*C), tap order (dy, dx), padding=1.
  N, H, W, C = x.shape
  xp = jnp.pad(x, ((0, 0), (1, 1), (1, 1), (0, 0)))
  cols = []
  for dy in range(3):
    for dx in range(3):
      cols.append(xp[:, dy:dy + H, dx:dx + W, :][:, ::stride, ::stride, :])
  return jnp.concatenate(cols, axis=-1)


# ----------------------------------------------------------------------------
# public wrapper
# ----------------------------------------------------------------------------
@functools.partial(jax.jit, static_argnames=("stride", "stride_in_1x1"))
def bottleneck_with_batchnorm(x_nchw, params, *, stride=1, stride_in_1x1=True):
  N, Cin, H, W = x_nchw.shape
  Cb = params["w1"].shape[0]
  Cout = params["w3"].shape[0]
  has_ds = "wd" in params
  if not has_ds and stride != 1:
    raise ValueError("identity residual requires stride == 1 "
                     "(the PyTorch module would fail the add otherwise)")

  s1, s3 = (stride, 1) if stride_in_1x1 else (1, stride)
  cin_p, cb_p, cout_p = (_round_up(c, 128) for c in (Cin, Cb, Cout))

  # NCHW -> NHWC, channels zero-padded to a lane multiple, bf16 activations.
  x = jnp.transpose(x_nchw, (0, 2, 3, 1)).astype(jnp.float32)
  x = _pad_last(x, cin_p).astype(jnp.bfloat16)              # (N, H, W, cin_p)

  # ------------------ conv1 (1x1, stride s1) + BN1 stat partials ------------
  x1 = x[:, ::s1, ::s1, :]
  _, H1, W1, _ = x1.shape
  r1 = N * H1 * W1
  w1m = _pad2(jnp.transpose(params["w1"][:, :, 0, 0]),
              cin_p, cb_p).astype(jnp.bfloat16)
  tile1 = _pick_tile(r1)
  grid1 = pl.cdiv(r1, tile1)
  y1, st1 = pl.pallas_call(
      functools.partial(_conv_stats_kernel, true_rows=r1, tile_r=tile1),
      grid=(grid1,),
      in_specs=[_row_spec(tile1, cin_p), _full_spec((cin_p, cb_p))],
      out_specs=[_row_spec(tile1, cb_p), _stats_spec(cb_p)],
      out_shape=[jax.ShapeDtypeStruct((r1, cb_p), jnp.bfloat16),
                 jax.ShapeDtypeStruct((grid1, 2, cb_p), jnp.float32)],
      compiler_params=_cparams(),
  )(x1.reshape(r1, cin_p), w1m)
  scale1, shift1 = _finalize_bn(st1, r1, params["g1"], params["b1"], cb_p)

  # ------------------ conv2 (3x3, pad 1) + BN2 stat partials ----------------
  if s3 == 1:
    # Fused BN1-apply + ReLU + 9-tap on-chip conv (no im2col through HBM).
    H2, W2 = H1, W1
    hp, wp = H1 + 3, W1 + 2        # +1 top / +2 bottom, +1 left / +1 right pad
    y1p = jnp.pad(y1.reshape(N, H1, W1, cb_p),
                  ((0, 0), (1, 2), (1, 1), (0, 0))).reshape(N, hp * wp, cb_p)
    w2m = jnp.stack(
        [_pad2(jnp.transpose(params["w2"][:, :, dy, dx]), cb_p, cb_p)
         for dy in range(3) for dx in range(3)], axis=0).astype(jnp.bfloat16)
    in_mask = np.zeros((hp, wp, 1), np.float32)
    in_mask[1:H1 + 1, 1:W1 + 1, :] = 1.0
    in_mask = in_mask.reshape(hp * wp, 1)
    out_mask = np.zeros((H2, wp, 1), np.float32)
    out_mask[:, :W2, :] = 1.0
    out_mask = out_mask.reshape(H2 * wp, 1)

    y2p, st2 = pl.pallas_call(
        functools.partial(_conv3x3_stats_kernel, wp=wp, h_out=H2),
        grid=(N,),
        in_specs=[pl.BlockSpec((1, hp * wp, cb_p), lambda n: (n, 0, 0)),
                  _full_spec((1, cb_p)), _full_spec((1, cb_p)),
                  _full_spec((9, cb_p, cb_p)),
                  _full_spec((hp * wp, 1)), _full_spec((H2 * wp, 1))],
        out_specs=[pl.BlockSpec((1, H2 * wp, cb_p), lambda n: (n, 0, 0)),
                   _stats_spec(cb_p)],
        out_shape=[jax.ShapeDtypeStruct((N, H2 * wp, cb_p), jnp.bfloat16),
                   jax.ShapeDtypeStruct((N, 2, cb_p), jnp.float32)],
        scratch_shapes=[pltpu.VMEM((hp * wp, cb_p), jnp.float32)],
        compiler_params=_cparams(),
    )(y1p, scale1, shift1, w2m, jnp.asarray(in_mask), jnp.asarray(out_mask))
    y2 = y2p.reshape(N, H2, wp, cb_p)[:, :, :W2, :].reshape(N * H2 * W2, cb_p)
  else:
    # TODO(synk): strided 3x3 (stride_in_1x1=False, stride>1) falls back to a
    # wrapper-side BN-apply + im2col feeding the tiled conv+stats kernel.
    t1 = jnp.maximum(y1.astype(jnp.float32) * scale1 + shift1, 0.0)
    patches = _im2col_3x3(t1.reshape(N, H1, W1, cb_p).astype(jnp.bfloat16), s3)
    _, H2, W2, _ = patches.shape
    r2f = N * H2 * W2
    w2m = jnp.concatenate(
        [_pad2(jnp.transpose(params["w2"][:, :, dy, dx]), cb_p, cb_p)
         for dy in range(3) for dx in range(3)], axis=0).astype(jnp.bfloat16)
    tile2 = _pick_tile(r2f)
    grid2 = pl.cdiv(r2f, tile2)
    y2, st2 = pl.pallas_call(
        functools.partial(_conv_stats_kernel, true_rows=r2f, tile_r=tile2),
        grid=(grid2,),
        in_specs=[_row_spec(tile2, 9 * cb_p), _full_spec((9 * cb_p, cb_p))],
        out_specs=[_row_spec(tile2, cb_p), _stats_spec(cb_p)],
        out_shape=[jax.ShapeDtypeStruct((r2f, cb_p), jnp.bfloat16),
                   jax.ShapeDtypeStruct((grid2, 2, cb_p), jnp.float32)],
        compiler_params=_cparams(),
    )(patches.reshape(r2f, 9 * cb_p), w2m)

  r2 = N * H2 * W2
  scale2, shift2 = _finalize_bn(st2, r2, params["g2"], params["b2"], cb_p)

  # ------------------ conv3 (+ downsample), final add + ReLU ----------------
  w3m = _pad2(jnp.transpose(params["w3"][:, :, 0, 0]),
              cb_p, cout_p).astype(jnp.bfloat16)
  tile3 = _pick_tile(r2)
  grid3 = pl.cdiv(r2, tile3)

  if has_ds:
    xd = x[:, ::stride, ::stride, :].reshape(r2, cin_p)
    wdm = _pad2(jnp.transpose(params["wd"][:, :, 0, 0]),
                cin_p, cout_p).astype(jnp.bfloat16)
    y3, yd, st3, std = pl.pallas_call(
        functools.partial(_bnrelu_conv_ds_stats_kernel,
                          true_rows=r2, tile_r=tile3),
        grid=(grid3,),
        in_specs=[_row_spec(tile3, cb_p), _full_spec((1, cb_p)),
                  _full_spec((1, cb_p)), _full_spec((cb_p, cout_p)),
                  _row_spec(tile3, cin_p), _full_spec((cin_p, cout_p))],
        out_specs=[_row_spec(tile3, cout_p), _row_spec(tile3, cout_p),
                   _stats_spec(cout_p), _stats_spec(cout_p)],
        out_shape=[jax.ShapeDtypeStruct((r2, cout_p), jnp.bfloat16),
                   jax.ShapeDtypeStruct((r2, cout_p), jnp.bfloat16),
                   jax.ShapeDtypeStruct((grid3, 2, cout_p), jnp.float32),
                   jax.ShapeDtypeStruct((grid3, 2, cout_p), jnp.float32)],
        compiler_params=_cparams(),
    )(y2, scale2, shift2, w3m, xd, wdm)
    scale3, shift3 = _finalize_bn(st3, r2, params["g3"], params["b3"], cout_p)
    scaled, shiftd = _finalize_bn(std, r2, params["gd"], params["bd"], cout_p)
    out = pl.pallas_call(
        _final_downsample_kernel,
        grid=(grid3,),
        in_specs=[_row_spec(tile3, cout_p), _full_spec((1, cout_p)),
                  _full_spec((1, cout_p)), _row_spec(tile3, cout_p),
                  _full_spec((1, cout_p)), _full_spec((1, cout_p))],
        out_specs=_row_spec(tile3, cout_p),
        out_shape=jax.ShapeDtypeStruct((r2, cout_p), jnp.float32),
        compiler_params=_cparams(),
    )(y3, scale3, shift3, yd, scaled, shiftd)
  else:
    y3, st3 = pl.pallas_call(
        functools.partial(_bnrelu_conv_stats_kernel,
                          true_rows=r2, tile_r=tile3),
        grid=(grid3,),
        in_specs=[_row_spec(tile3, cb_p), _full_spec((1, cb_p)),
                  _full_spec((1, cb_p)), _full_spec((cb_p, cout_p))],
        out_specs=[_row_spec(tile3, cout_p), _stats_spec(cout_p)],
        out_shape=[jax.ShapeDtypeStruct((r2, cout_p), jnp.bfloat16),
                   jax.ShapeDtypeStruct((grid3, 2, cout_p), jnp.float32)],
        compiler_params=_cparams(),
    )(y2, scale2, shift2, w3m)
    scale3, shift3 = _finalize_bn(st3, r2, params["g3"], params["b3"], cout_p)
    res = x.reshape(r2, cin_p)          # Cin == Cout and stride == 1 here
    out = pl.pallas_call(
        _final_identity_kernel,
        grid=(grid3,),
        in_specs=[_row_spec(tile3, cout_p), _full_spec((1, cout_p)),
                  _full_spec((1, cout_p)), _row_spec(tile3, cout_p)],
        out_specs=_row_spec(tile3, cout_p),
        out_shape=jax.ShapeDtypeStruct((r2, cout_p), jnp.float32),
        compiler_params=_cparams(),
    )(y3, scale3, shift3, res)

  out = out[:, :Cout].reshape(N, H2, W2, Cout)
  return jnp.transpose(out, (0, 3, 1, 2))                   # back to NCHW


# ----------------------------------------------------------------------------
# Pure-JAX reference (for correctness check)
# ----------------------------------------------------------------------------
def reference(x, params, *, stride=1, stride_in_1x1=True):
  def conv(x, w, s, pad):
    return jax.lax.conv_general_dilated(
        x, w, (s, s), pad, dimension_numbers=("NCHW", "OIHW", "NCHW"))

  def bn(x, g, b):
    mean = jnp.mean(x, axis=(0, 2, 3), keepdims=True)
    var = jnp.mean((x - mean) ** 2, axis=(0, 2, 3), keepdims=True)
    return ((x - mean) * jax.lax.rsqrt(var + EPS) * g.reshape(1, -1, 1, 1)
            + b.reshape(1, -1, 1, 1))

  s1, s3 = (stride, 1) if stride_in_1x1 else (1, stride)
  out = jax.nn.relu(bn(conv(x, params["w1"], s1, "VALID"),
                       params["g1"], params["b1"]))
  out = jax.nn.relu(bn(conv(out, params["w2"], s3, ((1, 1), (1, 1))),
                       params["g2"], params["b2"]))
  out = bn(conv(out, params["w3"], 1, "VALID"), params["g3"], params["b3"])
  if "wd" in params:
    residual = bn(conv(x, params["wd"], stride, "VALID"),
                  params["gd"], params["bd"])
  else:
    residual = x
  return jax.nn.relu(out + residual)


# ----------------------------------------------------------------------------
if __name__ == "__main__":
  root = jax.random.PRNGKey(0)

  def make_params(key, cin, cb, cout, downsample):
    ks = jax.random.split(key, 12)
    def g(k, shape, scale=0.1):
      return scale * jax.random.normal(k, shape, jnp.float32)
    p = {
        "w1": g(ks[0], (cb, cin, 1, 1)),
        "g1": 1.0 + g(ks[1], (cb,)), "b1": g(ks[2], (cb,)),
        "w2": g(ks[3], (cb, cb, 3, 3)),
        "g2": 1.0 + g(ks[4], (cb,)), "b2": g(ks[5], (cb,)),
        "w3": g(ks[6], (cout, cb, 1, 1)),
        "g3": 1.0 + g(ks[7], (cout,)), "b3": g(ks[8], (cout,)),
    }
    if downsample:
      p["wd"] = g(ks[9], (cout, cin, 1, 1))
      p["gd"] = 1.0 + g(ks[10], (cout,))
      p["bd"] = g(ks[11], (cout,))
    return p

  def run_case(key, *, n, cin, h, w, cb, cout, stride, stride_in_1x1):
    kx, kp = jax.random.split(key)
    x = jax.random.normal(kx, (n, cin, h, w), jnp.float32)
    params = make_params(kp, cin, cb, cout, downsample=(cin != cout))
    out = jax.block_until_ready(
        bottleneck_with_batchnorm(x, params, stride=stride,
                                  stride_in_1x1=stride_in_1x1))
    ref = jax.block_until_ready(
        reference(x, params, stride=stride, stride_in_1x1=stride_in_1x1))
    assert out.shape == ref.shape, (out.shape, ref.shape)
    np.testing.assert_allclose(np.asarray(out), np.asarray(ref),
                               rtol=5e-2, atol=5e-2)

  k1, k2 = jax.random.split(root)
  # downsample branch exercised (Cin != Cout)
  run_case(k1, n=2, cin=32, h=16, w=16, cb=16, cout=64,
           stride=1, stride_in_1x1=True)
  # identity-residual branch exercised (Cin == Cout)
  run_case(k2, n=2, cin=64, h=16, w=16, cb=32, cout=64,
           stride=1, stride_in_1x1=True)

  print("KERNEL_OK")
</pallas_src>

<mosaic_0001>
module attributes {stable_mosaic.version = 11 : i64} {
  func.func @_conv_stats_kernel(%arg0: i32, %arg1: memref<512x128xbf16, #tpu.memory_space<vmem>>, %arg2: memref<128x128xbf16, #tpu.memory_space<vmem>>, %arg3: memref<512x128xbf16, #tpu.memory_space<vmem>>, %arg4: memref<1x2x128xf32, #tpu.memory_space<vmem>>) attributes {dimension_semantics = [#tpu.dimension_semantics<parallel>], iteration_bounds = array<i64: 1>, scalar_prefetch = 0 : i64, scratch_operands = 0 : i64, tpu.core_type = #tpu.core_type<tc>, window_params = [{transform_indices = @transform_0, window_bounds = array<i64: 512, 128>}, {pipeline_mode = #tpu.pipeline_mode<synchronous>, transform_indices = @transform_1, window_bounds = array<i64: 128, 128>}, {transform_indices = @transform_2, window_bounds = array<i64: 512, 128>}, {transform_indices = @transform_3, window_bounds = array<i64: 1, 2, 128>}]} {
    %0 = tpu.iota {dimensions = array<i32: 0>} : vector<512x1xi32>
    %c512_i32 = arith.constant 512 : i32
    %1 = arith.muli %arg0, %c512_i32 : i32
    %2 = vector.broadcast %1 : i32 to vector<512x1xi32>
    %3 = arith.addi %0, %2 : vector<512x1xi32>
    %c512_i32_0 = arith.constant 512 : i32
    %4 = vector.broadcast %c512_i32_0 : i32 to vector<512x1xi32>
    %5 = arith.cmpi slt, %3, %4 : vector<512x1xi32>
    %c0 = arith.constant 0 : index
    %c0_1 = arith.constant 0 : index
    %6 = vector.load %arg1[%c0, %c0_1] : memref<512x128xbf16, #tpu.memory_space<vmem>>, vector<512x128xbf16>
    %c0_2 = arith.constant 0 : index
    %c0_3 = arith.constant 0 : index
    %7 = vector.load %arg2[%c0_2, %c0_3] : memref<128x128xbf16, #tpu.memory_space<vmem>>, vector<128x128xbf16>
    %cst = arith.constant dense<0.000000e+00> : vector<512x128xf32>
    %8 = tpu.matmul %6, %7, %cst {dimension_numbers = #tpu.dot_dimension_numbers<[1], [0], [0], [1], [0, 0, 1, 1], [], []>} : vector<512x128xbf16>, vector<128x128xbf16>, vector<512x128xf32> -> vector<512x128xf32>
    %cst_4 = arith.constant 0.000000e+00 : f32
    %9 = vector.shape_cast %5 : vector<512x1xi1> to vector<512x1xi1>
    %10 = vector.broadcast %9 : vector<512x1xi1> to vector<512x128xi1>
    %11 = vector.broadcast %cst_4 : f32 to vector<512x128xf32>
    %12 = arith.select %10, %8, %11 : vector<512x128xi1>, vector<512x128xf32>
    %13 = arith.truncf %12 : vector<512x128xf32> to vector<512x128xbf16>
    %c0_5 = arith.constant 0 : index
    %c0_6 = arith.constant 0 : index
    %14 = vector.load %arg3[%c0_5, %c0_6] : memref<512x128xbf16, #tpu.memory_space<vmem>>, vector<512x128xbf16>
    tpu.vector_store %arg3[%c0_5, %c0_6], %13 {strides = array<i32>} : memref<512x128xbf16, #tpu.memory_space<vmem>>, vector<512x128xbf16>,
    %cst_7 = arith.constant dense<0.000000e+00> : vector<128xf32>
    %15 = vector.multi_reduction <add>, %12, %cst_7 [0] : vector<512x128xf32> to vector<128xf32>
    %16 = vector.shape_cast %15 : vector<128xf32> to vector<1x128xf32>
    %17 = vector.shape_cast %16 : vector<1x128xf32> to vector<1x1x128xf32>
    %c0_8 = arith.constant 0 : index
    %c0_9 = arith.constant 0 : index
    %c0_10 = arith.constant 0 : index
    %18 = vector.load %arg4[%c0_8, %c0_9, %c0_10] : memref<1x2x128xf32, #tpu.memory_space<vmem>>, vector<1x1x128xf32>
    tpu.vector_store %arg4[%c0_8, %c0_9, %c0_10], %17 {strides = array<i32>} : memref<1x2x128xf32, #tpu.memory_space<vmem>>, vector<1x1x128xf32>,
    %19 = arith.mulf %12, %12 : vector<512x128xf32>
    %cst_11 = arith.constant dense<0.000000e+00> : vector<128xf32>
    %20 = vector.multi_reduction <add>, %19, %cst_11 [0] : vector<512x128xf32> to vector<128xf32>
    %21 = vector.shape_cast %20 : vector<128xf32> to vector<1x128xf32>
    %22 = vector.shape_cast %21 : vector<1x128xf32> to vector<1x1x128xf32>
    %c0_12 = arith.constant 0 : index
    %c1 = arith.constant 1 : index
    %c0_13 = arith.constant 0 : index
    %23 = vector.load %arg4[%c0_12, %c1, %c0_13] : memref<1x2x128xf32, #tpu.memory_space<vmem>>, vector<1x1x128xf32>
    tpu.vector_store %arg4[%c0_12, %c1, %c0_13], %22 {strides = array<i32>} : memref<1x2x128xf32, #tpu.memory_space<vmem>>, vector<1x1x128xf32>,
    return
  }
  func.func @transform_0(%arg0: i32) -> (i32, i32) {
    %c0_i32 = arith.constant 0 : i32
    %c0_i32_0 = arith.constant 0 : i32
    return %arg0, %c0_i32 : i32, i32
  }
  func.func @transform_1(%arg0: i32) -> (i32, i32) {
    %c0_i32 = arith.constant 0 : i32
    %c0_i32_0 = arith.constant 0 : i32
    %c0_i32_1 = arith.constant 0 : i32
    return %c0_i32, %c0_i32_0 : i32, i32
  }
  func.func @transform_2(%arg0: i32) -> (i32, i32) {
    %c0_i32 = arith.constant 0 : i32
    %c0_i32_0 = arith.constant 0 : i32
    return %arg0, %c0_i32 : i32, i32
  }
  func.func @transform_3(%arg0: i32) -> (i32, i32, i32) {
    %c0_i32 = arith.constant 0 : i32
    %c0_i32_0 = arith.constant 0 : i32
    %c0_i32_1 = arith.constant 0 : i32
    return %arg0, %c0_i32, %c0_i32_0 : i32, i32, i32
  }
}

module attributes {stable_mosaic.version = 11 : i64} {
  func.func @_conv3x3_stats_kernel(%arg0: i32, %arg1: memref<1x342x128xbf16, #tpu.memory_space<vmem>>, %arg2: memref<1x128xf32, #tpu.memory_space<vmem>>, %arg3: memref<1x128xf32, #tpu.memory_space<vmem>>, %arg4: memref<9x128x128xbf16, #tpu.memory_space<vmem>>, %arg5: memref<342x1xf32, #tpu.memory_space<vmem>>, %arg6: memref<288x1xf32, #tpu.memory_space<vmem>>, %arg7: memref<1x288x128xbf16, #tpu.memory_space<vmem>>, %arg8: memref<1x2x128xf32, #tpu.memory_space<vmem>>, %arg9: memref<342x128xf32, #tpu.memory_space<vmem>>) attributes {dimension_semantics = [#tpu.dimension_semantics<parallel>], iteration_bounds = array<i64: 2>, scalar_prefetch = 0 : i64, scratch_operands = 1 : i64, tpu.core_type = #tpu.core_type<tc>, window_params = [{transform_indices = @transform_0, window_bounds = array<i64: 1, 342, 128>}, {pipeline_mode = #tpu.pipeline_mode<synchronous>, transform_indices = @transform_1, window_bounds = array<i64: 1, 128>}, {pipeline_mode = #tpu.pipeline_mode<synchronous>, transform_indices = @transform_2, window_bounds = array<i64: 1, 128>}, {pipeline_mode = #tpu.pipeline_mode<synchronous>, transform_indices = @transform_3, window_bounds = array<i64: 9, 128, 128>}, {pipeline_mode = #tpu.pipeline_mode<synchronous>, transform_indices = @transform_4, window_bounds = array<i64: 342, 1>}, {pipeline_mode = #tpu.pipeline_mode<synchronous>, transform_indices = @transform_5, window_bounds = array<i64: 288, 1>}, {transform_indices = @transform_6, window_bounds = array<i64: 1, 288, 128>}, {transform_indices = @transform_7, window_bounds = array<i64: 1, 2, 128>}]} {
    %c0 = arith.constant 0 : index
    %c0_0 = arith.constant 0 : index
    %c0_1 = arith.constant 0 : index
    %0 = vector.load %arg1[%c0, %c0_0, %c0_1] : memref<1x342x128xbf16, #tpu.memory_space<vmem>>, vector<1x342x128xbf16>
    %1 = vector.shape_cast %0 : vector<1x342x128xbf16> to vector<342x128xbf16>
    %2 = arith.extf %1 : vector<342x128xbf16> to vector<342x128xf32>
    %c0_2 = arith.constant 0 : index
    %c0_3 = arith.constant 0 : index
    %3 = vector.load %arg2[%c0_2, %c0_3] : memref<1x128xf32, #tpu.memory_space<vmem>>, vector<1x128xf32>
    %4 = vector.broadcast %3 : vector<1x128xf32> to vector<342x128xf32>
    %5 = arith.mulf %2, %4 : vector<342x128xf32>
    %c0_4 = arith.constant 0 : index
    %c0_5 = arith.constant 0 : index
    %6 = vector.load %arg3[%c0_4, %c0_5] : memref<1x128xf32, #tpu.memory_space<vmem>>, vector<1x128xf32>
    %7 = vector.broadcast %6 : vector<1x128xf32> to vector<342x128xf32>
    %8 = arith.addf %5, %7 : vector<342x128xf32>
    %cst = arith.constant 0.000000e+00 : f32
    %9 = vector.broadcast %cst : f32 to vector<342x128xf32>
    %10 = arith.maximumf %8, %9 : vector<342x128xf32>
    %c0_6 = arith.constant 0 : index
    %c0_7 = arith.constant 0 : index
    %11 = vector.load %arg5[%c0_6, %c0_7] : memref<342x1xf32, #tpu.memory_space<vmem>>, vector<342x1xf32>
    %12 = vector.broadcast %11 : vector<342x1xf32> to vector<342x128xf32>
    %13 = arith.mulf %10, %12 : vector<342x128xf32>
    %c0_8 = arith.constant 0 : index
    %c0_9 = arith.constant 0 : index
    %14 = vector.load %arg9[%c0_8, %c0_9] : memref<342x128xf32, #tpu.memory_space<vmem>>, vector<342x128xf32>
    tpu.vector_store %arg9[%c0_8, %c0_9], %13 {strides = array<i32>} : memref<342x128xf32, #tpu.memory_space<vmem>>, vector<342x128xf32>,
    %cst_10 = arith.constant 0.000000e+00 : f32
    %15 = vector.broadcast %cst_10 : f32 to vector<288x128xf32>
    %c0_11 = arith.constant 0 : index
    %c0_12 = arith.constant 0 : index
    %16 = vector.load %arg9[%c0_11, %c0_12] : memref<342x128xf32, #tpu.memory_space<vmem>>, vector<288x128xf32>
    %17 = arith.truncf %16 : vector<288x128xf32> to vector<288x128xbf16>
    %c0_13 = arith.constant 0 : index
    %c0_14 = arith.constant 0 : index
    %c0_15 = arith.constant 0 : index
    %18 = vector.load %arg4[%c0_13, %c0_14, %c0_15] : memref<9x128x128xbf16, #tpu.memory_space<vmem>>, vector<1x128x128xbf16>
    %19 = vector.shape_cast %18 : vector<1x128x128xbf16> to vector<128x128xbf16>
    %cst_16 = arith.constant dense<0.000000e+00> : vector<288x128xf32>
    %20 = tpu.matmul %17, %19, %cst_16 {dimension_numbers = #tpu.dot_dimension_numbers<[1], [0], [0], [1], [0, 0, 1, 1], [], []>} : vector<288x128xbf16>, vector<128x128xbf16>, vector<288x128xf32> -> vector<288x128xf32>
    %21 = arith.addf %15, %20 : vector<288x128xf32>
    %c1 = arith.constant 1 : index
    %c0_17 = arith.constant 0 : index
    %22 = vector.load %arg9[%c1, %c0_17] : memref<342x128xf32, #tpu.memory_space<vmem>>, vector<288x128xf32>
    %23 = arith.truncf %22 : vector<288x128xf32> to vector<288x128xbf16>
    %c1_18 = arith.constant 1 : index
    %c0_19 = arith.constant 0 : index
    %c0_20 = arith.constant 0 : index
    %24 = vector.load %arg4[%c1_18, %c0_19, %c0_20] : memref<9x128x128xbf16, #tpu.memory_space<vmem>>, vector<1x128x128xbf16>
    %25 = vector.shape_cast %24 : vector<1x128x128xbf16> to vector<128x128xbf16>
    %cst_21 = arith.constant dense<0.000000e+00> : vector<288x128xf32>
    %26 = tpu.matmul %23, %25, %cst_21 {dimension_numbers = #tpu.dot_dimension_numbers<[1], [0], [0], [1], [0, 0, 1, 1], [], []>} : vector<288x128xbf16>, vector<128x128xbf16>, vector<288x128xf32> -> vector<288x128xf32>
    %27 = arith.addf %21, %26 : vector<288x128xf32>
    %c2 = arith.constant 2 : index
    %c0_22 = arith.constant 0 : index
    %28 = vector.load %arg9[%c2, %c0_22] : memref<342x128xf32, #tpu.memory_space<vmem>>, vector<288x128xf32>
    %29 = arith.truncf %28 : vector<288x128xf32> to vector<288x128xbf16>
    %c2_23 = arith.constant 2 : index
    %c0_24 = arith.constant 0 : index
    %c0_25 = arith.constant 0 : index
    %30 = vector.load %arg4[%c2_23, %c0_24, %c0_25] : memref<9x128x128xbf16, #tpu.memory_space<vmem>>, vector<1x128x128xbf16>
    %31 = vector.shape_cast %30 : vector<1x128x128xbf16> to vector<128x128xbf16>
    %cst_26 = arith.constant dense<0.000000e+00> : vector<288x128xf32>
    %32 = tpu.matmul %29, %31, %cst_26 {dimension_numbers = #tpu.dot_dimension_numbers<[1], [0], [0], [1], [0, 0, 1, 1], [], []>} : vector<288x128xbf16>, vector<128x128xbf16>, vector<288x128xf32> -> vector<288x128xf32>
    %33 = arith.addf %27, %32 : vector<288x128xf32>
    %c18 = arith.constant 18 : index
    %c0_27 = arith.constant 0 : index
    %34 = vector.load %arg9[%c18, %c0_27] : memref<342x128xf32, #tpu.memory_space<vmem>>, vector<288x128xf32>
    %35 = arith.truncf %34 : vector<288x128xf32> to vector<288x128xbf16>
    %c3 = arith.constant 3 : index
    %c0_28 = arith.constant 0 : index
    %c0_29 = arith.constant 0 : index
    %36 = vector.load %arg4[%c3, %c0_28, %c0_29] : memref<9x128x128xbf16, #tpu.memory_space<vmem>>, vector<1x128x128xbf16>
    %37 = vector.shape_cast %36 : vector<1x128x128xbf16> to vector<128x128xbf16>
    %cst_30 = arith.constant dense<0.000000e+00> : vector<288x128xf32>
    %38 = tpu.matmul %35, %37, %cst_30 {dimension_numbers = #tpu.dot_dimension_numbers<[1], [0], [0], [1], [0, 0, 1, 1], [], []>} : vector<288x128xbf16>, vector<128x128xbf16>, vector<288x128xf32> -> vector<288x128xf32>
    %39 = arith.addf %33, %38 : vector<288x128xf32>
    %c19 = arith.constant 19 : index
    %c0_31 = arith.constant 0 : index
    %40 = vector.load %arg9[%c19, %c0_31] : memref<342x128xf32, #tpu.memory_space<vmem>>, vector<288x128xf32>
    %41 = arith.truncf %40 : vector<288x128xf32> to vector<288x128xbf16>
    %c4 = arith.constant 4 : index
    %c0_32 = arith.constant 0 : index
    %c0_33 = arith.constant 0 : index
    %42 = vector.load %arg4[%c4, %c0_32, %c0_33] : memref<9x128x128xbf16, #tpu.memory_space<vmem>>, vector<1x128x128xbf16>
    %43 = vector.shape_cast %42 : vector<1x128x128xbf16> to vector<128x128xbf16>
    %cst_34 = arith.constant dense<0.000000e+00> : vector<288x128xf32>
    %44 = tpu.matmul %41, %43, %cst_34 {dimension_numbers = #tpu.dot_dimension_numbers<[1], [0], [0], [1], [0, 0, 1, 1], [], []>} : vector<288x128xbf16>, vector<128x128xbf16>, vector<288x128xf32> -> vector<288x128xf32>
    %45 = arith.addf %39, %44 : vector<288x128xf32>
    %c20 = arith.constant 20 : index
    %c0_35 = arith.constant 0 : index
    %46 = vector.load %arg9[%c20, %c0_35] : memref<342x128xf32, #tpu.memory_space<vmem>>, vector<288x128xf32>
    %47 = arith.truncf %46 : vector<288x128xf32> to vector<288x128xbf16>
    %c5 = arith.constant 5 : index
    %c0_36 = arith.constant 0 : index
    %c0_37 = arith.constant 0 : index
    %48 = vector.load %arg4[%c5, %c0_36, %c0_37] : memref<9x128x128xbf16, #tpu.memory_space<vmem>>, vector<1x128x128xbf16>
    %49 = vector.shape_cast %48 : vector<1x128x128xbf16> to vector<128x128xbf16>
    %cst_38 = arith.constant dense<0.000000e+00> : vector<288x128xf32>
    %50 = tpu.matmul %47, %49, %cst_38 {dimension_numbers = #tpu.dot_dimension_numbers<[1], [0], [0], [1], [0, 0, 1, 1], [], []>} : vector<288x128xbf16>, vector<128x128xbf16>, vector<288x128xf32> -> vector<288x128xf32>
    %51 = arith.addf %45, %50 : vector<288x128xf32>
    %c36 = arith.constant 36 : index
    %c0_39 = arith.constant 0 : index
    %52 = vector.load %arg9[%c36, %c0_39] : memref<342x128xf32, #tpu.memory_space<vmem>>, vector<288x128xf32>
    %53 = arith.truncf %52 : vector<288x128xf32> to vector<288x128xbf16>
    %c6 = arith.constant 6 : index
    %c0_40 = arith.constant 0 : index
    %c0_41 = arith.constant 0 : index
    %54 = vector.load %arg4[%c6, %c0_40, %c0_41] : memref<9x128x128xbf16, #tpu.memory_space<vmem>>, vector<1x128x128xbf16>
    %55 = vector.shape_cast %54 : vector<1x128x128xbf16> to vector<128x128xbf16>
    %cst_42 = arith.constant dense<0.000000e+00> : vector<288x128xf32>
    %56 = tpu.matmul %53, %55, %cst_42 {dimension_numbers = #tpu.dot_dimension_numbers<[1], [0], [0], [1], [0, 0, 1, 1], [], []>} : vector<288x128xbf16>, vector<128x128xbf16>, vector<288x128xf32> -> vector<288x128xf32>
    %57 = arith.addf %51, %56 : vector<288x128xf32>
    %c37 = arith.constant 37 : index
    %c0_43 = arith.constant 0 : index
    %58 = vector.load %arg9[%c37, %c0_43] : memref<342x128xf32, #tpu.memory_space<vmem>>, vector<288x128xf32>
    %59 = arith.truncf %58 : vector<288x128xf32> to vector<288x128xbf16>
    %c7 = arith.constant 7 : index
    %c0_44 = arith.constant 0 : index
    %c0_45 = arith.constant 0 : index
    %60 = vector.load %arg4[%c7, %c0_44, %c0_45] : memref<9x128x128xbf16, #tpu.memory_space<vmem>>, vector<1x128x128xbf16>
    %61 = vector.shape_cast %60 : vector<1x128x128xbf16> to vector<128x128xbf16>
    %cst_46 = arith.constant dense<0.000000e+00> : vector<288x128xf32>
    %62 = tpu.matmul %59, %61, %cst_46 {dimension_numbers = #tpu.dot_dimension_numbers<[1], [0], [0], [1], [0, 0, 1, 1], [], []>} : vector<288x128xbf16>, vector<128x128xbf16>, vector<288x128xf32> -> vector<288x128xf32>
    %63 = arith.addf %57, %62 : vector<288x128xf32>
    %c38 = arith.constant 38 : index
    %c0_47 = arith.constant 0 : index
    %64 = vector.load %arg9[%c38, %c0_47] : memref<342x128xf32, #tpu.memory_space<vmem>>, vector<288x128xf32>
    %65 = arith.truncf %64 : vector<288x128xf32> to vector<288x128xbf16>
    %c8 = arith.constant 8 : index
    %c0_48 = arith.constant 0 : index
    %c0_49 = arith.constant 0 : index
    %66 = vector.load %arg4[%c8, %c0_48, %c0_49] : memref<9x128x128xbf16, #tpu.memory_space<vmem>>, vector<1x128x128xbf16>
    %67 = vector.shape_cast %66 : vector<1x128x128xbf16> to vector<128x128xbf16>
    %cst_50 = arith.constant dense<0.000000e+00> : vector<288x128xf32>
    %68 = tpu.matmul %65, %67, %cst_50 {dimension_numbers = #tpu.dot_dimension_numbers<[1], [0], [0], [1], [0, 0, 1, 1], [], []>} : vector<288x128xbf16>, vector<128x128xbf16>, vector<288x128xf32> -> vector<288x128xf32>
    %69 = arith.addf %63, %68 : vector<288x128xf32>
    %70 = arith.truncf %69 : vector<288x128xf32> to vector<288x128xbf16>
    %c0_51 = arith.constant 0 : index
    %c0_52 = arith.constant 0 : index
    %c0_53 = arith.constant 0 : index
    %71 = vector.load %arg7[%c0_51, %c0_52, %c0_53] : memref<1x288x128xbf16, #tpu.memory_space<vmem>>, vector<1x288x128xbf16>
    %72 = vector.shape_cast %71 : vector<1x288x128xbf16> to vector<288x128xbf16>
    %73 = vector.shape_cast %70 : vector<288x128xbf16> to vector<1x288x128xbf16>
    tpu.vector_store %arg7[%c0_51, %c0_52, %c0_53], %73 {strides = array<i32>} : memref<1x288x128xbf16, #tpu.memory_space<vmem>>, vector<1x288x128xbf16>,
    %c0_54 = arith.constant 0 : index
    %c0_55 = arith.constant 0 : index
    %74 = vector.load %arg6[%c0_54, %c0_55] : memref<288x1xf32, #tpu.memory_space<vmem>>, vector<288x1xf32>
    %75 = vector.broadcast %74 : vector<288x1xf32> to vector<288x128xf32>
    %76 = arith.mulf %69, %75 : vector<288x128xf32>
    %cst_56 = arith.constant dense<0.000000e+00> : vector<128xf32>
    %77 = vector.multi_reduction <add>, %76, %cst_56 [0] : vector<288x128xf32> to vector<128xf32>
    %78 = vector.shape_cast %77 : vector<128xf32> to vector<1x128xf32>
    %79 = vector.shape_cast %78 : vector<1x128xf32> to vector<1x1x128xf32>
    %c0_57 = arith.constant 0 : index
    %c0_58 = arith.constant 0 : index
    %c0_59 = arith.constant 0 : index
    %80 = vector.load %arg8[%c0_57, %c0_58, %c0_59] : memref<1x2x128xf32, #tpu.memory_space<vmem>>, vector<1x1x128xf32>
    tpu.vector_store %arg8[%c0_57, %c0_58, %c0_59], %79 {strides = array<i32>} : memref<1x2x128xf32, #tpu.memory_space<vmem>>, vector<1x1x128xf32>,
    %81 = arith.mulf %76, %76 : vector<288x128xf32>
    %cst_60 = arith.constant dense<0.000000e+00> : vector<128xf32>
    %82 = vector.multi_reduction <add>, %81, %cst_60 [0] : vector<288x128xf32> to vector<128xf32>
    %83 = vector.shape_cast %82 : vector<128xf32> to vector<1x128xf32>
    %84 = vector.shape_cast %83 : vector<1x128xf32> to vector<1x1x128xf32>
    %c0_61 = arith.constant 0 : index
    %c1_62 = arith.constant 1 : index
    %c0_63 = arith.constant 0 : index
    %85 = vector.load %arg8[%c0_61, %c1_62, %c0_63] : memref<1x2x128xf32, #tpu.memory_space<vmem>>, vector<1x1x128xf32>
    tpu.vector_store %arg8[%c0_61, %c1_62, %c0_63], %84 {strides = array<i32>} : memref<1x2x128xf32, #tpu.memory_space<vmem>>, vector<1x1x128xf32>,
    return
  }
  func.func @transform_0(%arg0: i32) -> (i32, i32, i32) {
    %c0_i32 = arith.constant 0 : i32
    %c0_i32_0 = arith.constant 0 : i32
    %c0_i32_1 = arith.constant 0 : i32
    return %arg0, %c0_i32, %c0_i32_0 : i32, i32, i32
  }
  func.func @transform_1(%arg0: i32) -> (i32, i32) {
    %c0_i32 = arith.constant 0 : i32
    %c0_i32_0 = arith.constant 0 : i32
    %c0_i32_1 = arith.constant 0 : i32
    return %c0_i32, %c0_i32_0 : i32, i32
  }
  func.func @transform_2(%arg0: i32) -> (i32, i32) {
    %c0_i32 = arith.constant 0 : i32
    %c0_i32_0 = arith.constant 0 : i32
    %c0_i32_1 = arith.constant 0 : i32
    return %c0_i32, %c0_i32_0 : i32, i32
  }
  func.func @transform_3(%arg0: i32) -> (i32, i32, i32) {
    %c0_i32 = arith.constant 0 : i32
    %c0_i32_0 = arith.constant 0 : i32
    %c0_i32_1 = arith.constant 0 : i32
    %c0_i32_2 = arith.constant 0 : i32
    return %c0_i32, %c0_i32_0, %c0_i32_1 : i32, i32, i32
  }
  func.func @transform_4(%arg0: i32) -> (i32, i32) {
    %c0_i32 = arith.constant 0 : i32
    %c0_i32_0 = arith.constant 0 : i32
    %c0_i32_1 = arith.constant 0 : i32
    return %c0_i32, %c0_i32_0 : i32, i32
  }
  func.func @transform_5(%arg0: i32) -> (i32, i32) {
    %c0_i32 = arith.constant 0 : i32
    %c0_i32_0 = arith.constant 0 : i32
    %c0_i32_1 = arith.constant 0 : i32
    return %c0_i32, %c0_i32_0 : i32, i32
  }
  func.func @transform_6(%arg0: i32) -> (i32, i32, i32) {
    %c0_i32 = arith.constant 0 : i32
    %c0_i32_0 = arith.constant 0 : i32
    %c0_i32_1 = arith.constant 0 : i32
    return %arg0, %c0_i32, %c0_i32_0 : i32, i32, i32
  }
  func.func @transform_7(%arg0: i32) -> (i32, i32, i32) {
    %c0_i32 = arith.constant 0 : i32
    %c0_i32_0 = arith.constant 0 : i32
    %c0_i32_1 = arith.constant 0 : i32
    return %arg0, %c0_i32, %c0_i32_0 : i32, i32, i32
  }
}

module attributes {stable_mosaic.version = 11 : i64} {
  func.func @_final_downsample_kernel(%arg0: i32, %arg1: memref<512x128xbf16, #tpu.memory_space<vmem>>, %arg2: memref<1x128xf32, #tpu.memory_space<vmem>>, %arg3: memref<1x128xf32, #tpu.memory_space<vmem>>, %arg4: memref<512x128xbf16, #tpu.memory_space<vmem>>, %arg5: memref<1x128xf32, #tpu.memory_space<vmem>>, %arg6: memref<1x128xf32, #tpu.memory_space<vmem>>, %arg7: memref<512x128xf32, #tpu.memory_space<vmem>>) attributes {dimension_semantics = [#tpu.dimension_semantics<parallel>], iteration_bounds = array<i64: 1>, scalar_prefetch = 0 : i64, scratch_operands = 0 : i64, tpu.core_type = #tpu.core_type<tc>, window_params = [{transform_indices = @transform_0, window_bounds = array<i64: 512, 128>}, {pipeline_mode = #tpu.pipeline_mode<synchronous>, transform_indices = @transform_1, window_bounds = array<i64: 1, 128>}, {pipeline_mode = #tpu.pipeline_mode<synchronous>, transform_indices = @transform_2, window_bounds = array<i64: 1, 128>}, {transform_indices = @transform_3, window_bounds = array<i64: 512, 128>}, {pipeline_mode = #tpu.pipeline_mode<synchronous>, transform_indices = @transform_4, window_bounds = array<i64: 1, 128>}, {pipeline_mode = #tpu.pipeline_mode<synchronous>, transform_indices = @transform_5, window_bounds = array<i64: 1, 128>}, {transform_indices = @transform_6, window_bounds = array<i64: 512, 128>}]} {
    %c0 = arith.constant 0 : index
    %c0_0 = arith.constant 0 : index
    %0 = vector.load %arg1[%c0, %c0_0] : memref<512x128xbf16, #tpu.memory_space<vmem>>, vector<512x128xbf16>
    %1 = arith.extf %0 : vector<512x128xbf16> to vector<512x128xf32>
    %c0_1 = arith.constant 0 : index
    %c0_2 = arith.constant 0 : index
    %2 = vector.load %arg2[%c0_1, %c0_2] : memref<1x128xf32, #tpu.memory_space<vmem>>, vector<1x128xf32>
    %3 = vector.broadcast %2 : vector<1x128xf32> to vector<512x128xf32>
    %4 = arith.mulf %1, %3 : vector<512x128xf32>
    %c0_3 = arith.constant 0 : index
    %c0_4 = arith.constant 0 : index
    %5 = vector.load %arg3[%c0_3, %c0_4] : memref<1x128xf32, #tpu.memory_space<vmem>>, vector<1x128xf32>
    %6 = vector.broadcast %5 : vector<1x128xf32> to vector<512x128xf32>
    %7 = arith.addf %4, %6 : vector<512x128xf32>
    %c0_5 = arith.constant 0 : index
    %c0_6 = arith.constant 0 : index
    %8 = vector.load %arg4[%c0_5, %c0_6] : memref<512x128xbf16, #tpu.memory_space<vmem>>, vector<512x128xbf16>
    %9 = arith.extf %8 : vector<512x128xbf16> to vector<512x128xf32>
    %c0_7 = arith.constant 0 : index
    %c0_8 = arith.constant 0 : index
    %10 = vector.load %arg5[%c0_7, %c0_8] : memref<1x128xf32, #tpu.memory_space<vmem>>, vector<1x128xf32>
    %11 = vector.broadcast %10 : vector<1x128xf32> to vector<512x128xf32>
    %12 = arith.mulf %9, %11 : vector<512x128xf32>
    %c0_9 = arith.constant 0 : index
    %c0_10 = arith.constant 0 : index
    %13 = vector.load %arg6[%c0_9, %c0_10] : memref<1x128xf32, #tpu.memory_space<vmem>>, vector<1x128xf32>
    %14 = vector.broadcast %13 : vector<1x128xf32> to vector<512x128xf32>
    %15 = arith.addf %12, %14 : vector<512x128xf32>
    %16 = arith.addf %7, %15 : vector<512x128xf32>
    %cst = arith.constant 0.000000e+00 : f32
    %17 = vector.broadcast %cst : f32 to vector<512x128xf32>
    %18 = arith.maximumf %16, %17 : vector<512x128xf32>
    %c0_11 = arith.constant 0 : index
    %c0_12 = arith.constant 0 : index
    %19 = vector.load %arg7[%c0_11, %c0_12] : memref<512x128xf32, #tpu.memory_space<vmem>>, vector<512x128xf32>
    tpu.vector_store %arg7[%c0_11, %c0_12], %18 {strides = array<i32>} : memref<512x128xf32, #tpu.memory_space<vmem>>, vector<512x128xf32>,
    return
  }
  func.func @transform_0(%arg0: i32) -> (i32, i32) {
    %c0_i32 = arith.constant 0 : i32
    %c0_i32_0 = arith.constant 0 : i32
    return %arg0, %c0_i32 : i32, i32
  }
  func.func @transform_1(%arg0: i32) -> (i32, i32) {
    %c0_i32 = arith.constant 0 : i32
    %c0_i32_0 = arith.constant 0 : i32
    %c0_i32_1 = arith.constant 0 : i32
    return %c0_i32, %c0_i32_0 : i32, i32
  }
  func.func @transform_2(%arg0: i32) -> (i32, i32) {
    %c0_i32 = arith.constant 0 : i32
    %c0_i32_0 = arith.constant 0 : i32
    %c0_i32_1 = arith.constant 0 : i32
    return %c0_i32, %c0_i32_0 : i32, i32
  }
  func.func @transform_3(%arg0: i32) -> (i32, i32) {
    %c0_i32 = arith.constant 0 : i32
    %c0_i32_0 = arith.constant 0 : i32
    return %arg0, %c0_i32 : i32, i32
  }
  func.func @transform_4(%arg0: i32) -> (i32, i32) {
    %c0_i32 = arith.constant 0 : i32
    %c0_i32_0 = arith.constant 0 : i32
    %c0_i32_1 = arith.constant 0 : i32
    return %c0_i32, %c0_i32_0 : i32, i32
  }
  func.func @transform_5(%arg0: i32) -> (i32, i32) {
    %c0_i32 = arith.constant 0 : i32
    %c0_i32_0 = arith.constant 0 : i32
    %c0_i32_1 = arith.constant 0 : i32
    return %c0_i32, %c0_i32_0 : i32, i32
  }
  func.func @transform_6(%arg0: i32) -> (i32, i32) {
    %c0_i32 = arith.constant 0 : i32
    %c0_i32_0 = arith.constant 0 : i32
    return %arg0, %c0_i32 : i32, i32
  }
}

module attributes {stable_mosaic.version = 11 : i64} {
  func.func @_bnrelu_conv_ds_stats_kernel(%arg0: i32, %arg1: memref<512x128xbf16, #tpu.memory_space<vmem>>, %arg2: memref<1x128xf32, #tpu.memory_space<vmem>>, %arg3: memref<1x128xf32, #tpu.memory_space<vmem>>, %arg4: memref<128x128xbf16, #tpu.memory_space<vmem>>, %arg5: memref<512x128xbf16, #tpu.memory_space<vmem>>, %arg6: memref<128x128xbf16, #tpu.memory_space<vmem>>, %arg7: memref<512x128xbf16, #tpu.memory_space<vmem>>, %arg8: memref<512x128xbf16, #tpu.memory_space<vmem>>, %arg9: memref<1x2x128xf32, #tpu.memory_space<vmem>>, %arg10: memref<1x2x128xf32, #tpu.memory_space<vmem>>) attributes {dimension_semantics = [#tpu.dimension_semantics<parallel>], iteration_bounds = array<i64: 1>, scalar_prefetch = 0 : i64, scratch_operands = 0 : i64, tpu.core_type = #tpu.core_type<tc>, window_params = [{transform_indices = @transform_0, window_bounds = array<i64: 512, 128>}, {pipeline_mode = #tpu.pipeline_mode<synchronous>, transform_indices = @transform_1, window_bounds = array<i64: 1, 128>}, {pipeline_mode = #tpu.pipeline_mode<synchronous>, transform_indices = @transform_2, window_bounds = array<i64: 1, 128>}, {pipeline_mode = #tpu.pipeline_mode<synchronous>, transform_indices = @transform_3, window_bounds = array<i64: 128, 128>}, {transform_indices = @transform_4, window_bounds = array<i64: 512, 128>}, {pipeline_mode = #tpu.pipeline_mode<synchronous>, transform_indices = @transform_5, window_bounds = array<i64: 128, 128>}, {transform_indices = @transform_6, window_bounds = array<i64: 512, 128>}, {transform_indices = @transform_7, window_bounds = array<i64: 512, 128>}, {transform_indices = @transform_8, window_bounds = array<i64: 1, 2, 128>}, {transform_indices = @transform_9, window_bounds = array<i64: 1, 2, 128>}]} {
    %0 = tpu.iota {dimensions = array<i32: 0>} : vector<512x1xi32>
    %c512_i32 = arith.constant 512 : i32
    %1 = arith.muli %arg0, %c512_i32 : i32
    %2 = vector.broadcast %1 : i32 to vector<512x1xi32>
    %3 = arith.addi %0, %2 : vector<512x1xi32>
    %c512_i32_0 = arith.constant 512 : i32
    %4 = vector.broadcast %c512_i32_0 : i32 to vector<512x1xi32>
    %5 = arith.cmpi slt, %3, %4 : vector<512x1xi32>
    %c0 = arith.constant 0 : index
    %c0_1 = arith.constant 0 : index
    %6 = vector.load %arg1[%c0, %c0_1] : memref<512x128xbf16, #tpu.memory_space<vmem>>, vector<512x128xbf16>
    %7 = arith.extf %6 : vector<512x128xbf16> to vector<512x128xf32>
    %c0_2 = arith.constant 0 : index
    %c0_3 = arith.constant 0 : index
    %8 = vector.load %arg2[%c0_2, %c0_3] : memref<1x128xf32, #tpu.memory_space<vmem>>, vector<1x128xf32>
    %9 = vector.broadcast %8 : vector<1x128xf32> to vector<512x128xf32>
    %10 = arith.mulf %7, %9 : vector<512x128xf32>
    %c0_4 = arith.constant 0 : index
    %c0_5 = arith.constant 0 : index
    %11 = vector.load %arg3[%c0_4, %c0_5] : memref<1x128xf32, #tpu.memory_space<vmem>>, vector<1x128xf32>
    %12 = vector.broadcast %11 : vector<1x128xf32> to vector<512x128xf32>
    %13 = arith.addf %10, %12 : vector<512x128xf32>
    %cst = arith.constant 0.000000e+00 : f32
    %14 = vector.broadcast %cst : f32 to vector<512x128xf32>
    %15 = arith.maximumf %13, %14 : vector<512x128xf32>
    %16 = arith.truncf %15 : vector<512x128xf32> to vector<512x128xbf16>
    %c0_6 = arith.constant 0 : index
    %c0_7 = arith.constant 0 : index
    %17 = vector.load %arg4[%c0_6, %c0_7] : memref<128x128xbf16, #tpu.memory_space<vmem>>, vector<128x128xbf16>
    %cst_8 = arith.constant dense<0.000000e+00> : vector<512x128xf32>
    %18 = tpu.matmul %16, %17, %cst_8 {dimension_numbers = #tpu.dot_dimension_numbers<[1], [0], [0], [1], [0, 0, 1, 1], [], []>} : vector<512x128xbf16>, vector<128x128xbf16>, vector<512x128xf32> -> vector<512x128xf32>
    %cst_9 = arith.constant 0.000000e+00 : f32
    %19 = vector.shape_cast %5 : vector<512x1xi1> to vector<512x1xi1>
    %20 = vector.broadcast %19 : vector<512x1xi1> to vector<512x128xi1>
    %21 = vector.broadcast %cst_9 : f32 to vector<512x128xf32>
    %22 = arith.select %20, %18, %21 : vector<512x128xi1>, vector<512x128xf32>
    %23 = arith.truncf %22 : vector<512x128xf32> to vector<512x128xbf16>
    %c0_10 = arith.constant 0 : index
    %c0_11 = arith.constant 0 : index
    %24 = vector.load %arg7[%c0_10, %c0_11] : memref<512x128xbf16, #tpu.memory_space<vmem>>, vector<512x128xbf16>
    tpu.vector_store %arg7[%c0_10, %c0_11], %23 {strides = array<i32>} : memref<512x128xbf16, #tpu.memory_space<vmem>>, vector<512x128xbf16>,
    %cst_12 = arith.constant dense<0.000000e+00> : vector<128xf32>
    %25 = vector.multi_reduction <add>, %22, %cst_12 [0] : vector<512x128xf32> to vector<128xf32>
    %26 = vector.shape_cast %25 : vector<128xf32> to vector<1x128xf32>
    %27 = vector.shape_cast %26 : vector<1x128xf32> to vector<1x1x128xf32>
    %c0_13 = arith.constant 0 : index
    %c0_14 = arith.constant 0 : index
    %c0_15 = arith.constant 0 : index
    %28 = vector.load %arg9[%c0_13, %c0_14, %c0_15] : memref<1x2x128xf32, #tpu.memory_space<vmem>>, vector<1x1x128xf32>
    tpu.vector_store %arg9[%c0_13, %c0_14, %c0_15], %27 {strides = array<i32>} : memref<1x2x128xf32, #tpu.memory_space<vmem>>, vector<1x1x128xf32>,
    %29 = arith.mulf %22, %22 : vector<512x128xf32>
    %cst_16 = arith.constant dense<0.000000e+00> : vector<128xf32>
    %30 = vector.multi_reduction <add>, %29, %cst_16 [0] : vector<512x128xf32> to vector<128xf32>
    %31 = vector.shape_cast %30 : vector<128xf32> to vector<1x128xf32>
    %32 = vector.shape_cast %31 : vector<1x128xf32> to vector<1x1x128xf32>
    %c0_17 = arith.constant 0 : index
    %c1 = arith.constant 1 : index
    %c0_18 = arith.constant 0 : index
    %33 = vector.load %arg9[%c0_17, %c1, %c0_18] : memref<1x2x128xf32, #tpu.memory_space<vmem>>, vector<1x1x128xf32>
    tpu.vector_store %arg9[%c0_17, %c1, %c0_18], %32 {strides = array<i32>} : memref<1x2x128xf32, #tpu.memory_space<vmem>>, vector<1x1x128xf32>,
    %c0_19 = arith.constant 0 : index
    %c0_20 = arith.constant 0 : index
    %34 = vector.load %arg5[%c0_19, %c0_20] : memref<512x128xbf16, #tpu.memory_space<vmem>>, vector<512x128xbf16>
    %c0_21 = arith.constant 0 : index
    %c0_22 = arith.constant 0 : index
    %35 = vector.load %arg6[%c0_21, %c0_22] : memref<128x128xbf16, #tpu.memory_space<vmem>>, vector<128x128xbf16>
    %cst_23 = arith.constant dense<0.000000e+00> : vector<512x128xf32>
    %36 = tpu.matmul %34, %35, %cst_23 {dimension_numbers = #tpu.dot_dimension_numbers<[1], [0], [0], [1], [0, 0, 1, 1], [], []>} : vector<512x128xbf16>, vector<128x128xbf16>, vector<512x128xf32> -> vector<512x128xf32>
    %cst_24 = arith.constant 0.000000e+00 : f32
    %37 = vector.shape_cast %5 : vector<512x1xi1> to vector<512x1xi1>
    %38 = vector.broadcast %37 : vector<512x1xi1> to vector<512x128xi1>
    %39 = vector.broadcast %cst_24 : f32 to vector<512x128xf32>
    %40 = arith.select %38, %36, %39 : vector<512x128xi1>, vector<512x128xf32>
    %41 = arith.truncf %40 : vector<512x128xf32> to vector<512x128xbf16>
    %c0_25 = arith.constant 0 : index
    %c0_26 = arith.constant 0 : index
    %42 = vector.load %arg8[%c0_25, %c0_26] : memref<512x128xbf16, #tpu.memory_space<vmem>>, vector<512x128xbf16>
    tpu.vector_store %arg8[%c0_25, %c0_26], %41 {strides = array<i32>} : memref<512x128xbf16, #tpu.memory_space<vmem>>, vector<512x128xbf16>,
    %cst_27 = arith.constant dense<0.000000e+00> : vector<128xf32>
    %43 = vector.multi_reduction <add>, %40, %cst_27 [0] : vector<512x128xf32> to vector<128xf32>
    %44 = vector.shape_cast %43 : vector<128xf32> to vector<1x128xf32>
    %45 = vector.shape_cast %44 : vector<1x128xf32> to vector<1x1x128xf32>
    %c0_28 = arith.constant 0 : index
    %c0_29 = arith.constant 0 : index
    %c0_30 = arith.constant 0 : index
    %46 = vector.load %arg10[%c0_28, %c0_29, %c0_30] : memref<1x2x128xf32, #tpu.memory_space<vmem>>, vector<1x1x128xf32>
    tpu.vector_store %arg10[%c0_28, %c0_29, %c0_30], %45 {strides = array<i32>} : memref<1x2x128xf32, #tpu.memory_space<vmem>>, vector<1x1x128xf32>,
    %47 = arith.mulf %40, %40 : vector<512x128xf32>
    %cst_31 = arith.constant dense<0.000000e+00> : vector<128xf32>
    %48 = vector.multi_reduction <add>, %47, %cst_31 [0] : vector<512x128xf32> to vector<128xf32>
    %49 = vector.shape_cast %48 : vector<128xf32> to vector<1x128xf32>
    %50 = vector.shape_cast %49 : vector<1x128xf32> to vector<1x1x128xf32>
    %c0_32 = arith.constant 0 : index
    %c1_33 = arith.constant 1 : index
    %c0_34 = arith.constant 0 : index
    %51 = vector.load %arg10[%c0_32, %c1_33, %c0_34] : memref<1x2x128xf32, #tpu.memory_space<vmem>>, vector<1x1x128xf32>
    tpu.vector_store %arg10[%c0_32, %c1_33, %c0_34], %50 {strides = array<i32>} : memref<1x2x128xf32, #tpu.memory_space<vmem>>, vector<1x1x128xf32>,
    return
  }
  func.func @transform_0(%arg0: i32) -> (i32, i32) {
    %c0_i32 = arith.constant 0 : i32
    %c0_i32_0 = arith.constant 0 : i32
    return %arg0, %c0_i32 : i32, i32
  }
  func.func @transform_1(%arg0: i32) -> (i32, i32) {
    %c0_i32 = arith.constant 0 : i32
    %c0_i32_0 = arith.constant 0 : i32
    %c0_i32_1 = arith.constant 0 : i32
    return %c0_i32, %c0_i32_0 : i32, i32
  }
  func.func @transform_2(%arg0: i32) -> (i32, i32) {
    %c0_i32 = arith.constant 0 : i32
    %c0_i32_0 = arith.constant 0 : i32
    %c0_i32_1 = arith.constant 0 : i32
    return %c0_i32, %c0_i32_0 : i32, i32
  }
  func.func @transform_3(%arg0: i32) -> (i32, i32) {
    %c0_i32 = arith.constant 0 : i32
    %c0_i32_0 = arith.constant 0 : i32
    %c0_i32_1 = arith.constant 0 : i32
    return %c0_i32, %c0_i32_0 : i32, i32
  }
  func.func @transform_4(%arg0: i32) -> (i32, i32) {
    %c0_i32 = arith.constant 0 : i32
    %c0_i32_0 = arith.constant 0 : i32
    return %arg0, %c0_i32 : i32, i32
  }
  func.func @transform_5(%arg0: i32) -> (i32, i32) {
    %c0_i32 = arith.constant 0 : i32
    %c0_i32_0 = arith.constant 0 : i32
    %c0_i32_1 = arith.constant 0 : i32
    return %c0_i32, %c0_i32_0 : i32, i32
  }
  func.func @transform_6(%arg0: i32) -> (i32, i32) {
    %c0_i32 = arith.constant 0 : i32
    %c0_i32_0 = arith.constant 0 : i32
    return %arg0, %c0_i32 : i32, i32
  }
  func.func @transform_7(%arg0: i32) -> (i32, i32) {
    %c0_i32 = arith.constant 0 : i32
    %c0_i32_0 = arith.constant 0 : i32
    return %arg0, %c0_i32 : i32, i32
  }
  func.func @transform_8(%arg0: i32) -> (i32, i32, i32) {
    %c0_i32 = arith.constant 0 : i32
    %c0_i32_0 = arith.constant 0 : i32
    %c0_i32_1 = arith.constant 0 : i32
    return %arg0, %c0_i32, %c0_i32_0 : i32, i32, i32
  }
  func.func @transform_9(%arg0: i32) -> (i32, i32, i32) {
    %c0_i32 = arith.constant 0 : i32
    %c0_i32_0 = arith.constant 0 : i32
    %c0_i32_1 = arith.constant 0 : i32
    return %arg0, %c0_i32, %c0_i32_0 : i32, i32, i32
  }
}

</mosaic_0001>

<llo_original>
// kernel: bottleneck_with_batchnorm.4
$region0: #{bottleneck_with_batchnorm.4}
  #allocation0 [shape = 'u32[]', space=smem, size = 0x4, offset = 0x4, fixed_abs, tag = 'smem constant byte address 0x4 - core index']
  #allocation1 [shape = 'u32[144,128]{1,0:T(1,128)}', space=vmem, size = 0x12000, scoped, tag = 'internal scratch']
  %s0 = inlined_call_operand.hbm [shape: bf16[512,128], index: 0, kind: input, shape index: {}]
  %s1 = inlined_call_operand.hbm [shape: bf16[128,128], index: 1, kind: input, shape index: {}]
  %s2 = inlined_call_operand.hbm [shape: bf16[512,128], index: 2, kind: output, shape index: {0}]
  %s3 = inlined_call_operand.hbm [shape: f32[1,2,128], index: 3, kind: output, shape index: {1}]
  %4 = xla_tuple %s2, %s3
  %s5 = sld [smem:[#allocation0]]
  $region34: #{bottleneck_with_batchnorm.4} parent=0
    _
  %s7 = ssub.s32 1, %s5
  %s8 = scalar_select 0, %s7, %s5
  $region1: #{bottleneck_with_batchnorm.4} parent=0
    #allocation2 [shape = 'u8[131072]{0}', space=vmem, size = 0x20000, scoped, tag = 'input window, operand 0, single buffered']
    #allocation3 [shape = 's32[1]{0}', space=sflag, size = 0x4, scoped, tag = 'scoped memory for bottleneck_with_batchnorm.4']
    #allocation4 [shape = 's32[1]{0}', space=sflag, size = 0x4, scoped, tag = 'scoped memory for bottleneck_with_batchnorm.4']
    #allocation5 [shape = 'u8[32768]{0}', space=vmem, size = 0x8000, scoped, tag = 'input window, operand 1, single buffered']
    #allocation6 [shape = 's32[1]{0}', space=sflag, size = 0x4, scoped, tag = 'scoped memory for bottleneck_with_batchnorm.4']
    #allocation7 [shape = 'u8[131072]{0}', space=vmem, size = 0x20000, scoped, tag = 'output window, operand 0, single buffered']
    #allocation8 [shape = 'u8[1024]{0}', space=vmem, size = 0x400, scoped, tag = 'output window, operand 1, single buffered']
    #allocation9 [shape = 's32[1]{0}', space=sflag, size = 0x4, scoped, tag = 'scoped memory for bottleneck_with_batchnorm.4']
    %9 = vsyncpa [#allocation3], 0
    %10 = vsyncpa [#allocation6], 0
    %11 = vsyncpa [#allocation4], 0
    %12 = vsyncpa [#allocation9], 0
    // Predicated region
    $region2: #{bottleneck_with_batchnorm.4} parent=1 // pred_check
      _
    $region3: #{bottleneck_with_batchnorm.4} parent=1 // pred_check_branch
      %14 = sbr.rel (0) target = $region5
    $region4: #{bottleneck_with_batchnorm.4} parent=1 // pred_region
      %s16 = ssub.s32 4096, 4096
      %17 = vsyncadd [#allocation3], %s16
      %s18 = sshll.u32 [#allocation2], 4
      %s19 = int_to_ptr.vmem [resolvable:$true] %s18
      %24 = dma.hbm_to_vmem [thread:$0]  %s0, 4096, %s19, [#allocation3], 64, 64, 4
    $region5: #{bottleneck_with_batchnorm.4} parent=1 // pred_fallthru
      _
    // Predicated region
    $region6: #{bottleneck_with_batchnorm.4} parent=1 // pred_check
      _
    $region7: #{bottleneck_with_batchnorm.4} parent=1 // pred_check_branch
      %26 = sbr.rel (0) target = $region9
    $region8: #{bottleneck_with_batchnorm.4} parent=1 // pred_region
      %s28 = ssub.s32 1024, 1024
      %29 = vsyncadd [#allocation6], %s28
      %s30 = sshll.u32 [#allocation5], 4
      %s31 = int_to_ptr.vmem [resolvable:$true] %s30
      %36 = dma.hbm_to_vmem [thread:$0]  %s1, 1024, %s31, [#allocation6], 64, 64, 4
    $region9: #{bottleneck_with_batchnorm.4} parent=1 // pred_fallthru
      _
    // Predicated region
    $region10: #{bottleneck_with_batchnorm.4} parent=1 // pred_check
      _
    $region11: #{bottleneck_with_batchnorm.4} parent=1 // pred_check_branch
      %38 = sbr.rel (0) target = $region13
    $region12: #{bottleneck_with_batchnorm.4} parent=1 // pred_region
      %39 = dma.done [#allocation3], 4096
    $region13: #{bottleneck_with_batchnorm.4} parent=1 // pred_fallthru
      _
    // Predicated region
    $region14: #{bottleneck_with_batchnorm.4} parent=1 // pred_check
      _
    $region15: #{bottleneck_with_batchnorm.4} parent=1 // pred_check_branch
      %41 = sbr.rel (0) target = $region17
    $region16: #{bottleneck_with_batchnorm.4} parent=1 // pred_region
      %42 = dma.done [#allocation6], 1024
    $region17: #{bottleneck_with_batchnorm.4} parent=1 // pred_fallthru
      _
    %v44 = vlaneseq
    %v45 = vshrl.u32 %v44, 7
    %v46 = vadd.s32 %v45, 8
    %v47 = vadd.s32 %v45, 16
    %v48 = vadd.s32 %v45, 24
    %v49 = vadd.s32 %v45, 32
    %v50 = vadd.s32 %v45, 40
    %v51 = vadd.s32 %v45, 48
    %v52 = vadd.s32 %v45, 56
    %v53 = vadd.s32 %v45, 64
    %v54 = vadd.s32 %v45, 72
    %v55 = vadd.s32 %v45, 80
    %v56 = vadd.s32 %v45, 88
    %v57 = vadd.s32 %v45, 96
    %v58 = vadd.s32 %v45, 104
    %v59 = vadd.s32 %v45, 112
    %v60 = vadd.s32 %v45, 120
    %v61 = vadd.s32 %v45, 128
    %v62 = vadd.s32 %v45, 136
    %v63 = vadd.s32 %v45, 144
    %v64 = vadd.s32 %v45, 152
    %v65 = vadd.s32 %v45, 160
    %v66 = vadd.s32 %v45, 168
    %v67 = vadd.s32 %v45, 176
    %v68 = vadd.s32 %v45, 184
    %v69 = vadd.s32 %v45, 192
    %v70 = vadd.s32 %v45, 200
    %v71 = vadd.s32 %v45, 208
    %v72 = vadd.s32 %v45, 216
    %v73 = vadd.s32 %v45, 224
    %v74 = vadd.s32 %v45, 232
    %v75 = vadd.s32 %v45, 240
    %v76 = vadd.s32 %v45, 248
    %v77 = vadd.s32 %v45, 256
    %v78 = vadd.s32 %v45, 264
    %v79 = vadd.s32 %v45, 272
    %v80 = vadd.s32 %v45, 280
    %v81 = vadd.s32 %v45, 288
    %v82 = vadd.s32 %v45, 296
    %v83 = vadd.s32 %v45, 304
    %v84 = vadd.s32 %v45, 312
    %v85 = vadd.s32 %v45, 320
    %v86 = vadd.s32 %v45, 328
    %v87 = vadd.s32 %v45, 336
    %v88 = vadd.s32 %v45, 344
    %v89 = vadd.s32 %v45, 352
    %v90 = vadd.s32 %v45, 360
    %v91 = vadd.s32 %v45, 368
    %v92 = vadd.s32 %v45, 376
    %v93 = vadd.s32 %v45, 384
    %v94 = vadd.s32 %v45, 392
    %v95 = vadd.s32 %v45, 400
    %v96 = vadd.s32 %v45, 408
    %v97 = vadd.s32 %v45, 416
    %v98 = vadd.s32 %v45, 424
    %v99 = vadd.s32 %v45, 432
    %v100 = vadd.s32 %v45, 440
    %v101 = vadd.s32 %v45, 448
    %v102 = vadd.s32 %v45, 456
    %v103 = vadd.s32 %v45, 464
    %v104 = vadd.s32 %v45, 472
    %v105 = vadd.s32 %v45, 480
    %v106 = vadd.s32 %v45, 488
    %v107 = vadd.s32 %v45, 496
    %v108 = vadd.s32 %v45, 504
    %s109 = smul.u32 0, 512
    %v110 = vstv %s109
    %v111 = vadd.s32 %v45, %v110
    %v112 = vadd.s32 %v46, %v110
    %v113 = vadd.s32 %v47, %v110
    %v114 = vadd.s32 %v48, %v110
    %v115 = vadd.s32 %v49, %v110
    %v116 = vadd.s32 %v50, %v110
    %v117 = vadd.s32 %v51, %v110
    %v118 = vadd.s32 %v52, %v110
    %v119 = vadd.s32 %v53, %v110
    %v120 = vadd.s32 %v54, %v110
    %v121 = vadd.s32 %v55, %v110
    %v122 = vadd.s32 %v56, %v110
    %v123 = vadd.s32 %v57, %v110
    %v124 = vadd.s32 %v58, %v110
    %v125 = vadd.s32 %v59, %v110
    %v126 = vadd.s32 %v60, %v110
    %v127 = vadd.s32 %v61, %v110
    %v128 = vadd.s32 %v62, %v110
    %v129 = vadd.s32 %v63, %v110
    %v130 = vadd.s32 %v64, %v110
    %v131 = vadd.s32 %v65, %v110
    %v132 = vadd.s32 %v66, %v110
    %v133 = vadd.s32 %v67, %v110
    %v134 = vadd.s32 %v68, %v110
    %v135 = vadd.s32 %v69, %v110
    %v136 = vadd.s32 %v70, %v110
    %v137 = vadd.s32 %v71, %v110
    %v138 = vadd.s32 %v72, %v110
    %v139 = vadd.s32 %v73, %v110
    %v140 = vadd.s32 %v74, %v110
    %v141 = vadd.s32 %v75, %v110
    %v142 = vadd.s32 %v76, %v110
    %v143 = vadd.s32 %v77, %v110
    %v144 = vadd.s32 %v78, %v110
    %v145 = vadd.s32 %v79, %v110
    %v146 = vadd.s32 %v80, %v110
    %v147 = vadd.s32 %v81, %v110
    %v148 = vadd.s32 %v82, %v110
    %v149 = vadd.s32 %v83, %v110
    %v150 = vadd.s32 %v84, %v110
    %v151 = vadd.s32 %v85, %v110
    %v152 = vadd.s32 %v86, %v110
    %v153 = vadd.s32 %v87, %v110
    %v154 = vadd.s32 %v88, %v110
    %v155 = vadd.s32 %v89, %v110
    %v156 = vadd.s32 %v90, %v110
    %v157 = vadd.s32 %v91, %v110
    %v158 = vadd.s32 %v92, %v110
    %v159 = vadd.s32 %v93, %v110
    %v160 = vadd.s32 %v94, %v110
    %v161 = vadd.s32 %v95, %v110
    %v162 = vadd.s32 %v96, %v110
    %v163 = vadd.s32 %v97, %v110
    %v164 = vadd.s32 %v98, %v110
    %v165 = vadd.s32 %v99, %v110
    %v166 = vadd.s32 %v100, %v110
    %v167 = vadd.s32 %v101, %v110
    %v168 = vadd.s32 %v102, %v110
    %v169 = vadd.s32 %v103, %v110
    %v170 = vadd.s32 %v104, %v110
    %v171 = vadd.s32 %v105, %v110
    %v172 = vadd.s32 %v106, %v110
    %v173 = vadd.s32 %v107, %v110
    %v174 = vadd.s32 %v108, %v110
    %vm175 = vcmp.lt.s32.totalorder %v111, 512
    %vm176 = vcmp.lt.s32.totalorder %v112, 512
    %vm177 = vcmp.lt.s32.totalorder %v113, 512
    %vm178 = vcmp.lt.s32.totalorder %v114, 512
    %vm179 = vcmp.lt.s32.totalorder %v115, 512
    %vm180 = vcmp.lt.s32.totalorder %v116, 512
    %vm181 = vcmp.lt.s32.totalorder %v117, 512
    %vm182 = vcmp.lt.s32.totalorder %v118, 512
    %vm183 = vcmp.lt.s32.totalorder %v119, 512
    %vm184 = vcmp.lt.s32.totalorder %v120, 512
    %vm185 = vcmp.lt.s32.totalorder %v121, 512
    %vm186 = vcmp.lt.s32.totalorder %v122, 512
    %vm187 = vcmp.lt.s32.totalorder %v123, 512
    %vm188 = vcmp.lt.s32.totalorder %v124, 512
    %vm189 = vcmp.lt.s32.totalorder %v125, 512
    %vm190 = vcmp.lt.s32.totalorder %v126, 512
    %vm191 = vcmp.lt.s32.totalorder %v127, 512
    %vm192 = vcmp.lt.s32.totalorder %v128, 512
    %vm193 = vcmp.lt.s32.totalorder %v129, 512
    %vm194 = vcmp.lt.s32.totalorder %v130, 512
    %vm195 = vcmp.lt.s32.totalorder %v131, 512
    %vm196 = vcmp.lt.s32.totalorder %v132, 512
    %vm197 = vcmp.lt.s32.totalorder %v133, 512
    %vm198 = vcmp.lt.s32.totalorder %v134, 512
    %vm199 = vcmp.lt.s32.totalorder %v135, 512
    %vm200 = vcmp.lt.s32.totalorder %v136, 512
    %vm201 = vcmp.lt.s32.totalorder %v137, 512
    %vm202 = vcmp.lt.s32.totalorder %v138, 512
    %vm203 = vcmp.lt.s32.totalorder %v139, 512
    %vm204 = vcmp.lt.s32.totalorder %v140, 512
    %vm205 = vcmp.lt.s32.totalorder %v141, 512
    %vm206 = vcmp.lt.s32.totalorder %v142, 512
    %vm207 = vcmp.lt.s32.totalorder %v143, 512
    %vm208 = vcmp.lt.s32.totalorder %v144, 512
    %vm209 = vcmp.lt.s32.totalorder %v145, 512
    %vm210 = vcmp.lt.s32.totalorder %v146, 512
    %vm211 = vcmp.lt.s32.totalorder %v147, 512
    %vm212 = vcmp.lt.s32.totalorder %v148, 512
    %vm213 = vcmp.lt.s32.totalorder %v149, 512
    %vm214 = vcmp.lt.s32.totalorder %v150, 512
    %vm215 = vcmp.lt.s32.totalorder %v151, 512
    %vm216 = vcmp.lt.s32.totalorder %v152, 512
    %vm217 = vcmp.lt.s32.totalorder %v153, 512
    %vm218 = vcmp.lt.s32.totalorder %v154, 512
    %vm219 = vcmp.lt.s32.totalorder %v155, 512
    %vm220 = vcmp.lt.s32.totalorder %v156, 512
    %vm221 = vcmp.lt.s32.totalorder %v157, 512
    %vm222 = vcmp.lt.s32.totalorder %v158, 512
    %vm223 = vcmp.lt.s32.totalorder %v159, 512
    %vm224 = vcmp.lt.s32.totalorder %v160, 512
    %vm225 = vcmp.lt.s32.totalorder %v161, 512
    %vm226 = vcmp.lt.s32.totalorder %v162, 512
    %vm227 = vcmp.lt.s32.totalorder %v163, 512
    %vm228 = vcmp.lt.s32.totalorder %v164, 512
    %vm229 = vcmp.lt.s32.totalorder %v165, 512
    %vm230 = vcmp.lt.s32.totalorder %v166, 512
    %vm231 = vcmp.lt.s32.totalorder %v167, 512
    %vm232 = vcmp.lt.s32.totalorder %v168, 512
    %vm233 = vcmp.lt.s32.totalorder %v169, 512
    %vm234 = vcmp.lt.s32.totalorder %v170, 512
    %vm235 = vcmp.lt.s32.totalorder %v171, 512
    %vm236 = vcmp.lt.s32.totalorder %v172, 512
    %vm237 = vcmp.lt.s32.totalorder %v173, 512
    %vm238 = vcmp.lt.s32.totalorder %v174, 512
    %v239 = vld [vmem:[#allocation2] sm:$0xf]
    %v240 = vld [vmem:[#allocation2 + $0x4] sm:$0xf]
    %v241 = vld [vmem:[#allocation2 + $0x8] sm:$0xf]
    %v242 = vld [vmem:[#allocation2 + $0xc] sm:$0xf]
    %v243 = vld [vmem:[#allocation2 + $0x10] sm:$0xf]
    %v244 = vld [vmem:[#allocation2 + $0x14] sm:$0xf]
    %v245 = vld [vmem:[#allocation2 + $0x18] sm:$0xf]
    %v246 = vld [vmem:[#allocation2 + $0x1c] sm:$0xf]
    %v247 = vld [vmem:[#allocation2 + $0x20] sm:$0xf]
    %v248 = vld [vmem:[#allocation2 + $0x24] sm:$0xf]
    %v249 = vld [vmem:[#allocation2 + $0x28] sm:$0xf]
    %v250 = vld [vmem:[#allocation2 + $0x2c] sm:$0xf]
    %v251 = vld [vmem:[#allocation2 + $0x30] sm:$0xf]
    %v252 = vld [vmem:[#allocation2 + $0x34] sm:$0xf]
    %v253 = vld [vmem:[#allocation2 + $0x38] sm:$0xf]
    %v254 = vld [vmem:[#allocation2 + $0x3c] sm:$0xf]
    %v255 = vld [vmem:[#allocation2 + $0x40] sm:$0xf]
    %v256 = vld [vmem:[#allocation2 + $0x44] sm:$0xf]
    %v257 = vld [vmem:[#allocation2 + $0x48] sm:$0xf]
    %v258 = vld [vmem:[#allocation2 + $0x4c] sm:$0xf]
    %v259 = vld [vmem:[#allocation2 + $0x50] sm:$0xf]
    %v260 = vld [vmem:[#allocation2 + $0x54] sm:$0xf]
    %v261 = vld [vmem:[#allocation2 + $0x58] sm:$0xf]
    %v262 = vld [vmem:[#allocation2 + $0x5c] sm:$0xf]
    %v263 = vld [vmem:[#allocation2 + $0x60] sm:$0xf]
    %v264 = vld [vmem:[#allocation2 + $0x64] sm:$0xf]
    %v265 = vld [vmem:[#allocation2 + $0x68] sm:$0xf]
    %v266 = vld [vmem:[#allocation2 + $0x6c] sm:$0xf]
    %v267 = vld [vmem:[#allocation2 + $0x70] sm:$0xf]
    %v268 = vld [vmem:[#allocation2 + $0x74] sm:$0xf]
    %v269 = vld [vmem:[#allocation2 + $0x78] sm:$0xf]
    %v270 = vld [vmem:[#allocation2 + $0x7c] sm:$0xf]
    %v271 = vld [vmem:[#allocation2 + $0x80] sm:$0xf]
    %v272 = vld [vmem:[#allocation2 + $0x84] sm:$0xf]
    %v273 = vld [vmem:[#allocation2 + $0x88] sm:$0xf]
    %v274 = vld [vmem:[#allocation2 + $0x8c] sm:$0xf]
    %v275 = vld [vmem:[#allocation2 + $0x90] sm:$0xf]
    %v276 = vld [vmem:[#allocation2 + $0x94] sm:$0xf]
    %v277 = vld [vmem:[#allocation2 + $0x98] sm:$0xf]
    %v278 = vld [vmem:[#allocation2 + $0x9c] sm:$0xf]
    %v279 = vld [vmem:[#allocation2 + $0xa0] sm:$0xf]
    %v280 = vld [vmem:[#allocation2 + $0xa4] sm:$0xf]
    %v281 = vld [vmem:[#allocation2 + $0xa8] sm:$0xf]
    %v282 = vld [vmem:[#allocation2 + $0xac] sm:$0xf]
    %v283 = vld [vmem:[#allocation2 + $0xb0] sm:$0xf]
    %v284 = vld [vmem:[#allocation2 + $0xb4] sm:$0xf]
    %v285 = vld [vmem:[#allocation2 + $0xb8] sm:$0xf]
    %v286 = vld [vmem:[#allocation2 + $0xbc] sm:$0xf]
    %v287 = vld [vmem:[#allocation2 + $0xc0] sm:$0xf]
    %v288 = vld [vmem:[#allocation2 + $0xc4] sm:$0xf]
    %v289 = vld [vmem:[#allocation2 + $0xc8] sm:$0xf]
    %v290 = vld [vmem:[#allocation2 + $0xcc] sm:$0xf]
    %v291 = vld [vmem:[#allocation2 + $0xd0] sm:$0xf]
    %v292 = vld [vmem:[#allocation2 + $0xd4] sm:$0xf]
    %v293 = vld [vmem:[#allocation2 + $0xd8] sm:$0xf]
    %v294 = vld [vmem:[#allocation2 + $0xdc] sm:$0xf]
    %v295 = vld [vmem:[#allocation2 + $0xe0] sm:$0xf]
    %v296 = vld [vmem:[#allocation2 + $0xe4] sm:$0xf]
    %v297 = vld [vmem:[#allocation2 + $0xe8] sm:$0xf]
    %v298 = vld [vmem:[#allocation2 + $0xec] sm:$0xf]
    %v299 = vld [vmem:[#allocation2 + $0xf0] sm:$0xf]
    %v300 = vld [vmem:[#allocation2 + $0xf4] sm:$0xf]
    %v301 = vld [vmem:[#allocation2 + $0xf8] sm:$0xf]
    %v302 = vld [vmem:[#allocation2 + $0xfc] sm:$0xf]
    %v303 = vld [vmem:[#allocation5] sm:$0xf]
    %v304 = vld [vmem:[#allocation5 + $0x4] sm:$0xf]
    %v305 = vld [vmem:[#allocation5 + $0x8] sm:$0xf]
    %v306 = vld [vmem:[#allocation5 + $0xc] sm:$0xf]
    %v307 = vld [vmem:[#allocation5 + $0x10] sm:$0xf]
    %v308 = vld [vmem:[#allocation5 + $0x14] sm:$0xf]
    %v309 = vld [vmem:[#allocation5 + $0x18] sm:$0xf]
    %v310 = vld [vmem:[#allocation5 + $0x1c] sm:$0xf]
    %v311 = vld [vmem:[#allocation5 + $0x20] sm:$0xf]
    %v312 = vld [vmem:[#allocation5 + $0x24] sm:$0xf]
    %v313 = vld [vmem:[#allocation5 + $0x28] sm:$0xf]
    %v314 = vld [vmem:[#allocation5 + $0x2c] sm:$0xf]
    %v315 = vld [vmem:[#allocation5 + $0x30] sm:$0xf]
    %v316 = vld [vmem:[#allocation5 + $0x34] sm:$0xf]
    %v317 = vld [vmem:[#allocation5 + $0x38] sm:$0xf]
    %v318 = vld [vmem:[#allocation5 + $0x3c] sm:$0xf]
    %v383 = vunpack.c.l.b16 %v239
    %v384 = vunpack.c.l.b16 %v240
    %v385 = vunpack.c.l.b16 %v241
    %v386 = vunpack.c.l.b16 %v242
    %v387 = vunpack.c.l.b16 %v243
    %v388 = vunpack.c.l.b16 %v244
    %v389 = vunpack.c.l.b16 %v245
    %v390 = vunpack.c.l.b16 %v246
    %v391 = vunpack.c.l.b16 %v247
    %v392 = vunpack.c.l.b16 %v248
    %v393 = vunpack.c.l.b16 %v249
    %v394 = vunpack.c.l.b16 %v250
    %v395 = vunpack.c.l.b16 %v251
    %v396 = vunpack.c.l.b16 %v252
    %v397 = vunpack.c.l.b16 %v253
    %v398 = vunpack.c.l.b16 %v254
    %v399 = vunpack.c.l.b16 %v255
    %v400 = vunpack.c.l.b16 %v256
    %v401 = vunpack.c.l.b16 %v257
    %v402 = vunpack.c.l.b16 %v258
    %v403 = vunpack.c.l.b16 %v259
    %v404 = vunpack.c.l.b16 %v260
    %v405 = vunpack.c.l.b16 %v261
    %v406 = vunpack.c.l.b16 %v262
    %v407 = vunpack.c.l.b16 %v263
    %v408 = vunpack.c.l.b16 %v264
    %v409 = vunpack.c.l.b16 %v265
    %v410 = vunpack.c.l.b16 %v266
    %v411 = vunpack.c.l.b16 %v267
    %v412 = vunpack.c.l.b16 %v268
    %v413 = vunpack.c.l.b16 %v269
    %v414 = vunpack.c.l.b16 %v270
    %v415 = vunpack.c.l.b16 %v271
    %v416 = vunpack.c.l.b16 %v272
    %v417 = vunpack.c.l.b16 %v273
    %v418 = vunpack.c.l.b16 %v274
    %v419 = vunpack.c.l.b16 %v275
    %v420 = vunpack.c.l.b16 %v276
    %v421 = vunpack.c.l.b16 %v277
    %v422 = vunpack.c.l.b16 %v278
    %v423 = vunpack.c.l.b16 %v279
    %v424 = vunpack.c.l.b16 %v280
    %v425 = vunpack.c.l.b16 %v281
    %v426 = vunpack.c.l.b16 %v282
    %v427 = vunpack.c.l.b16 %v283
    %v428 = vunpack.c.l.b16 %v284
    %v429 = vunpack.c.l.b16 %v285
    %v430 = vunpack.c.l.b16 %v286
    %v431 = vunpack.c.l.b16 %v287
    %v432 = vunpack.c.l.b16 %v288
    %v433 = vunpack.c.l.b16 %v289
    %v434 = vunpack.c.l.b16 %v290
    %v435 = vunpack.c.l.b16 %v291
    %v436 = vunpack.c.l.b16 %v292
    %v437 = vunpack.c.l.b16 %v293
    %v438 = vunpack.c.l.b16 %v294
    %v439 = vunpack.c.l.b16 %v295
    %v440 = vunpack.c.l.b16 %v296
    %v441 = vunpack.c.l.b16 %v297
    %v442 = vunpack.c.l.b16 %v298
    %v443 = vunpack.c.l.b16 %v299
    %v444 = vunpack.c.l.b16 %v300
    %v445 = vunpack.c.l.b16 %v301
    %v446 = vunpack.c.l.b16 %v302
    %v447 = vpack.c.b16 %v384, %v383
    %v448 = vpack.c.b16 %v386, %v385
    %v449 = vpack.c.b16 %v388, %v387
    %v450 = vpack.c.b16 %v390, %v389
    %v451 = vpack.c.b16 %v392, %v391
    %v452 = vpack.c.b16 %v394, %v393
    %v453 = vpack.c.b16 %v396, %v395
    %v454 = vpack.c.b16 %v398, %v397
    %v455 = vpack.c.b16 %v400, %v399
    %v456 = vpack.c.b16 %v402, %v401
    %v457 = vpack.c.b16 %v404, %v403
    %v458 = vpack.c.b16 %v406, %v405
    %v459 = vpack.c.b16 %v408, %v407
    %v460 = vpack.c.b16 %v410, %v409
    %v461 = vpack.c.b16 %v412, %v411
    %v462 = vpack.c.b16 %v414, %v413
    %v463 = vpack.c.b16 %v416, %v415
    %v464 = vpack.c.b16 %v418, %v417
    %v465 = vpack.c.b16 %v420, %v419
    %v466 = vpack.c.b16 %v422, %v421
    %v467 = vpack.c.b16 %v424, %v423
    %v468 = vpack.c.b16 %v426, %v425
    %v469 = vpack.c.b16 %v428, %v427
    %v470 = vpack.c.b16 %v430, %v429
    %v471 = vpack.c.b16 %v432, %v431
    %v472 = vpack.c.b16 %v434, %v433
    %v473 = vpack.c.b16 %v436, %v435
    %v474 = vpack.c.b16 %v438, %v437
    %v475 = vpack.c.b16 %v440, %v439
    %v476 = vpack.c.b16 %v442, %v441
    %v477 = vpack.c.b16 %v444, %v443
    %v478 = vpack.c.b16 %v446, %v445
    %v527 = vunpack.c.l.b16 %v303
    %v528 = vunpack.c.l.b16 %v304
    %v529 = vunpack.c.l.b16 %v305
    %v530 = vunpack.c.l.b16 %v306
    %v531 = vunpack.c.l.b16 %v307
    %v532 = vunpack.c.l.b16 %v308
    %v533 = vunpack.c.l.b16 %v309
    %v534 = vunpack.c.l.b16 %v310
    %v535 = vunpack.c.l.b16 %v311
    %v536 = vunpack.c.l.b16 %v312
    %v537 = vunpack.c.l.b16 %v313
    %v538 = vunpack.c.l.b16 %v314
    %v539 = vunpack.c.l.b16 %v315
    %v540 = vunpack.c.l.b16 %v316
    %v541 = vunpack.c.l.b16 %v317
    %v542 = vunpack.c.l.b16 %v318
    %v543 = vpack.c.b16 %v528, %v527
    %v544 = vpack.c.b16 %v530, %v529
    %v545 = vpack.c.b16 %v532, %v531
    %v546 = vpack.c.b16 %v534, %v533
    %v547 = vpack.c.b16 %v536, %v535
    %v548 = vpack.c.b16 %v538, %v537
    %v549 = vpack.c.b16 %v540, %v539
    %v550 = vpack.c.b16 %v542, %v541
    %559 = vmatprep.subr.bf16.mxu0 0
    %560 = vmatpush1.bf16.msra.mxu0 %v543
    %561 = vmatprep.subr.bf16.mxu0 0
    %562 = vmatpush1.bf16.msra.mxu0 %v544
    %563 = vmatprep.subr.bf16.mxu0 0
    %564 = vmatpush1.bf16.msra.mxu0 %v545
    %565 = vmatprep.subr.bf16.mxu0 0
    %566 = vmatpush1.bf16.msra.mxu0 %v546
    %567 = vmatprep.subr.bf16.mxu0 0
    %568 = vmatpush1.bf16.msra.mxu0 %v547
    %569 = vmatprep.subr.bf16.mxu0 0
    %570 = vmatpush1.bf16.msra.mxu0 %v548
    %571 = vmatprep.subr.bf16.mxu0 0
    %572 = vmatpush1.bf16.msra.mxu0 %v549
    %573 = vmatprep.subr.bf16.mxu0 0
    %574 = vmatpush1.bf16.msra.mxu0 %v550
    %575 = vmatprep.subr.bf16.mxu0 0
    %576 = vmatpush1.bf16.msra.mxu0 0
    %577 = vmatprep.subr.bf16.mxu0 0
    %578 = vmatpush1.bf16.msra.mxu0 0
    %579 = vmatprep.subr.bf16.mxu0 0
    %580 = vmatpush1.bf16.msra.mxu0 0
    %581 = vmatprep.subr.bf16.mxu0 0
    %582 = vmatpush1.bf16.msra.mxu0 0
    %583 = vmatprep.subr.bf16.mxu0 0
    %584 = vmatpush1.bf16.msra.mxu0 0
    %585 = vmatprep.subr.bf16.mxu0 0
    %586 = vmatpush1.bf16.msra.mxu0 0
    %587 = vmatprep.subr.bf16.mxu0 0
    %588 = vmatpush1.bf16.msra.mxu0 0
    %589 = vmatprep.subr.bf16.mxu0 0
    %590 = vmatpush1.bf16.msra.mxu0 0
    %591 = vmatprep.mubr.bf16.mxu0 0
    %592 = vmatmul.mubr.bf16.gmra.mrb[0].mxu0 %v447
    %v593 = vpop.f32.mrb[0].mxu0
    %v594 = vadd.f32 0.0, %v593
    %v595 = vpop.f32.mrb[0].mxu0
    %v596 = vpop.f32.mrb[0].mxu0
    %v597 = vadd.f32 0.0, %v596
    %v598 = vpop.f32.mrb[0].mxu0
    %599 = vmatprep.mubr.bf16.mxu0 0
    %600 = vmatmul.mubr.bf16.gmra.mrb[0].mxu0 %v448
    %v601 = vpop.f32.mrb[0].mxu0
    %v602 = vadd.f32 0.0, %v601
    %v603 = vpop.f32.mrb[0].mxu0
    %v604 = vpop.f32.mrb[0].mxu0
    %v605 = vadd.f32 0.0, %v604
    %v606 = vpop.f32.mrb[0].mxu0
    %607 = vmatprep.mubr.bf16.mxu0 0
    %608 = vmatmul.mubr.bf16.gmra.mrb[0].mxu0 %v449
    %v609 = vpop.f32.mrb[0].mxu0
    %v610 = vadd.f32 0.0, %v609
    %v611 = vpop.f32.mrb[0].mxu0
    %v612 = vpop.f32.mrb[0].mxu0
    %v613 = vadd.f32 0.0, %v612
    %v614 = vpop.f32.mrb[0].mxu0
    %615 = vmatprep.mubr.bf16.mxu0 0
    %616 = vmatmul.mubr.bf16.gmra.mrb[0].mxu0 %v450
    %v617 = vpop.f32.mrb[0].mxu0
    %v618 = vadd.f32 0.0, %v617
    %v619 = vpop.f32.mrb[0].mxu0
    %v620 = vpop.f32.mrb[0].mxu0
    %v621 = vadd.f32 0.0, %v620
    %v622 = vpop.f32.mrb[0].mxu0
    %623 = vmatprep.mubr.bf16.mxu0 0
    %624 = vmatmul.mubr.bf16.gmra.mrb[0].mxu0 %v451
    %v625 = vpop.f32.mrb[0].mxu0
    %v626 = vadd.f32 0.0, %v625
    %v627 = vpop.f32.mrb[0].mxu0
    %v628 = vpop.f32.mrb[0].mxu0
    %v629 = vadd.f32 0.0, %v628
    %v630 = vpop.f32.mrb[0].mxu0
    %631 = vmatprep.mubr.bf16.mxu0 0
    %632 = vmatmul.mubr.bf16.gmra.mrb[0].mxu0 %v452
    %v633 = vpop.f32.mrb[0].mxu0
    %v634 = vadd.f32 0.0, %v633
    %v635 = vpop.f32.mrb[0].mxu0
    %v636 = vpop.f32.mrb[0].mxu0
    %v637 = vadd.f32 0.0, %v636
    %v638 = vpop.f32.mrb[0].mxu0
    %639 = vmatprep.mubr.bf16.mxu0 0
    %640 = vmatmul.mubr.bf16.gmra.mrb[0].mxu0 %v453
    %v641 = vpop.f32.mrb[0].mxu0
    %v642 = vadd.f32 0.0, %v641
    %v643 = vpop.f32.mrb[0].mxu0
    %v644 = vpop.f32.mrb[0].mxu0
    %v645 = vadd.f32 0.0, %v644
    %v646 = vpop.f32.mrb[0].mxu0
    %647 = vmatprep.mubr.bf16.mxu0 0
    %648 = vmatmul.mubr.bf16.gmra.mrb[0].mxu0 %v454
    %v649 = vpop.f32.mrb[0].mxu0
    %v650 = vadd.f32 0.0, %v649
    %v651 = vpop.f32.mrb[0].mxu0
    %v652 = vpop.f32.mrb[0].mxu0
    %v653 = vadd.f32 0.0, %v652
    %v654 = vpop.f32.mrb[0].mxu0
    %655 = vmatprep.mubr.bf16.mxu0 0
    %656 = vmatmul.mubr.bf16.gmra.mrb[0].mxu0 %v455
    %v657 = vpop.f32.mrb[0].mxu0
    %v658 = vadd.f32 0.0, %v657
    %v659 = vpop.f32.mrb[0].mxu0
    %v660 = vpop.f32.mrb[0].mxu0
    %v661 = vadd.f32 0.0, %v660
    %v662 = vpop.f32.mrb[0].mxu0
    %663 = vmatprep.mubr.bf16.mxu0 0
    %664 = vmatmul.mubr.bf16.gmra.mrb[0].mxu0 %v456
    %v665 = vpop.f32.mrb[0].mxu0
    %v666 = vadd.f32 0.0, %v665
    %v667 = vpop.f32.mrb[0].mxu0
    %v668 = vpop.f32.mrb[0].mxu0
    %v669 = vadd.f32 0.0, %v668
    %v670 = vpop.f32.mrb[0].mxu0
    %671 = vmatprep.mubr.bf16.mxu0 0
    %672 = vmatmul.mubr.bf16.gmra.mrb[0].mxu0 %v457
    %v673 = vpop.f32.mrb[0].mxu0
    %v674 = vadd.f32 0.0, %v673
    %v675 = vpop.f32.mrb[0].mxu0
    %v676 = vpop.f32.mrb[0].mxu0
    %v677 = vadd.f32 0.0, %v676
    %v678 = vpop.f32.mrb[0].mxu0
    %679 = vmatprep.mubr.bf16.mxu0 0
    %680 = vmatmul.mubr.bf16.gmra.mrb[0].mxu0 %v458
    %v681 = vpop.f32.mrb[0].mxu0
    %v682 = vadd.f32 0.0, %v681
    %v683 = vpop.f32.mrb[0].mxu0
    %v684 = vpop.f32.mrb[0].mxu0
    %v685 = vadd.f32 0.0, %v684
    %v686 = vpop.f32.mrb[0].mxu0
    %687 = vmatprep.mubr.bf16.mxu0 0
    %688 = vmatmul.mubr.bf16.gmra.mrb[0].mxu0 %v459
    %v689 = vpop.f32.mrb[0].mxu0
    %v690 = vadd.f32 0.0, %v689
    %v691 = vpop.f32.mrb[0].mxu0
    %v692 = vpop.f32.mrb[0].mxu0
    %v693 = vadd.f32 0.0, %v692
    %v694 = vpop.f32.mrb[0].mxu0
    %695 = vmatprep.mubr.bf16.mxu0 0
    %696 = vmatmul.mubr.bf16.gmra.mrb[0].mxu0 %v460
    %v697 = vpop.f32.mrb[0].mxu0
    %v698 = vadd.f32 0.0, %v697
    %v699 = vpop.f32.mrb[0].mxu0
    %v700 = vpop.f32.mrb[0].mxu0
    %v701 = vadd.f32 0.0, %v700
    %v702 = vpop.f32.mrb[0].mxu0
    %703 = vmatprep.mubr.bf16.mxu0 0
    %704 = vmatmul.mubr.bf16.gmra.mrb[0].mxu0 %v461
    %v705 = vpop.f32.mrb[0].mxu0
    %v706 = vadd.f32 0.0, %v705
    %v707 = vpop.f32.mrb[0].mxu0
    %v708 = vpop.f32.mrb[0].mxu0
    %v709 = vadd.f32 0.0, %v708
    %v710 = vpop.f32.mrb[0].mxu0
    %711 = vmatprep.mubr.bf16.mxu0 0
    %712 = vmatmul.mubr.bf16.gmra.mrb[0].mxu0 %v462
    %v713 = vpop.f32.mrb[0].mxu0
    %v714 = vadd.f32 0.0, %v713
    %v715 = vpop.f32.mrb[0].mxu0
    %v716 = vpop.f32.mrb[0].mxu0
    %v717 = vadd.f32 0.0, %v716
    %v718 = vpop.f32.mrb[0].mxu0
    %719 = vmatprep.mubr.bf16.mxu0 0
    %720 = vmatmul.mubr.bf16.gmra.mrb[0].mxu0 %v463
    %v721 = vpop.f32.mrb[0].mxu0
    %v722 = vadd.f32 0.0, %v721
    %v723 = vpop.f32.mrb[0].mxu0
    %v724 = vpop.f32.mrb[0].mxu0
    %v725 = vadd.f32 0.0, %v724
    %v726 = vpop.f32.mrb[0].mxu0
    %727 = vmatprep.mubr.bf16.mxu0 0
    %728 = vmatmul.mubr.bf16.gmra.mrb[0].mxu0 %v464
    %v729 = vpop.f32.mrb[0].mxu0
    %v730 = vadd.f32 0.0, %v729
    %v731 = vpop.f32.mrb[0].mxu0
    %v732 = vpop.f32.mrb[0].mxu0
    %v733 = vadd.f32 0.0, %v732
    %v734 = vpop.f32.mrb[0].mxu0
    %735 = vmatprep.mubr.bf16.mxu0 0
    %736 = vmatmul.mubr.bf16.gmra.mrb[0].mxu0 %v465
    %v737 = vpop.f32.mrb[0].mxu0
    %v738 = vadd.f32 0.0, %v737
    %v739 = vpop.f32.mrb[0].mxu0
    %v740 = vpop.f32.mrb[0].mxu0
    %v741 = vadd.f32 0.0, %v740
    %v742 = vpop.f32.mrb[0].mxu0
    %743 = vmatprep.mubr.bf16.mxu0 0
    %744 = vmatmul.mubr.bf16.gmra.mrb[0].mxu0 %v466
    %v745 = vpop.f32.mrb[0].mxu0
    %v746 = vadd.f32 0.0, %v745
    %v747 = vpop.f32.mrb[0].mxu0
    %v748 = vpop.f32.mrb[0].mxu0
    %v749 = vadd.f32 0.0, %v748
    %v750 = vpop.f32.mrb[0].mxu0
    %751 = vmatprep.mubr.bf16.mxu0 0
    %752 = vmatmul.mubr.bf16.gmra.mrb[0].mxu0 %v467
    %v753 = vpop.f32.mrb[0].mxu0
    %v754 = vadd.f32 0.0, %v753
    %v755 = vpop.f32.mrb[0].mxu0
    %v756 = vpop.f32.mrb[0].mxu0
    %v757 = vadd.f32 0.0, %v756
    %v758 = vpop.f32.mrb[0].mxu0
    %759 = vmatprep.mubr.bf16.mxu0 0
    %760 = vmatmul.mubr.bf16.gmra.mrb[0].mxu0 %v468
    %v761 = vpop.f32.mrb[0].mxu0
    %v762 = vadd.f32 0.0, %v761
    %v763 = vpop.f32.mrb[0].mxu0
    %v764 = vpop.f32.mrb[0].mxu0
    %v765 = vadd.f32 0.0, %v764
    %v766 = vpop.f32.mrb[0].mxu0
    %767 = vmatprep.mubr.bf16.mxu0 0
    %768 = vmatmul.mubr.bf16.gmra.mrb[0].mxu0 %v469
    %v769 = vpop.f32.mrb[0].mxu0
    %v770 = vadd.f32 0.0, %v769
    %v771 = vpop.f32.mrb[0].mxu0
    %v772 = vpop.f32.mrb[0].mxu0
    %v773 = vadd.f32 0.0, %v772
    %v774 = vpop.f32.mrb[0].mxu0
    %775 = vmatprep.mubr.bf16.mxu0 0
    %776 = vmatmul.mubr.bf16.gmra.mrb[0].mxu0 %v470
    %v777 = vpop.f32.mrb[0].mxu0
    %v778 = vadd.f32 0.0, %v777
    %v779 = vpop.f32.mrb[0].mxu0
    %v780 = vpop.f32.mrb[0].mxu0
    %v781 = vadd.f32 0.0, %v780
    %v782 = vpop.f32.mrb[0].mxu0
    %783 = vmatprep.mubr.bf16.mxu0 0
    %784 = vmatmul.mubr.bf16.gmra.mrb[0].mxu0 %v471
    %v785 = vpop.f32.mrb[0].mxu0
    %v786 = vadd.f32 0.0, %v785
    %v787 = vpop.f32.mrb[0].mxu0
    %v788 = vpop.f32.mrb[0].mxu0
    %v789 = vadd.f32 0.0, %v788
    %v790 = vpop.f32.mrb[0].mxu0
    %791 = vmatprep.mubr.bf16.mxu0 0
    %792 = vmatmul.mubr.bf16.gmra.mrb[0].mxu0 %v472
    %v793 = vpop.f32.mrb[0].mxu0
    %v794 = vadd.f32 0.0, %v793
    %v795 = vpop.f32.mrb[0].mxu0
    %v796 = vpop.f32.mrb[0].mxu0
    %v797 = vadd.f32 0.0, %v796
    %v798 = vpop.f32.mrb[0].mxu0
    %799 = vmatprep.mubr.bf16.mxu0 0
    %800 = vmatmul.mubr.bf16.gmra.mrb[0].mxu0 %v473
    %v801 = vpop.f32.mrb[0].mxu0
    %v802 = vadd.f32 0.0, %v801
    %v803 = vpop.f32.mrb[0].mxu0
    %v804 = vpop.f32.mrb[0].mxu0
    %v805 = vadd.f32 0.0, %v804
    %v806 = vpop.f32.mrb[0].mxu0
    %807 = vmatprep.mubr.bf16.mxu0 0
    %808 = vmatmul.mubr.bf16.gmra.mrb[0].mxu0 %v474
    %v809 = vpop.f32.mrb[0].mxu0
    %v810 = vadd.f32 0.0, %v809
    %v811 = vpop.f32.mrb[0].mxu0
    %v812 = vpop.f32.mrb[0].mxu0
    %v813 = vadd.f32 0.0, %v812
    %v814 = vpop.f32.mrb[0].mxu0
    %815 = vmatprep.mubr.bf16.mxu0 0
    %816 = vmatmul.mubr.bf16.gmra.mrb[0].mxu0 %v475
    %v817 = vpop.f32.mrb[0].mxu0
    %v818 = vadd.f32 0.0, %v817
    %v819 = vpop.f32.mrb[0].mxu0
    %v820 = vpop.f32.mrb[0].mxu0
    %v821 = vadd.f32 0.0, %v820
    %v822 = vpop.f32.mrb[0].mxu0
    %823 = vmatprep.mubr.bf16.mxu0 0
    %824 = vmatmul.mubr.bf16.gmra.mrb[0].mxu0 %v476
    %v825 = vpop.f32.mrb[0].mxu0
    %v826 = vadd.f32 0.0, %v825
    %v827 = vpop.f32.mrb[0].mxu0
    %v828 = vpop.f32.mrb[0].mxu0
    %v829 = vadd.f32 0.0, %v828
    %v830 = vpop.f32.mrb[0].mxu0
    %831 = vmatprep.mubr.bf16.mxu0 0
    %832 = vmatmul.mubr.bf16.gmra.mrb[0].mxu0 %v477
    %v833 = vpop.f32.mrb[0].mxu0
    %v834 = vadd.f32 0.0, %v833
    %v835 = vpop.f32.mrb[0].mxu0
    %v836 = vpop.f32.mrb[0].mxu0
    %v837 = vadd.f32 0.0, %v836
    %v838 = vpop.f32.mrb[0].mxu0
    %839 = vmatprep.mubr.bf16.mxu0 0
    %840 = vmatmul.mubr.bf16.gmra.mrb[0].mxu0 %v478
    %v841 = vpop.f32.mrb[0].mxu0
    %v842 = vadd.f32 0.0, %v841
    %v843 = vpop.f32.mrb[0].mxu0
    %v844 = vpop.f32.mrb[0].mxu0
    %v845 = vadd.f32 0.0, %v844
    %v846 = vpop.f32.mrb[0].mxu0
    %847 = vdwg.mxu0
    %v848 = vsel %vm175, 1, 0
    %v849 = vsel %vm176, 1, 0
    %v850 = vsel %vm177, 1, 0
    %v851 = vsel %vm178, 1, 0
    %v852 = vsel %vm179, 1, 0
    %v853 = vsel %vm180, 1, 0
    %v854 = vsel %vm181, 1, 0
    %v855 = vsel %vm182, 1, 0
    %v856 = vsel %vm183, 1, 0
    %v857 = vsel %vm184, 1, 0
    %v858 = vsel %vm185, 1, 0
    %v859 = vsel %vm186, 1, 0
    %v860 = vsel %vm187, 1, 0
    %v861 = vsel %vm188, 1, 0
    %v862 = vsel %vm189, 1, 0
    %v863 = vsel %vm190, 1, 0
    %v864 = vsel %vm191, 1, 0
    %v865 = vsel %vm192, 1, 0
    %v866 = vsel %vm193, 1, 0
    %v867 = vsel %vm194, 1, 0
    %v868 = vsel %vm195, 1, 0
    %v869 = vsel %vm196, 1, 0
    %v870 = vsel %vm197, 1, 0
    %v871 = vsel %vm198, 1, 0
    %v872 = vsel %vm199, 1, 0
    %v873 = vsel %vm200, 1, 0
    %v874 = vsel %vm201, 1, 0
    %v875 = vsel %vm202, 1, 0
    %v876 = vsel %vm203, 1, 0
    %v877 = vsel %vm204, 1, 0
    %v878 = vsel %vm205, 1, 0
    %v879 = vsel %vm206, 1, 0
    %v880 = vsel %vm207, 1, 0
    %v881 = vsel %vm208, 1, 0
    %v882 = vsel %vm209, 1, 0
    %v883 = vsel %vm210, 1, 0
    %v884 = vsel %vm211, 1, 0
    %v885 = vsel %vm212, 1, 0
    %v886 = vsel %vm213, 1, 0
    %v887 = vsel %vm214, 1, 0
    %v888 = vsel %vm215, 1, 0
    %v889 = vsel %vm216, 1, 0
    %v890 = vsel %vm217, 1, 0
    %v891 = vsel %vm218, 1, 0
    %v892 = vsel %vm219, 1, 0
    %v893 = vsel %vm220, 1, 0
    %v894 = vsel %vm221, 1, 0
    %v895 = vsel %vm222, 1, 0
    %v896 = vsel %vm223, 1, 0
    %v897 = vsel %vm224, 1, 0
    %v898 = vsel %vm225, 1, 0
    %v899 = vsel %vm226, 1, 0
    %v900 = vsel %vm227, 1, 0
    %v901 = vsel %vm228, 1, 0
    %v902 = vsel %vm229, 1, 0
    %v903 = vsel %vm230, 1, 0
    %v904 = vsel %vm231, 1, 0
    %v905 = vsel %vm232, 1, 0
    %v906 = vsel %vm233, 1, 0
    %v907 = vsel %vm234, 1, 0
    %v908 = vsel %vm235, 1, 0
    %v909 = vsel %vm236, 1, 0
    %v910 = vsel %vm237, 1, 0
    %v911 = vsel %vm238, 1, 0
    %vm912 = vcmp.eq.s32.totalorder %v848, 1
    %vm913 = vcmp.eq.s32.totalorder %v849, 1
    %vm914 = vcmp.eq.s32.totalorder %v850, 1
    %vm915 = vcmp.eq.s32.totalorder %v851, 1
    %vm916 = vcmp.eq.s32.totalorder %v852, 1
    %vm917 = vcmp.eq.s32.totalorder %v853, 1
    %vm918 = vcmp.eq.s32.totalorder %v854, 1
    %vm919 = vcmp.eq.s32.totalorder %v855, 1
    %vm920 = vcmp.eq.s32.totalorder %v856, 1
    %vm921 = vcmp.eq.s32.totalorder %v857, 1
    %vm922 = vcmp.eq.s32.totalorder %v858, 1
    %vm923 = vcmp.eq.s32.totalorder %v859, 1
    %vm924 = vcmp.eq.s32.totalorder %v860, 1
    %vm925 = vcmp.eq.s32.totalorder %v861, 1
    %vm926 = vcmp.eq.s32.totalorder %v862, 1
    %vm927 = vcmp.eq.s32.totalorder %v863, 1
    %vm928 = vcmp.eq.s32.totalorder %v864, 1
    %vm929 = vcmp.eq.s32.totalorder %v865, 1
    %vm930 = vcmp.eq.s32.totalorder %v866, 1
    %vm931 = vcmp.eq.s32.totalorder %v867, 1
    %vm932 = vcmp.eq.s32.totalorder %v868, 1
    %vm933 = vcmp.eq.s32.totalorder %v869, 1
    %vm934 = vcmp.eq.s32.totalorder %v870, 1
    %vm935 = vcmp.eq.s32.totalorder %v871, 1
    %vm936 = vcmp.eq.s32.totalorder %v872, 1
    %vm937 = vcmp.eq.s32.totalorder %v873, 1
    %vm938 = vcmp.eq.s32.totalorder %v874, 1
    %vm939 = vcmp.eq.s32.totalorder %v875, 1
    %vm940 = vcmp.eq.s32.totalorder %v876, 1
    %vm941 = vcmp.eq.s32.totalorder %v877, 1
    %vm942 = vcmp.eq.s32.totalorder %v878, 1
    %vm943 = vcmp.eq.s32.totalorder %v879, 1
    %vm944 = vcmp.eq.s32.totalorder %v880, 1
    %vm945 = vcmp.eq.s32.totalorder %v881, 1
    %vm946 = vcmp.eq.s32.totalorder %v882, 1
    %vm947 = vcmp.eq.s32.totalorder %v883, 1
    %vm948 = vcmp.eq.s32.totalorder %v884, 1
    %vm949 = vcmp.eq.s32.totalorder %v885, 1
    %vm950 = vcmp.eq.s32.totalorder %v886, 1
    %vm951 = vcmp.eq.s32.totalorder %v887, 1
    %vm952 = vcmp.eq.s32.totalorder %v888, 1
    %vm953 = vcmp.eq.s32.totalorder %v889, 1
    %vm954 = vcmp.eq.s32.totalorder %v890, 1
    %vm955 = vcmp.eq.s32.totalorder %v891, 1
    %vm956 = vcmp.eq.s32.totalorder %v892, 1
    %vm957 = vcmp.eq.s32.totalorder %v893, 1
    %vm958 = vcmp.eq.s32.totalorder %v894, 1
    %vm959 = vcmp.eq.s32.totalorder %v895, 1
    %vm960 = vcmp.eq.s32.totalorder %v896, 1
    %vm961 = vcmp.eq.s32.totalorder %v897, 1
    %vm962 = vcmp.eq.s32.totalorder %v898, 1
    %vm963 = vcmp.eq.s32.totalorder %v899, 1
    %vm964 = vcmp.eq.s32.totalorder %v900, 1
    %vm965 = vcmp.eq.s32.totalorder %v901, 1
    %vm966 = vcmp.eq.s32.totalorder %v902, 1
    %vm967 = vcmp.eq.s32.totalorder %v903, 1
    %vm968 = vcmp.eq.s32.totalorder %v904, 1
    %vm969 = vcmp.eq.s32.totalorder %v905, 1
    %vm970 = vcmp.eq.s32.totalorder %v906, 1
    %vm971 = vcmp.eq.s32.totalorder %v907, 1
    %vm972 = vcmp.eq.s32.totalorder %v908, 1
    %vm973 = vcmp.eq.s32.totalorder %v909, 1
    %vm974 = vcmp.eq.s32.totalorder %v910, 1
    %vm975 = vcmp.eq.s32.totalorder %v911, 1
    %v976 = vsel %vm912, %v594, 0.0
    %v977 = vsel %vm913, %v597, 0.0
    %v978 = vsel %vm914, %v602, 0.0
    %v979 = vsel %vm915, %v605, 0.0
    %v980 = vsel %vm916, %v610, 0.0
    %v981 = vsel %vm917, %v613, 0.0
    %v982 = vsel %vm918, %v618, 0.0
    %v983 = vsel %vm919, %v621, 0.0
    %v984 = vsel %vm920, %v626, 0.0
    %v985 = vsel %vm921, %v629, 0.0
    %v986 = vsel %vm922, %v634, 0.0
    %v987 = vsel %vm923, %v637, 0.0
    %v988 = vsel %vm924, %v642, 0.0
    %v989 = vsel %vm925, %v645, 0.0
    %v990 = vsel %vm926, %v650, 0.0
    %v991 = vsel %vm927, %v653, 0.0
    %v992 = vsel %vm928, %v658, 0.0
    %v993 = vsel %vm929, %v661, 0.0
    %v994 = vsel %vm930, %v666, 0.0
    %v995 = vsel %vm931, %v669, 0.0
    %v996 = vsel %vm932, %v674, 0.0
    %v997 = vsel %vm933, %v677, 0.0
    %v998 = vsel %vm934, %v682, 0.0
    %v999 = vsel %vm935, %v685, 0.0
    %v1000 = vsel %vm936, %v690, 0.0
    %v1001 = vsel %vm937, %v693, 0.0
    %v1002 = vsel %vm938, %v698, 0.0
    %v1003 = vsel %vm939, %v701, 0.0
    %v1004 = vsel %vm940, %v706, 0.0
    %v1005 = vsel %vm941, %v709, 0.0
    %v1006 = vsel %vm942, %v714, 0.0
    %v1007 = vsel %vm943, %v717, 0.0
    %v1008 = vsel %vm944, %v722, 0.0
    %v1009 = vsel %vm945, %v725, 0.0
    %v1010 = vsel %vm946, %v730, 0.0
    %v1011 = vsel %vm947, %v733, 0.0
    %v1012 = vsel %vm948, %v738, 0.0
    %v1013 = vsel %vm949, %v741, 0.0
    %v1014 = vsel %vm950, %v746, 0.0
    %v1015 = vsel %vm951, %v749, 0.0
    %v1016 = vsel %vm952, %v754, 0.0
    %v1017 = vsel %vm953, %v757, 0.0
    %v1018 = vsel %vm954, %v762, 0.0
    %v1019 = vsel %vm955, %v765, 0.0
    %v1020 = vsel %vm956, %v770, 0.0
    %v1021 = vsel %vm957, %v773, 0.0
    %v1022 = vsel %vm958, %v778, 0.0
    %v1023 = vsel %vm959, %v781, 0.0
    %v1024 = vsel %vm960, %v786, 0.0
    %v1025 = vsel %vm961, %v789, 0.0
    %v1026 = vsel %vm962, %v794, 0.0
    %v1027 = vsel %vm963, %v797, 0.0
    %v1028 = vsel %vm964, %v802, 0.0
    %v1029 = vsel %vm965, %v805, 0.0
    %v1030 = vsel %vm966, %v810, 0.0
    %v1031 = vsel %vm967, %v813, 0.0
    %v1032 = vsel %vm968, %v818, 0.0
    %v1033 = vsel %vm969, %v821, 0.0
    %v1034 = vsel %vm970, %v826, 0.0
    %v1035 = vsel %vm971, %v829, 0.0
    %v1036 = vsel %vm972, %v834, 0.0
    %v1037 = vsel %vm973, %v837, 0.0
    %v1038 = vsel %vm974, %v842, 0.0
    %v1039 = vsel %vm975, %v845, 0.0
    %v1040 = vpack.c.bf16 %v977, %v976
    %v1041 = vpack.c.bf16 %v979, %v978
    %v1042 = vpack.c.bf16 %v981, %v980
    %v1043 = vpack.c.bf16 %v983, %v982
    %v1044 = vpack.c.bf16 %v985, %v984
    %v1045 = vpack.c.bf16 %v987, %v986
    %v1046 = vpack.c.bf16 %v989, %v988
    %v1047 = vpack.c.bf16 %v991, %v990
    %v1048 = vpack.c.bf16 %v993, %v992
    %v1049 = vpack.c.bf16 %v995, %v994
    %v1050 = vpack.c.bf16 %v997, %v996
    %v1051 = vpack.c.bf16 %v999, %v998
    %v1052 = vpack.c.bf16 %v1001, %v1000
    %v1053 = vpack.c.bf16 %v1003, %v1002
    %v1054 = vpack.c.bf16 %v1005, %v1004
    %v1055 = vpack.c.bf16 %v1007, %v1006
    %v1056 = vpack.c.bf16 %v1009, %v1008
    %v1057 = vpack.c.bf16 %v1011, %v1010
    %v1058 = vpack.c.bf16 %v1013, %v1012
    %v1059 = vpack.c.bf16 %v1015, %v1014
    %v1060 = vpack.c.bf16 %v1017, %v1016
    %v1061 = vpack.c.bf16 %v1019, %v1018
    %v1062 = vpack.c.bf16 %v1021, %v1020
    %v1063 = vpack.c.bf16 %v1023, %v1022
    %v1064 = vpack.c.bf16 %v1025, %v1024
    %v1065 = vpack.c.bf16 %v1027, %v1026
    %v1066 = vpack.c.bf16 %v1029, %v1028
    %v1067 = vpack.c.bf16 %v1031, %v1030
    %v1068 = vpack.c.bf16 %v1033, %v1032
    %v1069 = vpack.c.bf16 %v1035, %v1034
    %v1070 = vpack.c.bf16 %v1037, %v1036
    %v1071 = vpack.c.bf16 %v1039, %v1038
    %v1104 = vunpack.c.l.b16 %v1040
    %v1105 = vunpack.c.h.b16 %v1040
    %v1106 = vunpack.c.l.b16 %v1041
    %v1107 = vunpack.c.h.b16 %v1041
    %v1108 = vunpack.c.l.b16 %v1042
    %v1109 = vunpack.c.h.b16 %v1042
    %v1110 = vunpack.c.l.b16 %v1043
    %v1111 = vunpack.c.h.b16 %v1043
    %v1112 = vunpack.c.l.b16 %v1044
    %v1113 = vunpack.c.h.b16 %v1044
    %v1114 = vunpack.c.l.b16 %v1045
    %v1115 = vunpack.c.h.b16 %v1045
    %v1116 = vunpack.c.l.b16 %v1046
    %v1117 = vunpack.c.h.b16 %v1046
    %v1118 = vunpack.c.l.b16 %v1047
    %v1119 = vunpack.c.h.b16 %v1047
    %v1120 = vunpack.c.l.b16 %v1048
    %v1121 = vunpack.c.h.b16 %v1048
    %v1122 = vunpack.c.l.b16 %v1049
    %v1123 = vunpack.c.h.b16 %v1049
    %v1124 = vunpack.c.l.b16 %v1050
    %v1125 = vunpack.c.h.b16 %v1050
    %v1126 = vunpack.c.l.b16 %v1051
    %v1127 = vunpack.c.h.b16 %v1051
    %v1128 = vunpack.c.l.b16 %v1052
    %v1129 = vunpack.c.h.b16 %v1052
    %v1130 = vunpack.c.l.b16 %v1053
    %v1131 = vunpack.c.h.b16 %v1053
    %v1132 = vunpack.c.l.b16 %v1054
    %v1133 = vunpack.c.h.b16 %v1054
    %v1134 = vunpack.c.l.b16 %v1055
    %v1135 = vunpack.c.h.b16 %v1055
    %v1136 = vunpack.c.l.b16 %v1056
    %v1137 = vunpack.c.h.b16 %v1056
    %v1138 = vunpack.c.l.b16 %v1057
    %v1139 = vunpack.c.h.b16 %v1057
    %v1140 = vunpack.c.l.b16 %v1058
    %v1141 = vunpack.c.h.b16 %v1058
    %v1142 = vunpack.c.l.b16 %v1059
    %v1143 = vunpack.c.h.b16 %v1059
    %v1144 = vunpack.c.l.b16 %v1060
    %v1145 = vunpack.c.h.b16 %v1060
    %v1146 = vunpack.c.l.b16 %v1061
    %v1147 = vunpack.c.h.b16 %v1061
    %v1148 = vunpack.c.l.b16 %v1062
    %v1149 = vunpack.c.h.b16 %v1062
    %v1150 = vunpack.c.l.b16 %v1063
    %v1151 = vunpack.c.h.b16 %v1063
    %v1152 = vunpack.c.l.b16 %v1064
    %v1153 = vunpack.c.h.b16 %v1064
    %v1154 = vunpack.c.l.b16 %v1065
    %v1155 = vunpack.c.h.b16 %v1065
    %v1156 = vunpack.c.l.b16 %v1066
    %v1157 = vunpack.c.h.b16 %v1066
    %v1158 = vunpack.c.l.b16 %v1067
    %v1159 = vunpack.c.h.b16 %v1067
    %v1160 = vunpack.c.l.b16 %v1068
    %v1161 = vunpack.c.h.b16 %v1068
    %v1162 = vunpack.c.l.b16 %v1069
    %v1163 = vunpack.c.h.b16 %v1069
    %v1164 = vunpack.c.l.b16 %v1070
    %v1165 = vunpack.c.h.b16 %v1070
    %v1166 = vunpack.c.l.b16 %v1071
    %v1167 = vunpack.c.h.b16 %v1071
    %v1168 = vpack.c.b16 %v1104, %v1104
    %v1169 = vpack.c.b16 %v1105, %v1105
    %v1170 = vpack.c.b16 %v1106, %v1106
    %v1171 = vpack.c.b16 %v1107, %v1107
    %v1172 = vpack.c.b16 %v1108, %v1108
    %v1173 = vpack.c.b16 %v1109, %v1109
    %v1174 = vpack.c.b16 %v1110, %v1110
    %v1175 = vpack.c.b16 %v1111, %v1111
    %v1176 = vpack.c.b16 %v1112, %v1112
    %v1177 = vpack.c.b16 %v1113, %v1113
    %v1178 = vpack.c.b16 %v1114, %v1114
    %v1179 = vpack.c.b16 %v1115, %v1115
    %v1180 = vpack.c.b16 %v1116, %v1116
    %v1181 = vpack.c.b16 %v1117, %v1117
    %v1182 = vpack.c.b16 %v1118, %v1118
    %v1183 = vpack.c.b16 %v1119, %v1119
    %v1184 = vpack.c.b16 %v1120, %v1120
    %v1185 = vpack.c.b16 %v1121, %v1121
    %v1186 = vpack.c.b16 %v1122, %v1122
    %v1187 = vpack.c.b16 %v1123, %v1123
    %v1188 = vpack.c.b16 %v1124, %v1124
    %v1189 = vpack.c.b16 %v1125, %v1125
    %v1190 = vpack.c.b16 %v1126, %v1126
    %v1191 = vpack.c.b16 %v1127, %v1127
    %v1192 = vpack.c.b16 %v1128, %v1128
    %v1193 = vpack.c.b16 %v1129, %v1129
    %v1194 = vpack.c.b16 %v1130, %v1130
    %v1195 = vpack.c.b16 %v1131, %v1131
    %v1196 = vpack.c.b16 %v1132, %v1132
    %v1197 = vpack.c.b16 %v1133, %v1133
    %v1198 = vpack.c.b16 %v1134, %v1134
    %v1199 = vpack.c.b16 %v1135, %v1135
    %v1200 = vpack.c.b16 %v1136, %v1136
    %v1201 = vpack.c.b16 %v1137, %v1137
    %v1202 = vpack.c.b16 %v1138, %v1138
    %v1203 = vpack.c.b16 %v1139, %v1139
    %v1204 = vpack.c.b16 %v1140, %v1140
    %v1205 = vpack.c.b16 %v1141, %v1141
    %v1206 = vpack.c.b16 %v1142, %v1142
    %v1207 = vpack.c.b16 %v1143, %v1143
    %v1208 = vpack.c.b16 %v1144, %v1144
    %v1209 = vpack.c.b16 %v1145, %v1145
    %v1210 = vpack.c.b16 %v1146, %v1146
    %v1211 = vpack.c.b16 %v1147, %v1147
    %v1212 = vpack.c.b16 %v1148, %v1148
    %v1213 = vpack.c.b16 %v1149, %v1149
    %v1214 = vpack.c.b16 %v1150, %v1150
    %v1215 = vpack.c.b16 %v1151, %v1151
    %v1216 = vpack.c.b16 %v1152, %v1152
    %v1217 = vpack.c.b16 %v1153, %v1153
    %v1218 = vpack.c.b16 %v1154, %v1154
    %v1219 = vpack.c.b16 %v1155, %v1155
    %v1220 = vpack.c.b16 %v1156, %v1156
    %v1221 = vpack.c.b16 %v1157, %v1157
    %v1222 = vpack.c.b16 %v1158, %v1158
    %v1223 = vpack.c.b16 %v1159, %v1159
    %v1224 = vpack.c.b16 %v1160, %v1160
    %v1225 = vpack.c.b16 %v1161, %v1161
    %v1226 = vpack.c.b16 %v1162, %v1162
    %v1227 = vpack.c.b16 %v1163, %v1163
    %v1228 = vpack.c.b16 %v1164, %v1164
    %v1229 = vpack.c.b16 %v1165, %v1165
    %v1230 = vpack.c.b16 %v1166, %v1166
    %v1231 = vpack.c.b16 %v1167, %v1167
    %1296 = vst [vmem:[#allocation7] sm:$0xf] %v1168
    %1297 = vst [vmem:[#allocation7 + $0x4] sm:$0xf] %v1169
    %1298 = vst [vmem:[#allocation7 + $0x8] sm:$0xf] %v1170
    %1299 = vst [vmem:[#allocation7 + $0xc] sm:$0xf] %v1171
    %1300 = vst [vmem:[#allocation7 + $0x10] sm:$0xf] %v1172
    %1301 = vst [vmem:[#allocation7 + $0x14] sm:$0xf] %v1173
    %1302 = vst [vmem:[#allocation7 + $0x18] sm:$0xf] %v1174
    %1303 = vst [vmem:[#allocation7 + $0x1c] sm:$0xf] %v1175
    %1304 = vst [vmem:[#allocation7 + $0x20] sm:$0xf] %v1176
    %1305 = vst [vmem:[#allocation7 + $0x24] sm:$0xf] %v1177
    %1306 = vst [vmem:[#allocation7 + $0x28] sm:$0xf] %v1178
    %1307 = vst [vmem:[#allocation7 + $0x2c] sm:$0xf] %v1179
    %1308 = vst [vmem:[#allocation7 + $0x30] sm:$0xf] %v1180
    %1309 = vst [vmem:[#allocation7 + $0x34] sm:$0xf] %v1181
    %1310 = vst [vmem:[#allocation7 + $0x38] sm:$0xf] %v1182
    %1311 = vst [vmem:[#allocation7 + $0x3c] sm:$0xf] %v1183
    %1312 = vst [vmem:[#allocation7 + $0x40] sm:$0xf] %v1184
    %1313 = vst [vmem:[#allocation7 + $0x44] sm:$0xf] %v1185
    %1314 = vst [vmem:[#allocation7 + $0x48] sm:$0xf] %v1186
    %1315 = vst [vmem:[#allocation7 + $0x4c] sm:$0xf] %v1187
    %1316 = vst [vmem:[#allocation7 + $0x50] sm:$0xf] %v1188
    %1317 = vst [vmem:[#allocation7 + $0x54] sm:$0xf] %v1189
    %1318 = vst [vmem:[#allocation7 + $0x58] sm:$0xf] %v1190
    %1319 = vst [vmem:[#allocation7 + $0x5c] sm:$0xf] %v1191
    %1320 = vst [vmem:[#allocation7 + $0x60] sm:$0xf] %v1192
    %1321 = vst [vmem:[#allocation7 + $0x64] sm:$0xf] %v1193
    %1322 = vst [vmem:[#allocation7 + $0x68] sm:$0xf] %v1194
    %1323 = vst [vmem:[#allocation7 + $0x6c] sm:$0xf] %v1195
    %1324 = vst [vmem:[#allocation7 + $0x70] sm:$0xf] %v1196
    %1325 = vst [vmem:[#allocation7 + $0x74] sm:$0xf] %v1197
    %1326 = vst [vmem:[#allocation7 + $0x78] sm:$0xf] %v1198
    %1327 = vst [vmem:[#allocation7 + $0x7c] sm:$0xf] %v1199
    %1328 = vst [vmem:[#allocation7 + $0x80] sm:$0xf] %v1200
    %1329 = vst [vmem:[#allocation7 + $0x84] sm:$0xf] %v1201
    %1330 = vst [vmem:[#allocation7 + $0x88] sm:$0xf] %v1202
    %1331 = vst [vmem:[#allocation7 + $0x8c] sm:$0xf] %v1203
    %1332 = vst [vmem:[#allocation7 + $0x90] sm:$0xf] %v1204
    %1333 = vst [vmem:[#allocation7 + $0x94] sm:$0xf] %v1205
    %1334 = vst [vmem:[#allocation7 + $0x98] sm:$0xf] %v1206
    %1335 = vst [vmem:[#allocation7 + $0x9c] sm:$0xf] %v1207
    %1336 = vst [vmem:[#allocation7 + $0xa0] sm:$0xf] %v1208
    %1337 = vst [vmem:[#allocation7 + $0xa4] sm:$0xf] %v1209
    %1338 = vst [vmem:[#allocation7 + $0xa8] sm:$0xf] %v1210
    %1339 = vst [vmem:[#allocation7 + $0xac] sm:$0xf] %v1211
    %1340 = vst [vmem:[#allocation7 + $0xb0] sm:$0xf] %v1212
    %1341 = vst [vmem:[#allocation7 + $0xb4] sm:$0xf] %v1213
    %1342 = vst [vmem:[#allocation7 + $0xb8] sm:$0xf] %v1214
    %1343 = vst [vmem:[#allocation7 + $0xbc] sm:$0xf] %v1215
    %1344 = vst [vmem:[#allocation7 + $0xc0] sm:$0xf] %v1216
    %1345 = vst [vmem:[#allocation7 + $0xc4] sm:$0xf] %v1217
    %1346 = vst [vmem:[#allocation7 + $0xc8] sm:$0xf] %v1218
    %1347 = vst [vmem:[#allocation7 + $0xcc] sm:$0xf] %v1219
    %1348 = vst [vmem:[#allocation7 + $0xd0] sm:$0xf] %v1220
    %1349 = vst [vmem:[#allocation7 + $0xd4] sm:$0xf] %v1221
    %1350 = vst [vmem:[#allocation7 + $0xd8] sm:$0xf] %v1222
    %1351 = vst [vmem:[#allocation7 + $0xdc] sm:$0xf] %v1223
    %1352 = vst [vmem:[#allocation7 + $0xe0] sm:$0xf] %v1224
    %1353 = vst [vmem:[#allocation7 + $0xe4] sm:$0xf] %v1225
    %1354 = vst [vmem:[#allocation7 + $0xe8] sm:$0xf] %v1226
    %1355 = vst [vmem:[#allocation7 + $0xec] sm:$0xf] %v1227
    %1356 = vst [vmem:[#allocation7 + $0xf0] sm:$0xf] %v1228
    %1357 = vst [vmem:[#allocation7 + $0xf4] sm:$0xf] %v1229
    %1358 = vst [vmem:[#allocation7 + $0xf8] sm:$0xf] %v1230
    %1359 = vst [vmem:[#allocation7 + $0xfc] sm:$0xf] %v1231
    %v1360 = vadd.f32 %v976, %v977
    %v1361 = vadd.f32 %v1360, %v978
    %v1362 = vadd.f32 %v1361, %v979
    %v1363 = vadd.f32 %v1362, %v980
    %v1364 = vadd.f32 %v1363, %v981
    %v1365 = vadd.f32 %v1364, %v982
    %v1366 = vadd.f32 %v1365, %v983
    %v1367 = vadd.f32 %v1366, %v984
    %v1368 = vadd.f32 %v1367, %v985
    %v1369 = vadd.f32 %v1368, %v986
    %v1370 = vadd.f32 %v1369, %v987
    %v1371 = vadd.f32 %v1370, %v988
    %v1372 = vadd.f32 %v1371, %v989
    %v1373 = vadd.f32 %v1372, %v990
    %v1374 = vadd.f32 %v1373, %v991
    %v1375 = vadd.f32 %v1374, %v992
    %v1376 = vadd.f32 %v1375, %v993
    %v1377 = vadd.f32 %v1376, %v994
    %v1378 = vadd.f32 %v1377, %v995
    %v1379 = vadd.f32 %v1378, %v996
    %v1380 = vadd.f32 %v1379, %v997
    %v1381 = vadd.f32 %v1380, %v998
    %v1382 = vadd.f32 %v1381, %v999
    %v1383 = vadd.f32 %v1382, %v1000
    %v1384 = vadd.f32 %v1383, %v1001
    %v1385 = vadd.f32 %v1384, %v1002
    %v1386 = vadd.f32 %v1385, %v1003
    %v1387 = vadd.f32 %v1386, %v1004
    %v1388 = vadd.f32 %v1387, %v1005
    %v1389 = vadd.f32 %v1388, %v1006
    %v1390 = vadd.f32 %v1389, %v1007
    %v1391 = vadd.f32 %v1390, %v1008
    %v1392 = vadd.f32 %v1391, %v1009
    %v1393 = vadd.f32 %v1392, %v1010
    %v1394 = vadd.f32 %v1393, %v1011
    %v1395 = vadd.f32 %v1394, %v1012
    %v1396 = vadd.f32 %v1395, %v1013
    %v1397 = vadd.f32 %v1396, %v1014
    %v1398 = vadd.f32 %v1397, %v1015
    %v1399 = vadd.f32 %v1398, %v1016
    %v1400 = vadd.f32 %v1399, %v1017
    %v1401 = vadd.f32 %v1400, %v1018
    %v1402 = vadd.f32 %v1401, %v1019
    %v1403 = vadd.f32 %v1402, %v1020
    %v1404 = vadd.f32 %v1403, %v1021
    %v1405 = vadd.f32 %v1404, %v1022
    %v1406 = vadd.f32 %v1405, %v1023
    %v1407 = vadd.f32 %v1406, %v1024
    %v1408 = vadd.f32 %v1407, %v1025
    %v1409 = vadd.f32 %v1408, %v1026
    %v1410 = vadd.f32 %v1409, %v1027
    %v1411 = vadd.f32 %v1410, %v1028
    %v1412 = vadd.f32 %v1411, %v1029
    %v1413 = vadd.f32 %v1412, %v1030
    %v1414 = vadd.f32 %v1413, %v1031
    %v1415 = vadd.f32 %v1414, %v1032
    %v1416 = vadd.f32 %v1415, %v1033
    %v1417 = vadd.f32 %v1416, %v1034
    %v1418 = vadd.f32 %v1417, %v1035
    %v1419 = vadd.f32 %v1418, %v1036
    %v1420 = vadd.f32 %v1419, %v1037
    %v1421 = vadd.f32 %v1420, %v1038
    %v1422 = vadd.f32 %v1421, %v1039
    %v1423 = vrot.slane %v1422, 4
    %v1424 = vadd.f32 %v1422, %v1423
    %v1425 = vrot.slane %v1424, 2
    %v1426 = vadd.f32 %v1424, %v1425
    %v1427 = vrot.slane %v1426, 1
    %v1428 = vadd.f32 %v1426, %v1427
    %1429 = vst [vmem:[#allocation8] sm:$0x1] %v1428
    %v1430 = vmul.f32 %v976, %v976
    %v1431 = vmul.f32 %v977, %v977
    %v1432 = vmul.f32 %v978, %v978
    %v1433 = vmul.f32 %v979, %v979
    %v1434 = vmul.f32 %v980, %v980
    %v1435 = vmul.f32 %v981, %v981
    %v1436 = vmul.f32 %v982, %v982
    %v1437 = vmul.f32 %v983, %v983
    %v1438 = vmul.f32 %v984, %v984
    %v1439 = vmul.f32 %v985, %v985
    %v1440 = vmul.f32 %v986, %v986
    %v1441 = vmul.f32 %v987, %v987
    %v1442 = vmul.f32 %v988, %v988
    %v1443 = vmul.f32 %v989, %v989
    %v1444 = vmul.f32 %v990, %v990
    %v1445 = vmul.f32 %v991, %v991
    %v1446 = vmul.f32 %v992, %v992
    %v1447 = vmul.f32 %v993, %v993
    %v1448 = vmul.f32 %v994, %v994
    %v1449 = vmul.f32 %v995, %v995
    %v1450 = vmul.f32 %v996, %v996
    %v1451 = vmul.f32 %v997, %v997
    %v1452 = vmul.f32 %v998, %v998
    %v1453 = vmul.f32 %v999, %v999
    %v1454 = vmul.f32 %v1000, %v1000
    %v1455 = vmul.f32 %v1001, %v1001
    %v1456 = vmul.f32 %v1002, %v1002
    %v1457 = vmul.f32 %v1003, %v1003
    %v1458 = vmul.f32 %v1004, %v1004
    %v1459 = vmul.f32 %v1005, %v1005
    %v1460 = vmul.f32 %v1006, %v1006
    %v1461 = vmul.f32 %v1007, %v1007
    %v1462 = vmul.f32 %v1008, %v1008
    %v1463 = vmul.f32 %v1009, %v1009
    %v1464 = vmul.f32 %v1010, %v1010
    %v1465 = vmul.f32 %v1011, %v1011
    %v1466 = vmul.f32 %v1012, %v1012
    %v1467 = vmul.f32 %v1013, %v1013
    %v1468 = vmul.f32 %v1014, %v1014
    %v1469 = vmul.f32 %v1015, %v1015
    %v1470 = vmul.f32 %v1016, %v1016
    %v1471 = vmul.f32 %v1017, %v1017
    %v1472 = vmul.f32 %v1018, %v1018
    %v1473 = vmul.f32 %v1019, %v1019
    %v1474 = vmul.f32 %v1020, %v1020
    %v1475 = vmul.f32 %v1021, %v1021
    %v1476 = vmul.f32 %v1022, %v1022
    %v1477 = vmul.f32 %v1023, %v1023
    %v1478 = vmul.f32 %v1024, %v1024
    %v1479 = vmul.f32 %v1025, %v1025
    %v1480 = vmul.f32 %v1026, %v1026
    %v1481 = vmul.f32 %v1027, %v1027
    %v1482 = vmul.f32 %v1028, %v1028
    %v1483 = vmul.f32 %v1029, %v1029
    %v1484 = vmul.f32 %v1030, %v1030
    %v1485 = vmul.f32 %v1031, %v1031
    %v1486 = vmul.f32 %v1032, %v1032
    %v1487 = vmul.f32 %v1033, %v1033
    %v1488 = vmul.f32 %v1034, %v1034
    %v1489 = vmul.f32 %v1035, %v1035
    %v1490 = vmul.f32 %v1036, %v1036
    %v1491 = vmul.f32 %v1037, %v1037
    %v1492 = vmul.f32 %v1038, %v1038
    %v1493 = vmul.f32 %v1039, %v1039
    %v1494 = vadd.f32 %v1430, %v1431
    %v1495 = vadd.f32 %v1494, %v1432
    %v1496 = vadd.f32 %v1495, %v1433
    %v1497 = vadd.f32 %v1496, %v1434
    %v1498 = vadd.f32 %v1497, %v1435
    %v1499 = vadd.f32 %v1498, %v1436
    %v1500 = vadd.f32 %v1499, %v1437
    %v1501 = vadd.f32 %v1500, %v1438
    %v1502 = vadd.f32 %v1501, %v1439
    %v1503 = vadd.f32 %v1502, %v1440
    %v1504 = vadd.f32 %v1503, %v1441
    %v1505 = vadd.f32 %v1504, %v1442
    %v1506 = vadd.f32 %v1505, %v1443
    %v1507 = vadd.f32 %v1506, %v1444
    %v1508 = vadd.f32 %v1507, %v1445
    %v1509 = vadd.f32 %v1508, %v1446
    %v1510 = vadd.f32 %v1509, %v1447
    %v1511 = vadd.f32 %v1510, %v1448
    %v1512 = vadd.f32 %v1511, %v1449
    %v1513 = vadd.f32 %v1512, %v1450
    %v1514 = vadd.f32 %v1513, %v1451
    %v1515 = vadd.f32 %v1514, %v1452
    %v1516 = vadd.f32 %v1515, %v1453
    %v1517 = vadd.f32 %v1516, %v1454
    %v1518 = vadd.f32 %v1517, %v1455
    %v1519 = vadd.f32 %v1518, %v1456
    %v1520 = vadd.f32 %v1519, %v1457
    %v1521 = vadd.f32 %v1520, %v1458
    %v1522 = vadd.f32 %v1521, %v1459
    %v1523 = vadd.f32 %v1522, %v1460
    %v1524 = vadd.f32 %v1523, %v1461
    %v1525 = vadd.f32 %v1524, %v1462
    %v1526 = vadd.f32 %v1525, %v1463
    %v1527 = vadd.f32 %v1526, %v1464
    %v1528 = vadd.f32 %v1527, %v1465
    %v1529 = vadd.f32 %v1528, %v1466
    %v1530 = vadd.f32 %v1529, %v1467
    %v1531 = vadd.f32 %v1530, %v1468
    %v1532 = vadd.f32 %v1531, %v1469
    %v1533 = vadd.f32 %v1532, %v1470
    %v1534 = vadd.f32 %v1533, %v1471
    %v1535 = vadd.f32 %v1534, %v1472
    %v1536 = vadd.f32 %v1535, %v1473
    %v1537 = vadd.f32 %v1536, %v1474
    %v1538 = vadd.f32 %v1537, %v1475
    %v1539 = vadd.f32 %v1538, %v1476
    %v1540 = vadd.f32 %v1539, %v1477
    %v1541 = vadd.f32 %v1540, %v1478
    %v1542 = vadd.f32 %v1541, %v1479
    %v1543 = vadd.f32 %v1542, %v1480
    %v1544 = vadd.f32 %v1543, %v1481
    %v1545 = vadd.f32 %v1544, %v1482
    %v1546 = vadd.f32 %v1545, %v1483
    %v1547 = vadd.f32 %v1546, %v1484
    %v1548 = vadd.f32 %v1547, %v1485
    %v1549 = vadd.f32 %v1548, %v1486
    %v1550 = vadd.f32 %v1549, %v1487
    %v1551 = vadd.f32 %v1550, %v1488
    %v1552 = vadd.f32 %v1551, %v1489
    %v1553 = vadd.f32 %v1552, %v1490
    %v1554 = vadd.f32 %v1553, %v1491
    %v1555 = vadd.f32 %v1554, %v1492
    %v1556 = vadd.f32 %v1555, %v1493
    %v1557 = vrot.slane %v1556, 4
    %v1558 = vadd.f32 %v1556, %v1557
    %v1559 = vrot.slane %v1558, 2
    %v1560 = vadd.f32 %v1558, %v1559
    %v1561 = vrot.slane %v1560, 1
    %v1562 = vadd.f32 %v1560, %v1561
    %1563 = vst [vmem:[#allocation8 + $0x1] sm:$0x1] %v1562
    // Predicated region
    $region18: #{bottleneck_with_batchnorm.4} parent=1 // pred_check
      _
    $region19: #{bottleneck_with_batchnorm.4} parent=1 // pred_check_branch
      %1565 = sbr.rel (0) target = $region21
    $region20: #{bottleneck_with_batchnorm.4} parent=1 // pred_region
      %s1567 = ssub.s32 4096, 4096
      %1568 = vsyncadd [#allocation4], %s1567
      %s1569 = sshll.u32 [#allocation7], 4
      %s1570 = int_to_ptr.vmem [resolvable:$true] %s1569
      %1575 = dma.vmem_to_hbm [thread:$0]  %s1570, 4096, %s2, [#allocation4], 64, 64, 4
    $region21: #{bottleneck_with_batchnorm.4} parent=1 // pred_fallthru
      _
    // Predicated region
    $region22: #{bottleneck_with_batchnorm.4} parent=1 // pred_check
      _
    $region23: #{bottleneck_with_batchnorm.4} parent=1 // pred_check_branch
      %1577 = sbr.rel (0) target = $region25
    $region24: #{bottleneck_with_batchnorm.4} parent=1 // pred_region
      %s1579 = ssub.s32 32, 32
      %1580 = vsyncadd [#allocation9], %s1579
      %s1582 = sshll.u32 [#allocation8], 4
      %s1583 = int_to_ptr.vmem [resolvable:$true] %s1582
      %1585 = dma.vmem_to_hbm [thread:$0]  %s1583, 32, %s3, [#allocation9]
    $region25: #{bottleneck_with_batchnorm.4} parent=1 // pred_fallthru
      _
    // Predicated region
    $region26: #{bottleneck_with_batchnorm.4} parent=1 // pred_check
      _
    $region27: #{bottleneck_with_batchnorm.4} parent=1 // pred_check_branch
      %1587 = sbr.rel (0) target = $region29
    $region28: #{bottleneck_with_batchnorm.4} parent=1 // pred_region
      %1588 = dma.done [#allocation4], 4096
    $region29: #{bottleneck_with_batchnorm.4} parent=1 // pred_fallthru
      _
    // Predicated region
    $region30: #{bottleneck_with_batchnorm.4} parent=1 // pred_check
      _
    $region31: #{bottleneck_with_batchnorm.4} parent=1 // pred_check_branch
      %1590 = sbr.rel (0) target = $region33
    $region32: #{bottleneck_with_batchnorm.4} parent=1 // pred_region
      %1591 = dma.done [#allocation9], 32
    $region33: #{bottleneck_with_batchnorm.4} parent=1 // pred_fallthru
      _
    %1592 = vsyncpa [#allocation3], 1
    %1593 = vsyncpa [#allocation6], 1
    %1594 = vsyncpa [#allocation4], 1
    %1595 = vsyncpa [#allocation9], 1

// kernel: bottleneck_with_batchnorm.7
$region0: #{bottleneck_with_batchnorm.7}
  #allocation0 [shape = 'u32[]', space=smem, size = 0x4, offset = 0x4, fixed_abs, tag = 'smem constant byte address 0x4 - core index']
  #allocation1 [shape = 'u32[144,128]{1,0:T(1,128)}', space=vmem, size = 0x12000, scoped, tag = 'internal scratch']
  %s0 = inlined_call_operand.hbm [shape: bf16[512,128], index: 0, kind: input, shape index: {}]
  %s1 = inlined_call_operand.hbm [shape: f32[1,128], index: 1, kind: input, shape index: {}]
  %s2 = inlined_call_operand.hbm [shape: f32[1,128], index: 2, kind: input, shape index: {}]
  %s3 = inlined_call_operand.hbm [shape: bf16[512,128], index: 3, kind: input, shape index: {}]
  %s4 = inlined_call_operand.hbm [shape: f32[1,128], index: 4, kind: input, shape index: {}]
  %s5 = inlined_call_operand.hbm [shape: f32[1,128], index: 5, kind: input, shape index: {}]
  %s6 = inlined_call_operand.hbm [shape: f32[512,128], index: 6, kind: output, shape index: {}]
  %s7 = sld [smem:[#allocation0]]
  $region58: #{bottleneck_with_batchnorm.7} parent=0
    _
  %s9 = ssub.s32 1, %s7
  %s10 = scalar_select 0, %s9, %s7
  $region1: #{bottleneck_with_batchnorm.7} parent=0
    #allocation2 [shape = 'u8[131072]{0}', space=vmem, size = 0x20000, scoped, tag = 'input window, operand 0, single buffered']
    #allocation3 [shape = 's32[1]{0}', space=sflag, size = 0x4, scoped, tag = 'scoped memory for bottleneck_with_batchnorm.7']
    #allocation4 [shape = 's32[1]{0}', space=sflag, size = 0x4, scoped, tag = 'scoped memory for bottleneck_with_batchnorm.7']
    #allocation5 [shape = 'u8[512]{0}', space=vmem, size = 0x400, scoped, tag = 'input window, operand 1, single buffered']
    #allocation6 [shape = 's32[1]{0}', space=sflag, size = 0x4, scoped, tag = 'scoped memory for bottleneck_with_batchnorm.7']
    #allocation7 [shape = 'u8[512]{0}', space=vmem, size = 0x400, scoped, tag = 'input window, operand 2, single buffered']
    #allocation8 [shape = 'u8[131072]{0}', space=vmem, size = 0x20000, scoped, tag = 'input window, operand 3, single buffered']
    #allocation9 [shape = 's32[1]{0}', space=sflag, size = 0x4, scoped, tag = 'scoped memory for bottleneck_with_batchnorm.7']
    #allocation10 [shape = 'u8[512]{0}', space=vmem, size = 0x400, scoped, tag = 'input window, operand 4, single buffered']
    #allocation11 [shape = 'u8[512]{0}', space=vmem, size = 0x400, scoped, tag = 'input window, operand 5, single buffered']
    #allocation12 [shape = 's32[1]{0}', space=sflag, size = 0x4, scoped, tag = 'scoped memory for bottleneck_with_batchnorm.7']
    #allocation13 [shape = 'u8[262144]{0}', space=vmem, size = 0x40000, scoped, tag = 'output window, operand 0, single buffered']
    %11 = vsyncpa [#allocation3], 0
    %12 = vsyncpa [#allocation6], 0
    %13 = vsyncpa [#allocation9], 0
    %14 = vsyncpa [#allocation12], 0
    %15 = vsyncpa [#allocation4], 0
    // Predicated region
    $region2: #{bottleneck_with_batchnorm.7} parent=1 // pred_check
      _
    $region3: #{bottleneck_with_batchnorm.7} parent=1 // pred_check_branch
      %17 = sbr.rel (0) target = $region5
    $region4: #{bottleneck_with_batchnorm.7} parent=1 // pred_region
      %s19 = ssub.s32 4096, 4096
      %20 = vsyncadd [#allocation3], %s19
      %s21 = sshll.u32 [#allocation2], 4
      %s22 = int_to_ptr.vmem [resolvable:$true] %s21
      %27 = dma.hbm_to_vmem [thread:$0]  %s0, 4096, %s22, [#allocation3], 64, 64, 4
    $region5: #{bottleneck_with_batchnorm.7} parent=1 // pred_fallthru
      _
    // Predicated region
    $region6: #{bottleneck_with_batchnorm.7} parent=1 // pred_check
      _
    $region7: #{bottleneck_with_batchnorm.7} parent=1 // pred_check_branch
      %29 = sbr.rel (0) target = $region9
    $region8: #{bottleneck_with_batchnorm.7} parent=1 // pred_region
      %s31 = ssub.s32 16, 16
      %32 = vsyncadd [#allocation6], %s31
      %s34 = sshll.u32 [#allocation5], 4
      %s35 = int_to_ptr.vmem [resolvable:$true] %s34
      %37 = dma.hbm_to_vmem [thread:$0]  %s1, 16, %s35, [#allocation6]
    $region9: #{bottleneck_with_batchnorm.7} parent=1 // pred_fallthru
      _
    // Predicated region
    $region10: #{bottleneck_with_batchnorm.7} parent=1 // pred_check
      _
    $region11: #{bottleneck_with_batchnorm.7} parent=1 // pred_check_branch
      %39 = sbr.rel (0) target = $region13
    $region12: #{bottleneck_with_batchnorm.7} parent=1 // pred_region
      %s41 = ssub.s32 16, 16
      %42 = vsyncadd [#allocation6], %s41
      %s44 = sshll.u32 [#allocation7], 4
      %s45 = int_to_ptr.vmem [resolvable:$true] %s44
      %47 = dma.hbm_to_vmem [thread:$0]  %s2, 16, %s45, [#allocation6]
    $region13: #{bottleneck_with_batchnorm.7} parent=1 // pred_fallthru
      _
    // Predicated region
    $region14: #{bottleneck_with_batchnorm.7} parent=1 // pred_check
      _
    $region15: #{bottleneck_with_batchnorm.7} parent=1 // pred_check_branch
      %49 = sbr.rel (0) target = $region17
    $region16: #{bottleneck_with_batchnorm.7} parent=1 // pred_region
      %s51 = ssub.s32 4096, 4096
      %52 = vsyncadd [#allocation9], %s51
      %s53 = sshll.u32 [#allocation8], 4
      %s54 = int_to_ptr.vmem [resolvable:$true] %s53
      %59 = dma.hbm_to_vmem [thread:$0]  %s3, 4096, %s54, [#allocation9], 64, 64, 4
    $region17: #{bottleneck_with_batchnorm.7} parent=1 // pred_fallthru
      _
    // Predicated region
    $region18: #{bottleneck_with_batchnorm.7} parent=1 // pred_check
      _
    $region19: #{bottleneck_with_batchnorm.7} parent=1 // pred_check_branch
      %61 = sbr.rel (0) target = $region21
    $region20: #{bottleneck_with_batchnorm.7} parent=1 // pred_region
      %s63 = ssub.s32 16, 16
      %64 = vsyncadd [#allocation9], %s63
      %s66 = sshll.u32 [#allocation10], 4
      %s67 = int_to_ptr.vmem [resolvable:$true] %s66
      %69 = dma.hbm_to_vmem [thread:$0]  %s4, 16, %s67, [#allocation9]
    $region21: #{bottleneck_with_batchnorm.7} parent=1 // pred_fallthru
      _
    // Predicated region
    $region22: #{bottleneck_with_batchnorm.7} parent=1 // pred_check
      _
    $region23: #{bottleneck_with_batchnorm.7} parent=1 // pred_check_branch
      %71 = sbr.rel (0) target = $region25
    $region24: #{bottleneck_with_batchnorm.7} parent=1 // pred_region
      %s73 = ssub.s32 16, 16
      %74 = vsyncadd [#allocation12], %s73
      %s76 = sshll.u32 [#allocation11], 4
      %s77 = int_to_ptr.vmem [resolvable:$true] %s76
      %79 = dma.hbm_to_vmem [thread:$0]  %s5, 16, %s77, [#allocation12]
    $region25: #{bottleneck_with_batchnorm.7} parent=1 // pred_fallthru
      _
    // Predicated region
    $region26: #{bottleneck_with_batchnorm.7} parent=1 // pred_check
      _
    $region27: #{bottleneck_with_batchnorm.7} parent=1 // pred_check_branch
      %81 = sbr.rel (0) target = $region29
    $region28: #{bottleneck_with_batchnorm.7} parent=1 // pred_region
      %82 = dma.done [#allocation3], 4096
    $region29: #{bottleneck_with_batchnorm.7} parent=1 // pred_fallthru
      _
    // Predicated region
    $region30: #{bottleneck_with_batchnorm.7} parent=1 // pred_check
      _
    $region31: #{bottleneck_with_batchnorm.7} parent=1 // pred_check_branch
      %84 = sbr.rel (0) target = $region33
    $region32: #{bottleneck_with_batchnorm.7} parent=1 // pred_region
      %85 = dma.done [#allocation6], 16
    $region33: #{bottleneck_with_batchnorm.7} parent=1 // pred_fallthru
      _
    // Predicated region
    $region34: #{bottleneck_with_batchnorm.7} parent=1 // pred_check
      _
    $region35: #{bottleneck_with_batchnorm.7} parent=1 // pred_check_branch
      %87 = sbr.rel (0) target = $region37
    $region36: #{bottleneck_with_batchnorm.7} parent=1 // pred_region
      %88 = dma.done [#allocation6], 16
    $region37: #{bottleneck_with_batchnorm.7} parent=1 // pred_fallthru
      _
    // Predicated region
    $region38: #{bottleneck_with_batchnorm.7} parent=1 // pred_check
      _
    $region39: #{bottleneck_with_batchnorm.7} parent=1 // pred_check_branch
      %90 = sbr.rel (0) target = $region41
    $region40: #{bottleneck_with_batchnorm.7} parent=1 // pred_region
      %91 = dma.done [#allocation9], 4096
    $region41: #{bottleneck_with_batchnorm.7} parent=1 // pred_fallthru
      _
    // Predicated region
    $region42: #{bottleneck_with_batchnorm.7} parent=1 // pred_check
      _
    $region43: #{bottleneck_with_batchnorm.7} parent=1 // pred_check_branch
      %93 = sbr.rel (0) target = $region45
    $region44: #{bottleneck_with_batchnorm.7} parent=1 // pred_region
      %94 = dma.done [#allocation9], 16
    $region45: #{bottleneck_with_batchnorm.7} parent=1 // pred_fallthru
      _
    // Predicated region
    $region46: #{bottleneck_with_batchnorm.7} parent=1 // pred_check
      _
    $region47: #{bottleneck_with_batchnorm.7} parent=1 // pred_check_branch
      %96 = sbr.rel (0) target = $region49
    $region48: #{bottleneck_with_batchnorm.7} parent=1 // pred_region
      %97 = dma.done [#allocation12], 16
    $region49: #{bottleneck_with_batchnorm.7} parent=1 // pred_fallthru
      _
    %v98 = vld [vmem:[#allocation2] sm:$0xf]
    %v99 = vld [vmem:[#allocation2 + $0x4] sm:$0xf]
    %v100 = vld [vmem:[#allocation2 + $0x8] sm:$0xf]
    %v101 = vld [vmem:[#allocation2 + $0xc] sm:$0xf]
    %v102 = vld [vmem:[#allocation2 + $0x10] sm:$0xf]
    %v103 = vld [vmem:[#allocation2 + $0x14] sm:$0xf]
    %v104 = vld [vmem:[#allocation2 + $0x18] sm:$0xf]
    %v105 = vld [vmem:[#allocation2 + $0x1c] sm:$0xf]
    %v106 = vld [vmem:[#allocation2 + $0x20] sm:$0xf]
    %v107 = vld [vmem:[#allocation2 + $0x24] sm:$0xf]
    %v108 = vld [vmem:[#allocation2 + $0x28] sm:$0xf]
    %v109 = vld [vmem:[#allocation2 + $0x2c] sm:$0xf]
    %v110 = vld [vmem:[#allocation2 + $0x30] sm:$0xf]
    %v111 = vld [vmem:[#allocation2 + $0x34] sm:$0xf]
    %v112 = vld [vmem:[#allocation2 + $0x38] sm:$0xf]
    %v113 = vld [vmem:[#allocation2 + $0x3c] sm:$0xf]
    %v114 = vld [vmem:[#allocation2 + $0x40] sm:$0xf]
    %v115 = vld [vmem:[#allocation2 + $0x44] sm:$0xf]
    %v116 = vld [vmem:[#allocation2 + $0x48] sm:$0xf]
    %v117 = vld [vmem:[#allocation2 + $0x4c] sm:$0xf]
    %v118 = vld [vmem:[#allocation2 + $0x50] sm:$0xf]
    %v119 = vld [vmem:[#allocation2 + $0x54] sm:$0xf]
    %v120 = vld [vmem:[#allocation2 + $0x58] sm:$0xf]
    %v121 = vld [vmem:[#allocation2 + $0x5c] sm:$0xf]
    %v122 = vld [vmem:[#allocation2 + $0x60] sm:$0xf]
    %v123 = vld [vmem:[#allocation2 + $0x64] sm:$0xf]
    %v124 = vld [vmem:[#allocation2 + $0x68] sm:$0xf]
    %v125 = vld [vmem:[#allocation2 + $0x6c] sm:$0xf]
    %v126 = vld [vmem:[#allocation2 + $0x70] sm:$0xf]
    %v127 = vld [vmem:[#allocation2 + $0x74] sm:$0xf]
    %v128 = vld [vmem:[#allocation2 + $0x78] sm:$0xf]
    %v129 = vld [vmem:[#allocation2 + $0x7c] sm:$0xf]
    %v130 = vld [vmem:[#allocation2 + $0x80] sm:$0xf]
    %v131 = vld [vmem:[#allocation2 + $0x84] sm:$0xf]
    %v132 = vld [vmem:[#allocation2 + $0x88] sm:$0xf]
    %v133 = vld [vmem:[#allocation2 + $0x8c] sm:$0xf]
    %v134 = vld [vmem:[#allocation2 + $0x90] sm:$0xf]
    %v135 = vld [vmem:[#allocation2 + $0x94] sm:$0xf]
    %v136 = vld [vmem:[#allocation2 + $0x98] sm:$0xf]
    %v137 = vld [vmem:[#allocation2 + $0x9c] sm:$0xf]
    %v138 = vld [vmem:[#allocation2 + $0xa0] sm:$0xf]
    %v139 = vld [vmem:[#allocation2 + $0xa4] sm:$0xf]
    %v140 = vld [vmem:[#allocation2 + $0xa8] sm:$0xf]
    %v141 = vld [vmem:[#allocation2 + $0xac] sm:$0xf]
    %v142 = vld [vmem:[#allocation2 + $0xb0] sm:$0xf]
    %v143 = vld [vmem:[#allocation2 + $0xb4] sm:$0xf]
    %v144 = vld [vmem:[#allocation2 + $0xb8] sm:$0xf]
    %v145 = vld [vmem:[#allocation2 + $0xbc] sm:$0xf]
    %v146 = vld [vmem:[#allocation2 + $0xc0] sm:$0xf]
    %v147 = vld [vmem:[#allocation2 + $0xc4] sm:$0xf]
    %v148 = vld [vmem:[#allocation2 + $0xc8] sm:$0xf]
    %v149 = vld [vmem:[#allocation2 + $0xcc] sm:$0xf]
    %v150 = vld [vmem:[#allocation2 + $0xd0] sm:$0xf]
    %v151 = vld [vmem:[#allocation2 + $0xd4] sm:$0xf]
    %v152 = vld [vmem:[#allocation2 + $0xd8] sm:$0xf]
    %v153 = vld [vmem:[#allocation2 + $0xdc] sm:$0xf]
    %v154 = vld [vmem:[#allocation2 + $0xe0] sm:$0xf]
    %v155 = vld [vmem:[#allocation2 + $0xe4] sm:$0xf]
    %v156 = vld [vmem:[#allocation2 + $0xe8] sm:$0xf]
    %v157 = vld [vmem:[#allocation2 + $0xec] sm:$0xf]
    %v158 = vld [vmem:[#allocation2 + $0xf0] sm:$0xf]
    %v159 = vld [vmem:[#allocation2 + $0xf4] sm:$0xf]
    %v160 = vld [vmem:[#allocation2 + $0xf8] sm:$0xf]
    %v161 = vld [vmem:[#allocation2 + $0xfc] sm:$0xf]
    %v162 = vunpack.c.l.bf16 %v98
    %v163 = vunpack.c.l.bf16 %v99
    %v164 = vunpack.c.l.bf16 %v100
    %v165 = vunpack.c.l.bf16 %v101
    %v166 = vunpack.c.l.bf16 %v102
    %v167 = vunpack.c.l.bf16 %v103
    %v168 = vunpack.c.l.bf16 %v104
    %v169 = vunpack.c.l.bf16 %v105
    %v170 = vunpack.c.l.bf16 %v106
    %v171 = vunpack.c.l.bf16 %v107
    %v172 = vunpack.c.l.bf16 %v108
    %v173 = vunpack.c.l.bf16 %v109
    %v174 = vunpack.c.l.bf16 %v110
    %v175 = vunpack.c.l.bf16 %v111
    %v176 = vunpack.c.l.bf16 %v112
    %v177 = vunpack.c.l.bf16 %v113
    %v178 = vunpack.c.l.bf16 %v114
    %v179 = vunpack.c.l.bf16 %v115
    %v180 = vunpack.c.l.bf16 %v116
    %v181 = vunpack.c.l.bf16 %v117
    %v182 = vunpack.c.l.bf16 %v118
    %v183 = vunpack.c.l.bf16 %v119
    %v184 = vunpack.c.l.bf16 %v120
    %v185 = vunpack.c.l.bf16 %v121
    %v186 = vunpack.c.l.bf16 %v122
    %v187 = vunpack.c.l.bf16 %v123
    %v188 = vunpack.c.l.bf16 %v124
    %v189 = vunpack.c.l.bf16 %v125
    %v190 = vunpack.c.l.bf16 %v126
    %v191 = vunpack.c.l.bf16 %v127
    %v192 = vunpack.c.l.bf16 %v128
    %v193 = vunpack.c.l.bf16 %v129
    %v194 = vunpack.c.l.bf16 %v130
    %v195 = vunpack.c.l.bf16 %v131
    %v196 = vunpack.c.l.bf16 %v132
    %v197 = vunpack.c.l.bf16 %v133
    %v198 = vunpack.c.l.bf16 %v134
    %v199 = vunpack.c.l.bf16 %v135
    %v200 = vunpack.c.l.bf16 %v136
    %v201 = vunpack.c.l.bf16 %v137
    %v202 = vunpack.c.l.bf16 %v138
    %v203 = vunpack.c.l.bf16 %v139
    %v204 = vunpack.c.l.bf16 %v140
    %v205 = vunpack.c.l.bf16 %v141
    %v206 = vunpack.c.l.bf16 %v142
    %v207 = vunpack.c.l.bf16 %v143
    %v208 = vunpack.c.l.bf16 %v144
    %v209 = vunpack.c.l.bf16 %v145
    %v210 = vunpack.c.l.bf16 %v146
    %v211 = vunpack.c.l.bf16 %v147
    %v212 = vunpack.c.l.bf16 %v148
    %v213 = vunpack.c.l.bf16 %v149
    %v214 = vunpack.c.l.bf16 %v150
    %v215 = vunpack.c.l.bf16 %v151
    %v216 = vunpack.c.l.bf16 %v152
    %v217 = vunpack.c.l.bf16 %v153
    %v218 = vunpack.c.l.bf16 %v154
    %v219 = vunpack.c.l.bf16 %v155
    %v220 = vunpack.c.l.bf16 %v156
    %v221 = vunpack.c.l.bf16 %v157
    %v222 = vunpack.c.l.bf16 %v158
    %v223 = vunpack.c.l.bf16 %v159
    %v224 = vunpack.c.l.bf16 %v160
    %v225 = vunpack.c.l.bf16 %v161
    %v226 = vld [vmem:[#allocation5] sm:$0x1]
    %v228 = vlaneseq
    %v229 = vshrl.u32 %v228, 7
    %v230 = vsub.s32 0, %v229
    %v231 = vrot.slane %v226, %v230
    %v233 = vmul.f32 %v162, %v231
    %v234 = vmul.f32 %v163, %v231
    %v235 = vmul.f32 %v164, %v231
    %v236 = vmul.f32 %v165, %v231
    %v237 = vmul.f32 %v166, %v231
    %v238 = vmul.f32 %v167, %v231
    %v239 = vmul.f32 %v168, %v231
    %v240 = vmul.f32 %v169, %v231
    %v241 = vmul.f32 %v170, %v231
    %v242 = vmul.f32 %v171, %v231
    %v243 = vmul.f32 %v172, %v231
    %v244 = vmul.f32 %v173, %v231
    %v245 = vmul.f32 %v174, %v231
    %v246 = vmul.f32 %v175, %v231
    %v247 = vmul.f32 %v176, %v231
    %v248 = vmul.f32 %v177, %v231
    %v249 = vmul.f32 %v178, %v231
    %v250 = vmul.f32 %v179, %v231
    %v251 = vmul.f32 %v180, %v231
    %v252 = vmul.f32 %v181, %v231
    %v253 = vmul.f32 %v182, %v231
    %v254 = vmul.f32 %v183, %v231
    %v255 = vmul.f32 %v184, %v231
    %v256 = vmul.f32 %v185, %v231
    %v257 = vmul.f32 %v186, %v231
    %v258 = vmul.f32 %v187, %v231
    %v259 = vmul.f32 %v188, %v231
    %v260 = vmul.f32 %v189, %v231
    %v261 = vmul.f32 %v190, %v231
    %v262 = vmul.f32 %v191, %v231
    %v263 = vmul.f32 %v192, %v231
    %v264 = vmul.f32 %v193, %v231
    %v265 = vmul.f32 %v194, %v231
    %v266 = vmul.f32 %v195, %v231
    %v267 = vmul.f32 %v196, %v231
    %v268 = vmul.f32 %v197, %v231
    %v269 = vmul.f32 %v198, %v231
    %v270 = vmul.f32 %v199, %v231
    %v271 = vmul.f32 %v200, %v231
    %v272 = vmul.f32 %v201, %v231
    %v273 = vmul.f32 %v202, %v231
    %v274 = vmul.f32 %v203, %v231
    %v275 = vmul.f32 %v204, %v231
    %v276 = vmul.f32 %v205, %v231
    %v277 = vmul.f32 %v206, %v231
    %v278 = vmul.f32 %v207, %v231
    %v279 = vmul.f32 %v208, %v231
    %v280 = vmul.f32 %v209, %v231
    %v281 = vmul.f32 %v210, %v231
    %v282 = vmul.f32 %v211, %v231
    %v283 = vmul.f32 %v212, %v231
    %v284 = vmul.f32 %v213, %v231
    %v285 = vmul.f32 %v214, %v231
    %v286 = vmul.f32 %v215, %v231
    %v287 = vmul.f32 %v216, %v231
    %v288 = vmul.f32 %v217, %v231
    %v289 = vmul.f32 %v218, %v231
    %v290 = vmul.f32 %v219, %v231
    %v291 = vmul.f32 %v220, %v231
    %v292 = vmul.f32 %v221, %v231
    %v293 = vmul.f32 %v222, %v231
    %v294 = vmul.f32 %v223, %v231
    %v295 = vmul.f32 %v224, %v231
    %v296 = vmul.f32 %v225, %v231
    %v297 = vld [vmem:[#allocation7] sm:$0x1]
    %v299 = vlaneseq
    %v300 = vshrl.u32 %v299, 7
    %v301 = vsub.s32 0, %v300
    %v302 = vrot.slane %v297, %v301
    %v304 = vadd.f32 %v233, %v302
    %v305 = vadd.f32 %v234, %v302
    %v306 = vadd.f32 %v235, %v302
    %v307 = vadd.f32 %v236, %v302
    %v308 = vadd.f32 %v237, %v302
    %v309 = vadd.f32 %v238, %v302
    %v310 = vadd.f32 %v239, %v302
    %v311 = vadd.f32 %v240, %v302
    %v312 = vadd.f32 %v241, %v302
    %v313 = vadd.f32 %v242, %v302
    %v314 = vadd.f32 %v243, %v302
    %v315 = vadd.f32 %v244, %v302
    %v316 = vadd.f32 %v245, %v302
    %v317 = vadd.f32 %v246, %v302
    %v318 = vadd.f32 %v247, %v302
    %v319 = vadd.f32 %v248, %v302
    %v320 = vadd.f32 %v249, %v302
    %v321 = vadd.f32 %v250, %v302
    %v322 = vadd.f32 %v251, %v302
    %v323 = vadd.f32 %v252, %v302
    %v324 = vadd.f32 %v253, %v302
    %v325 = vadd.f32 %v254, %v302
    %v326 = vadd.f32 %v255, %v302
    %v327 = vadd.f32 %v256, %v302
    %v328 = vadd.f32 %v257, %v302
    %v329 = vadd.f32 %v258, %v302
    %v330 = vadd.f32 %v259, %v302
    %v331 = vadd.f32 %v260, %v302
    %v332 = vadd.f32 %v261, %v302
    %v333 = vadd.f32 %v262, %v302
    %v334 = vadd.f32 %v263, %v302
    %v335 = vadd.f32 %v264, %v302
    %v336 = vadd.f32 %v265, %v302
    %v337 = vadd.f32 %v266, %v302
    %v338 = vadd.f32 %v267, %v302
    %v339 = vadd.f32 %v268, %v302
    %v340 = vadd.f32 %v269, %v302
    %v341 = vadd.f32 %v270, %v302
    %v342 = vadd.f32 %v271, %v302
    %v343 = vadd.f32 %v272, %v302
    %v344 = vadd.f32 %v273, %v302
    %v345 = vadd.f32 %v274, %v302
    %v346 = vadd.f32 %v275, %v302
    %v347 = vadd.f32 %v276, %v302
    %v348 = vadd.f32 %v277, %v302
    %v349 = vadd.f32 %v278, %v302
    %v350 = vadd.f32 %v279, %v302
    %v351 = vadd.f32 %v280, %v302
    %v352 = vadd.f32 %v281, %v302
    %v353 = vadd.f32 %v282, %v302
    %v354 = vadd.f32 %v283, %v302
    %v355 = vadd.f32 %v284, %v302
    %v356 = vadd.f32 %v285, %v302
    %v357 = vadd.f32 %v286, %v302
    %v358 = vadd.f32 %v287, %v302
    %v359 = vadd.f32 %v288, %v302
    %v360 = vadd.f32 %v289, %v302
    %v361 = vadd.f32 %v290, %v302
    %v362 = vadd.f32 %v291, %v302
    %v363 = vadd.f32 %v292, %v302
    %v364 = vadd.f32 %v293, %v302
    %v365 = vadd.f32 %v294, %v302
    %v366 = vadd.f32 %v295, %v302
    %v367 = vadd.f32 %v296, %v302
    %v368 = vld [vmem:[#allocation8] sm:$0xf]
    %v369 = vld [vmem:[#allocation8 + $0x4] sm:$0xf]
    %v370 = vld [vmem:[#allocation8 + $0x8] sm:$0xf]
    %v371 = vld [vmem:[#allocation8 + $0xc] sm:$0xf]
    %v372 = vld [vmem:[#allocation8 + $0x10] sm:$0xf]
    %v373 = vld [vmem:[#allocation8 + $0x14] sm:$0xf]
    %v374 = vld [vmem:[#allocation8 + $0x18] sm:$0xf]
    %v375 = vld [vmem:[#allocation8 + $0x1c] sm:$0xf]
    %v376 = vld [vmem:[#allocation8 + $0x20] sm:$0xf]
    %v377 = vld [vmem:[#allocation8 + $0x24] sm:$0xf]
    %v378 = vld [vmem:[#allocation8 + $0x28] sm:$0xf]
    %v379 = vld [vmem:[#allocation8 + $0x2c] sm:$0xf]
    %v380 = vld [vmem:[#allocation8 + $0x30] sm:$0xf]
    %v381 = vld [vmem:[#allocation8 + $0x34] sm:$0xf]
    %v382 = vld [vmem:[#allocation8 + $0x38] sm:$0xf]
    %v383 = vld [vmem:[#allocation8 + $0x3c] sm:$0xf]
    %v384 = vld [vmem:[#allocation8 + $0x40] sm:$0xf]
    %v385 = vld [vmem:[#allocation8 + $0x44] sm:$0xf]
    %v386 = vld [vmem:[#allocation8 + $0x48] sm:$0xf]
    %v387 = vld [vmem:[#allocation8 + $0x4c] sm:$0xf]
    %v388 = vld [vmem:[#allocation8 + $0x50] sm:$0xf]
    %v389 = vld [vmem:[#allocation8 + $0x54] sm:$0xf]
    %v390 = vld [vmem:[#allocation8 + $0x58] sm:$0xf]
    %v391 = vld [vmem:[#allocation8 + $0x5c] sm:$0xf]
    %v392 = vld [vmem:[#allocation8 + $0x60] sm:$0xf]
    %v393 = vld [vmem:[#allocation8 + $0x64] sm:$0xf]
    %v394 = vld [vmem:[#allocation8 + $0x68] sm:$0xf]
    %v395 = vld [vmem:[#allocation8 + $0x6c] sm:$0xf]
    %v396 = vld [vmem:[#allocation8 + $0x70] sm:$0xf]
    %v397 = vld [vmem:[#allocation8 + $0x74] sm:$0xf]
    %v398 = vld [vmem:[#allocation8 + $0x78] sm:$0xf]
    %v399 = vld [vmem:[#allocation8 + $0x7c] sm:$0xf]
    %v400 = vld [vmem:[#allocation8 + $0x80] sm:$0xf]
    %v401 = vld [vmem:[#allocation8 + $0x84] sm:$0xf]
    %v402 = vld [vmem:[#allocation8 + $0x88] sm:$0xf]
    %v403 = vld [vmem:[#allocation8 + $0x8c] sm:$0xf]
    %v404 = vld [vmem:[#allocation8 + $0x90] sm:$0xf]
    %v405 = vld [vmem:[#allocation8 + $0x94] sm:$0xf]
    %v406 = vld [vmem:[#allocation8 + $0x98] sm:$0xf]
    %v407 = vld [vmem:[#allocation8 + $0x9c] sm:$0xf]
    %v408 = vld [vmem:[#allocation8 + $0xa0] sm:$0xf]
    %v409 = vld [vmem:[#allocation8 + $0xa4] sm:$0xf]
    %v410 = vld [vmem:[#allocation8 + $0xa8] sm:$0xf]
    %v411 = vld [vmem:[#allocation8 + $0xac] sm:$0xf]
    %v412 = vld [vmem:[#allocation8 + $0xb0] sm:$0xf]
    %v413 = vld [vmem:[#allocation8 + $0xb4] sm:$0xf]
    %v414 = vld [vmem:[#allocation8 + $0xb8] sm:$0xf]
    %v415 = vld [vmem:[#allocation8 + $0xbc] sm:$0xf]
    %v416 = vld [vmem:[#allocation8 + $0xc0] sm:$0xf]
    %v417 = vld [vmem:[#allocation8 + $0xc4] sm:$0xf]
    %v418 = vld [vmem:[#allocation8 + $0xc8] sm:$0xf]
    %v419 = vld [vmem:[#allocation8 + $0xcc] sm:$0xf]
    %v420 = vld [vmem:[#allocation8 + $0xd0] sm:$0xf]
    %v421 = vld [vmem:[#allocation8 + $0xd4] sm:$0xf]
    %v422 = vld [vmem:[#allocation8 + $0xd8] sm:$0xf]
    %v423 = vld [vmem:[#allocation8 + $0xdc] sm:$0xf]
    %v424 = vld [vmem:[#allocation8 + $0xe0] sm:$0xf]
    %v425 = vld [vmem:[#allocation8 + $0xe4] sm:$0xf]
    %v426 = vld [vmem:[#allocation8 + $0xe8] sm:$0xf]
    %v427 = vld [vmem:[#allocation8 + $0xec] sm:$0xf]
    %v428 = vld [vmem:[#allocation8 + $0xf0] sm:$0xf]
    %v429 = vld [vmem:[#allocation8 + $0xf4] sm:$0xf]
    %v430 = vld [vmem:[#allocation8 + $0xf8] sm:$0xf]
    %v431 = vld [vmem:[#allocation8 + $0xfc] sm:$0xf]
    %v432 = vunpack.c.l.bf16 %v368
    %v433 = vunpack.c.l.bf16 %v369
    %v434 = vunpack.c.l.bf16 %v370
    %v435 = vunpack.c.l.bf16 %v371
    %v436 = vunpack.c.l.bf16 %v372
    %v437 = vunpack.c.l.bf16 %v373
    %v438 = vunpack.c.l.bf16 %v374
    %v439 = vunpack.c.l.bf16 %v375
    %v440 = vunpack.c.l.bf16 %v376
    %v441 = vunpack.c.l.bf16 %v377
    %v442 = vunpack.c.l.bf16 %v378
    %v443 = vunpack.c.l.bf16 %v379
    %v444 = vunpack.c.l.bf16 %v380
    %v445 = vunpack.c.l.bf16 %v381
    %v446 = vunpack.c.l.bf16 %v382
    %v447 = vunpack.c.l.bf16 %v383
    %v448 = vunpack.c.l.bf16 %v384
    %v449 = vunpack.c.l.bf16 %v385
    %v450 = vunpack.c.l.bf16 %v386
    %v451 = vunpack.c.l.bf16 %v387
    %v452 = vunpack.c.l.bf16 %v388
    %v453 = vunpack.c.l.bf16 %v389
    %v454 = vunpack.c.l.bf16 %v390
    %v455 = vunpack.c.l.bf16 %v391
    %v456 = vunpack.c.l.bf16 %v392
    %v457 = vunpack.c.l.bf16 %v393
    %v458 = vunpack.c.l.bf16 %v394
    %v459 = vunpack.c.l.bf16 %v395
    %v460 = vunpack.c.l.bf16 %v396
    %v461 = vunpack.c.l.bf16 %v397
    %v462 = vunpack.c.l.bf16 %v398
    %v463 = vunpack.c.l.bf16 %v399
    %v464 = vunpack.c.l.bf16 %v400
    %v465 = vunpack.c.l.bf16 %v401
    %v466 = vunpack.c.l.bf16 %v402
    %v467 = vunpack.c.l.bf16 %v403
    %v468 = vunpack.c.l.bf16 %v404
    %v469 = vunpack.c.l.bf16 %v405
    %v470 = vunpack.c.l.bf16 %v406
    %v471 = vunpack.c.l.bf16 %v407
    %v472 = vunpack.c.l.bf16 %v408
    %v473 = vunpack.c.l.bf16 %v409
    %v474 = vunpack.c.l.bf16 %v410
    %v475 = vunpack.c.l.bf16 %v411
    %v476 = vunpack.c.l.bf16 %v412
    %v477 = vunpack.c.l.bf16 %v413
    %v478 = vunpack.c.l.bf16 %v414
    %v479 = vunpack.c.l.bf16 %v415
    %v480 = vunpack.c.l.bf16 %v416
    %v481 = vunpack.c.l.bf16 %v417
    %v482 = vunpack.c.l.bf16 %v418
    %v483 = vunpack.c.l.bf16 %v419
    %v484 = vunpack.c.l.bf16 %v420
    %v485 = vunpack.c.l.bf16 %v421
    %v486 = vunpack.c.l.bf16 %v422
    %v487 = vunpack.c.l.bf16 %v423
    %v488 = vunpack.c.l.bf16 %v424
    %v489 = vunpack.c.l.bf16 %v425
    %v490 = vunpack.c.l.bf16 %v426
    %v491 = vunpack.c.l.bf16 %v427
    %v492 = vunpack.c.l.bf16 %v428
    %v493 = vunpack.c.l.bf16 %v429
    %v494 = vunpack.c.l.bf16 %v430
    %v495 = vunpack.c.l.bf16 %v431
    %v496 = vld [vmem:[#allocation10] sm:$0x1]
    %v498 = vlaneseq
    %v499 = vshrl.u32 %v498, 7
    %v500 = vsub.s32 0, %v499
    %v501 = vrot.slane %v496, %v500
    %v503 = vmul.f32 %v432, %v501
    %v504 = vmul.f32 %v433, %v501
    %v505 = vmul.f32 %v434, %v501
    %v506 = vmul.f32 %v435, %v501
    %v507 = vmul.f32 %v436, %v501
    %v508 = vmul.f32 %v437, %v501
    %v509 = vmul.f32 %v438, %v501
    %v510 = vmul.f32 %v439, %v501
    %v511 = vmul.f32 %v440, %v501
    %v512 = vmul.f32 %v441, %v501
    %v513 = vmul.f32 %v442, %v501
    %v514 = vmul.f32 %v443, %v501
    %v515 = vmul.f32 %v444, %v501
    %v516 = vmul.f32 %v445, %v501
    %v517 = vmul.f32 %v446, %v501
    %v518 = vmul.f32 %v447, %v501
    %v519 = vmul.f32 %v448, %v501
    %v520 = vmul.f32 %v449, %v501
    %v521 = vmul.f32 %v450, %v501
    %v522 = vmul.f32 %v451, %v501
    %v523 = vmul.f32 %v452, %v501
    %v524 = vmul.f32 %v453, %v501
    %v525 = vmul.f32 %v454, %v501
    %v526 = vmul.f32 %v455, %v501
    %v527 = vmul.f32 %v456, %v501
    %v528 = vmul.f32 %v457, %v501
    %v529 = vmul.f32 %v458, %v501
    %v530 = vmul.f32 %v459, %v501
    %v531 = vmul.f32 %v460, %v501
    %v532 = vmul.f32 %v461, %v501
    %v533 = vmul.f32 %v462, %v501
    %v534 = vmul.f32 %v463, %v501
    %v535 = vmul.f32 %v464, %v501
    %v536 = vmul.f32 %v465, %v501
    %v537 = vmul.f32 %v466, %v501
    %v538 = vmul.f32 %v467, %v501
    %v539 = vmul.f32 %v468, %v501
    %v540 = vmul.f32 %v469, %v501
    %v541 = vmul.f32 %v470, %v501
    %v542 = vmul.f32 %v471, %v501
    %v543 = vmul.f32 %v472, %v501
    %v544 = vmul.f32 %v473, %v501
    %v545 = vmul.f32 %v474, %v501
    %v546 = vmul.f32 %v475, %v501
    %v547 = vmul.f32 %v476, %v501
    %v548 = vmul.f32 %v477, %v501
    %v549 = vmul.f32 %v478, %v501
    %v550 = vmul.f32 %v479, %v501
    %v551 = vmul.f32 %v480, %v501
    %v552 = vmul.f32 %v481, %v501
    %v553 = vmul.f32 %v482, %v501
    %v554 = vmul.f32 %v483, %v501
    %v555 = vmul.f32 %v484, %v501
    %v556 = vmul.f32 %v485, %v501
    %v557 = vmul.f32 %v486, %v501
    %v558 = vmul.f32 %v487, %v501
    %v559 = vmul.f32 %v488, %v501
    %v560 = vmul.f32 %v489, %v501
    %v561 = vmul.f32 %v490, %v501
    %v562 = vmul.f32 %v491, %v501
    %v563 = vmul.f32 %v492, %v501
    %v564 = vmul.f32 %v493, %v501
    %v565 = vmul.f32 %v494, %v501
    %v566 = vmul.f32 %v495, %v501
    %v567 = vld [vmem:[#allocation11] sm:$0x1]
    %v569 = vlaneseq
    %v570 = vshrl.u32 %v569, 7
    %v571 = vsub.s32 0, %v570
    %v572 = vrot.slane %v567, %v571
    %v574 = vadd.f32 %v503, %v572
    %v575 = vadd.f32 %v504, %v572
    %v576 = vadd.f32 %v505, %v572
    %v577 = vadd.f32 %v506, %v572
    %v578 = vadd.f32 %v507, %v572
    %v579 = vadd.f32 %v508, %v572
    %v580 = vadd.f32 %v509, %v572
    %v581 = vadd.f32 %v510, %v572
    %v582 = vadd.f32 %v511, %v572
    %v583 = vadd.f32 %v512, %v572
    %v584 = vadd.f32 %v513, %v572
    %v585 = vadd.f32 %v514, %v572
    %v586 = vadd.f32 %v515, %v572
    %v587 = vadd.f32 %v516, %v572
    %v588 = vadd.f32 %v517, %v572
    %v589 = vadd.f32 %v518, %v572
    %v590 = vadd.f32 %v519, %v572
    %v591 = vadd.f32 %v520, %v572
    %v592 = vadd.f32 %v521, %v572
    %v593 = vadd.f32 %v522, %v572
    %v594 = vadd.f32 %v523, %v572
    %v595 = vadd.f32 %v524, %v572
    %v596 = vadd.f32 %v525, %v572
    %v597 = vadd.f32 %v526, %v572
    %v598 = vadd.f32 %v527, %v572
    %v599 = vadd.f32 %v528, %v572
    %v600 = vadd.f32 %v529, %v572
    %v601 = vadd.f32 %v530, %v572
    %v602 = vadd.f32 %v531, %v572
    %v603 = vadd.f32 %v532, %v572
    %v604 = vadd.f32 %v533, %v572
    %v605 = vadd.f32 %v534, %v572
    %v606 = vadd.f32 %v535, %v572
    %v607 = vadd.f32 %v536, %v572
    %v608 = vadd.f32 %v537, %v572
    %v609 = vadd.f32 %v538, %v572
    %v610 = vadd.f32 %v539, %v572
    %v611 = vadd.f32 %v540, %v572
    %v612 = vadd.f32 %v541, %v572
    %v613 = vadd.f32 %v542, %v572
    %v614 = vadd.f32 %v543, %v572
    %v615 = vadd.f32 %v544, %v572
    %v616 = vadd.f32 %v545, %v572
    %v617 = vadd.f32 %v546, %v572
    %v618 = vadd.f32 %v547, %v572
    %v619 = vadd.f32 %v548, %v572
    %v620 = vadd.f32 %v549, %v572
    %v621 = vadd.f32 %v550, %v572
    %v622 = vadd.f32 %v551, %v572
    %v623 = vadd.f32 %v552, %v572
    %v624 = vadd.f32 %v553, %v572
    %v625 = vadd.f32 %v554, %v572
    %v626 = vadd.f32 %v555, %v572
    %v627 = vadd.f32 %v556, %v572
    %v628 = vadd.f32 %v557, %v572
    %v629 = vadd.f32 %v558, %v572
    %v630 = vadd.f32 %v559, %v572
    %v631 = vadd.f32 %v560, %v572
    %v632 = vadd.f32 %v561, %v572
    %v633 = vadd.f32 %v562, %v572
    %v634 = vadd.f32 %v563, %v572
    %v635 = vadd.f32 %v564, %v572
    %v636 = vadd.f32 %v565, %v572
    %v637 = vadd.f32 %v566, %v572
    %v638 = vadd.f32 %v304, %v574
    %v639 = vadd.f32 %v305, %v575
    %v640 = vadd.f32 %v306, %v576
    %v641 = vadd.f32 %v307, %v577
    %v642 = vadd.f32 %v308, %v578
    %v643 = vadd.f32 %v309, %v579
    %v644 = vadd.f32 %v310, %v580
    %v645 = vadd.f32 %v311, %v581
    %v646 = vadd.f32 %v312, %v582
    %v647 = vadd.f32 %v313, %v583
    %v648 = vadd.f32 %v314, %v584
    %v649 = vadd.f32 %v315, %v585
    %v650 = vadd.f32 %v316, %v586
    %v651 = vadd.f32 %v317, %v587
    %v652 = vadd.f32 %v318, %v588
    %v653 = vadd.f32 %v319, %v589
    %v654 = vadd.f32 %v320, %v590
    %v655 = vadd.f32 %v321, %v591
    %v656 = vadd.f32 %v322, %v592
    %v657 = vadd.f32 %v323, %v593
    %v658 = vadd.f32 %v324, %v594
    %v659 = vadd.f32 %v325, %v595
    %v660 = vadd.f32 %v326, %v596
    %v661 = vadd.f32 %v327, %v597
    %v662 = vadd.f32 %v328, %v598
    %v663 = vadd.f32 %v329, %v599
    %v664 = vadd.f32 %v330, %v600
    %v665 = vadd.f32 %v331, %v601
    %v666 = vadd.f32 %v332, %v602
    %v667 = vadd.f32 %v333, %v603
    %v668 = vadd.f32 %v334, %v604
    %v669 = vadd.f32 %v335, %v605
    %v670 = vadd.f32 %v336, %v606
    %v671 = vadd.f32 %v337, %v607
    %v672 = vadd.f32 %v338, %v608
    %v673 = vadd.f32 %v339, %v609
    %v674 = vadd.f32 %v340, %v610
    %v675 = vadd.f32 %v341, %v611
    %v676 = vadd.f32 %v342, %v612
    %v677 = vadd.f32 %v343, %v613
    %v678 = vadd.f32 %v344, %v614
    %v679 = vadd.f32 %v345, %v615
    %v680 = vadd.f32 %v346, %v616
    %v681 = vadd.f32 %v347, %v617
    %v682 = vadd.f32 %v348, %v618
    %v683 = vadd.f32 %v349, %v619
    %v684 = vadd.f32 %v350, %v620
    %v685 = vadd.f32 %v351, %v621
    %v686 = vadd.f32 %v352, %v622
    %v687 = vadd.f32 %v353, %v623
    %v688 = vadd.f32 %v354, %v624
    %v689 = vadd.f32 %v355, %v625
    %v690 = vadd.f32 %v356, %v626
    %v691 = vadd.f32 %v357, %v627
    %v692 = vadd.f32 %v358, %v628
    %v693 = vadd.f32 %v359, %v629
    %v694 = vadd.f32 %v360, %v630
    %v695 = vadd.f32 %v361, %v631
    %v696 = vadd.f32 %v362, %v632
    %v697 = vadd.f32 %v363, %v633
    %v698 = vadd.f32 %v364, %v634
    %v699 = vadd.f32 %v365, %v635
    %v700 = vadd.f32 %v366, %v636
    %v701 = vadd.f32 %v367, %v637
    %v702 = vmax.f32 %v638, 0.0
    %v703 = vmax.f32 %v639, 0.0
    %v704 = vmax.f32 %v640, 0.0
    %v705 = vmax.f32 %v641, 0.0
    %v706 = vmax.f32 %v642, 0.0
    %v707 = vmax.f32 %v643, 0.0
    %v708 = vmax.f32 %v644, 0.0
    %v709 = vmax.f32 %v645, 0.0
    %v710 = vmax.f32 %v646, 0.0
    %v711 = vmax.f32 %v647, 0.0
    %v712 = vmax.f32 %v648, 0.0
    %v713 = vmax.f32 %v649, 0.0
    %v714 = vmax.f32 %v650, 0.0
    %v715 = vmax.f32 %v651, 0.0
    %v716 = vmax.f32 %v652, 0.0
    %v717 = vmax.f32 %v653, 0.0
    %v718 = vmax.f32 %v654, 0.0
    %v719 = vmax.f32 %v655, 0.0
    %v720 = vmax.f32 %v656, 0.0
    %v721 = vmax.f32 %v657, 0.0
    %v722 = vmax.f32 %v658, 0.0
    %v723 = vmax.f32 %v659, 0.0
    %v724 = vmax.f32 %v660, 0.0
    %v725 = vmax.f32 %v661, 0.0
    %v726 = vmax.f32 %v662, 0.0
    %v727 = vmax.f32 %v663, 0.0
    %v728 = vmax.f32 %v664, 0.0
    %v729 = vmax.f32 %v665, 0.0
    %v730 = vmax.f32 %v666, 0.0
    %v731 = vmax.f32 %v667, 0.0
    %v732 = vmax.f32 %v668, 0.0
    %v733 = vmax.f32 %v669, 0.0
    %v734 = vmax.f32 %v670, 0.0
    %v735 = vmax.f32 %v671, 0.0
    %v736 = vmax.f32 %v672, 0.0
    %v737 = vmax.f32 %v673, 0.0
    %v738 = vmax.f32 %v674, 0.0
    %v739 = vmax.f32 %v675, 0.0
    %v740 = vmax.f32 %v676, 0.0
    %v741 = vmax.f32 %v677, 0.0
    %v742 = vmax.f32 %v678, 0.0
    %v743 = vmax.f32 %v679, 0.0
    %v744 = vmax.f32 %v680, 0.0
    %v745 = vmax.f32 %v681, 0.0
    %v746 = vmax.f32 %v682, 0.0
    %v747 = vmax.f32 %v683, 0.0
    %v748 = vmax.f32 %v684, 0.0
    %v749 = vmax.f32 %v685, 0.0
    %v750 = vmax.f32 %v686, 0.0
    %v751 = vmax.f32 %v687, 0.0
    %v752 = vmax.f32 %v688, 0.0
    %v753 = vmax.f32 %v689, 0.0
    %v754 = vmax.f32 %v690, 0.0
    %v755 = vmax.f32 %v691, 0.0
    %v756 = vmax.f32 %v692, 0.0
    %v757 = vmax.f32 %v693, 0.0
    %v758 = vmax.f32 %v694, 0.0
    %v759 = vmax.f32 %v695, 0.0
    %v760 = vmax.f32 %v696, 0.0
    %v761 = vmax.f32 %v697, 0.0
    %v762 = vmax.f32 %v698, 0.0
    %v763 = vmax.f32 %v699, 0.0
    %v764 = vmax.f32 %v700, 0.0
    %v765 = vmax.f32 %v701, 0.0
    %766 = vst [vmem:[#allocation13] sm:$0xff] %v702
    %767 = vst [vmem:[#allocation13 + $0x8] sm:$0xff] %v703
    %768 = vst [vmem:[#allocation13 + $0x10] sm:$0xff] %v704
    %769 = vst [vmem:[#allocation13 + $0x18] sm:$0xff] %v705
    %770 = vst [vmem:[#allocation13 + $0x20] sm:$0xff] %v706
    %771 = vst [vmem:[#allocation13 + $0x28] sm:$0xff] %v707
    %772 = vst [vmem:[#allocation13 + $0x30] sm:$0xff] %v708
    %773 = vst [vmem:[#allocation13 + $0x38] sm:$0xff] %v709
    %774 = vst [vmem:[#allocation13 + $0x40] sm:$0xff] %v710
    %775 = vst [vmem:[#allocation13 + $0x48] sm:$0xff] %v711
    %776 = vst [vmem:[#allocation13 + $0x50] sm:$0xff] %v712
    %777 = vst [vmem:[#allocation13 + $0x58] sm:$0xff] %v713
    %778 = vst [vmem:[#allocation13 + $0x60] sm:$0xff] %v714
    %779 = vst [vmem:[#allocation13 + $0x68] sm:$0xff] %v715
    %780 = vst [vmem:[#allocation13 + $0x70] sm:$0xff] %v716
    %781 = vst [vmem:[#allocation13 + $0x78] sm:$0xff] %v717
    %782 = vst [vmem:[#allocation13 + $0x80] sm:$0xff] %v718
    %783 = vst [vmem:[#allocation13 + $0x88] sm:$0xff] %v719
    %784 = vst [vmem:[#allocation13 + $0x90] sm:$0xff] %v720
    %785 = vst [vmem:[#allocation13 + $0x98] sm:$0xff] %v721
    %786 = vst [vmem:[#allocation13 + $0xa0] sm:$0xff] %v722
    %787 = vst [vmem:[#allocation13 + $0xa8] sm:$0xff] %v723
    %788 = vst [vmem:[#allocation13 + $0xb0] sm:$0xff] %v724
    %789 = vst [vmem:[#allocation13 + $0xb8] sm:$0xff] %v725
    %790 = vst [vmem:[#allocation13 + $0xc0] sm:$0xff] %v726
    %791 = vst [vmem:[#allocation13 + $0xc8] sm:$0xff] %v727
    %792 = vst [vmem:[#allocation13 + $0xd0] sm:$0xff] %v728
    %793 = vst [vmem:[#allocation13 + $0xd8] sm:$0xff] %v729
    %794 = vst [vmem:[#allocation13 + $0xe0] sm:$0xff] %v730
    %795 = vst [vmem:[#allocation13 + $0xe8] sm:$0xff] %v731
    %796 = vst [vmem:[#allocation13 + $0xf0] sm:$0xff] %v732
    %797 = vst [vmem:[#allocation13 + $0xf8] sm:$0xff] %v733
    %798 = vst [vmem:[#allocation13 + $0x100] sm:$0xff] %v734
    %799 = vst [vmem:[#allocation13 + $0x108] sm:$0xff] %v735
    %800 = vst [vmem:[#allocation13 + $0x110] sm:$0xff] %v736
    %801 = vst [vmem:[#allocation13 + $0x118] sm:$0xff] %v737
    %802 = vst [vmem:[#allocation13 + $0x120] sm:$0xff] %v738
    %803 = vst [vmem:[#allocation13 + $0x128] sm:$0xff] %v739
    %804 = vst [vmem:[#allocation13 + $0x130] sm:$0xff] %v740
    %805 = vst [vmem:[#allocation13 + $0x138] sm:$0xff] %v741
    %806 = vst [vmem:[#allocation13 + $0x140] sm:$0xff] %v742
    %807 = vst [vmem:[#allocation13 + $0x148] sm:$0xff] %v743
    %808 = vst [vmem:[#allocation13 + $0x150] sm:$0xff] %v744
    %809 = vst [vmem:[#allocation13 + $0x158] sm:$0xff] %v745
    %810 = vst [vmem:[#allocation13 + $0x160] sm:$0xff] %v746
    %811 = vst [vmem:[#allocation13 + $0x168] sm:$0xff] %v747
    %812 = vst [vmem:[#allocation13 + $0x170] sm:$0xff] %v748
    %813 = vst [vmem:[#allocation13 + $0x178] sm:$0xff] %v749
    %814 = vst [vmem:[#allocation13 + $0x180] sm:$0xff] %v750
    %815 = vst [vmem:[#allocation13 + $0x188] sm:$0xff] %v751
    %816 = vst [vmem:[#allocation13 + $0x190] sm:$0xff] %v752
    %817 = vst [vmem:[#allocation13 + $0x198] sm:$0xff] %v753
    %818 = vst [vmem:[#allocation13 + $0x1a0] sm:$0xff] %v754
    %819 = vst [vmem:[#allocation13 + $0x1a8] sm:$0xff] %v755
    %820 = vst [vmem:[#allocation13 + $0x1b0] sm:$0xff] %v756
    %821 = vst [vmem:[#allocation13 + $0x1b8] sm:$0xff] %v757
    %822 = vst [vmem:[#allocation13 + $0x1c0] sm:$0xff] %v758
    %823 = vst [vmem:[#allocation13 + $0x1c8] sm:$0xff] %v759
    %824 = vst [vmem:[#allocation13 + $0x1d0] sm:$0xff] %v760
    %825 = vst [vmem:[#allocation13 + $0x1d8] sm:$0xff] %v761
    %826 = vst [vmem:[#allocation13 + $0x1e0] sm:$0xff] %v762
    %827 = vst [vmem:[#allocation13 + $0x1e8] sm:$0xff] %v763
    %828 = vst [vmem:[#allocation13 + $0x1f0] sm:$0xff] %v764
    %829 = vst [vmem:[#allocation13 + $0x1f8] sm:$0xff] %v765
    // Predicated region
    $region50: #{bottleneck_with_batchnorm.7} parent=1 // pred_check
      _
    $region51: #{bottleneck_with_batchnorm.7} parent=1 // pred_check_branch
      %831 = sbr.rel (0) target = $region53
    $region52: #{bottleneck_with_batchnorm.7} parent=1 // pred_region
      %s833 = ssub.s32 8192, 8192
      %834 = vsyncadd [#allocation4], %s833
      %s835 = sshll.u32 [#allocation13], 4
      %s836 = int_to_ptr.vmem [resolvable:$true] %s835
      %841 = dma.vmem_to_hbm [thread:$0]  %s836, 8192, %s6, [#allocation4], 128, 128, 8
    $region53: #{bottleneck_with_batchnorm.7} parent=1 // pred_fallthru
      _
    // Predicated region
    $region54: #{bottleneck_with_batchnorm.7} parent=1 // pred_check
      _
    $region55: #{bottleneck_with_batchnorm.7} parent=1 // pred_check_branch
      %843 = sbr.rel (0) target = $region57
    $region56: #{bottleneck_with_batchnorm.7} parent=1 // pred_region
      %844 = dma.done [#allocation4], 8192
    $region57: #{bottleneck_with_batchnorm.7} parent=1 // pred_fallthru
      _
    %845 = vsyncpa [#allocation3], 1
    %846 = vsyncpa [#allocation6], 1
    %847 = vsyncpa [#allocation9], 1
    %848 = vsyncpa [#allocation12], 1
    %849 = vsyncpa [#allocation4], 1

// kernel: bottleneck_with_batchnorm.5
$region0: #{bottleneck_with_batchnorm.5}
  #allocation0 [shape = 'u32[]', space=smem, size = 0x4, offset = 0x4, fixed_abs, tag = 'smem constant byte address 0x4 - core index']
  #allocation1 [shape = 'u32[144,128]{1,0:T(1,128)}', space=vmem, size = 0x12000, scoped, tag = 'internal scratch']
  #allocation2 [shape = 'f32[342,128]{1,0:T(8,128)}', space=vmem, size = 0x2b000, scoped, tag = 'scratch operand']
  %s0 = inlined_call_operand.hbm [shape: bf16[2,342,128], index: 0, kind: input, shape index: {}]
  %s1 = inlined_call_operand.hbm [shape: f32[1,128], index: 1, kind: input, shape index: {}]
  %s2 = inlined_call_operand.hbm [shape: f32[1,128], index: 2, kind: input, shape index: {}]
  %s3 = inlined_call_operand.hbm [shape: bf16[9,128,128], index: 3, kind: input, shape index: {}]
  %s4 = inlined_call_operand.hbm [shape: f32[342,1], index: 4, kind: input, shape index: {}]
  %s5 = inlined_call_operand.hbm [shape: f32[288,1], index: 5, kind: input, shape index: {}]
  %s6 = inlined_call_operand.hbm [shape: bf16[2,288,128], index: 6, kind: output, shape index: {0}]
  %s7 = inlined_call_operand.hbm [shape: f32[2,2,128], index: 7, kind: output, shape index: {1}]
  %8 = xla_tuple %s6, %s7
  %s9 = sld [smem:[#allocation0]]
  $region89: #{bottleneck_with_batchnorm.5} parent=0
    _
  %s11 = ssub.s32 1, %s9
  %s12 = scalar_select 0, %s11, %s9
  $region1: #{bottleneck_with_batchnorm.5} parent=0
    #allocation3 [shape = 'u8[176128]{0}', space=vmem, size = 0x2b000, scoped, tag = 'input window, operand 0']
    #allocation4 [shape = 's32[2]{0}', space=sflag, size = 0x8, scoped, tag = 'scoped memory for bottleneck_with_batchnorm.5']
    #allocation5 [shape = 's32[2]{0}', space=sflag, size = 0x8, scoped, tag = 'scoped memory for bottleneck_with_batchnorm.5']
    #allocation6 [shape = 'u8[512]{0}', space=vmem, size = 0x400, scoped, tag = 'input window, operand 1, single buffered']
    #allocation7 [shape = 's32[1]{0}', space=sflag, size = 0x4, scoped, tag = 'scoped memory for bottleneck_with_batchnorm.5']
    #allocation8 [shape = 'u8[512]{0}', space=vmem, size = 0x400, scoped, tag = 'input window, operand 2, single buffered']
    #allocation9 [shape = 'u8[294912]{0}', space=vmem, size = 0x48000, scoped, tag = 'input window, operand 3, single buffered']
    #allocation10 [shape = 's32[1]{0}', space=sflag, size = 0x4, scoped, tag = 'scoped memory for bottleneck_with_batchnorm.5']
    #allocation11 [shape = 'u8[176128]{0}', space=vmem, size = 0x2b000, scoped, tag = 'input window, operand 4, single buffered']
    #allocation12 [shape = 'u8[147456]{0}', space=vmem, size = 0x24000, scoped, tag = 'input window, operand 5, single buffered']
    #allocation13 [shape = 's32[1]{0}', space=sflag, size = 0x4, scoped, tag = 'scoped memory for bottleneck_with_batchnorm.5']
    #allocation14 [shape = 'u8[147456]{0}', space=vmem, size = 0x24000, scoped, tag = 'output window, operand 0']
    #allocation15 [shape = 'u8[2048]{0}', space=vmem, size = 0x800, scoped, tag = 'output window, operand 1']
    #allocation16 [shape = 's32[2]{0}', space=sflag, size = 0x8, scoped, tag = 'scoped memory for bottleneck_with_batchnorm.5']
    %13 = vsyncpa [#allocation4], 0
    %s14 = scalar_lea.sflag [#allocation4], 1
    %15 = vsyncpa %s14, 0
    %16 = vsyncpa [#allocation7], 0
    %17 = vsyncpa [#allocation10], 0
    %18 = vsyncpa [#allocation13], 0
    %19 = vsyncpa [#allocation5], 0
    %s20 = scalar_lea.sflag [#allocation5], 1
    %21 = vsyncpa %s20, 0
    %22 = vsyncpa [#allocation16], 0
    %s23 = scalar_lea.sflag [#allocation16], 1
    %24 = vsyncpa %s23, 0
    loop: start=0, step=1, limit=4
    $region2: #{bottleneck_with_batchnorm.5} parent=1 // loop_pre_header
      _
    $region3: #{bottleneck_with_batchnorm.5} parent=1 // loop_header
      %s26 = sphi 0, %s30
      %p27 = scmp.ge.s32.totalorder %s26, 4
      %s36 = sphi 0, %s38
      %s39 = sphi 0, %s36
      %s40 = sphi 0, %s39
      %s56 = sphi 0, %s40
      %s60 = sphi 0, %s60
      %s62 = sphi 0, %s60
      %s63 = sphi 0, %s62
      %s77 = sphi 0, %s63
      %s81 = sphi 0, %s81
      %s83 = sphi 0, %s81
      %s84 = sphi 0, %s83
      %s98 = sphi 0, %s84
      %s102 = sphi 0, %s102
      %s104 = sphi 0, %s102
      %s105 = sphi 0, %s104
      %s119 = sphi 0, %s105
      %s123 = sphi 0, %s123
      %s125 = sphi 0, %s123
      %s126 = sphi 0, %s125
      %s140 = sphi 0, %s126
      %s144 = sphi 0, %s144
      %s146 = sphi 0, %s144
      %s147 = sphi 0, %s146
      %s161 = sphi 0, %s147
      %s167 = sphi 0, %s169
      %s170 = sphi 0, %s167
      %s171 = sphi 0, %s170
      %s187 = sphi 0, %s171
      %s193 = sphi 0, %s195
      %s196 = sphi 0, %s193
      %s197 = sphi 0, %s196
      %s213 = sphi 0, %s197
    $region4: #{bottleneck_with_batchnorm.5} parent=1 // loop_header_branch
      %29 = sbr.rel (%p27) target = $region8
    $region5: #{bottleneck_with_batchnorm.5} parent=1 // loop_body
      %s31 = ssub.s32 %s26, 1
      %s32 = ssub.s32 %s26, 2
      %s33 = sadd.s32 %s26, 1
      %s34 = ssub.s32 %s26, %s33
      %p35 = scmp.eq.s32.totalorder %s34, 0
      %s37 = sadd.s32 %s36, 1
      %s38 = scalar_select %p35, %s36, %s37
      %p41 = pneg %p35
      %p42 = scmp.eq.s32.totalorder %s26, 1
      %p43 = por %p41, %p42
      %p44 = scmp.ne.s32.totalorder %s36, %s39
      %p45 = scmp.eq.s32.totalorder %s26, 0
      %p46 = por %p44, %p45
      %p47 = scmp.ne.s32.totalorder %s36, %s39
      %p48 = scmp.eq.s32.totalorder %s31, 1
      %p49 = por %p47, %p48
      %p50 = scmp.ne.s32.totalorder %s39, %s40
      %p51 = scmp.eq.s32.totalorder %s31, 0
      %p52 = por %p50, %p51
      %p53 = scmp.ne.s32.totalorder %s39, %s40
      %p54 = scmp.eq.s32.totalorder %s32, 1
      %p55 = por %p53, %p54
      %p57 = scmp.ne.s32.totalorder %s40, %s56
      %p58 = scmp.eq.s32.totalorder %s32, 0
      %p59 = por %p57, %p58
      %s61 = sadd.s32 %s60, 1
      %p64 = scmp.eq.s32.totalorder %s26, 1
      %p65 = scmp.ne.s32.totalorder %s60, %s62
      %p66 = scmp.eq.s32.totalorder %s26, 0
      %p67 = por %p65, %p66
      %p68 = scmp.ne.s32.totalorder %s60, %s62
      %p69 = scmp.eq.s32.totalorder %s31, 1
      %p70 = por %p68, %p69
      %p71 = scmp.ne.s32.totalorder %s62, %s63
      %p72 = scmp.eq.s32.totalorder %s31, 0
      %p73 = por %p71, %p72
      %p74 = scmp.ne.s32.totalorder %s62, %s63
      %p75 = scmp.eq.s32.totalorder %s32, 1
      %p76 = por %p74, %p75
      %p78 = scmp.ne.s32.totalorder %s63, %s77
      %p79 = scmp.eq.s32.totalorder %s32, 0
      %p80 = por %p78, %p79
      %s82 = sadd.s32 %s81, 1
      %p85 = scmp.eq.s32.totalorder %s26, 1
      %p86 = scmp.ne.s32.totalorder %s81, %s83
      %p87 = scmp.eq.s32.totalorder %s26, 0
      %p88 = por %p86, %p87
      %p89 = scmp.ne.s32.totalorder %s81, %s83
      %p90 = scmp.eq.s32.totalorder %s31, 1
      %p91 = por %p89, %p90
      %p92 = scmp.ne.s32.totalorder %s83, %s84
      %p93 = scmp.eq.s32.totalorder %s31, 0
      %p94 = por %p92, %p93
      %p95 = scmp.ne.s32.totalorder %s83, %s84
      %p96 = scmp.eq.s32.totalorder %s32, 1
      %p97 = por %p95, %p96
      %p99 = scmp.ne.s32.totalorder %s84, %s98
      %p100 = scmp.eq.s32.totalorder %s32, 0
      %p101 = por %p99, %p100
      %s103 = sadd.s32 %s102, 1
      %p106 = scmp.eq.s32.totalorder %s26, 1
      %p107 = scmp.ne.s32.totalorder %s102, %s104
      %p108 = scmp.eq.s32.totalorder %s26, 0
      %p109 = por %p107, %p108
      %p110 = scmp.ne.s32.totalorder %s102, %s104
      %p111 = scmp.eq.s32.totalorder %s31, 1
      %p112 = por %p110, %p111
      %p113 = scmp.ne.s32.totalorder %s104, %s105
      %p114 = scmp.eq.s32.totalorder %s31, 0
      %p115 = por %p113, %p114
      %p116 = scmp.ne.s32.totalorder %s104, %s105
      %p117 = scmp.eq.s32.totalorder %s32, 1
      %p118 = por %p116, %p117
      %p120 = scmp.ne.s32.totalorder %s105, %s119
      %p121 = scmp.eq.s32.totalorder %s32, 0
      %p122 = por %p120, %p121
      %s124 = sadd.s32 %s123, 1
      %p127 = scmp.eq.s32.totalorder %s26, 1
      %p128 = scmp.ne.s32.totalorder %s123, %s125
      %p129 = scmp.eq.s32.totalorder %s26, 0
      %p130 = por %p128, %p129
      %p131 = scmp.ne.s32.totalorder %s123, %s125
      %p132 = scmp.eq.s32.totalorder %s31, 1
      %p133 = por %p131, %p132
      %p134 = scmp.ne.s32.totalorder %s125, %s126
      %p135 = scmp.eq.s32.totalorder %s31, 0
      %p136 = por %p134, %p135
      %p137 = scmp.ne.s32.totalorder %s125, %s126
      %p138 = scmp.eq.s32.totalorder %s32, 1
      %p139 = por %p137, %p138
      %p141 = scmp.ne.s32.totalorder %s126, %s140
      %p142 = scmp.eq.s32.totalorder %s32, 0
      %p143 = por %p141, %p142
      %s145 = sadd.s32 %s144, 1
      %p148 = scmp.eq.s32.totalorder %s26, 1
      %p149 = scmp.ne.s32.totalorder %s144, %s146
      %p150 = scmp.eq.s32.totalorder %s26, 0
      %p151 = por %p149, %p150
      %p152 = scmp.ne.s32.totalorder %s144, %s146
      %p153 = scmp.eq.s32.totalorder %s31, 1
      %p154 = por %p152, %p153
      %p155 = scmp.ne.s32.totalorder %s146, %s147
      %p156 = scmp.eq.s32.totalorder %s31, 0
      %p157 = por %p155, %p156
      %p158 = scmp.ne.s32.totalorder %s146, %s147
      %p159 = scmp.eq.s32.totalorder %s32, 1
      %p160 = por %p158, %p159
      %p162 = scmp.ne.s32.totalorder %s147, %s161
      %p163 = scmp.eq.s32.totalorder %s32, 0
      %p164 = por %p162, %p163
      %s165 = ssub.s32 %s26, %s33
      %p166 = scmp.eq.s32.totalorder %s165, 0
      %s168 = sadd.s32 %s167, 1
      %s169 = scalar_select %p166, %s167, %s168
      %p172 = pneg %p166
      %p173 = scmp.eq.s32.totalorder %s26, 1
      %p174 = por %p172, %p173
      %p175 = scmp.ne.s32.totalorder %s167, %s170
      %p176 = scmp.eq.s32.totalorder %s26, 0
      %p177 = por %p175, %p176
      %p178 = scmp.ne.s32.totalorder %s167, %s170
      %p179 = scmp.eq.s32.totalorder %s31, 1
      %p180 = por %p178, %p179
      %p181 = scmp.ne.s32.totalorder %s170, %s171
      %p182 = scmp.eq.s32.totalorder %s31, 0
      %p183 = por %p181, %p182
      %p184 = scmp.ne.s32.totalorder %s170, %s171
      %p185 = scmp.eq.s32.totalorder %s32, 1
      %p186 = por %p184, %p185
      %p188 = scmp.ne.s32.totalorder %s171, %s187
      %p189 = scmp.eq.s32.totalorder %s32, 0
      %p190 = por %p188, %p189
      %s191 = ssub.s32 %s26, %s33
      %p192 = scmp.eq.s32.totalorder %s191, 0
      %s194 = sadd.s32 %s193, 1
      %s195 = scalar_select %p192, %s193, %s194
      %p198 = pneg %p192
      %p199 = scmp.eq.s32.totalorder %s26, 1
      %p200 = por %p198, %p199
      %p201 = scmp.ne.s32.totalorder %s193, %s196
      %p202 = scmp.eq.s32.totalorder %s26, 0
      %p203 = por %p201, %p202
      %p204 = scmp.ne.s32.totalorder %s193, %s196
      %p205 = scmp.eq.s32.totalorder %s31, 1
      %p206 = por %p204, %p205
      %p207 = scmp.ne.s32.totalorder %s196, %s197
      %p208 = scmp.eq.s32.totalorder %s31, 0
      %p209 = por %p207, %p208
      %p210 = scmp.ne.s32.totalorder %s196, %s197
      %p211 = scmp.eq.s32.totalorder %s32, 1
      %p212 = por %p210, %p211
      %p214 = scmp.ne.s32.totalorder %s197, %s213
      %p215 = scmp.eq.s32.totalorder %s32, 0
      %p216 = por %p214, %p215
      %p217 = scmp.le.s32.totalorder 1, %s26
      %p218 = scmp.lt.s32.totalorder %s26, 3
      %p219 = pnand %p217, %p218
      %p220 = pneg %p219
      // Predicated region
      $region9: #{bottleneck_with_batchnorm.5} parent=5 // pred_check
        _
      $region10: #{bottleneck_with_batchnorm.5} parent=5 // pred_check_branch
        %222 = sbr.rel (%p219) target = $region12
      $region11: #{bottleneck_with_batchnorm.5} parent=5 // pred_region
        %s223 = ssub.s32 %s26, 1
        // Predicated region
        $region13: #{bottleneck_with_batchnorm.5} parent=11 // pred_check
          %p224 = pneg %p73
        $region14: #{bottleneck_with_batchnorm.5} parent=11 // pred_check_branch
          %226 = sbr.rel (%p224) target = $region16
        $region15: #{bottleneck_with_batchnorm.5} parent=11 // pred_region
          %s228 = ssub.s32 16, 16
          %229 = vsyncadd [#allocation7], %s228
          %s231 = sshll.u32 [#allocation6], 4
          %s232 = int_to_ptr.vmem [resolvable:$true] %s231
          %234 = dma.hbm_to_vmem [thread:$0]  %s1, 16, %s232, [#allocation7]
        $region16: #{bottleneck_with_batchnorm.5} parent=11 // pred_fallthru
          _
        // Predicated region
        $region17: #{bottleneck_with_batchnorm.5} parent=11 // pred_check
          %p235 = pneg %p94
        $region18: #{bottleneck_with_batchnorm.5} parent=11 // pred_check_branch
          %237 = sbr.rel (%p235) target = $region20
        $region19: #{bottleneck_with_batchnorm.5} parent=11 // pred_region
          %s239 = ssub.s32 16, 16
          %240 = vsyncadd [#allocation7], %s239
          %s242 = sshll.u32 [#allocation8], 4
          %s243 = int_to_ptr.vmem [resolvable:$true] %s242
          %245 = dma.hbm_to_vmem [thread:$0]  %s2, 16, %s243, [#allocation7]
        $region20: #{bottleneck_with_batchnorm.5} parent=11 // pred_fallthru
          _
        // Predicated region
        $region21: #{bottleneck_with_batchnorm.5} parent=11 // pred_check
          %p246 = pneg %p115
        $region22: #{bottleneck_with_batchnorm.5} parent=11 // pred_check_branch
          %248 = sbr.rel (%p246) target = $region24
        $region23: #{bottleneck_with_batchnorm.5} parent=11 // pred_region
          %s250 = ssub.s32 9216, 9216
          %251 = vsyncadd [#allocation10], %s250
          %s252 = sshll.u32 [#allocation9], 4
          %s253 = int_to_ptr.vmem [resolvable:$true] %s252
          %258 = dma.hbm_to_vmem [thread:$0]  %s3, 9216, %s253, [#allocation10], 64, 64, 4
        $region24: #{bottleneck_with_batchnorm.5} parent=11 // pred_fallthru
          _
        // Predicated region
        $region25: #{bottleneck_with_batchnorm.5} parent=11 // pred_check
          %p259 = pneg %p136
        $region26: #{bottleneck_with_batchnorm.5} parent=11 // pred_check_branch
          %261 = sbr.rel (%p259) target = $region28
        $region27: #{bottleneck_with_batchnorm.5} parent=11 // pred_region
          %s263 = ssub.s32 5504, 5504
          %264 = vsyncadd [#allocation10], %s263
          %s265 = sshll.u32 [#allocation11], 4
          %s266 = int_to_ptr.vmem [resolvable:$true] %s265
          %271 = dma.hbm_to_vmem [thread:$0]  %s4, 5504, %s266, [#allocation10], 128, 128, 8
        $region28: #{bottleneck_with_batchnorm.5} parent=11 // pred_fallthru
          _
        // Predicated region
        $region29: #{bottleneck_with_batchnorm.5} parent=11 // pred_check
          %p272 = pneg %p157
        $region30: #{bottleneck_with_batchnorm.5} parent=11 // pred_check_branch
          %274 = sbr.rel (%p272) target = $region32
        $region31: #{bottleneck_with_batchnorm.5} parent=11 // pred_region
          %s276 = ssub.s32 4608, 4608
          %277 = vsyncadd [#allocation13], %s276
          %s278 = sshll.u32 [#allocation12], 4
          %s279 = int_to_ptr.vmem [resolvable:$true] %s278
          %284 = dma.hbm_to_vmem [thread:$0]  %s5, 4608, %s279, [#allocation13], 128, 128, 8
        $region32: #{bottleneck_with_batchnorm.5} parent=11 // pred_fallthru
          _
      $region12: #{bottleneck_with_batchnorm.5} parent=5 // pred_fallthru
        _
      %p285 = scmp.lt.s32.totalorder %s26, 2
      // Predicated region
      $region33: #{bottleneck_with_batchnorm.5} parent=5 // pred_check
        %p286 = pneg %p285
      $region34: #{bottleneck_with_batchnorm.5} parent=5 // pred_check_branch
        %288 = sbr.rel (%p286) target = $region36
      $region35: #{bottleneck_with_batchnorm.5} parent=5 // pred_region
        // Predicated region
        $region37: #{bottleneck_with_batchnorm.5} parent=35 // pred_check
          %p289 = pneg %p46
        $region38: #{bottleneck_with_batchnorm.5} parent=35 // pred_check_branch
          %291 = sbr.rel (%p289) target = $region40
        $region39: #{bottleneck_with_batchnorm.5} parent=35 // pred_region
          %s292 = sand.u32 %s36, 1
          %s293 = scalar_lea.sflag [#allocation4], %s292
          %s294 = sand.u32 %s36, 1
          %s295 = smul.addr %s294, 172
          %s296 = scalar_lea.vmem [#allocation3], %s295
          %s298 = ssub.s32 2752, 2752
          %299 = vsyncadd %s293, %s298
          %s300 = smul.addr %s26, 43
          %s301 = smul.addr %s300, 64
          %s302 = scalar_lea.hbm %s0, %s301
          %s303 = sshll.u32 %s296, 4
          %s304 = int_to_ptr.vmem [resolvable:$true] %s303
          %309 = dma.hbm_to_vmem [thread:$0]  %s302, 2752, %s304, %s293, 64, 64, 4
        $region40: #{bottleneck_with_batchnorm.5} parent=35 // pred_fallthru
          _
      $region36: #{bottleneck_with_batchnorm.5} parent=5 // pred_fallthru
        _
      %p310 = scmp.le.s32.totalorder 1, %s26
      %p311 = scmp.lt.s32.totalorder %s26, 3
      %p312 = pnand %p310, %p311
      %p313 = pneg %p312
      // Predicated region
      $region41: #{bottleneck_with_batchnorm.5} parent=5 // pred_check
        _
      $region42: #{bottleneck_with_batchnorm.5} parent=5 // pred_check_branch
        %315 = sbr.rel (%p312) target = $region44
      $region43: #{bottleneck_with_batchnorm.5} parent=5 // pred_region
        %s316 = ssub.s32 %s26, 1
        %s317 = sand.u32 %s39, 1
        %s318 = scalar_lea.sflag [#allocation4], %s317
        %s319 = sand.u32 %s39, 1
        %s320 = smul.addr %s319, 172
        %s321 = scalar_lea.vmem [#allocation3], %s320
        // Predicated region
        $region45: #{bottleneck_with_batchnorm.5} parent=43 // pred_check
          %p322 = pneg %p52
        $region46: #{bottleneck_with_batchnorm.5} parent=43 // pred_check_branch
          %324 = sbr.rel (%p322) target = $region48
        $region47: #{bottleneck_with_batchnorm.5} parent=43 // pred_region
          %325 = dma.done %s318, 2752
        $region48: #{bottleneck_with_batchnorm.5} parent=43 // pred_fallthru
          _
        // Predicated region
        $region49: #{bottleneck_with_batchnorm.5} parent=43 // pred_check
          %p326 = pneg %p73
        $region50: #{bottleneck_with_batchnorm.5} parent=43 // pred_check_branch
          %328 = sbr.rel (%p326) target = $region52
        $region51: #{bottleneck_with_batchnorm.5} parent=43 // pred_region
          %329 = dma.done [#allocation7], 16
        $region52: #{bottleneck_with_batchnorm.5} parent=43 // pred_fallthru
          _
        // Predicated region
        $region53: #{bottleneck_with_batchnorm.5} parent=43 // pred_check
          %p330 = pneg %p94
        $region54: #{bottleneck_with_batchnorm.5} parent=43 // pred_check_branch
          %332 = sbr.rel (%p330) target = $region56
        $region55: #{bottleneck_with_batchnorm.5} parent=43 // pred_region
          %333 = dma.done [#allocation7], 16
        $region56: #{bottleneck_with_batchnorm.5} parent=43 // pred_fallthru
          _
        // Predicated region
        $region57: #{bottleneck_with_batchnorm.5} parent=43 // pred_check
          %p334 = pneg %p115
        $region58: #{bottleneck_with_batchnorm.5} parent=43 // pred_check_branch
          %336 = sbr.rel (%p334) target = $region60
        $region59: #{bottleneck_with_batchnorm.5} parent=43 // pred_region
          %337 = dma.done [#allocation10], 9216
        $region60: #{bottleneck_with_batchnorm.5} parent=43 // pred_fallthru
          _
        // Predicated region
        $region61: #{bottleneck_with_batchnorm.5} parent=43 // pred_check
          %p338 = pneg %p136
        $region62: #{bottleneck_with_batchnorm.5} parent=43 // pred_check_branch
          %340 = sbr.rel (%p338) target = $region64
        $region63: #{bottleneck_with_batchnorm.5} parent=43 // pred_region
          %341 = dma.done [#allocation10], 5504
        $region64: #{bottleneck_with_batchnorm.5} parent=43 // pred_fallthru
          _
        // Predicated region
        $region65: #{bottleneck_with_batchnorm.5} parent=43 // pred_check
          %p342 = pneg %p157
        $region66: #{bottleneck_with_batchnorm.5} parent=43 // pred_check_branch
          %344 = sbr.rel (%p342) target = $region68
        $region67: #{bottleneck_with_batchnorm.5} parent=43 // pred_region
          %345 = dma.done [#allocation13], 4608
        $region68: #{bottleneck_with_batchnorm.5} parent=43 // pred_fallthru
          _
        %s346 = sand.u32 %s39, 1
        %s347 = scalar_lea.sflag [#allocation4], %s346
        %s348 = sand.u32 %s39, 1
        %s349 = smul.addr %s348, 172
        %s350 = scalar_lea.vmem [#allocation3], %s349
        %p351 = pneg %p52
        %p352 = pneg %p49
        %p353 = pneg %p73
        %p354 = pneg %p70
        %p355 = pneg %p94
        %p356 = pneg %p91
        %p357 = pneg %p115
        %p358 = pneg %p112
        %p359 = pneg %p136
        %p360 = pneg %p133
        %p361 = pneg %p157
        %p362 = pneg %p154
        %p363 = pneg %p183
        %p364 = pneg %p180
        %s365 = sand.u32 %s170, 1
        %s366 = scalar_lea.sflag [#allocation5], %s365
        %s367 = sand.u32 %s170, 1
        %s368 = smul.addr %s367, 144
        %s369 = scalar_lea.vmem [#allocation14], %s368
        %p370 = pneg %p209
        %p371 = pneg %p206
        %s372 = sand.u32 %s196, 1
        %s373 = scalar_lea.sflag [#allocation16], %s372
        %s374 = sand.u32 %s196, 1
        %s375 = smul.addr %s374, 2
        %s376 = scalar_lea.vmem [#allocation15], %s375
        %v378 = vld [vmem:[%s321] sm:$0xf]
        %v379 = vld [vmem:[%s321 + $0x4] sm:$0xf]
        %v380 = vld [vmem:[%s321 + $0x8] sm:$0xf]
        %v381 = vld [vmem:[%s321 + $0xc] sm:$0xf]
        %v382 = vld [vmem:[%s321 + $0x10] sm:$0xf]
        %v383 = vld [vmem:[%s321 + $0x14] sm:$0xf]
        %v384 = vld [vmem:[%s321 + $0x18] sm:$0xf]
        %v385 = vld [vmem:[%s321 + $0x1c] sm:$0xf]
        %v386 = vld [vmem:[%s321 + $0x20] sm:$0xf]
        %v387 = vld [vmem:[%s321 + $0x24] sm:$0xf]
        %v388 = vld [vmem:[%s321 + $0x28] sm:$0xf]
        %v389 = vld [vmem:[%s321 + $0x2c] sm:$0xf]
        %v390 = vld [vmem:[%s321 + $0x30] sm:$0xf]
        %v391 = vld [vmem:[%s321 + $0x34] sm:$0xf]
        %v392 = vld [vmem:[%s321 + $0x38] sm:$0xf]
        %v393 = vld [vmem:[%s321 + $0x3c] sm:$0xf]
        %v394 = vld [vmem:[%s321 + $0x40] sm:$0xf]
        %v395 = vld [vmem:[%s321 + $0x44] sm:$0xf]
        %v396 = vld [vmem:[%s321 + $0x48] sm:$0xf]
        %v397 = vld [vmem:[%s321 + $0x4c] sm:$0xf]
        %v398 = vld [vmem:[%s321 + $0x50] sm:$0xf]
        %v399 = vld [vmem:[%s321 + $0x54] sm:$0xf]
        %v400 = vld [vmem:[%s321 + $0x58] sm:$0xf]
        %v401 = vld [vmem:[%s321 + $0x5c] sm:$0xf]
        %v402 = vld [vmem:[%s321 + $0x60] sm:$0xf]
        %v403 = vld [vmem:[%s321 + $0x64] sm:$0xf]
        %v404 = vld [vmem:[%s321 + $0x68] sm:$0xf]
        %v405 = vld [vmem:[%s321 + $0x6c] sm:$0xf]
        %v406 = vld [vmem:[%s321 + $0x70] sm:$0xf]
        %v407 = vld [vmem:[%s321 + $0x74] sm:$0xf]
        %v408 = vld [vmem:[%s321 + $0x78] sm:$0xf]
        %v409 = vld [vmem:[%s321 + $0x7c] sm:$0xf]
        %v410 = vld [vmem:[%s321 + $0x80] sm:$0xf]
        %v411 = vld [vmem:[%s321 + $0x84] sm:$0xf]
        %v412 = vld [vmem:[%s321 + $0x88] sm:$0xf]
        %v413 = vld [vmem:[%s321 + $0x8c] sm:$0xf]
        %v414 = vld [vmem:[%s321 + $0x90] sm:$0xf]
        %v415 = vld [vmem:[%s321 + $0x94] sm:$0xf]
        %v416 = vld [vmem:[%s321 + $0x98] sm:$0xf]
        %v417 = vld [vmem:[%s321 + $0x9c] sm:$0xf]
        %v418 = vld [vmem:[%s321 + $0xa0] sm:$0xf]
        %v419 = vld [vmem:[%s321 + $0xa4] sm:$0xf]
        %v420 = vld [vmem:[%s321 + $0xa8] sm:$0x7]
        %v421 = vunpack.c.l.bf16 %v378
        %v422 = vunpack.c.l.bf16 %v379
        %v423 = vunpack.c.l.bf16 %v380
        %v424 = vunpack.c.l.bf16 %v381
        %v425 = vunpack.c.l.bf16 %v382
        %v426 = vunpack.c.l.bf16 %v383
        %v427 = vunpack.c.l.bf16 %v384
        %v428 = vunpack.c.l.bf16 %v385
        %v429 = vunpack.c.l.bf16 %v386
        %v430 = vunpack.c.l.bf16 %v387
        %v431 = vunpack.c.l.bf16 %v388
        %v432 = vunpack.c.l.bf16 %v389
        %v433 = vunpack.c.l.bf16 %v390
        %v434 = vunpack.c.l.bf16 %v391
        %v435 = vunpack.c.l.bf16 %v392
        %v436 = vunpack.c.l.bf16 %v393
        %v437 = vunpack.c.l.bf16 %v394
        %v438 = vunpack.c.l.bf16 %v395
        %v439 = vunpack.c.l.bf16 %v396
        %v440 = vunpack.c.l.bf16 %v397
        %v441 = vunpack.c.l.bf16 %v398
        %v442 = vunpack.c.l.bf16 %v399
        %v443 = vunpack.c.l.bf16 %v400
        %v444 = vunpack.c.l.bf16 %v401
        %v445 = vunpack.c.l.bf16 %v402
        %v446 = vunpack.c.l.bf16 %v403
        %v447 = vunpack.c.l.bf16 %v404
        %v448 = vunpack.c.l.bf16 %v405
        %v449 = vunpack.c.l.bf16 %v406
        %v450 = vunpack.c.l.bf16 %v407
        %v451 = vunpack.c.l.bf16 %v408
        %v452 = vunpack.c.l.bf16 %v409
        %v453 = vunpack.c.l.bf16 %v410
        %v454 = vunpack.c.l.bf16 %v411
        %v455 = vunpack.c.l.bf16 %v412
        %v456 = vunpack.c.l.bf16 %v413
        %v457 = vunpack.c.l.bf16 %v414
        %v458 = vunpack.c.l.bf16 %v415
        %v459 = vunpack.c.l.bf16 %v416
        %v460 = vunpack.c.l.bf16 %v417
        %v461 = vunpack.c.l.bf16 %v418
        %v462 = vunpack.c.l.bf16 %v419
        %v463 = vunpack.c.l.bf16 %v420
        %v464 = vld [vmem:[#allocation6] sm:$0x1]
        %v466 = vlaneseq
        %v467 = vshrl.u32 %v466, 7
        %v468 = vsub.s32 0, %v467
        %v469 = vrot.slane %v464, %v468
        %v471 = vmul.f32 %v421, %v469
        %v472 = vmul.f32 %v422, %v469
        %v473 = vmul.f32 %v423, %v469
        %v474 = vmul.f32 %v424, %v469
        %v475 = vmul.f32 %v425, %v469
        %v476 = vmul.f32 %v426, %v469
        %v477 = vmul.f32 %v427, %v469
        %v478 = vmul.f32 %v428, %v469
        %v479 = vmul.f32 %v429, %v469
        %v480 = vmul.f32 %v430, %v469
        %v481 = vmul.f32 %v431, %v469
        %v482 = vmul.f32 %v432, %v469
        %v483 = vmul.f32 %v433, %v469
        %v484 = vmul.f32 %v434, %v469
        %v485 = vmul.f32 %v435, %v469
        %v486 = vmul.f32 %v436, %v469
        %v487 = vmul.f32 %v437, %v469
        %v488 = vmul.f32 %v438, %v469
        %v489 = vmul.f32 %v439, %v469
        %v490 = vmul.f32 %v440, %v469
        %v491 = vmul.f32 %v441, %v469
        %v492 = vmul.f32 %v442, %v469
        %v493 = vmul.f32 %v443, %v469
        %v494 = vmul.f32 %v444, %v469
        %v495 = vmul.f32 %v445, %v469
        %v496 = vmul.f32 %v446, %v469
        %v497 = vmul.f32 %v447, %v469
        %v498 = vmul.f32 %v448, %v469
        %v499 = vmul.f32 %v449, %v469
        %v500 = vmul.f32 %v450, %v469
        %v501 = vmul.f32 %v451, %v469
        %v502 = vmul.f32 %v452, %v469
        %v503 = vmul.f32 %v453, %v469
        %v504 = vmul.f32 %v454, %v469
        %v505 = vmul.f32 %v455, %v469
        %v506 = vmul.f32 %v456, %v469
        %v507 = vmul.f32 %v457, %v469
        %v508 = vmul.f32 %v458, %v469
        %v509 = vmul.f32 %v459, %v469
        %v510 = vmul.f32 %v460, %v469
        %v511 = vmul.f32 %v461, %v469
        %v512 = vmul.f32 %v462, %v469
        %v513 = vmul.f32 %v463, %v469
        %v514 = vld [vmem:[#allocation8] sm:$0x1]
        %v516 = vlaneseq
        %v517 = vshrl.u32 %v516, 7
        %v518 = vsub.s32 0, %v517
        %v519 = vrot.slane %v514, %v518
        %v521 = vadd.f32 %v471, %v519
        %v522 = vadd.f32 %v472, %v519
        %v523 = vadd.f32 %v473, %v519
        %v524 = vadd.f32 %v474, %v519
        %v525 = vadd.f32 %v475, %v519
        %v526 = vadd.f32 %v476, %v519
        %v527 = vadd.f32 %v477, %v519
        %v528 = vadd.f32 %v478, %v519
        %v529 = vadd.f32 %v479, %v519
        %v530 = vadd.f32 %v480, %v519
        %v531 = vadd.f32 %v481, %v519
        %v532 = vadd.f32 %v482, %v519
        %v533 = vadd.f32 %v483, %v519
        %v534 = vadd.f32 %v484, %v519
        %v535 = vadd.f32 %v485, %v519
        %v536 = vadd.f32 %v486, %v519
        %v537 = vadd.f32 %v487, %v519
        %v538 = vadd.f32 %v488, %v519
        %v539 = vadd.f32 %v489, %v519
        %v540 = vadd.f32 %v490, %v519
        %v541 = vadd.f32 %v491, %v519
        %v542 = vadd.f32 %v492, %v519
        %v543 = vadd.f32 %v493, %v519
        %v544 = vadd.f32 %v494, %v519
        %v545 = vadd.f32 %v495, %v519
        %v546 = vadd.f32 %v496, %v519
        %v547 = vadd.f32 %v497, %v519
        %v548 = vadd.f32 %v498, %v519
        %v549 = vadd.f32 %v499, %v519
        %v550 = vadd.f32 %v500, %v519
        %v551 = vadd.f32 %v501, %v519
        %v552 = vadd.f32 %v502, %v519
        %v553 = vadd.f32 %v503, %v519
        %v554 = vadd.f32 %v504, %v519
        %v555 = vadd.f32 %v505, %v519
        %v556 = vadd.f32 %v506, %v519
        %v557 = vadd.f32 %v507, %v519
        %v558 = vadd.f32 %v508, %v519
        %v559 = vadd.f32 %v509, %v519
        %v560 = vadd.f32 %v510, %v519
        %v561 = vadd.f32 %v511, %v519
        %v562 = vadd.f32 %v512, %v519
        %v563 = vadd.f32 %v513, %v519
        %v564 = vmax.f32 %v521, 0.0
        %v565 = vmax.f32 %v522, 0.0
        %v566 = vmax.f32 %v523, 0.0
        %v567 = vmax.f32 %v524, 0.0
        %v568 = vmax.f32 %v525, 0.0
        %v569 = vmax.f32 %v526, 0.0
        %v570 = vmax.f32 %v527, 0.0
        %v571 = vmax.f32 %v528, 0.0
        %v572 = vmax.f32 %v529, 0.0
        %v573 = vmax.f32 %v530, 0.0
        %v574 = vmax.f32 %v531, 0.0
        %v575 = vmax.f32 %v532, 0.0
        %v576 = vmax.f32 %v533, 0.0
        %v577 = vmax.f32 %v534, 0.0
        %v578 = vmax.f32 %v535, 0.0
        %v579 = vmax.f32 %v536, 0.0
        %v580 = vmax.f32 %v537, 0.0
        %v581 = vmax.f32 %v538, 0.0
        %v582 = vmax.f32 %v539, 0.0
        %v583 = vmax.f32 %v540, 0.0
        %v584 = vmax.f32 %v541, 0.0
        %v585 = vmax.f32 %v542, 0.0
        %v586 = vmax.f32 %v543, 0.0
        %v587 = vmax.f32 %v544, 0.0
        %v588 = vmax.f32 %v545, 0.0
        %v589 = vmax.f32 %v546, 0.0
        %v590 = vmax.f32 %v547, 0.0
        %v591 = vmax.f32 %v548, 0.0
        %v592 = vmax.f32 %v549, 0.0
        %v593 = vmax.f32 %v550, 0.0
        %v594 = vmax.f32 %v551, 0.0
        %v595 = vmax.f32 %v552, 0.0
        %v596 = vmax.f32 %v553, 0.0
        %v597 = vmax.f32 %v554, 0.0
        %v598 = vmax.f32 %v555, 0.0
        %v599 = vmax.f32 %v556, 0.0
        %v600 = vmax.f32 %v557, 0.0
        %v601 = vmax.f32 %v558, 0.0
        %v602 = vmax.f32 %v559, 0.0
        %v603 = vmax.f32 %v560, 0.0
        %v604 = vmax.f32 %v561, 0.0
        %v605 = vmax.f32 %v562, 0.0
        %v606 = vmax.f32 %v563, 0.0
        %v607 = vld [vmem:[#allocation11] sm:$0xff]
        %v608 = vld [vmem:[#allocation11 + $0x8] sm:$0xff]
        %v609 = vld [vmem:[#allocation11 + $0x10] sm:$0xff]
        %v610 = vld [vmem:[#allocation11 + $0x18] sm:$0xff]
        %v611 = vld [vmem:[#allocation11 + $0x20] sm:$0xff]
        %v612 = vld [vmem:[#allocation11 + $0x28] sm:$0xff]
        %v613 = vld [vmem:[#allocation11 + $0x30] sm:$0xff]
        %v614 = vld [vmem:[#allocation11 + $0x38] sm:$0xff]
        %v615 = vld [vmem:[#allocation11 + $0x40] sm:$0xff]
        %v616 = vld [vmem:[#allocation11 + $0x48] sm:$0xff]
        %v617 = vld [vmem:[#allocation11 + $0x50] sm:$0xff]
        %v618 = vld [vmem:[#allocation11 + $0x58] sm:$0xff]
        %v619 = vld [vmem:[#allocation11 + $0x60] sm:$0xff]
        %v620 = vld [vmem:[#allocation11 + $0x68] sm:$0xff]
        %v621 = vld [vmem:[#allocation11 + $0x70] sm:$0xff]
        %v622 = vld [vmem:[#allocation11 + $0x78] sm:$0xff]
        %v623 = vld [vmem:[#allocation11 + $0x80] sm:$0xff]
        %v624 = vld [vmem:[#allocation11 + $0x88] sm:$0xff]
        %v625 = vld [vmem:[#allocation11 + $0x90] sm:$0xff]
        %v626 = vld [vmem:[#allocation11 + $0x98] sm:$0xff]
        %v627 = vld [vmem:[#allocation11 + $0xa0] sm:$0xff]
        %v628 = vld [vmem:[#allocation11 + $0xa8] sm:$0xff]
        %v629 = vld [vmem:[#allocation11 + $0xb0] sm:$0xff]
        %v630 = vld [vmem:[#allocation11 + $0xb8] sm:$0xff]
        %v631 = vld [vmem:[#allocation11 + $0xc0] sm:$0xff]
        %v632 = vld [vmem:[#allocation11 + $0xc8] sm:$0xff]
        %v633 = vld [vmem:[#allocation11 + $0xd0] sm:$0xff]
        %v634 = vld [vmem:[#allocation11 + $0xd8] sm:$0xff]
        %v635 = vld [vmem:[#allocation11 + $0xe0] sm:$0xff]
        %v636 = vld [vmem:[#allocation11 + $0xe8] sm:$0xff]
        %v637 = vld [vmem:[#allocation11 + $0xf0] sm:$0xff]
        %v638 = vld [vmem:[#allocation11 + $0xf8] sm:$0xff]
        %v639 = vld [vmem:[#allocation11 + $0x100] sm:$0xff]
        %v640 = vld [vmem:[#allocation11 + $0x108] sm:$0xff]
        %v641 = vld [vmem:[#allocation11 + $0x110] sm:$0xff]
        %v642 = vld [vmem:[#allocation11 + $0x118] sm:$0xff]
        %v643 = vld [vmem:[#allocation11 + $0x120] sm:$0xff]
        %v644 = vld [vmem:[#allocation11 + $0x128] sm:$0xff]
        %v645 = vld [vmem:[#allocation11 + $0x130] sm:$0xff]
        %v646 = vld [vmem:[#allocation11 + $0x138] sm:$0xff]
        %v647 = vld [vmem:[#allocation11 + $0x140] sm:$0xff]
        %v648 = vld [vmem:[#allocation11 + $0x148] sm:$0xff]
        %v649 = vld [vmem:[#allocation11 + $0x150] sm:$0x3f]
        %651 = vset.pattern.permute.xlu0 0
        %652 = vperm.xlu0 %651, %v607
        %v653 = vpop.permute.xlu0 %652
        %656 = vset.pattern.permute.xlu0 0
        %657 = vperm.xlu0 %656, %v608
        %v658 = vpop.permute.xlu0 %657
        %661 = vset.pattern.permute.xlu0 0
        %662 = vperm.xlu0 %661, %v609
        %v663 = vpop.permute.xlu0 %662
        %666 = vset.pattern.permute.xlu0 0
        %667 = vperm.xlu0 %666, %v610
        %v668 = vpop.permute.xlu0 %667
        %671 = vset.pattern.permute.xlu0 0
        %672 = vperm.xlu0 %671, %v611
        %v673 = vpop.permute.xlu0 %672
        %676 = vset.pattern.permute.xlu0 0
        %677 = vperm.xlu0 %676, %v612
        %v678 = vpop.permute.xlu0 %677
        %681 = vset.pattern.permute.xlu0 0
        %682 = vperm.xlu0 %681, %v613
        %v683 = vpop.permute.xlu0 %682
        %686 = vset.pattern.permute.xlu0 0
        %687 = vperm.xlu0 %686, %v614
        %v688 = vpop.permute.xlu0 %687
        %691 = vset.pattern.permute.xlu0 0
        %692 = vperm.xlu0 %691, %v615
        %v693 = vpop.permute.xlu0 %692
        %696 = vset.pattern.permute.xlu0 0
        %697 = vperm.xlu0 %696, %v616
        %v698 = vpop.permute.xlu0 %697
        %701 = vset.pattern.permute.xlu0 0
        %702 = vperm.xlu0 %701, %v617
        %v703 = vpop.permute.xlu0 %702
        %706 = vset.pattern.permute.xlu0 0
        %707 = vperm.xlu0 %706, %v618
        %v708 = vpop.permute.xlu0 %707
        %711 = vset.pattern.permute.xlu0 0
        %712 = vperm.xlu0 %711, %v619
        %v713 = vpop.permute.xlu0 %712
        %716 = vset.pattern.permute.xlu0 0
        %717 = vperm.xlu0 %716, %v620
        %v718 = vpop.permute.xlu0 %717
        %721 = vset.pattern.permute.xlu0 0
        %722 = vperm.xlu0 %721, %v621
        %v723 = vpop.permute.xlu0 %722
        %726 = vset.pattern.permute.xlu0 0
        %727 = vperm.xlu0 %726, %v622
        %v728 = vpop.permute.xlu0 %727
        %731 = vset.pattern.permute.xlu0 0
        %732 = vperm.xlu0 %731, %v623
        %v733 = vpop.permute.xlu0 %732
        %736 = vset.pattern.permute.xlu0 0
        %737 = vperm.xlu0 %736, %v624
        %v738 = vpop.permute.xlu0 %737
        %741 = vset.pattern.permute.xlu0 0
        %742 = vperm.xlu0 %741, %v625
        %v743 = vpop.permute.xlu0 %742
        %746 = vset.pattern.permute.xlu0 0
        %747 = vperm.xlu0 %746, %v626
        %v748 = vpop.permute.xlu0 %747
        %751 = vset.pattern.permute.xlu0 0
        %752 = vperm.xlu0 %751, %v627
        %v753 = vpop.permute.xlu0 %752
        %756 = vset.pattern.permute.xlu0 0
        %757 = vperm.xlu0 %756, %v628
        %v758 = vpop.permute.xlu0 %757
        %761 = vset.pattern.permute.xlu0 0
        %762 = vperm.xlu0 %761, %v629
        %v763 = vpop.permute.xlu0 %762
        %766 = vset.pattern.permute.xlu0 0
        %767 = vperm.xlu0 %766, %v630
        %v768 = vpop.permute.xlu0 %767
        %771 = vset.pattern.permute.xlu0 0
        %772 = vperm.xlu0 %771, %v631
        %v773 = vpop.permute.xlu0 %772
        %776 = vset.pattern.permute.xlu0 0
        %777 = vperm.xlu0 %776, %v632
        %v778 = vpop.permute.xlu0 %777
        %781 = vset.pattern.permute.xlu0 0
        %782 = vperm.xlu0 %781, %v633
        %v783 = vpop.permute.xlu0 %782
        %786 = vset.pattern.permute.xlu0 0
        %787 = vperm.xlu0 %786, %v634
        %v788 = vpop.permute.xlu0 %787
        %791 = vset.pattern.permute.xlu0 0
        %792 = vperm.xlu0 %791, %v635
        %v793 = vpop.permute.xlu0 %792
        %796 = vset.pattern.permute.xlu0 0
        %797 = vperm.xlu0 %796, %v636
        %v798 = vpop.permute.xlu0 %797
        %801 = vset.pattern.permute.xlu0 0
        %802 = vperm.xlu0 %801, %v637
        %v803 = vpop.permute.xlu0 %802
        %806 = vset.pattern.permute.xlu0 0
        %807 = vperm.xlu0 %806, %v638
        %v808 = vpop.permute.xlu0 %807
        %811 = vset.pattern.permute.xlu0 0
        %812 = vperm.xlu0 %811, %v639
        %v813 = vpop.permute.xlu0 %812
        %816 = vset.pattern.permute.xlu0 0
        %817 = vperm.xlu0 %816, %v640
        %v818 = vpop.permute.xlu0 %817
        %821 = vset.pattern.permute.xlu0 0
        %822 = vperm.xlu0 %821, %v641
        %v823 = vpop.permute.xlu0 %822
        %826 = vset.pattern.permute.xlu0 0
        %827 = vperm.xlu0 %826, %v642
        %v828 = vpop.permute.xlu0 %827
        %831 = vset.pattern.permute.xlu0 0
        %832 = vperm.xlu0 %831, %v643
        %v833 = vpop.permute.xlu0 %832
        %836 = vset.pattern.permute.xlu0 0
        %837 = vperm.xlu0 %836, %v644
        %v838 = vpop.permute.xlu0 %837
        %841 = vset.pattern.permute.xlu0 0
        %842 = vperm.xlu0 %841, %v645
        %v843 = vpop.permute.xlu0 %842
        %846 = vset.pattern.permute.xlu0 0
        %847 = vperm.xlu0 %846, %v646
        %v848 = vpop.permute.xlu0 %847
        %851 = vset.pattern.permute.xlu0 0
        %852 = vperm.xlu0 %851, %v647
        %v853 = vpop.permute.xlu0 %852
        %856 = vset.pattern.permute.xlu0 0
        %857 = vperm.xlu0 %856, %v648
        %v858 = vpop.permute.xlu0 %857
        %861 = vset.pattern.permute.xlu0 0
        %862 = vperm.xlu0 %861, %v649
        %v863 = vpop.permute.xlu0 %862
        %v865 = vmul.f32 %v564, %v653
        %v866 = vmul.f32 %v565, %v658
        %v867 = vmul.f32 %v566, %v663
        %v868 = vmul.f32 %v567, %v668
        %v869 = vmul.f32 %v568, %v673
        %v870 = vmul.f32 %v569, %v678
        %v871 = vmul.f32 %v570, %v683
        %v872 = vmul.f32 %v571, %v688
        %v873 = vmul.f32 %v572, %v693
        %v874 = vmul.f32 %v573, %v698
        %v875 = vmul.f32 %v574, %v703
        %v876 = vmul.f32 %v575, %v708
        %v877 = vmul.f32 %v576, %v713
        %v878 = vmul.f32 %v577, %v718
        %v879 = vmul.f32 %v578, %v723
        %v880 = vmul.f32 %v579, %v728
        %v881 = vmul.f32 %v580, %v733
        %v882 = vmul.f32 %v581, %v738
        %v883 = vmul.f32 %v582, %v743
        %v884 = vmul.f32 %v583, %v748
        %v885 = vmul.f32 %v584, %v753
        %v886 = vmul.f32 %v585, %v758
        %v887 = vmul.f32 %v586, %v763
        %v888 = vmul.f32 %v587, %v768
        %v889 = vmul.f32 %v588, %v773
        %v890 = vmul.f32 %v589, %v778
        %v891 = vmul.f32 %v590, %v783
        %v892 = vmul.f32 %v591, %v788
        %v893 = vmul.f32 %v592, %v793
        %v894 = vmul.f32 %v593, %v798
        %v895 = vmul.f32 %v594, %v803
        %v896 = vmul.f32 %v595, %v808
        %v897 = vmul.f32 %v596, %v813
        %v898 = vmul.f32 %v597, %v818
        %v899 = vmul.f32 %v598, %v823
        %v900 = vmul.f32 %v599, %v828
        %v901 = vmul.f32 %v600, %v833
        %v902 = vmul.f32 %v601, %v838
        %v903 = vmul.f32 %v602, %v843
        %v904 = vmul.f32 %v603, %v848
        %v905 = vmul.f32 %v604, %v853
        %v906 = vmul.f32 %v605, %v858
        %v907 = vmul.f32 %v606, %v863
        %908 = vst [vmem:[#allocation2] sm:$0xff] %v865
        %909 = vst [vmem:[#allocation2 + $0x8] sm:$0xff] %v866
        %910 = vst [vmem:[#allocation2 + $0x10] sm:$0xff] %v867
        %911 = vst [vmem:[#allocation2 + $0x18] sm:$0xff] %v868
        %912 = vst [vmem:[#allocation2 + $0x20] sm:$0xff] %v869
        %913 = vst [vmem:[#allocation2 + $0x28] sm:$0xff] %v870
        %914 = vst [vmem:[#allocation2 + $0x30] sm:$0xff] %v871
        %915 = vst [vmem:[#allocation2 + $0x38] sm:$0xff] %v872
        %916 = vst [vmem:[#allocation2 + $0x40] sm:$0xff] %v873
        %917 = vst [vmem:[#allocation2 + $0x48] sm:$0xff] %v874
        %918 = vst [vmem:[#allocation2 + $0x50] sm:$0xff] %v875
        %919 = vst [vmem:[#allocation2 + $0x58] sm:$0xff] %v876
        %920 = vst [vmem:[#allocation2 + $0x60] sm:$0xff] %v877
        %921 = vst [vmem:[#allocation2 + $0x68] sm:$0xff] %v878
        %922 = vst [vmem:[#allocation2 + $0x70] sm:$0xff] %v879
        %923 = vst [vmem:[#allocation2 + $0x78] sm:$0xff] %v880
        %924 = vst [vmem:[#allocation2 + $0x80] sm:$0xff] %v881
        %925 = vst [vmem:[#allocation2 + $0x88] sm:$0xff] %v882
        %926 = vst [vmem:[#allocation2 + $0x90] sm:$0xff] %v883
        %927 = vst [vmem:[#allocation2 + $0x98] sm:$0xff] %v884
        %928 = vst [vmem:[#allocation2 + $0xa0] sm:$0xff] %v885
        %929 = vst [vmem:[#allocation2 + $0xa8] sm:$0xff] %v886
        %930 = vst [vmem:[#allocation2 + $0xb0] sm:$0xff] %v887
        %931 = vst [vmem:[#allocation2 + $0xb8] sm:$0xff] %v888
        %932 = vst [vmem:[#allocation2 + $0xc0] sm:$0xff] %v889
        %933 = vst [vmem:[#allocation2 + $0xc8] sm:$0xff] %v890
        %934 = vst [vmem:[#allocation2 + $0xd0] sm:$0xff] %v891
        %935 = vst [vmem:[#allocation2 + $0xd8] sm:$0xff] %v892
        %936 = vst [vmem:[#allocation2 + $0xe0] sm:$0xff] %v893
        %937 = vst [vmem:[#allocation2 + $0xe8] sm:$0xff] %v894
        %938 = vst [vmem:[#allocation2 + $0xf0] sm:$0xff] %v895
        %939 = vst [vmem:[#allocation2 + $0xf8] sm:$0xff] %v896
        %940 = vst [vmem:[#allocation2 + $0x100] sm:$0xff] %v897
        %941 = vst [vmem:[#allocation2 + $0x108] sm:$0xff] %v898
        %942 = vst [vmem:[#allocation2 + $0x110] sm:$0xff] %v899
        %943 = vst [vmem:[#allocation2 + $0x118] sm:$0xff] %v900
        %944 = vst [vmem:[#allocation2 + $0x120] sm:$0xff] %v901
        %945 = vst [vmem:[#allocation2 + $0x128] sm:$0xff] %v902
        %946 = vst [vmem:[#allocation2 + $0x130] sm:$0xff] %v903
        %947 = vst [vmem:[#allocation2 + $0x138] sm:$0xff] %v904
        %948 = vst [vmem:[#allocation2 + $0x140] sm:$0xff] %v905
        %949 = vst [vmem:[#allocation2 + $0x148] sm:$0xff] %v906
        %950 = vst [vmem:[#allocation2 + $0x150] sm:$0x3f] %v907
        %v951 = vld [vmem:[#allocation2] sm:$0xff]
        %v952 = vld [vmem:[#allocation2 + $0x8] sm:$0xff]
        %v953 = vld [vmem:[#allocation2 + $0x10] sm:$0xff]
        %v954 = vld [vmem:[#allocation2 + $0x18] sm:$0xff]
        %v955 = vld [vmem:[#allocation2 + $0x20] sm:$0xff]
        %v956 = vld [vmem:[#allocation2 + $0x28] sm:$0xff]
        %v957 = vld [vmem:[#allocation2 + $0x30] sm:$0xff]
        %v958 = vld [vmem:[#allocation2 + $0x38] sm:$0xff]
        %v959 = vld [vmem:[#allocation2 + $0x40] sm:$0xff]
        %v960 = vld [vmem:[#allocation2 + $0x48] sm:$0xff]
        %v961 = vld [vmem:[#allocation2 + $0x50] sm:$0xff]
        %v962 = vld [vmem:[#allocation2 + $0x58] sm:$0xff]
        %v963 = vld [vmem:[#allocation2 + $0x60] sm:$0xff]
        %v964 = vld [vmem:[#allocation2 + $0x68] sm:$0xff]
        %v965 = vld [vmem:[#allocation2 + $0x70] sm:$0xff]
        %v966 = vld [vmem:[#allocation2 + $0x78] sm:$0xff]
        %v967 = vld [vmem:[#allocation2 + $0x80] sm:$0xff]
        %v968 = vld [vmem:[#allocation2 + $0x88] sm:$0xff]
        %v969 = vld [vmem:[#allocation2 + $0x90] sm:$0xff]
        %v970 = vld [vmem:[#allocation2 + $0x98] sm:$0xff]
        %v971 = vld [vmem:[#allocation2 + $0xa0] sm:$0xff]
        %v972 = vld [vmem:[#allocation2 + $0xa8] sm:$0xff]
        %v973 = vld [vmem:[#allocation2 + $0xb0] sm:$0xff]
        %v974 = vld [vmem:[#allocation2 + $0xb8] sm:$0xff]
        %v975 = vld [vmem:[#allocation2 + $0xc0] sm:$0xff]
        %v976 = vld [vmem:[#allocation2 + $0xc8] sm:$0xff]
        %v977 = vld [vmem:[#allocation2 + $0xd0] sm:$0xff]
        %v978 = vld [vmem:[#allocation2 + $0xd8] sm:$0xff]
        %v979 = vld [vmem:[#allocation2 + $0xe0] sm:$0xff]
        %v980 = vld [vmem:[#allocation2 + $0xe8] sm:$0xff]
        %v981 = vld [vmem:[#allocation2 + $0xf0] sm:$0xff]
        %v982 = vld [vmem:[#allocation2 + $0xf8] sm:$0xff]
        %v983 = vld [vmem:[#allocation2 + $0x100] sm:$0xff]
        %v984 = vld [vmem:[#allocation2 + $0x108] sm:$0xff]
        %v985 = vld [vmem:[#allocation2 + $0x110] sm:$0xff]
        %v986 = vld [vmem:[#allocation2 + $0x118] sm:$0xff]
        %v987 = vpack.c.bf16 %v952, %v951
        %v988 = vpack.c.bf16 %v954, %v953
        %v989 = vpack.c.bf16 %v956, %v955
        %v990 = vpack.c.bf16 %v958, %v957
        %v991 = vpack.c.bf16 %v960, %v959
        %v992 = vpack.c.bf16 %v962, %v961
        %v993 = vpack.c.bf16 %v964, %v963
        %v994 = vpack.c.bf16 %v966, %v965
        %v995 = vpack.c.bf16 %v968, %v967
        %v996 = vpack.c.bf16 %v970, %v969
        %v997 = vpack.c.bf16 %v972, %v971
        %v998 = vpack.c.bf16 %v974, %v973
        %v999 = vpack.c.bf16 %v976, %v975
        %v1000 = vpack.c.bf16 %v978, %v977
        %v1001 = vpack.c.bf16 %v980, %v979
        %v1002 = vpack.c.bf16 %v982, %v981
        %v1003 = vpack.c.bf16 %v984, %v983
        %v1004 = vpack.c.bf16 %v986, %v985
        %v1005 = vld [vmem:[#allocation9] sm:$0xf]
        %v1006 = vld [vmem:[#allocation9 + $0x4] sm:$0xf]
        %v1007 = vld [vmem:[#allocation9 + $0x8] sm:$0xf]
        %v1008 = vld [vmem:[#allocation9 + $0xc] sm:$0xf]
        %v1009 = vld [vmem:[#allocation9 + $0x10] sm:$0xf]
        %v1010 = vld [vmem:[#allocation9 + $0x14] sm:$0xf]
        %v1011 = vld [vmem:[#allocation9 + $0x18] sm:$0xf]
        %v1012 = vld [vmem:[#allocation9 + $0x1c] sm:$0xf]
        %v1013 = vld [vmem:[#allocation9 + $0x20] sm:$0xf]
        %v1014 = vld [vmem:[#allocation9 + $0x24] sm:$0xf]
        %v1015 = vld [vmem:[#allocation9 + $0x28] sm:$0xf]
        %v1016 = vld [vmem:[#allocation9 + $0x2c] sm:$0xf]
        %v1017 = vld [vmem:[#allocation9 + $0x30] sm:$0xf]
        %v1018 = vld [vmem:[#allocation9 + $0x34] sm:$0xf]
        %v1019 = vld [vmem:[#allocation9 + $0x38] sm:$0xf]
        %v1020 = vld [vmem:[#allocation9 + $0x3c] sm:$0xf]
        %v1021 = vld [vmem:[#allocation2 + $0x1] sm:$0xff]
        %v1022 = vld [vmem:[#allocation2 + $0x9] sm:$0xff]
        %v1023 = vld [vmem:[#allocation2 + $0x11] sm:$0xff]
        %v1024 = vld [vmem:[#allocation2 + $0x19] sm:$0xff]
        %v1025 = vld [vmem:[#allocation2 + $0x21] sm:$0xff]
        %v1026 = vld [vmem:[#allocation2 + $0x29] sm:$0xff]
        %v1027 = vld [vmem:[#allocation2 + $0x31] sm:$0xff]
        %v1028 = vld [vmem:[#allocation2 + $0x39] sm:$0xff]
        %v1029 = vld [vmem:[#allocation2 + $0x41] sm:$0xff]
        %v1030 = vld [vmem:[#allocation2 + $0x49] sm:$0xff]
        %v1031 = vld [vmem:[#allocation2 + $0x51] sm:$0xff]
        %v1032 = vld [vmem:[#allocation2 + $0x59] sm:$0xff]
        %v1033 = vld [vmem:[#allocation2 + $0x61] sm:$0xff]
        %v1034 = vld [vmem:[#allocation2 + $0x69] sm:$0xff]
        %v1035 = vld [vmem:[#allocation2 + $0x71] sm:$0xff]
        %v1036 = vld [vmem:[#allocation2 + $0x79] sm:$0xff]
        %v1037 = vld [vmem:[#allocation2 + $0x81] sm:$0xff]
        %v1038 = vld [vmem:[#allocation2 + $0x89] sm:$0xff]
        %v1039 = vld [vmem:[#allocation2 + $0x91] sm:$0xff]
        %v1040 = vld [vmem:[#allocation2 + $0x99] sm:$0xff]
        %v1041 = vld [vmem:[#allocation2 + $0xa1] sm:$0xff]
        %v1042 = vld [vmem:[#allocation2 + $0xa9] sm:$0xff]
        %v1043 = vld [vmem:[#allocation2 + $0xb1] sm:$0xff]
        %v1044 = vld [vmem:[#allocation2 + $0xb9] sm:$0xff]
        %v1045 = vld [vmem:[#allocation2 + $0xc1] sm:$0xff]
        %v1046 = vld [vmem:[#allocation2 + $0xc9] sm:$0xff]
        %v1047 = vld [vmem:[#allocation2 + $0xd1] sm:$0xff]
        %v1048 = vld [vmem:[#allocation2 + $0xd9] sm:$0xff]
        %v1049 = vld [vmem:[#allocation2 + $0xe1] sm:$0xff]
        %v1050 = vld [vmem:[#allocation2 + $0xe9] sm:$0xff]
        %v1051 = vld [vmem:[#allocation2 + $0xf1] sm:$0xff]
        %v1052 = vld [vmem:[#allocation2 + $0xf9] sm:$0xff]
        %v1053 = vld [vmem:[#allocation2 + $0x101] sm:$0xff]
        %v1054 = vld [vmem:[#allocation2 + $0x109] sm:$0xff]
        %v1055 = vld [vmem:[#allocation2 + $0x111] sm:$0xff]
        %v1056 = vld [vmem:[#allocation2 + $0x119] sm:$0xff]
        %v1057 = vpack.c.bf16 %v1022, %v1021
        %v1058 = vpack.c.bf16 %v1024, %v1023
        %v1059 = vpack.c.bf16 %v1026, %v1025
        %v1060 = vpack.c.bf16 %v1028, %v1027
        %v1061 = vpack.c.bf16 %v1030, %v1029
        %v1062 = vpack.c.bf16 %v1032, %v1031
        %v1063 = vpack.c.bf16 %v1034, %v1033
        %v1064 = vpack.c.bf16 %v1036, %v1035
        %v1065 = vpack.c.bf16 %v1038, %v1037
        %v1066 = vpack.c.bf16 %v1040, %v1039
        %v1067 = vpack.c.bf16 %v1042, %v1041
        %v1068 = vpack.c.bf16 %v1044, %v1043
        %v1069 = vpack.c.bf16 %v1046, %v1045
        %v1070 = vpack.c.bf16 %v1048, %v1047
        %v1071 = vpack.c.bf16 %v1050, %v1049
        %v1072 = vpack.c.bf16 %v1052, %v1051
        %v1073 = vpack.c.bf16 %v1054, %v1053
        %v1074 = vpack.c.bf16 %v1056, %v1055
        %s1075 = scalar_lea.vmem [#allocation9], 64
        %v1076 = vld [vmem:[%s1075] sm:$0xf]
        %v1077 = vld [vmem:[%s1075 + $0x4] sm:$0xf]
        %v1078 = vld [vmem:[%s1075 + $0x8] sm:$0xf]
        %v1079 = vld [vmem:[%s1075 + $0xc] sm:$0xf]
        %v1080 = vld [vmem:[%s1075 + $0x10] sm:$0xf]
        %v1081 = vld [vmem:[%s1075 + $0x14] sm:$0xf]
        %v1082 = vld [vmem:[%s1075 + $0x18] sm:$0xf]
        %v1083 = vld [vmem:[%s1075 + $0x1c] sm:$0xf]
        %v1084 = vld [vmem:[%s1075 + $0x20] sm:$0xf]
        %v1085 = vld [vmem:[%s1075 + $0x24] sm:$0xf]
        %v1086 = vld [vmem:[%s1075 + $0x28] sm:$0xf]
        %v1087 = vld [vmem:[%s1075 + $0x2c] sm:$0xf]
        %v1088 = vld [vmem:[%s1075 + $0x30] sm:$0xf]
        %v1089 = vld [vmem:[%s1075 + $0x34] sm:$0xf]
        %v1090 = vld [vmem:[%s1075 + $0x38] sm:$0xf]
        %v1091 = vld [vmem:[%s1075 + $0x3c] sm:$0xf]
        %v1108 = vunpack.c.l.b16 %v1076
        %v1109 = vunpack.c.l.b16 %v1077
        %v1110 = vunpack.c.l.b16 %v1078
        %v1111 = vunpack.c.l.b16 %v1079
        %v1112 = vunpack.c.l.b16 %v1080
        %v1113 = vunpack.c.l.b16 %v1081
        %v1114 = vunpack.c.l.b16 %v1082
        %v1115 = vunpack.c.l.b16 %v1083
        %v1116 = vunpack.c.l.b16 %v1084
        %v1117 = vunpack.c.l.b16 %v1085
        %v1118 = vunpack.c.l.b16 %v1086
        %v1119 = vunpack.c.l.b16 %v1087
        %v1120 = vunpack.c.l.b16 %v1088
        %v1121 = vunpack.c.l.b16 %v1089
        %v1122 = vunpack.c.l.b16 %v1090
        %v1123 = vunpack.c.l.b16 %v1091
        %v1124 = vpack.c.b16 %v1109, %v1108
        %v1125 = vpack.c.b16 %v1111, %v1110
        %v1126 = vpack.c.b16 %v1113, %v1112
        %v1127 = vpack.c.b16 %v1115, %v1114
        %v1128 = vpack.c.b16 %v1117, %v1116
        %v1129 = vpack.c.b16 %v1119, %v1118
        %v1130 = vpack.c.b16 %v1121, %v1120
        %v1131 = vpack.c.b16 %v1123, %v1122
        %1140 = vmatprep.subr.bf16.mxu0 0
        %1141 = vmatpush1.bf16.msra.mxu0 %v1124
        %1142 = vmatprep.subr.bf16.mxu0 0
        %1143 = vmatpush1.bf16.msra.mxu0 %v1125
        %1144 = vmatprep.subr.bf16.mxu0 0
        %1145 = vmatpush1.bf16.msra.mxu0 %v1126
        %1146 = vmatprep.subr.bf16.mxu0 0
        %1147 = vmatpush1.bf16.msra.mxu0 %v1127
        %1148 = vmatprep.subr.bf16.mxu0 0
        %1149 = vmatpush1.bf16.msra.mxu0 %v1128
        %1150 = vmatprep.subr.bf16.mxu0 0
        %1151 = vmatpush1.bf16.msra.mxu0 %v1129
        %1152 = vmatprep.subr.bf16.mxu0 0
        %1153 = vmatpush1.bf16.msra.mxu0 %v1130
        %1154 = vmatprep.subr.bf16.mxu0 0
        %1155 = vmatpush1.bf16.msra.mxu0 %v1131
        %1156 = vmatprep.subr.bf16.mxu0 0
        %1157 = vmatpush1.bf16.msra.mxu0 0
        %1158 = vmatprep.subr.bf16.mxu0 0
        %1159 = vmatpush1.bf16.msra.mxu0 0
        %1160 = vmatprep.subr.bf16.mxu0 0
        %1161 = vmatpush1.bf16.msra.mxu0 0
        %1162 = vmatprep.subr.bf16.mxu0 0
        %1163 = vmatpush1.bf16.msra.mxu0 0
        %1164 = vmatprep.subr.bf16.mxu0 0
        %1165 = vmatpush1.bf16.msra.mxu0 0
        %1166 = vmatprep.subr.bf16.mxu0 0
        %1167 = vmatpush1.bf16.msra.mxu0 0
        %1168 = vmatprep.subr.bf16.mxu0 0
        %1169 = vmatpush1.bf16.msra.mxu0 0
        %1170 = vmatprep.subr.bf16.mxu0 0
        %1171 = vmatpush1.bf16.msra.mxu0 0
        %1172 = vmatprep.mubr.bf16.mxu0 0
        %1173 = vmatmul.mubr.bf16.gmra.mrb[0].mxu0 %v1057
        %v1174 = vpop.f32.mrb[0].mxu0
        %v1175 = vadd.f32 0.0, %v1174
        %v1176 = vpop.f32.mrb[0].mxu0
        %v1177 = vpop.f32.mrb[0].mxu0
        %v1178 = vadd.f32 0.0, %v1177
        %v1179 = vpop.f32.mrb[0].mxu0
        %1180 = vmatprep.mubr.bf16.mxu0 0
        %1181 = vmatmul.mubr.bf16.gmra.mrb[0].mxu0 %v1058
        %v1182 = vpop.f32.mrb[0].mxu0
        %v1183 = vadd.f32 0.0, %v1182
        %v1184 = vpop.f32.mrb[0].mxu0
        %v1185 = vpop.f32.mrb[0].mxu0
        %v1186 = vadd.f32 0.0, %v1185
        %v1187 = vpop.f32.mrb[0].mxu0
        %1188 = vmatprep.mubr.bf16.mxu0 0
        %1189 = vmatmul.mubr.bf16.gmra.mrb[0].mxu0 %v1059
        %v1190 = vpop.f32.mrb[0].mxu0
        %v1191 = vadd.f32 0.0, %v1190
        %v1192 = vpop.f32.mrb[0].mxu0
        %v1193 = vpop.f32.mrb[0].mxu0
        %v1194 = vadd.f32 0.0, %v1193
        %v1195 = vpop.f32.mrb[0].mxu0
        %1196 = vmatprep.mubr.bf16.mxu0 0
        %1197 = vmatmul.mubr.bf16.gmra.mrb[0].mxu0 %v1060
        %v1198 = vpop.f32.mrb[0].mxu0
        %v1199 = vadd.f32 0.0, %v1198
        %v1200 = vpop.f32.mrb[0].mxu0
        %v1201 = vpop.f32.mrb[0].mxu0
        %v1202 = vadd.f32 0.0, %v1201
        %v1203 = vpop.f32.mrb[0].mxu0
        %1204 = vmatprep.mubr.bf16.mxu0 0
        %1205 = vmatmul.mubr.bf16.gmra.mrb[0].mxu0 %v1061
        %v1206 = vpop.f32.mrb[0].mxu0
        %v1207 = vadd.f32 0.0, %v1206
        %v1208 = vpop.f32.mrb[0].mxu0
        %v1209 = vpop.f32.mrb[0].mxu0
        %v1210 = vadd.f32 0.0, %v1209
        %v1211 = vpop.f32.mrb[0].mxu0
        %1212 = vmatprep.mubr.bf16.mxu0 0
        %1213 = vmatmul.mubr.bf16.gmra.mrb[0].mxu0 %v1062
        %v1214 = vpop.f32.mrb[0].mxu0
        %v1215 = vadd.f32 0.0, %v1214
        %v1216 = vpop.f32.mrb[0].mxu0
        %v1217 = vpop.f32.mrb[0].mxu0
        %v1218 = vadd.f32 0.0, %v1217
        %v1219 = vpop.f32.mrb[0].mxu0
        %1220 = vmatprep.mubr.bf16.mxu0 0
        %1221 = vmatmul.mubr.bf16.gmra.mrb[0].mxu0 %v1063
        %v1222 = vpop.f32.mrb[0].mxu0
        %v1223 = vadd.f32 0.0, %v1222
        %v1224 = vpop.f32.mrb[0].mxu0
        %v1225 = vpop.f32.mrb[0].mxu0
        %v1226 = vadd.f32 0.0, %v1225
        %v1227 = vpop.f32.mrb[0].mxu0
        %1228 = vmatprep.mubr.bf16.mxu0 0
        %1229 = vmatmul.mubr.bf16.gmra.mrb[0].mxu0 %v1064
        %v1230 = vpop.f32.mrb[0].mxu0
        %v1231 = vadd.f32 0.0, %v1230
        %v1232 = vpop.f32.mrb[0].mxu0
        %v1233 = vpop.f32.mrb[0].mxu0
        %v1234 = vadd.f32 0.0, %v1233
        %v1235 = vpop.f32.mrb[0].mxu0
        %1236 = vmatprep.mubr.bf16.mxu0 0
        %1237 = vmatmul.mubr.bf16.gmra.mrb[0].mxu0 %v1065
        %v1238 = vpop.f32.mrb[0].mxu0
        %v1239 = vadd.f32 0.0, %v1238
        %v1240 = vpop.f32.mrb[0].mxu0
        %v1241 = vpop.f32.mrb[0].mxu0
        %v1242 = vadd.f32 0.0, %v1241
        %v1243 = vpop.f32.mrb[0].mxu0
        %1244 = vmatprep.mubr.bf16.mxu0 0
        %1245 = vmatmul.mubr.bf16.gmra.mrb[0].mxu0 %v1066
        %v1246 = vpop.f32.mrb[0].mxu0
        %v1247 = vadd.f32 0.0, %v1246
        %v1248 = vpop.f32.mrb[0].mxu0
        %v1249 = vpop.f32.mrb[0].mxu0
        %v1250 = vadd.f32 0.0, %v1249
        %v1251 = vpop.f32.mrb[0].mxu0
        %1252 = vmatprep.mubr.bf16.mxu0 0
        %1253 = vmatmul.mubr.bf16.gmra.mrb[0].mxu0 %v1067
        %v1254 = vpop.f32.mrb[0].mxu0
        %v1255 = vadd.f32 0.0, %v1254
        %v1256 = vpop.f32.mrb[0].mxu0
        %v1257 = vpop.f32.mrb[0].mxu0
        %v1258 = vadd.f32 0.0, %v1257
        %v1259 = vpop.f32.mrb[0].mxu0
        %1260 = vmatprep.mubr.bf16.mxu0 0
        %1261 = vmatmul.mubr.bf16.gmra.mrb[0].mxu0 %v1068
        %v1262 = vpop.f32.mrb[0].mxu0
        %v1263 = vadd.f32 0.0, %v1262
        %v1264 = vpop.f32.mrb[0].mxu0
        %v1265 = vpop.f32.mrb[0].mxu0
        %v1266 = vadd.f32 0.0, %v1265
        %v1267 = vpop.f32.mrb[0].mxu0
        %1268 = vmatprep.mubr.bf16.mxu0 0
        %1269 = vmatmul.mubr.bf16.gmra.mrb[0].mxu0 %v1069
        %v1270 = vpop.f32.mrb[0].mxu0
        %v1271 = vadd.f32 0.0, %v1270
        %v1272 = vpop.f32.mrb[0].mxu0
        %v1273 = vpop.f32.mrb[0].mxu0
        %v1274 = vadd.f32 0.0, %v1273
        %v1275 = vpop.f32.mrb[0].mxu0
        %1276 = vmatprep.mubr.bf16.mxu0 0
        %1277 = vmatmul.mubr.bf16.gmra.mrb[0].mxu0 %v1070
        %v1278 = vpop.f32.mrb[0].mxu0
        %v1279 = vadd.f32 0.0, %v1278
        %v1280 = vpop.f32.mrb[0].mxu0
        %v1281 = vpop.f32.mrb[0].mxu0
        %v1282 = vadd.f32 0.0, %v1281
        %v1283 = vpop.f32.mrb[0].mxu0
        %1284 = vmatprep.mubr.bf16.mxu0 0
        %1285 = vmatmul.mubr.bf16.gmra.mrb[0].mxu0 %v1071
        %v1286 = vpop.f32.mrb[0].mxu0
        %v1287 = vadd.f32 0.0, %v1286
        %v1288 = vpop.f32.mrb[0].mxu0
        %v1289 = vpop.f32.mrb[0].mxu0
        %v1290 = vadd.f32 0.0, %v1289
        %v1291 = vpop.f32.mrb[0].mxu0
        %1292 = vmatprep.mubr.bf16.mxu0 0
        %1293 = vmatmul.mubr.bf16.gmra.mrb[0].mxu0 %v1072
        %v1294 = vpop.f32.mrb[0].mxu0
        %v1295 = vadd.f32 0.0, %v1294
        %v1296 = vpop.f32.mrb[0].mxu0
        %v1297 = vpop.f32.mrb[0].mxu0
        %v1298 = vadd.f32 0.0, %v1297
        %v1299 = vpop.f32.mrb[0].mxu0
        %1300 = vmatprep.mubr.bf16.mxu0 0
        %1301 = vmatmul.mubr.bf16.gmra.mrb[0].mxu0 %v1073
        %v1302 = vpop.f32.mrb[0].mxu0
        %v1303 = vadd.f32 0.0, %v1302
        %v1304 = vpop.f32.mrb[0].mxu0
        %v1305 = vpop.f32.mrb[0].mxu0
        %v1306 = vadd.f32 0.0, %v1305
        %v1307 = vpop.f32.mrb[0].mxu0
        %1308 = vmatprep.mubr.bf16.mxu0 0
        %1309 = vmatmul.mubr.bf16.gmra.mrb[0].mxu0 %v1074
        %v1310 = vpop.f32.mrb[0].mxu0
        %v1311 = vadd.f32 0.0, %v1310
        %v1312 = vpop.f32.mrb[0].mxu0
        %v1313 = vpop.f32.mrb[0].mxu0
        %v1314 = vadd.f32 0.0, %v1313
        %v1315 = vpop.f32.mrb[0].mxu0
        %1316 = vdwg.mxu0
        %v1333 = vunpack.c.l.b16 %v1005
        %v1334 = vunpack.c.l.b16 %v1006
        %v1335 = vunpack.c.l.b16 %v1007
        %v1336 = vunpack.c.l.b16 %v1008
        %v1337 = vunpack.c.l.b16 %v1009
        %v1338 = vunpack.c.l.b16 %v1010
        %v1339 = vunpack.c.l.b16 %v1011
        %v1340 = vunpack.c.l.b16 %v1012
        %v1341 = vunpack.c.l.b16 %v1013
        %v1342 = vunpack.c.l.b16 %v1014
        %v1343 = vunpack.c.l.b16 %v1015
        %v1344 = vunpack.c.l.b16 %v1016
        %v1345 = vunpack.c.l.b16 %v1017
        %v1346 = vunpack.c.l.b16 %v1018
        %v1347 = vunpack.c.l.b16 %v1019
        %v1348 = vunpack.c.l.b16 %v1020
        %v1349 = vpack.c.b16 %v1334, %v1333
        %v1350 = vpack.c.b16 %v1336, %v1335
        %v1351 = vpack.c.b16 %v1338, %v1337
        %v1352 = vpack.c.b16 %v1340, %v1339
        %v1353 = vpack.c.b16 %v1342, %v1341
        %v1354 = vpack.c.b16 %v1344, %v1343
        %v1355 = vpack.c.b16 %v1346, %v1345
        %v1356 = vpack.c.b16 %v1348, %v1347
        %1365 = vmatprep.subr.bf16.mxu0 0
        %1366 = vmatpush1.bf16.msra.mxu0 %v1349
        %1367 = vmatprep.subr.bf16.mxu0 0
        %1368 = vmatpush1.bf16.msra.mxu0 %v1350
        %1369 = vmatprep.subr.bf16.mxu0 0
        %1370 = vmatpush1.bf16.msra.mxu0 %v1351
        %1371 = vmatprep.subr.bf16.mxu0 0
        %1372 = vmatpush1.bf16.msra.mxu0 %v1352
        %1373 = vmatprep.subr.bf16.mxu0 0
        %1374 = vmatpush1.bf16.msra.mxu0 %v1353
        %1375 = vmatprep.subr.bf16.mxu0 0
        %1376 = vmatpush1.bf16.msra.mxu0 %v1354
        %1377 = vmatprep.subr.bf16.mxu0 0
        %1378 = vmatpush1.bf16.msra.mxu0 %v1355
        %1379 = vmatprep.subr.bf16.mxu0 0
        %1380 = vmatpush1.bf16.msra.mxu0 %v1356
        %1381 = vmatprep.subr.bf16.mxu0 0
        %1382 = vmatpush1.bf16.msra.mxu0 0
        %1383 = vmatprep.subr.bf16.mxu0 0
        %1384 = vmatpush1.bf16.msra.mxu0 0
        %1385 = vmatprep.subr.bf16.mxu0 0
        %1386 = vmatpush1.bf16.msra.mxu0 0
        %1387 = vmatprep.subr.bf16.mxu0 0
        %1388 = vmatpush1.bf16.msra.mxu0 0
        %1389 = vmatprep.subr.bf16.mxu0 0
        %1390 = vmatpush1.bf16.msra.mxu0 0
        %1391 = vmatprep.subr.bf16.mxu0 0
        %1392 = vmatpush1.bf16.msra.mxu0 0
        %1393 = vmatprep.subr.bf16.mxu0 0
        %1394 = vmatpush1.bf16.msra.mxu0 0
        %1395 = vmatprep.subr.bf16.mxu0 0
        %1396 = vmatpush1.bf16.msra.mxu0 0
        %1397 = vmatprep.mubr.bf16.mxu0 0
        %1398 = vmatmul.mubr.bf16.gmra.mrb[0].mxu0 %v987
        %v1399 = vpop.f32.mrb[0].mxu0
        %v1400 = vadd.f32 %v1175, %v1399
        %v1401 = vpop.f32.mrb[0].mxu0
        %v1402 = vpop.f32.mrb[0].mxu0
        %v1403 = vadd.f32 %v1178, %v1402
        %v1404 = vpop.f32.mrb[0].mxu0
        %1405 = vmatprep.mubr.bf16.mxu0 0
        %1406 = vmatmul.mubr.bf16.gmra.mrb[0].mxu0 %v988
        %v1407 = vpop.f32.mrb[0].mxu0
        %v1408 = vadd.f32 %v1183, %v1407
        %v1409 = vpop.f32.mrb[0].mxu0
        %v1410 = vpop.f32.mrb[0].mxu0
        %v1411 = vadd.f32 %v1186, %v1410
        %v1412 = vpop.f32.mrb[0].mxu0
        %1413 = vmatprep.mubr.bf16.mxu0 0
        %1414 = vmatmul.mubr.bf16.gmra.mrb[0].mxu0 %v989
        %v1415 = vpop.f32.mrb[0].mxu0
        %v1416 = vadd.f32 %v1191, %v1415
        %v1417 = vpop.f32.mrb[0].mxu0
        %v1418 = vpop.f32.mrb[0].mxu0
        %v1419 = vadd.f32 %v1194, %v1418
        %v1420 = vpop.f32.mrb[0].mxu0
        %1421 = vmatprep.mubr.bf16.mxu0 0
        %1422 = vmatmul.mubr.bf16.gmra.mrb[0].mxu0 %v990
        %v1423 = vpop.f32.mrb[0].mxu0
        %v1424 = vadd.f32 %v1199, %v1423
        %v1425 = vpop.f32.mrb[0].mxu0
        %v1426 = vpop.f32.mrb[0].mxu0
        %v1427 = vadd.f32 %v1202, %v1426
        %v1428 = vpop.f32.mrb[0].mxu0
        %1429 = vmatprep.mubr.bf16.mxu0 0
        %1430 = vmatmul.mubr.bf16.gmra.mrb[0].mxu0 %v991
        %v1431 = vpop.f32.mrb[0].mxu0
        %v1432 = vadd.f32 %v1207, %v1431
        %v1433 = vpop.f32.mrb[0].mxu0
        %v1434 = vpop.f32.mrb[0].mxu0
        %v1435 = vadd.f32 %v1210, %v1434
        %v1436 = vpop.f32.mrb[0].mxu0
        %1437 = vmatprep.mubr.bf16.mxu0 0
        %1438 = vmatmul.mubr.bf16.gmra.mrb[0].mxu0 %v992
        %v1439 = vpop.f32.mrb[0].mxu0
        %v1440 = vadd.f32 %v1215, %v1439
        %v1441 = vpop.f32.mrb[0].mxu0
        %v1442 = vpop.f32.mrb[0].mxu0
        %v1443 = vadd.f32 %v1218, %v1442
        %v1444 = vpop.f32.mrb[0].mxu0
        %1445 = vmatprep.mubr.bf16.mxu0 0
        %1446 = vmatmul.mubr.bf16.gmra.mrb[0].mxu0 %v993
        %v1447 = vpop.f32.mrb[0].mxu0
        %v1448 = vadd.f32 %v1223, %v1447
        %v1449 = vpop.f32.mrb[0].mxu0
        %v1450 = vpop.f32.mrb[0].mxu0
        %v1451 = vadd.f32 %v1226, %v1450
        %v1452 = vpop.f32.mrb[0].mxu0
        %1453 = vmatprep.mubr.bf16.mxu0 0
        %1454 = vmatmul.mubr.bf16.gmra.mrb[0].mxu0 %v994
        %v1455 = vpop.f32.mrb[0].mxu0
        %v1456 = vadd.f32 %v1231, %v1455
        %v1457 = vpop.f32.mrb[0].mxu0
        %v1458 = vpop.f32.mrb[0].mxu0
        %v1459 = vadd.f32 %v1234, %v1458
        %v1460 = vpop.f32.mrb[0].mxu0
        %1461 = vmatprep.mubr.bf16.mxu0 0
        %1462 = vmatmul.mubr.bf16.gmra.mrb[0].mxu0 %v995
        %v1463 = vpop.f32.mrb[0].mxu0
        %v1464 = vadd.f32 %v1239, %v1463
        %v1465 = vpop.f32.mrb[0].mxu0
        %v1466 = vpop.f32.mrb[0].mxu0
        %v1467 = vadd.f32 %v1242, %v1466
        %v1468 = vpop.f32.mrb[0].mxu0
        %1469 = vmatprep.mubr.bf16.mxu0 0
        %1470 = vmatmul.mubr.bf16.gmra.mrb[0].mxu0 %v996
        %v1471 = vpop.f32.mrb[0].mxu0
        %v1472 = vadd.f32 %v1247, %v1471
        %v1473 = vpop.f32.mrb[0].mxu0
        %v1474 = vpop.f32.mrb[0].mxu0
        %v1475 = vadd.f32 %v1250, %v1474
        %v1476 = vpop.f32.mrb[0].mxu0
        %1477 = vmatprep.mubr.bf16.mxu0 0
        %1478 = vmatmul.mubr.bf16.gmra.mrb[0].mxu0 %v997
        %v1479 = vpop.f32.mrb[0].mxu0
        %v1480 = vadd.f32 %v1255, %v1479
        %v1481 = vpop.f32.mrb[0].mxu0
        %v1482 = vpop.f32.mrb[0].mxu0
        %v1483 = vadd.f32 %v1258, %v1482
        %v1484 = vpop.f32.mrb[0].mxu0
        %1485 = vmatprep.mubr.bf16.mxu0 0
        %1486 = vmatmul.mubr.bf16.gmra.mrb[0].mxu0 %v998
        %v1487 = vpop.f32.mrb[0].mxu0
        %v1488 = vadd.f32 %v1263, %v1487
        %v1489 = vpop.f32.mrb[0].mxu0
        %v1490 = vpop.f32.mrb[0].mxu0
        %v1491 = vadd.f32 %v1266, %v1490
        %v1492 = vpop.f32.mrb[0].mxu0
        %1493 = vmatprep.mubr.bf16.mxu0 0
        %1494 = vmatmul.mubr.bf16.gmra.mrb[0].mxu0 %v999
        %v1495 = vpop.f32.mrb[0].mxu0
        %v1496 = vadd.f32 %v1271, %v1495
        %v1497 = vpop.f32.mrb[0].mxu0
        %v1498 = vpop.f32.mrb[0].mxu0
        %v1499 = vadd.f32 %v1274, %v1498
        %v1500 = vpop.f32.mrb[0].mxu0
        %1501 = vmatprep.mubr.bf16.mxu0 0
        %1502 = vmatmul.mubr.bf16.gmra.mrb[0].mxu0 %v1000
        %v1503 = vpop.f32.mrb[0].mxu0
        %v1504 = vadd.f32 %v1279, %v1503
        %v1505 = vpop.f32.mrb[0].mxu0
        %v1506 = vpop.f32.mrb[0].mxu0
        %v1507 = vadd.f32 %v1282, %v1506
        %v1508 = vpop.f32.mrb[0].mxu0
        %1509 = vmatprep.mubr.bf16.mxu0 0
        %1510 = vmatmul.mubr.bf16.gmra.mrb[0].mxu0 %v1001
        %v1511 = vpop.f32.mrb[0].mxu0
        %v1512 = vadd.f32 %v1287, %v1511
        %v1513 = vpop.f32.mrb[0].mxu0
        %v1514 = vpop.f32.mrb[0].mxu0
        %v1515 = vadd.f32 %v1290, %v1514
        %v1516 = vpop.f32.mrb[0].mxu0
        %1517 = vmatprep.mubr.bf16.mxu0 0
        %1518 = vmatmul.mubr.bf16.gmra.mrb[0].mxu0 %v1002
        %v1519 = vpop.f32.mrb[0].mxu0
        %v1520 = vadd.f32 %v1295, %v1519
        %v1521 = vpop.f32.mrb[0].mxu0
        %v1522 = vpop.f32.mrb[0].mxu0
        %v1523 = vadd.f32 %v1298, %v1522
        %v1524 = vpop.f32.mrb[0].mxu0
        %1525 = vmatprep.mubr.bf16.mxu0 0
        %1526 = vmatmul.mubr.bf16.gmra.mrb[0].mxu0 %v1003
        %v1527 = vpop.f32.mrb[0].mxu0
        %v1528 = vadd.f32 %v1303, %v1527
        %v1529 = vpop.f32.mrb[0].mxu0
        %v1530 = vpop.f32.mrb[0].mxu0
        %v1531 = vadd.f32 %v1306, %v1530
        %v1532 = vpop.f32.mrb[0].mxu0
        %1533 = vmatprep.mubr.bf16.mxu0 0
        %1534 = vmatmul.mubr.bf16.gmra.mrb[0].mxu0 %v1004
        %v1535 = vpop.f32.mrb[0].mxu0
        %v1536 = vadd.f32 %v1311, %v1535
        %v1537 = vpop.f32.mrb[0].mxu0
        %v1538 = vpop.f32.mrb[0].mxu0
        %v1539 = vadd.f32 %v1314, %v1538
        %v1540 = vpop.f32.mrb[0].mxu0
        %1541 = vdwg.mxu0
        %v1542 = vld [vmem:[#allocation2 + $0x2] sm:$0xff]
        %v1543 = vld [vmem:[#allocation2 + $0xa] sm:$0xff]
        %v1544 = vld [vmem:[#allocation2 + $0x12] sm:$0xff]
        %v1545 = vld [vmem:[#allocation2 + $0x1a] sm:$0xff]
        %v1546 = vld [vmem:[#allocation2 + $0x22] sm:$0xff]
        %v1547 = vld [vmem:[#allocation2 + $0x2a] sm:$0xff]
        %v1548 = vld [vmem:[#allocation2 + $0x32] sm:$0xff]
        %v1549 = vld [vmem:[#allocation2 + $0x3a] sm:$0xff]
        %v1550 = vld [vmem:[#allocation2 + $0x42] sm:$0xff]
        %v1551 = vld [vmem:[#allocation2 + $0x4a] sm:$0xff]
        %v1552 = vld [vmem:[#allocation2 + $0x52] sm:$0xff]
        %v1553 = vld [vmem:[#allocation2 + $0x5a] sm:$0xff]
        %v1554 = vld [vmem:[#allocation2 + $0x62] sm:$0xff]
        %v1555 = vld [vmem:[#allocation2 + $0x6a] sm:$0xff]
        %v1556 = vld [vmem:[#allocation2 + $0x72] sm:$0xff]
        %v1557 = vld [vmem:[#allocation2 + $0x7a] sm:$0xff]
        %v1558 = vld [vmem:[#allocation2 + $0x82] sm:$0xff]
        %v1559 = vld [vmem:[#allocation2 + $0x8a] sm:$0xff]
        %v1560 = vld [vmem:[#allocation2 + $0x92] sm:$0xff]
        %v1561 = vld [vmem:[#allocation2 + $0x9a] sm:$0xff]
        %v1562 = vld [vmem:[#allocation2 + $0xa2] sm:$0xff]
        %v1563 = vld [vmem:[#allocation2 + $0xaa] sm:$0xff]
        %v1564 = vld [vmem:[#allocation2 + $0xb2] sm:$0xff]
        %v1565 = vld [vmem:[#allocation2 + $0xba] sm:$0xff]
        %v1566 = vld [vmem:[#allocation2 + $0xc2] sm:$0xff]
        %v1567 = vld [vmem:[#allocation2 + $0xca] sm:$0xff]
        %v1568 = vld [vmem:[#allocation2 + $0xd2] sm:$0xff]
        %v1569 = vld [vmem:[#allocation2 + $0xda] sm:$0xff]
        %v1570 = vld [vmem:[#allocation2 + $0xe2] sm:$0xff]
        %v1571 = vld [vmem:[#allocation2 + $0xea] sm:$0xff]
        %v1572 = vld [vmem:[#allocation2 + $0xf2] sm:$0xff]
        %v1573 = vld [vmem:[#allocation2 + $0xfa] sm:$0xff]
        %v1574 = vld [vmem:[#allocation2 + $0x102] sm:$0xff]
        %v1575 = vld [vmem:[#allocation2 + $0x10a] sm:$0xff]
        %v1576 = vld [vmem:[#allocation2 + $0x112] sm:$0xff]
        %v1577 = vld [vmem:[#allocation2 + $0x11a] sm:$0xff]
        %v1578 = vpack.c.bf16 %v1543, %v1542
        %v1579 = vpack.c.bf16 %v1545, %v1544
        %v1580 = vpack.c.bf16 %v1547, %v1546
        %v1581 = vpack.c.bf16 %v1549, %v1548
        %v1582 = vpack.c.bf16 %v1551, %v1550
        %v1583 = vpack.c.bf16 %v1553, %v1552
        %v1584 = vpack.c.bf16 %v1555, %v1554
        %v1585 = vpack.c.bf16 %v1557, %v1556
        %v1586 = vpack.c.bf16 %v1559, %v1558
        %v1587 = vpack.c.bf16 %v1561, %v1560
        %v1588 = vpack.c.bf16 %v1563, %v1562
        %v1589 = vpack.c.bf16 %v1565, %v1564
        %v1590 = vpack.c.bf16 %v1567, %v1566
        %v1591 = vpack.c.bf16 %v1569, %v1568
        %v1592 = vpack.c.bf16 %v1571, %v1570
        %v1593 = vpack.c.bf16 %v1573, %v1572
        %v1594 = vpack.c.bf16 %v1575, %v1574
        %v1595 = vpack.c.bf16 %v1577, %v1576
        %s1596 = scalar_lea.vmem [#allocation9], 128
        %v1597 = vld [vmem:[%s1596] sm:$0xf]
        %v1598 = vld [vmem:[%s1596 + $0x4] sm:$0xf]
        %v1599 = vld [vmem:[%s1596 + $0x8] sm:$0xf]
        %v1600 = vld [vmem:[%s1596 + $0xc] sm:$0xf]
        %v1601 = vld [vmem:[%s1596 + $0x10] sm:$0xf]
        %v1602 = vld [vmem:[%s1596 + $0x14] sm:$0xf]
        %v1603 = vld [vmem:[%s1596 + $0x18] sm:$0xf]
        %v1604 = vld [vmem:[%s1596 + $0x1c] sm:$0xf]
        %v1605 = vld [vmem:[%s1596 + $0x20] sm:$0xf]
        %v1606 = vld [vmem:[%s1596 + $0x24] sm:$0xf]
        %v1607 = vld [vmem:[%s1596 + $0x28] sm:$0xf]
        %v1608 = vld [vmem:[%s1596 + $0x2c] sm:$0xf]
        %v1609 = vld [vmem:[%s1596 + $0x30] sm:$0xf]
        %v1610 = vld [vmem:[%s1596 + $0x34] sm:$0xf]
        %v1611 = vld [vmem:[%s1596 + $0x38] sm:$0xf]
        %v1612 = vld [vmem:[%s1596 + $0x3c] sm:$0xf]
        %v1629 = vunpack.c.l.b16 %v1597
        %v1630 = vunpack.c.l.b16 %v1598
        %v1631 = vunpack.c.l.b16 %v1599
        %v1632 = vunpack.c.l.b16 %v1600
        %v1633 = vunpack.c.l.b16 %v1601
        %v1634 = vunpack.c.l.b16 %v1602
        %v1635 = vunpack.c.l.b16 %v1603
        %v1636 = vunpack.c.l.b16 %v1604
        %v1637 = vunpack.c.l.b16 %v1605
        %v1638 = vunpack.c.l.b16 %v1606
        %v1639 = vunpack.c.l.b16 %v1607
        %v1640 = vunpack.c.l.b16 %v1608
        %v1641 = vunpack.c.l.b16 %v1609
        %v1642 = vunpack.c.l.b16 %v1610
        %v1643 = vunpack.c.l.b16 %v1611
        %v1644 = vunpack.c.l.b16 %v1612
        %v1645 = vpack.c.b16 %v1630, %v1629
        %v1646 = vpack.c.b16 %v1632, %v1631
        %v1647 = vpack.c.b16 %v1634, %v1633
        %v1648 = vpack.c.b16 %v1636, %v1635
        %v1649 = vpack.c.b16 %v1638, %v1637
        %v1650 = vpack.c.b16 %v1640, %v1639
        %v1651 = vpack.c.b16 %v1642, %v1641
        %v1652 = vpack.c.b16 %v1644, %v1643
        %1661 = vmatprep.subr.bf16.mxu0 0
        %1662 = vmatpush1.bf16.msra.mxu0 %v1645
        %1663 = vmatprep.subr.bf16.mxu0 0
        %1664 = vmatpush1.bf16.msra.mxu0 %v1646
        %1665 = vmatprep.subr.bf16.mxu0 0
        %1666 = vmatpush1.bf16.msra.mxu0 %v1647
        %1667 = vmatprep.subr.bf16.mxu0 0
        %1668 = vmatpush1.bf16.msra.mxu0 %v1648
        %1669 = vmatprep.subr.bf16.mxu0 0
        %1670 = vmatpush1.bf16.msra.mxu0 %v1649
        %1671 = vmatprep.subr.bf16.mxu0 0
        %1672 = vmatpush1.bf16.msra.mxu0 %v1650
        %1673 = vmatprep.subr.bf16.mxu0 0
        %1674 = vmatpush1.bf16.msra.mxu0 %v1651
        %1675 = vmatprep.subr.bf16.mxu0 0
        %1676 = vmatpush1.bf16.msra.mxu0 %v1652
        %1677 = vmatprep.subr.bf16.mxu0 0
        %1678 = vmatpush1.bf16.msra.mxu0 0
        %1679 = vmatprep.subr.bf16.mxu0 0
        %1680 = vmatpush1.bf16.msra.mxu0 0
        %1681 = vmatprep.subr.bf16.mxu0 0
        %1682 = vmatpush1.bf16.msra.mxu0 0
        %1683 = vmatprep.subr.bf16.mxu0 0
        %1684 = vmatpush1.bf16.msra.mxu0 0
        %1685 = vmatprep.subr.bf16.mxu0 0
        %1686 = vmatpush1.bf16.msra.mxu0 0
        %1687 = vmatprep.subr.bf16.mxu0 0
        %1688 = vmatpush1.bf16.msra.mxu0 0
        %1689 = vmatprep.subr.bf16.mxu0 0
        %1690 = vmatpush1.bf16.msra.mxu0 0
        %1691 = vmatprep.subr.bf16.mxu0 0
        %1692 = vmatpush1.bf16.msra.mxu0 0
        %1693 = vmatprep.mubr.bf16.mxu0 0
        %1694 = vmatmul.mubr.bf16.gmra.mrb[0].mxu0 %v1578
        %v1695 = vpop.f32.mrb[0].mxu0
        %v1696 = vadd.f32 0.0, %v1695
        %v1697 = vpop.f32.mrb[0].mxu0
        %v1698 = vpop.f32.mrb[0].mxu0
        %v1699 = vadd.f32 0.0, %v1698
        %v1700 = vpop.f32.mrb[0].mxu0
        %1701 = vmatprep.mubr.bf16.mxu0 0
        %1702 = vmatmul.mubr.bf16.gmra.mrb[0].mxu0 %v1579
        %v1703 = vpop.f32.mrb[0].mxu0
        %v1704 = vadd.f32 0.0, %v1703
        %v1705 = vpop.f32.mrb[0].mxu0
        %v1706 = vpop.f32.mrb[0].mxu0
        %v1707 = vadd.f32 0.0, %v1706
        %v1708 = vpop.f32.mrb[0].mxu0
        %1709 = vmatprep.mubr.bf16.mxu0 0
        %1710 = vmatmul.mubr.bf16.gmra.mrb[0].mxu0 %v1580
        %v1711 = vpop.f32.mrb[0].mxu0
        %v1712 = vadd.f32 0.0, %v1711
        %v1713 = vpop.f32.mrb[0].mxu0
        %v1714 = vpop.f32.mrb[0].mxu0
        %v1715 = vadd.f32 0.0, %v1714
        %v1716 = vpop.f32.mrb[0].mxu0
        %1717 = vmatprep.mubr.bf16.mxu0 0
        %1718 = vmatmul.mubr.bf16.gmra.mrb[0].mxu0 %v1581
        %v1719 = vpop.f32.mrb[0].mxu0
        %v1720 = vadd.f32 0.0, %v1719
        %v1721 = vpop.f32.mrb[0].mxu0
        %v1722 = vpop.f32.mrb[0].mxu0
        %v1723 = vadd.f32 0.0, %v1722
        %v1724 = vpop.f32.mrb[0].mxu0
        %1725 = vmatprep.mubr.bf16.mxu0 0
        %1726 = vmatmul.mubr.bf16.gmra.mrb[0].mxu0 %v1582
        %v1727 = vpop.f32.mrb[0].mxu0
        %v1728 = vadd.f32 0.0, %v1727
        %v1729 = vpop.f32.mrb[0].mxu0
        %v1730 = vpop.f32.mrb[0].mxu0
        %v1731 = vadd.f32 0.0, %v1730
        %v1732 = vpop.f32.mrb[0].mxu0
        %1733 = vmatprep.mubr.bf16.mxu0 0
        %1734 = vmatmul.mubr.bf16.gmra.mrb[0].mxu0 %v1583
        %v1735 = vpop.f32.mrb[0].mxu0
        %v1736 = vadd.f32 0.0, %v1735
        %v1737 = vpop.f32.mrb[0].mxu0
        %v1738 = vpop.f32.mrb[0].mxu0
        %v1739 = vadd.f32 0.0, %v1738
        %v1740 = vpop.f32.mrb[0].mxu0
        %1741 = vmatprep.mubr.bf16.mxu0 0
        %1742 = vmatmul.mubr.bf16.gmra.mrb[0].mxu0 %v1584
        %v1743 = vpop.f32.mrb[0].mxu0
        %v1744 = vadd.f32 0.0, %v1743
        %v1745 = vpop.f32.mrb[0].mxu0
        %v1746 = vpop.f32.mrb[0].mxu0
        %v1747 = vadd.f32 0.0, %v1746
        %v1748 = vpop.f32.mrb[0].mxu0
        %1749 = vmatprep.mubr.bf16.mxu0 0
        %1750 = vmatmul.mubr.bf16.gmra.mrb[0].mxu0 %v1585
        %v1751 = vpop.f32.mrb[0].mxu0
        %v1752 = vadd.f32 0.0, %v1751
        %v1753 = vpop.f32.mrb[0].mxu0
        %v1754 = vpop.f32.mrb[0].mxu0
        %v1755 = vadd.f32 0.0, %v1754
        %v1756 = vpop.f32.mrb[0].mxu0
        %1757 = vmatprep.mubr.bf16.mxu0 0
        %1758 = vmatmul.mubr.bf16.gmra.mrb[0].mxu0 %v1586
        %v1759 = vpop.f32.mrb[0].mxu0
        %v1760 = vadd.f32 0.0, %v1759
        %v1761 = vpop.f32.mrb[0].mxu0
        %v1762 = vpop.f32.mrb[0].mxu0
        %v1763 = vadd.f32 0.0, %v1762
        %v1764 = vpop.f32.mrb[0].mxu0
        %1765 = vmatprep.mubr.bf16.mxu0 0
        %1766 = vmatmul.mubr.bf16.gmra.mrb[0].mxu0 %v1587
        %v1767 = vpop.f32.mrb[0].mxu0
        %v1768 = vadd.f32 0.0, %v1767
        %v1769 = vpop.f32.mrb[0].mxu0
        %v1770 = vpop.f32.mrb[0].mxu0
        %v1771 = vadd.f32 0.0, %v1770
        %v1772 = vpop.f32.mrb[0].mxu0
        %1773 = vmatprep.mubr.bf16.mxu0 0
        %1774 = vmatmul.mubr.bf16.gmra.mrb[0].mxu0 %v1588
        %v1775 = vpop.f32.mrb[0].mxu0
        %v1776 = vadd.f32 0.0, %v1775
        %v1777 = vpop.f32.mrb[0].mxu0
        %v1778 = vpop.f32.mrb[0].mxu0
        %v1779 = vadd.f32 0.0, %v1778
        %v1780 = vpop.f32.mrb[0].mxu0
        %1781 = vmatprep.mubr.bf16.mxu0 0
        %1782 = vmatmul.mubr.bf16.gmra.mrb[0].mxu0 %v1589
        %v1783 = vpop.f32.mrb[0].mxu0
        %v1784 = vadd.f32 0.0, %v1783
        %v1785 = vpop.f32.mrb[0].mxu0
        %v1786 = vpop.f32.mrb[0].mxu0
        %v1787 = vadd.f32 0.0, %v1786
        %v1788 = vpop.f32.mrb[0].mxu0
        %1789 = vmatprep.mubr.bf16.mxu0 0
        %1790 = vmatmul.mubr.bf16.gmra.mrb[0].mxu0 %v1590
        %v1791 = vpop.f32.mrb[0].mxu0
        %v1792 = vadd.f32 0.0, %v1791
        %v1793 = vpop.f32.mrb[0].mxu0
        %v1794 = vpop.f32.mrb[0].mxu0
        %v1795 = vadd.f32 0.0, %v1794
        %v1796 = vpop.f32.mrb[0].mxu0
        %1797 = vmatprep.mubr.bf16.mxu0 0
        %1798 = vmatmul.mubr.bf16.gmra.mrb[0].mxu0 %v1591
        %v1799 = vpop.f32.mrb[0].mxu0
        %v1800 = vadd.f32 0.0, %v1799
        %v1801 = vpop.f32.mrb[0].mxu0
        %v1802 = vpop.f32.mrb[0].mxu0
        %v1803 = vadd.f32 0.0, %v1802
        %v1804 = vpop.f32.mrb[0].mxu0
        %1805 = vmatprep.mubr.bf16.mxu0 0
        %1806 = vmatmul.mubr.bf16.gmra.mrb[0].mxu0 %v1592
        %v1807 = vpop.f32.mrb[0].mxu0
        %v1808 = vadd.f32 0.0, %v1807
        %v1809 = vpop.f32.mrb[0].mxu0
        %v1810 = vpop.f32.mrb[0].mxu0
        %v1811 = vadd.f32 0.0, %v1810
        %v1812 = vpop.f32.mrb[0].mxu0
        %1813 = vmatprep.mubr.bf16.mxu0 0
        %1814 = vmatmul.mubr.bf16.gmra.mrb[0].mxu0 %v1593
        %v1815 = vpop.f32.mrb[0].mxu0
        %v1816 = vadd.f32 0.0, %v1815
        %v1817 = vpop.f32.mrb[0].mxu0
        %v1818 = vpop.f32.mrb[0].mxu0
        %v1819 = vadd.f32 0.0, %v1818
        %v1820 = vpop.f32.mrb[0].mxu0
        %1821 = vmatprep.mubr.bf16.mxu0 0
        %1822 = vmatmul.mubr.bf16.gmra.mrb[0].mxu0 %v1594
        %v1823 = vpop.f32.mrb[0].mxu0
        %v1824 = vadd.f32 0.0, %v1823
        %v1825 = vpop.f32.mrb[0].mxu0
        %v1826 = vpop.f32.mrb[0].mxu0
        %v1827 = vadd.f32 0.0, %v1826
        %v1828 = vpop.f32.mrb[0].mxu0
        %1829 = vmatprep.mubr.bf16.mxu0 0
        %1830 = vmatmul.mubr.bf16.gmra.mrb[0].mxu0 %v1595
        %v1831 = vpop.f32.mrb[0].mxu0
        %v1832 = vadd.f32 0.0, %v1831
        %v1833 = vpop.f32.mrb[0].mxu0
        %v1834 = vpop.f32.mrb[0].mxu0
        %v1835 = vadd.f32 0.0, %v1834
        %v1836 = vpop.f32.mrb[0].mxu0
        %1837 = vdwg.mxu0
        %v1838 = vadd.f32 %v1400, %v1696
        %v1839 = vadd.f32 %v1403, %v1699
        %v1840 = vadd.f32 %v1408, %v1704
        %v1841 = vadd.f32 %v1411, %v1707
        %v1842 = vadd.f32 %v1416, %v1712
        %v1843 = vadd.f32 %v1419, %v1715
        %v1844 = vadd.f32 %v1424, %v1720
        %v1845 = vadd.f32 %v1427, %v1723
        %v1846 = vadd.f32 %v1432, %v1728
        %v1847 = vadd.f32 %v1435, %v1731
        %v1848 = vadd.f32 %v1440, %v1736
        %v1849 = vadd.f32 %v1443, %v1739
        %v1850 = vadd.f32 %v1448, %v1744
        %v1851 = vadd.f32 %v1451, %v1747
        %v1852 = vadd.f32 %v1456, %v1752
        %v1853 = vadd.f32 %v1459, %v1755
        %v1854 = vadd.f32 %v1464, %v1760
        %v1855 = vadd.f32 %v1467, %v1763
        %v1856 = vadd.f32 %v1472, %v1768
        %v1857 = vadd.f32 %v1475, %v1771
        %v1858 = vadd.f32 %v1480, %v1776
        %v1859 = vadd.f32 %v1483, %v1779
        %v1860 = vadd.f32 %v1488, %v1784
        %v1861 = vadd.f32 %v1491, %v1787
        %v1862 = vadd.f32 %v1496, %v1792
        %v1863 = vadd.f32 %v1499, %v1795
        %v1864 = vadd.f32 %v1504, %v1800
        %v1865 = vadd.f32 %v1507, %v1803
        %v1866 = vadd.f32 %v1512, %v1808
        %v1867 = vadd.f32 %v1515, %v1811
        %v1868 = vadd.f32 %v1520, %v1816
        %v1869 = vadd.f32 %v1523, %v1819
        %v1870 = vadd.f32 %v1528, %v1824
        %v1871 = vadd.f32 %v1531, %v1827
        %v1872 = vadd.f32 %v1536, %v1832
        %v1873 = vadd.f32 %v1539, %v1835
        %v1874 = vld [vmem:[#allocation2 + $0x12] sm:$0xff]
        %v1875 = vld [vmem:[#allocation2 + $0x1a] sm:$0xff]
        %v1876 = vld [vmem:[#allocation2 + $0x22] sm:$0xff]
        %v1877 = vld [vmem:[#allocation2 + $0x2a] sm:$0xff]
        %v1878 = vld [vmem:[#allocation2 + $0x32] sm:$0xff]
        %v1879 = vld [vmem:[#allocation2 + $0x3a] sm:$0xff]
        %v1880 = vld [vmem:[#allocation2 + $0x42] sm:$0xff]
        %v1881 = vld [vmem:[#allocation2 + $0x4a] sm:$0xff]
        %v1882 = vld [vmem:[#allocation2 + $0x52] sm:$0xff]
        %v1883 = vld [vmem:[#allocation2 + $0x5a] sm:$0xff]
        %v1884 = vld [vmem:[#allocation2 + $0x62] sm:$0xff]
        %v1885 = vld [vmem:[#allocation2 + $0x6a] sm:$0xff]
        %v1886 = vld [vmem:[#allocation2 + $0x72] sm:$0xff]
        %v1887 = vld [vmem:[#allocation2 + $0x7a] sm:$0xff]
        %v1888 = vld [vmem:[#allocation2 + $0x82] sm:$0xff]
        %v1889 = vld [vmem:[#allocation2 + $0x8a] sm:$0xff]
        %v1890 = vld [vmem:[#allocation2 + $0x92] sm:$0xff]
        %v1891 = vld [vmem:[#allocation2 + $0x9a] sm:$0xff]
        %v1892 = vld [vmem:[#allocation2 + $0xa2] sm:$0xff]
        %v1893 = vld [vmem:[#allocation2 + $0xaa] sm:$0xff]
        %v1894 = vld [vmem:[#allocation2 + $0xb2] sm:$0xff]
        %v1895 = vld [vmem:[#allocation2 + $0xba] sm:$0xff]
        %v1896 = vld [vmem:[#allocation2 + $0xc2] sm:$0xff]
        %v1897 = vld [vmem:[#allocation2 + $0xca] sm:$0xff]
        %v1898 = vld [vmem:[#allocation2 + $0xd2] sm:$0xff]
        %v1899 = vld [vmem:[#allocation2 + $0xda] sm:$0xff]
        %v1900 = vld [vmem:[#allocation2 + $0xe2] sm:$0xff]
        %v1901 = vld [vmem:[#allocation2 + $0xea] sm:$0xff]
        %v1902 = vld [vmem:[#allocation2 + $0xf2] sm:$0xff]
        %v1903 = vld [vmem:[#allocation2 + $0xfa] sm:$0xff]
        %v1904 = vld [vmem:[#allocation2 + $0x102] sm:$0xff]
        %v1905 = vld [vmem:[#allocation2 + $0x10a] sm:$0xff]
        %v1906 = vld [vmem:[#allocation2 + $0x112] sm:$0xff]
        %v1907 = vld [vmem:[#allocation2 + $0x11a] sm:$0xff]
        %v1908 = vld [vmem:[#allocation2 + $0x122] sm:$0xff]
        %v1909 = vld [vmem:[#allocation2 + $0x12a] sm:$0xff]
        %v1910 = vpack.c.bf16 %v1875, %v1874
        %v1911 = vpack.c.bf16 %v1877, %v1876
        %v1912 = vpack.c.bf16 %v1879, %v1878
        %v1913 = vpack.c.bf16 %v1881, %v1880
        %v1914 = vpack.c.bf16 %v1883, %v1882
        %v1915 = vpack.c.bf16 %v1885, %v1884
        %v1916 = vpack.c.bf16 %v1887, %v1886
        %v1917 = vpack.c.bf16 %v1889, %v1888
        %v1918 = vpack.c.bf16 %v1891, %v1890
        %v1919 = vpack.c.bf16 %v1893, %v1892
        %v1920 = vpack.c.bf16 %v1895, %v1894
        %v1921 = vpack.c.bf16 %v1897, %v1896
        %v1922 = vpack.c.bf16 %v1899, %v1898
        %v1923 = vpack.c.bf16 %v1901, %v1900
        %v1924 = vpack.c.bf16 %v1903, %v1902
        %v1925 = vpack.c.bf16 %v1905, %v1904
        %v1926 = vpack.c.bf16 %v1907, %v1906
        %v1927 = vpack.c.bf16 %v1909, %v1908
        %s1928 = scalar_lea.vmem [#allocation9], 192
        %v1929 = vld [vmem:[%s1928] sm:$0xf]
        %v1930 = vld [vmem:[%s1928 + $0x4] sm:$0xf]
        %v1931 = vld [vmem:[%s1928 + $0x8] sm:$0xf]
        %v1932 = vld [vmem:[%s1928 + $0xc] sm:$0xf]
        %v1933 = vld [vmem:[%s1928 + $0x10] sm:$0xf]
        %v1934 = vld [vmem:[%s1928 + $0x14] sm:$0xf]
        %v1935 = vld [vmem:[%s1928 + $0x18] sm:$0xf]
        %v1936 = vld [vmem:[%s1928 + $0x1c] sm:$0xf]
        %v1937 = vld [vmem:[%s1928 + $0x20] sm:$0xf]
        %v1938 = vld [vmem:[%s1928 + $0x24] sm:$0xf]
        %v1939 = vld [vmem:[%s1928 + $0x28] sm:$0xf]
        %v1940 = vld [vmem:[%s1928 + $0x2c] sm:$0xf]
        %v1941 = vld [vmem:[%s1928 + $0x30] sm:$0xf]
        %v1942 = vld [vmem:[%s1928 + $0x34] sm:$0xf]
        %v1943 = vld [vmem:[%s1928 + $0x38] sm:$0xf]
        %v1944 = vld [vmem:[%s1928 + $0x3c] sm:$0xf]
        %v1961 = vunpack.c.l.b16 %v1929
        %v1962 = vunpack.c.l.b16 %v1930
        %v1963 = vunpack.c.l.b16 %v1931
        %v1964 = vunpack.c.l.b16 %v1932
        %v1965 = vunpack.c.l.b16 %v1933
        %v1966 = vunpack.c.l.b16 %v1934
        %v1967 = vunpack.c.l.b16 %v1935
        %v1968 = vunpack.c.l.b16 %v1936
        %v1969 = vunpack.c.l.b16 %v1937
        %v1970 = vunpack.c.l.b16 %v1938
        %v1971 = vunpack.c.l.b16 %v1939
        %v1972 = vunpack.c.l.b16 %v1940
        %v1973 = vunpack.c.l.b16 %v1941
        %v1974 = vunpack.c.l.b16 %v1942
        %v1975 = vunpack.c.l.b16 %v1943
        %v1976 = vunpack.c.l.b16 %v1944
        %v1977 = vpack.c.b16 %v1962, %v1961
        %v1978 = vpack.c.b16 %v1964, %v1963
        %v1979 = vpack.c.b16 %v1966, %v1965
        %v1980 = vpack.c.b16 %v1968, %v1967
        %v1981 = vpack.c.b16 %v1970, %v1969
        %v1982 = vpack.c.b16 %v1972, %v1971
        %v1983 = vpack.c.b16 %v1974, %v1973
        %v1984 = vpack.c.b16 %v1976, %v1975
        %1993 = vmatprep.subr.bf16.mxu0 0
        %1994 = vmatpush1.bf16.msra.mxu0 %v1977
        %1995 = vmatprep.subr.bf16.mxu0 0
        %1996 = vmatpush1.bf16.msra.mxu0 %v1978
        %1997 = vmatprep.subr.bf16.mxu0 0
        %1998 = vmatpush1.bf16.msra.mxu0 %v1979
        %1999 = vmatprep.subr.bf16.mxu0 0
        %2000 = vmatpush1.bf16.msra.mxu0 %v1980
        %2001 = vmatprep.subr.bf16.mxu0 0
        %2002 = vmatpush1.bf16.msra.mxu0 %v1981
        %2003 = vmatprep.subr.bf16.mxu0 0
        %2004 = vmatpush1.bf16.msra.mxu0 %v1982
        %2005 = vmatprep.subr.bf16.mxu0 0
        %2006 = vmatpush1.bf16.msra.mxu0 %v1983
        %2007 = vmatprep.subr.bf16.mxu0 0
        %2008 = vmatpush1.bf16.msra.mxu0 %v1984
        %2009 = vmatprep.subr.bf16.mxu0 0
        %2010 = vmatpush1.bf16.msra.mxu0 0
        %2011 = vmatprep.subr.bf16.mxu0 0
        %2012 = vmatpush1.bf16.msra.mxu0 0
        %2013 = vmatprep.subr.bf16.mxu0 0
        %2014 = vmatpush1.bf16.msra.mxu0 0
        %2015 = vmatprep.subr.bf16.mxu0 0
        %2016 = vmatpush1.bf16.msra.mxu0 0
        %2017 = vmatprep.subr.bf16.mxu0 0
        %2018 = vmatpush1.bf16.msra.mxu0 0
        %2019 = vmatprep.subr.bf16.mxu0 0
        %2020 = vmatpush1.bf16.msra.mxu0 0
        %2021 = vmatprep.subr.bf16.mxu0 0
        %2022 = vmatpush1.bf16.msra.mxu0 0
        %2023 = vmatprep.subr.bf16.mxu0 0
        %2024 = vmatpush1.bf16.msra.mxu0 0
        %2025 = vmatprep.mubr.bf16.mxu0 0
        %2026 = vmatmul.mubr.bf16.gmra.mrb[0].mxu0 %v1910
        %v2027 = vpop.f32.mrb[0].mxu0
        %v2028 = vadd.f32 0.0, %v2027
        %v2029 = vpop.f32.mrb[0].mxu0
        %v2030 = vpop.f32.mrb[0].mxu0
        %v2031 = vadd.f32 0.0, %v2030
        %v2032 = vpop.f32.mrb[0].mxu0
        %2033 = vmatprep.mubr.bf16.mxu0 0
        %2034 = vmatmul.mubr.bf16.gmra.mrb[0].mxu0 %v1911
        %v2035 = vpop.f32.mrb[0].mxu0
        %v2036 = vadd.f32 0.0, %v2035
        %v2037 = vpop.f32.mrb[0].mxu0
        %v2038 = vpop.f32.mrb[0].mxu0
        %v2039 = vadd.f32 0.0, %v2038
        %v2040 = vpop.f32.mrb[0].mxu0
        %2041 = vmatprep.mubr.bf16.mxu0 0
        %2042 = vmatmul.mubr.bf16.gmra.mrb[0].mxu0 %v1912
        %v2043 = vpop.f32.mrb[0].mxu0
        %v2044 = vadd.f32 0.0, %v2043
        %v2045 = vpop.f32.mrb[0].mxu0
        %v2046 = vpop.f32.mrb[0].mxu0
        %v2047 = vadd.f32 0.0, %v2046
        %v2048 = vpop.f32.mrb[0].mxu0
        %2049 = vmatprep.mubr.bf16.mxu0 0
        %2050 = vmatmul.mubr.bf16.gmra.mrb[0].mxu0 %v1913
        %v2051 = vpop.f32.mrb[0].mxu0
        %v2052 = vadd.f32 0.0, %v2051
        %v2053 = vpop.f32.mrb[0].mxu0
        %v2054 = vpop.f32.mrb[0].mxu0
        %v2055 = vadd.f32 0.0, %v2054
        %v2056 = vpop.f32.mrb[0].mxu0
        %2057 = vmatprep.mubr.bf16.mxu0 0
        %2058 = vmatmul.mubr.bf16.gmra.mrb[0].mxu0 %v1914
        %v2059 = vpop.f32.mrb[0].mxu0
        %v2060 = vadd.f32 0.0, %v2059
        %v2061 = vpop.f32.mrb[0].mxu0
        %v2062 = vpop.f32.mrb[0].mxu0
        %v2063 = vadd.f32 0.0, %v2062
        %v2064 = vpop.f32.mrb[0].mxu0
        %2065 = vmatprep.mubr.bf16.mxu0 0
        %2066 = vmatmul.mubr.bf16.gmra.mrb[0].mxu0 %v1915
        %v2067 = vpop.f32.mrb[0].mxu0
        %v2068 = vadd.f32 0.0, %v2067
        %v2069 = vpop.f32.mrb[0].mxu0
        %v2070 = vpop.f32.mrb[0].mxu0
        %v2071 = vadd.f32 0.0, %v2070
        %v2072 = vpop.f32.mrb[0].mxu0
        %2073 = vmatprep.mubr.bf16.mxu0 0
        %2074 = vmatmul.mubr.bf16.gmra.mrb[0].mxu0 %v1916
        %v2075 = vpop.f32.mrb[0].mxu0
        %v2076 = vadd.f32 0.0, %v2075
        %v2077 = vpop.f32.mrb[0].mxu0
        %v2078 = vpop.f32.mrb[0].mxu0
        %v2079 = vadd.f32 0.0, %v2078
        %v2080 = vpop.f32.mrb[0].mxu0
        %2081 = vmatprep.mubr.bf16.mxu0 0
        %2082 = vmatmul.mubr.bf16.gmra.mrb[0].mxu0 %v1917
        %v2083 = vpop.f32.mrb[0].mxu0
        %v2084 = vadd.f32 0.0, %v2083
        %v2085 = vpop.f32.mrb[0].mxu0
        %v2086 = vpop.f32.mrb[0].mxu0
        %v2087 = vadd.f32 0.0, %v2086
        %v2088 = vpop.f32.mrb[0].mxu0
        %2089 = vmatprep.mubr.bf16.mxu0 0
        %2090 = vmatmul.mubr.bf16.gmra.mrb[0].mxu0 %v1918
        %v2091 = vpop.f32.mrb[0].mxu0
        %v2092 = vadd.f32 0.0, %v2091
        %v2093 = vpop.f32.mrb[0].mxu0
        %v2094 = vpop.f32.mrb[0].mxu0
        %v2095 = vadd.f32 0.0, %v2094
        %v2096 = vpop.f32.mrb[0].mxu0
        %2097 = vmatprep.mubr.bf16.mxu0 0
        %2098 = vmatmul.mubr.bf16.gmra.mrb[0].mxu0 %v1919
        %v2099 = vpop.f32.mrb[0].mxu0
        %v2100 = vadd.f32 0.0, %v2099
        %v2101 = vpop.f32.mrb[0].mxu0
        %v2102 = vpop.f32.mrb[0].mxu0
        %v2103 = vadd.f32 0.0, %v2102
        %v2104 = vpop.f32.mrb[0].mxu0
        %2105 = vmatprep.mubr.bf16.mxu0 0
        %2106 = vmatmul.mubr.bf16.gmra.mrb[0].mxu0 %v1920
        %v2107 = vpop.f32.mrb[0].mxu0
        %v2108 = vadd.f32 0.0, %v2107
        %v2109 = vpop.f32.mrb[0].mxu0
        %v2110 = vpop.f32.mrb[0].mxu0
        %v2111 = vadd.f32 0.0, %v2110
        %v2112 = vpop.f32.mrb[0].mxu0
        %2113 = vmatprep.mubr.bf16.mxu0 0
        %2114 = vmatmul.mubr.bf16.gmra.mrb[0].mxu0 %v1921
        %v2115 = vpop.f32.mrb[0].mxu0
        %v2116 = vadd.f32 0.0, %v2115
        %v2117 = vpop.f32.mrb[0].mxu0
        %v2118 = vpop.f32.mrb[0].mxu0
        %v2119 = vadd.f32 0.0, %v2118
        %v2120 = vpop.f32.mrb[0].mxu0
        %2121 = vmatprep.mubr.bf16.mxu0 0
        %2122 = vmatmul.mubr.bf16.gmra.mrb[0].mxu0 %v1922
        %v2123 = vpop.f32.mrb[0].mxu0
        %v2124 = vadd.f32 0.0, %v2123
        %v2125 = vpop.f32.mrb[0].mxu0
        %v2126 = vpop.f32.mrb[0].mxu0
        %v2127 = vadd.f32 0.0, %v2126
        %v2128 = vpop.f32.mrb[0].mxu0
        %2129 = vmatprep.mubr.bf16.mxu0 0
        %2130 = vmatmul.mubr.bf16.gmra.mrb[0].mxu0 %v1923
        %v2131 = vpop.f32.mrb[0].mxu0
        %v2132 = vadd.f32 0.0, %v2131
        %v2133 = vpop.f32.mrb[0].mxu0
        %v2134 = vpop.f32.mrb[0].mxu0
        %v2135 = vadd.f32 0.0, %v2134
        %v2136 = vpop.f32.mrb[0].mxu0
        %2137 = vmatprep.mubr.bf16.mxu0 0
        %2138 = vmatmul.mubr.bf16.gmra.mrb[0].mxu0 %v1924
        %v2139 = vpop.f32.mrb[0].mxu0
        %v2140 = vadd.f32 0.0, %v2139
        %v2141 = vpop.f32.mrb[0].mxu0
        %v2142 = vpop.f32.mrb[0].mxu0
        %v2143 = vadd.f32 0.0, %v2142
        %v2144 = vpop.f32.mrb[0].mxu0
        %2145 = vmatprep.mubr.bf16.mxu0 0
        %2146 = vmatmul.mubr.bf16.gmra.mrb[0].mxu0 %v1925
        %v2147 = vpop.f32.mrb[0].mxu0
        %v2148 = vadd.f32 0.0, %v2147
        %v2149 = vpop.f32.mrb[0].mxu0
        %v2150 = vpop.f32.mrb[0].mxu0
        %v2151 = vadd.f32 0.0, %v2150
        %v2152 = vpop.f32.mrb[0].mxu0
        %2153 = vmatprep.mubr.bf16.mxu0 0
        %2154 = vmatmul.mubr.bf16.gmra.mrb[0].mxu0 %v1926
        %v2155 = vpop.f32.mrb[0].mxu0
        %v2156 = vadd.f32 0.0, %v2155
        %v2157 = vpop.f32.mrb[0].mxu0
        %v2158 = vpop.f32.mrb[0].mxu0
        %v2159 = vadd.f32 0.0, %v2158
        %v2160 = vpop.f32.mrb[0].mxu0
        %2161 = vmatprep.mubr.bf16.mxu0 0
        %2162 = vmatmul.mubr.bf16.gmra.mrb[0].mxu0 %v1927
        %v2163 = vpop.f32.mrb[0].mxu0
        %v2164 = vadd.f32 0.0, %v2163
        %v2165 = vpop.f32.mrb[0].mxu0
        %v2166 = vpop.f32.mrb[0].mxu0
        %v2167 = vadd.f32 0.0, %v2166
        %v2168 = vpop.f32.mrb[0].mxu0
        %2169 = vdwg.mxu0
        %v2170 = vadd.f32 %v1838, %v2028
        %v2171 = vadd.f32 %v1839, %v2031
        %v2172 = vadd.f32 %v1840, %v2036
        %v2173 = vadd.f32 %v1841, %v2039
        %v2174 = vadd.f32 %v1842, %v2044
        %v2175 = vadd.f32 %v1843, %v2047
        %v2176 = vadd.f32 %v1844, %v2052
        %v2177 = vadd.f32 %v1845, %v2055
        %v2178 = vadd.f32 %v1846, %v2060
        %v2179 = vadd.f32 %v1847, %v2063
        %v2180 = vadd.f32 %v1848, %v2068
        %v2181 = vadd.f32 %v1849, %v2071
        %v2182 = vadd.f32 %v1850, %v2076
        %v2183 = vadd.f32 %v1851, %v2079
        %v2184 = vadd.f32 %v1852, %v2084
        %v2185 = vadd.f32 %v1853, %v2087
        %v2186 = vadd.f32 %v1854, %v2092
        %v2187 = vadd.f32 %v1855, %v2095
        %v2188 = vadd.f32 %v1856, %v2100
        %v2189 = vadd.f32 %v1857, %v2103
        %v2190 = vadd.f32 %v1858, %v2108
        %v2191 = vadd.f32 %v1859, %v2111
        %v2192 = vadd.f32 %v1860, %v2116
        %v2193 = vadd.f32 %v1861, %v2119
        %v2194 = vadd.f32 %v1862, %v2124
        %v2195 = vadd.f32 %v1863, %v2127
        %v2196 = vadd.f32 %v1864, %v2132
        %v2197 = vadd.f32 %v1865, %v2135
        %v2198 = vadd.f32 %v1866, %v2140
        %v2199 = vadd.f32 %v1867, %v2143
        %v2200 = vadd.f32 %v1868, %v2148
        %v2201 = vadd.f32 %v1869, %v2151
        %v2202 = vadd.f32 %v1870, %v2156
        %v2203 = vadd.f32 %v1871, %v2159
        %v2204 = vadd.f32 %v1872, %v2164
        %v2205 = vadd.f32 %v1873, %v2167
        %v2206 = vld [vmem:[#allocation2 + $0x13] sm:$0xff]
        %v2207 = vld [vmem:[#allocation2 + $0x1b] sm:$0xff]
        %v2208 = vld [vmem:[#allocation2 + $0x23] sm:$0xff]
        %v2209 = vld [vmem:[#allocation2 + $0x2b] sm:$0xff]
        %v2210 = vld [vmem:[#allocation2 + $0x33] sm:$0xff]
        %v2211 = vld [vmem:[#allocation2 + $0x3b] sm:$0xff]
        %v2212 = vld [vmem:[#allocation2 + $0x43] sm:$0xff]
        %v2213 = vld [vmem:[#allocation2 + $0x4b] sm:$0xff]
        %v2214 = vld [vmem:[#allocation2 + $0x53] sm:$0xff]
        %v2215 = vld [vmem:[#allocation2 + $0x5b] sm:$0xff]
        %v2216 = vld [vmem:[#allocation2 + $0x63] sm:$0xff]
        %v2217 = vld [vmem:[#allocation2 + $0x6b] sm:$0xff]
        %v2218 = vld [vmem:[#allocation2 + $0x73] sm:$0xff]
        %v2219 = vld [vmem:[#allocation2 + $0x7b] sm:$0xff]
        %v2220 = vld [vmem:[#allocation2 + $0x83] sm:$0xff]
        %v2221 = vld [vmem:[#allocation2 + $0x8b] sm:$0xff]
        %v2222 = vld [vmem:[#allocation2 + $0x93] sm:$0xff]
        %v2223 = vld [vmem:[#allocation2 + $0x9b] sm:$0xff]
        %v2224 = vld [vmem:[#allocation2 + $0xa3] sm:$0xff]
        %v2225 = vld [vmem:[#allocation2 + $0xab] sm:$0xff]
        %v2226 = vld [vmem:[#allocation2 + $0xb3] sm:$0xff]
        %v2227 = vld [vmem:[#allocation2 + $0xbb] sm:$0xff]
        %v2228 = vld [vmem:[#allocation2 + $0xc3] sm:$0xff]
        %v2229 = vld [vmem:[#allocation2 + $0xcb] sm:$0xff]
        %v2230 = vld [vmem:[#allocation2 + $0xd3] sm:$0xff]
        %v2231 = vld [vmem:[#allocation2 + $0xdb] sm:$0xff]
        %v2232 = vld [vmem:[#allocation2 + $0xe3] sm:$0xff]
        %v2233 = vld [vmem:[#allocation2 + $0xeb] sm:$0xff]
        %v2234 = vld [vmem:[#allocation2 + $0xf3] sm:$0xff]
        %v2235 = vld [vmem:[#allocation2 + $0xfb] sm:$0xff]
        %v2236 = vld [vmem:[#allocation2 + $0x103] sm:$0xff]
        %v2237 = vld [vmem:[#allocation2 + $0x10b] sm:$0xff]
        %v2238 = vld [vmem:[#allocation2 + $0x113] sm:$0xff]
        %v2239 = vld [vmem:[#allocation2 + $0x11b] sm:$0xff]
        %v2240 = vld [vmem:[#allocation2 + $0x123] sm:$0xff]
        %v2241 = vld [vmem:[#allocation2 + $0x12b] sm:$0xff]
        %v2242 = vpack.c.bf16 %v2207, %v2206
        %v2243 = vpack.c.bf16 %v2209, %v2208
        %v2244 = vpack.c.bf16 %v2211, %v2210
        %v2245 = vpack.c.bf16 %v2213, %v2212
        %v2246 = vpack.c.bf16 %v2215, %v2214
        %v2247 = vpack.c.bf16 %v2217, %v2216
        %v2248 = vpack.c.bf16 %v2219, %v2218
        %v2249 = vpack.c.bf16 %v2221, %v2220
        %v2250 = vpack.c.bf16 %v2223, %v2222
        %v2251 = vpack.c.bf16 %v2225, %v2224
        %v2252 = vpack.c.bf16 %v2227, %v2226
        %v2253 = vpack.c.bf16 %v2229, %v2228
        %v2254 = vpack.c.bf16 %v2231, %v2230
        %v2255 = vpack.c.bf16 %v2233, %v2232
        %v2256 = vpack.c.bf16 %v2235, %v2234
        %v2257 = vpack.c.bf16 %v2237, %v2236
        %v2258 = vpack.c.bf16 %v2239, %v2238
        %v2259 = vpack.c.bf16 %v2241, %v2240
        %s2260 = scalar_lea.vmem [#allocation9], 256
        %v2261 = vld [vmem:[%s2260] sm:$0xf]
        %v2262 = vld [vmem:[%s2260 + $0x4] sm:$0xf]
        %v2263 = vld [vmem:[%s2260 + $0x8] sm:$0xf]
        %v2264 = vld [vmem:[%s2260 + $0xc] sm:$0xf]
        %v2265 = vld [vmem:[%s2260 + $0x10] sm:$0xf]
        %v2266 = vld [vmem:[%s2260 + $0x14] sm:$0xf]
        %v2267 = vld [vmem:[%s2260 + $0x18] sm:$0xf]
        %v2268 = vld [vmem:[%s2260 + $0x1c] sm:$0xf]
        %v2269 = vld [vmem:[%s2260 + $0x20] sm:$0xf]
        %v2270 = vld [vmem:[%s2260 + $0x24] sm:$0xf]
        %v2271 = vld [vmem:[%s2260 + $0x28] sm:$0xf]
        %v2272 = vld [vmem:[%s2260 + $0x2c] sm:$0xf]
        %v2273 = vld [vmem:[%s2260 + $0x30] sm:$0xf]
        %v2274 = vld [vmem:[%s2260 + $0x34] sm:$0xf]
        %v2275 = vld [vmem:[%s2260 + $0x38] sm:$0xf]
        %v2276 = vld [vmem:[%s2260 + $0x3c] sm:$0xf]
        %v2293 = vunpack.c.l.b16 %v2261
        %v2294 = vunpack.c.l.b16 %v2262
        %v2295 = vunpack.c.l.b16 %v2263
        %v2296 = vunpack.c.l.b16 %v2264
        %v2297 = vunpack.c.l.b16 %v2265
        %v2298 = vunpack.c.l.b16 %v2266
        %v2299 = vunpack.c.l.b16 %v2267
        %v2300 = vunpack.c.l.b16 %v2268
        %v2301 = vunpack.c.l.b16 %v2269
        %v2302 = vunpack.c.l.b16 %v2270
        %v2303 = vunpack.c.l.b16 %v2271
        %v2304 = vunpack.c.l.b16 %v2272
        %v2305 = vunpack.c.l.b16 %v2273
        %v2306 = vunpack.c.l.b16 %v2274
        %v2307 = vunpack.c.l.b16 %v2275
        %v2308 = vunpack.c.l.b16 %v2276
        %v2309 = vpack.c.b16 %v2294, %v2293
        %v2310 = vpack.c.b16 %v2296, %v2295
        %v2311 = vpack.c.b16 %v2298, %v2297
        %v2312 = vpack.c.b16 %v2300, %v2299
        %v2313 = vpack.c.b16 %v2302, %v2301
        %v2314 = vpack.c.b16 %v2304, %v2303
        %v2315 = vpack.c.b16 %v2306, %v2305
        %v2316 = vpack.c.b16 %v2308, %v2307
        %2325 = vmatprep.subr.bf16.mxu0 0
        %2326 = vmatpush1.bf16.msra.mxu0 %v2309
        %2327 = vmatprep.subr.bf16.mxu0 0
        %2328 = vmatpush1.bf16.msra.mxu0 %v2310
        %2329 = vmatprep.subr.bf16.mxu0 0
        %2330 = vmatpush1.bf16.msra.mxu0 %v2311
        %2331 = vmatprep.subr.bf16.mxu0 0
        %2332 = vmatpush1.bf16.msra.mxu0 %v2312
        %2333 = vmatprep.subr.bf16.mxu0 0
        %2334 = vmatpush1.bf16.msra.mxu0 %v2313
        %2335 = vmatprep.subr.bf16.mxu0 0
        %2336 = vmatpush1.bf16.msra.mxu0 %v2314
        %2337 = vmatprep.subr.bf16.mxu0 0
        %2338 = vmatpush1.bf16.msra.mxu0 %v2315
        %2339 = vmatprep.subr.bf16.mxu0 0
        %2340 = vmatpush1.bf16.msra.mxu0 %v2316
        %2341 = vmatprep.subr.bf16.mxu0 0
        %2342 = vmatpush1.bf16.msra.mxu0 0
        %2343 = vmatprep.subr.bf16.mxu0 0
        %2344 = vmatpush1.bf16.msra.mxu0 0
        %2345 = vmatprep.subr.bf16.mxu0 0
        %2346 = vmatpush1.bf16.msra.mxu0 0
        %2347 = vmatprep.subr.bf16.mxu0 0
        %2348 = vmatpush1.bf16.msra.mxu0 0
        %2349 = vmatprep.subr.bf16.mxu0 0
        %2350 = vmatpush1.bf16.msra.mxu0 0
        %2351 = vmatprep.subr.bf16.mxu0 0
        %2352 = vmatpush1.bf16.msra.mxu0 0
        %2353 = vmatprep.subr.bf16.mxu0 0
        %2354 = vmatpush1.bf16.msra.mxu0 0
        %2355 = vmatprep.subr.bf16.mxu0 0
        %2356 = vmatpush1.bf16.msra.mxu0 0
        %2357 = vmatprep.mubr.bf16.mxu0 0
        %2358 = vmatmul.mubr.bf16.gmra.mrb[0].mxu0 %v2242
        %v2359 = vpop.f32.mrb[0].mxu0
        %v2360 = vadd.f32 0.0, %v2359
        %v2361 = vpop.f32.mrb[0].mxu0
        %v2362 = vpop.f32.mrb[0].mxu0
        %v2363 = vadd.f32 0.0, %v2362
        %v2364 = vpop.f32.mrb[0].mxu0
        %2365 = vmatprep.mubr.bf16.mxu0 0
        %2366 = vmatmul.mubr.bf16.gmra.mrb[0].mxu0 %v2243
        %v2367 = vpop.f32.mrb[0].mxu0
        %v2368 = vadd.f32 0.0, %v2367
        %v2369 = vpop.f32.mrb[0].mxu0
        %v2370 = vpop.f32.mrb[0].mxu0
        %v2371 = vadd.f32 0.0, %v2370
        %v2372 = vpop.f32.mrb[0].mxu0
        %2373 = vmatprep.mubr.bf16.mxu0 0
        %2374 = vmatmul.mubr.bf16.gmra.mrb[0].mxu0 %v2244
        %v2375 = vpop.f32.mrb[0].mxu0
        %v2376 = vadd.f32 0.0, %v2375
        %v2377 = vpop.f32.mrb[0].mxu0
        %v2378 = vpop.f32.mrb[0].mxu0
        %v2379 = vadd.f32 0.0, %v2378
        %v2380 = vpop.f32.mrb[0].mxu0
        %2381 = vmatprep.mubr.bf16.mxu0 0
        %2382 = vmatmul.mubr.bf16.gmra.mrb[0].mxu0 %v2245
        %v2383 = vpop.f32.mrb[0].mxu0
        %v2384 = vadd.f32 0.0, %v2383
        %v2385 = vpop.f32.mrb[0].mxu0
        %v2386 = vpop.f32.mrb[0].mxu0
        %v2387 = vadd.f32 0.0, %v2386
        %v2388 = vpop.f32.mrb[0].mxu0
        %2389 = vmatprep.mubr.bf16.mxu0 0
        %2390 = vmatmul.mubr.bf16.gmra.mrb[0].mxu0 %v2246
        %v2391 = vpop.f32.mrb[0].mxu0
        %v2392 = vadd.f32 0.0, %v2391
        %v2393 = vpop.f32.mrb[0].mxu0
        %v2394 = vpop.f32.mrb[0].mxu0
        %v2395 = vadd.f32 0.0, %v2394
        %v2396 = vpop.f32.mrb[0].mxu0
        %2397 = vmatprep.mubr.bf16.mxu0 0
        %2398 = vmatmul.mubr.bf16.gmra.mrb[0].mxu0 %v2247
        %v2399 = vpop.f32.mrb[0].mxu0
        %v2400 = vadd.f32 0.0, %v2399
        %v2401 = vpop.f32.mrb[0].mxu0
        %v2402 = vpop.f32.mrb[0].mxu0
        %v2403 = vadd.f32 0.0, %v2402
        %v2404 = vpop.f32.mrb[0].mxu0
        %2405 = vmatprep.mubr.bf16.mxu0 0
        %2406 = vmatmul.mubr.bf16.gmra.mrb[0].mxu0 %v2248
        %v2407 = vpop.f32.mrb[0].mxu0
        %v2408 = vadd.f32 0.0, %v2407
        %v2409 = vpop.f32.mrb[0].mxu0
        %v2410 = vpop.f32.mrb[0].mxu0
        %v2411 = vadd.f32 0.0, %v2410
        %v2412 = vpop.f32.mrb[0].mxu0
        %2413 = vmatprep.mubr.bf16.mxu0 0
        %2414 = vmatmul.mubr.bf16.gmra.mrb[0].mxu0 %v2249
        %v2415 = vpop.f32.mrb[0].mxu0
        %v2416 = vadd.f32 0.0, %v2415
        %v2417 = vpop.f32.mrb[0].mxu0
        %v2418 = vpop.f32.mrb[0].mxu0
        %v2419 = vadd.f32 0.0, %v2418
        %v2420 = vpop.f32.mrb[0].mxu0
        %2421 = vmatprep.mubr.bf16.mxu0 0
        %2422 = vmatmul.mubr.bf16.gmra.mrb[0].mxu0 %v2250
        %v2423 = vpop.f32.mrb[0].mxu0
        %v2424 = vadd.f32 0.0, %v2423
        %v2425 = vpop.f32.mrb[0].mxu0
        %v2426 = vpop.f32.mrb[0].mxu0
        %v2427 = vadd.f32 0.0, %v2426
        %v2428 = vpop.f32.mrb[0].mxu0
        %2429 = vmatprep.mubr.bf16.mxu0 0
        %2430 = vmatmul.mubr.bf16.gmra.mrb[0].mxu0 %v2251
        %v2431 = vpop.f32.mrb[0].mxu0
        %v2432 = vadd.f32 0.0, %v2431
        %v2433 = vpop.f32.mrb[0].mxu0
        %v2434 = vpop.f32.mrb[0].mxu0
        %v2435 = vadd.f32 0.0, %v2434
        %v2436 = vpop.f32.mrb[0].mxu0
        %2437 = vmatprep.mubr.bf16.mxu0 0
        %2438 = vmatmul.mubr.bf16.gmra.mrb[0].mxu0 %v2252
        %v2439 = vpop.f32.mrb[0].mxu0
        %v2440 = vadd.f32 0.0, %v2439
        %v2441 = vpop.f32.mrb[0].mxu0
        %v2442 = vpop.f32.mrb[0].mxu0
        %v2443 = vadd.f32 0.0, %v2442
        %v2444 = vpop.f32.mrb[0].mxu0
        %2445 = vmatprep.mubr.bf16.mxu0 0
        %2446 = vmatmul.mubr.bf16.gmra.mrb[0].mxu0 %v2253
        %v2447 = vpop.f32.mrb[0].mxu0
        %v2448 = vadd.f32 0.0, %v2447
        %v2449 = vpop.f32.mrb[0].mxu0
        %v2450 = vpop.f32.mrb[0].mxu0
        %v2451 = vadd.f32 0.0, %v2450
        %v2452 = vpop.f32.mrb[0].mxu0
        %2453 = vmatprep.mubr.bf16.mxu0 0
        %2454 = vmatmul.mubr.bf16.gmra.mrb[0].mxu0 %v2254
        %v2455 = vpop.f32.mrb[0].mxu0
        %v2456 = vadd.f32 0.0, %v2455
        %v2457 = vpop.f32.mrb[0].mxu0
        %v2458 = vpop.f32.mrb[0].mxu0
        %v2459 = vadd.f32 0.0, %v2458
        %v2460 = vpop.f32.mrb[0].mxu0
        %2461 = vmatprep.mubr.bf16.mxu0 0
        %2462 = vmatmul.mubr.bf16.gmra.mrb[0].mxu0 %v2255
        %v2463 = vpop.f32.mrb[0].mxu0
        %v2464 = vadd.f32 0.0, %v2463
        %v2465 = vpop.f32.mrb[0].mxu0
        %v2466 = vpop.f32.mrb[0].mxu0
        %v2467 = vadd.f32 0.0, %v2466
        %v2468 = vpop.f32.mrb[0].mxu0
        %2469 = vmatprep.mubr.bf16.mxu0 0
        %2470 = vmatmul.mubr.bf16.gmra.mrb[0].mxu0 %v2256
        %v2471 = vpop.f32.mrb[0].mxu0
        %v2472 = vadd.f32 0.0, %v2471
        %v2473 = vpop.f32.mrb[0].mxu0
        %v2474 = vpop.f32.mrb[0].mxu0
        %v2475 = vadd.f32 0.0, %v2474
        %v2476 = vpop.f32.mrb[0].mxu0
        %2477 = vmatprep.mubr.bf16.mxu0 0
        %2478 = vmatmul.mubr.bf16.gmra.mrb[0].mxu0 %v2257
        %v2479 = vpop.f32.mrb[0].mxu0
        %v2480 = vadd.f32 0.0, %v2479
        %v2481 = vpop.f32.mrb[0].mxu0
        %v2482 = vpop.f32.mrb[0].mxu0
        %v2483 = vadd.f32 0.0, %v2482
        %v2484 = vpop.f32.mrb[0].mxu0
        %2485 = vmatprep.mubr.bf16.mxu0 0
        %2486 = vmatmul.mubr.bf16.gmra.mrb[0].mxu0 %v2258
        %v2487 = vpop.f32.mrb[0].mxu0
        %v2488 = vadd.f32 0.0, %v2487
        %v2489 = vpop.f32.mrb[0].mxu0
        %v2490 = vpop.f32.mrb[0].mxu0
        %v2491 = vadd.f32 0.0, %v2490
        %v2492 = vpop.f32.mrb[0].mxu0
        %2493 = vmatprep.mubr.bf16.mxu0 0
        %2494 = vmatmul.mubr.bf16.gmra.mrb[0].mxu0 %v2259
        %v2495 = vpop.f32.mrb[0].mxu0
        %v2496 = vadd.f32 0.0, %v2495
        %v2497 = vpop.f32.mrb[0].mxu0
        %v2498 = vpop.f32.mrb[0].mxu0
        %v2499 = vadd.f32 0.0, %v2498
        %v2500 = vpop.f32.mrb[0].mxu0
        %2501 = vdwg.mxu0
        %v2502 = vadd.f32 %v2170, %v2360
        %v2503 = vadd.f32 %v2171, %v2363
        %v2504 = vadd.f32 %v2172, %v2368
        %v2505 = vadd.f32 %v2173, %v2371
        %v2506 = vadd.f32 %v2174, %v2376
        %v2507 = vadd.f32 %v2175, %v2379
        %v2508 = vadd.f32 %v2176, %v2384
        %v2509 = vadd.f32 %v2177, %v2387
        %v2510 = vadd.f32 %v2178, %v2392
        %v2511 = vadd.f32 %v2179, %v2395
        %v2512 = vadd.f32 %v2180, %v2400
        %v2513 = vadd.f32 %v2181, %v2403
        %v2514 = vadd.f32 %v2182, %v2408
        %v2515 = vadd.f32 %v2183, %v2411
        %v2516 = vadd.f32 %v2184, %v2416
        %v2517 = vadd.f32 %v2185, %v2419
        %v2518 = vadd.f32 %v2186, %v2424
        %v2519 = vadd.f32 %v2187, %v2427
        %v2520 = vadd.f32 %v2188, %v2432
        %v2521 = vadd.f32 %v2189, %v2435
        %v2522 = vadd.f32 %v2190, %v2440
        %v2523 = vadd.f32 %v2191, %v2443
        %v2524 = vadd.f32 %v2192, %v2448
        %v2525 = vadd.f32 %v2193, %v2451
        %v2526 = vadd.f32 %v2194, %v2456
        %v2527 = vadd.f32 %v2195, %v2459
        %v2528 = vadd.f32 %v2196, %v2464
        %v2529 = vadd.f32 %v2197, %v2467
        %v2530 = vadd.f32 %v2198, %v2472
        %v2531 = vadd.f32 %v2199, %v2475
        %v2532 = vadd.f32 %v2200, %v2480
        %v2533 = vadd.f32 %v2201, %v2483
        %v2534 = vadd.f32 %v2202, %v2488
        %v2535 = vadd.f32 %v2203, %v2491
        %v2536 = vadd.f32 %v2204, %v2496
        %v2537 = vadd.f32 %v2205, %v2499
        %v2538 = vld [vmem:[#allocation2 + $0x14] sm:$0xff]
        %v2539 = vld [vmem:[#allocation2 + $0x1c] sm:$0xff]
        %v2540 = vld [vmem:[#allocation2 + $0x24] sm:$0xff]
        %v2541 = vld [vmem:[#allocation2 + $0x2c] sm:$0xff]
        %v2542 = vld [vmem:[#allocation2 + $0x34] sm:$0xff]
        %v2543 = vld [vmem:[#allocation2 + $0x3c] sm:$0xff]
        %v2544 = vld [vmem:[#allocation2 + $0x44] sm:$0xff]
        %v2545 = vld [vmem:[#allocation2 + $0x4c] sm:$0xff]
        %v2546 = vld [vmem:[#allocation2 + $0x54] sm:$0xff]
        %v2547 = vld [vmem:[#allocation2 + $0x5c] sm:$0xff]
        %v2548 = vld [vmem:[#allocation2 + $0x64] sm:$0xff]
        %v2549 = vld [vmem:[#allocation2 + $0x6c] sm:$0xff]
        %v2550 = vld [vmem:[#allocation2 + $0x74] sm:$0xff]
        %v2551 = vld [vmem:[#allocation2 + $0x7c] sm:$0xff]
        %v2552 = vld [vmem:[#allocation2 + $0x84] sm:$0xff]
        %v2553 = vld [vmem:[#allocation2 + $0x8c] sm:$0xff]
        %v2554 = vld [vmem:[#allocation2 + $0x94] sm:$0xff]
        %v2555 = vld [vmem:[#allocation2 + $0x9c] sm:$0xff]
        %v2556 = vld [vmem:[#allocation2 + $0xa4] sm:$0xff]
        %v2557 = vld [vmem:[#allocation2 + $0xac] sm:$0xff]
        %v2558 = vld [vmem:[#allocation2 + $0xb4] sm:$0xff]
        %v2559 = vld [vmem:[#allocation2 + $0xbc] sm:$0xff]
        %v2560 = vld [vmem:[#allocation2 + $0xc4] sm:$0xff]
        %v2561 = vld [vmem:[#allocation2 + $0xcc] sm:$0xff]
        %v2562 = vld [vmem:[#allocation2 + $0xd4] sm:$0xff]
        %v2563 = vld [vmem:[#allocation2 + $0xdc] sm:$0xff]
        %v2564 = vld [vmem:[#allocation2 + $0xe4] sm:$0xff]
        %v2565 = vld [vmem:[#allocation2 + $0xec] sm:$0xff]
        %v2566 = vld [vmem:[#allocation2 + $0xf4] sm:$0xff]
        %v2567 = vld [vmem:[#allocation2 + $0xfc] sm:$0xff]
        %v2568 = vld [vmem:[#allocation2 + $0x104] sm:$0xff]
        %v2569 = vld [vmem:[#allocation2 + $0x10c] sm:$0xff]
        %v2570 = vld [vmem:[#allocation2 + $0x114] sm:$0xff]
        %v2571 = vld [vmem:[#allocation2 + $0x11c] sm:$0xff]
        %v2572 = vld [vmem:[#allocation2 + $0x124] sm:$0xff]
        %v2573 = vld [vmem:[#allocation2 + $0x12c] sm:$0xff]
        %v2574 = vpack.c.bf16 %v2539, %v2538
        %v2575 = vpack.c.bf16 %v2541, %v2540
        %v2576 = vpack.c.bf16 %v2543, %v2542
        %v2577 = vpack.c.bf16 %v2545, %v2544
        %v2578 = vpack.c.bf16 %v2547, %v2546
        %v2579 = vpack.c.bf16 %v2549, %v2548
        %v2580 = vpack.c.bf16 %v2551, %v2550
        %v2581 = vpack.c.bf16 %v2553, %v2552
        %v2582 = vpack.c.bf16 %v2555, %v2554
        %v2583 = vpack.c.bf16 %v2557, %v2556
        %v2584 = vpack.c.bf16 %v2559, %v2558
        %v2585 = vpack.c.bf16 %v2561, %v2560
        %v2586 = vpack.c.bf16 %v2563, %v2562
        %v2587 = vpack.c.bf16 %v2565, %v2564
        %v2588 = vpack.c.bf16 %v2567, %v2566
        %v2589 = vpack.c.bf16 %v2569, %v2568
        %v2590 = vpack.c.bf16 %v2571, %v2570
        %v2591 = vpack.c.bf16 %v2573, %v2572
        %s2592 = scalar_lea.vmem [#allocation9], 320
        %v2593 = vld [vmem:[%s2592] sm:$0xf]
        %v2594 = vld [vmem:[%s2592 + $0x4] sm:$0xf]
        %v2595 = vld [vmem:[%s2592 + $0x8] sm:$0xf]
        %v2596 = vld [vmem:[%s2592 + $0xc] sm:$0xf]
        %v2597 = vld [vmem:[%s2592 + $0x10] sm:$0xf]
        %v2598 = vld [vmem:[%s2592 + $0x14] sm:$0xf]
        %v2599 = vld [vmem:[%s2592 + $0x18] sm:$0xf]
        %v2600 = vld [vmem:[%s2592 + $0x1c] sm:$0xf]
        %v2601 = vld [vmem:[%s2592 + $0x20] sm:$0xf]
        %v2602 = vld [vmem:[%s2592 + $0x24] sm:$0xf]
        %v2603 = vld [vmem:[%s2592 + $0x28] sm:$0xf]
        %v2604 = vld [vmem:[%s2592 + $0x2c] sm:$0xf]
        %v2605 = vld [vmem:[%s2592 + $0x30] sm:$0xf]
        %v2606 = vld [vmem:[%s2592 + $0x34] sm:$0xf]
        %v2607 = vld [vmem:[%s2592 + $0x38] sm:$0xf]
        %v2608 = vld [vmem:[%s2592 + $0x3c] sm:$0xf]
        %v2625 = vunpack.c.l.b16 %v2593
        %v2626 = vunpack.c.l.b16 %v2594
        %v2627 = vunpack.c.l.b16 %v2595
        %v2628 = vunpack.c.l.b16 %v2596
        %v2629 = vunpack.c.l.b16 %v2597
        %v2630 = vunpack.c.l.b16 %v2598
        %v2631 = vunpack.c.l.b16 %v2599
        %v2632 = vunpack.c.l.b16 %v2600
        %v2633 = vunpack.c.l.b16 %v2601
        %v2634 = vunpack.c.l.b16 %v2602
        %v2635 = vunpack.c.l.b16 %v2603
        %v2636 = vunpack.c.l.b16 %v2604
        %v2637 = vunpack.c.l.b16 %v2605
        %v2638 = vunpack.c.l.b16 %v2606
        %v2639 = vunpack.c.l.b16 %v2607
        %v2640 = vunpack.c.l.b16 %v2608
        %v2641 = vpack.c.b16 %v2626, %v2625
        %v2642 = vpack.c.b16 %v2628, %v2627
        %v2643 = vpack.c.b16 %v2630, %v2629
        %v2644 = vpack.c.b16 %v2632, %v2631
        %v2645 = vpack.c.b16 %v2634, %v2633
        %v2646 = vpack.c.b16 %v2636, %v2635
        %v2647 = vpack.c.b16 %v2638, %v2637
        %v2648 = vpack.c.b16 %v2640, %v2639
        %2657 = vmatprep.subr.bf16.mxu0 0
        %2658 = vmatpush1.bf16.msra.mxu0 %v2641
        %2659 = vmatprep.subr.bf16.mxu0 0
        %2660 = vmatpush1.bf16.msra.mxu0 %v2642
        %2661 = vmatprep.subr.bf16.mxu0 0
        %2662 = vmatpush1.bf16.msra.mxu0 %v2643
        %2663 = vmatprep.subr.bf16.mxu0 0
        %2664 = vmatpush1.bf16.msra.mxu0 %v2644
        %2665 = vmatprep.subr.bf16.mxu0 0
        %2666 = vmatpush1.bf16.msra.mxu0 %v2645
        %2667 = vmatprep.subr.bf16.mxu0 0
        %2668 = vmatpush1.bf16.msra.mxu0 %v2646
        %2669 = vmatprep.subr.bf16.mxu0 0
        %2670 = vmatpush1.bf16.msra.mxu0 %v2647
        %2671 = vmatprep.subr.bf16.mxu0 0
        %2672 = vmatpush1.bf16.msra.mxu0 %v2648
        %2673 = vmatprep.subr.bf16.mxu0 0
        %2674 = vmatpush1.bf16.msra.mxu0 0
        %2675 = vmatprep.subr.bf16.mxu0 0
        %2676 = vmatpush1.bf16.msra.mxu0 0
        %2677 = vmatprep.subr.bf16.mxu0 0
        %2678 = vmatpush1.bf16.msra.mxu0 0
        %2679 = vmatprep.subr.bf16.mxu0 0
        %2680 = vmatpush1.bf16.msra.mxu0 0
        %2681 = vmatprep.subr.bf16.mxu0 0
        %2682 = vmatpush1.bf16.msra.mxu0 0
        %2683 = vmatprep.subr.bf16.mxu0 0
        %2684 = vmatpush1.bf16.msra.mxu0 0
        %2685 = vmatprep.subr.bf16.mxu0 0
        %2686 = vmatpush1.bf16.msra.mxu0 0
        %2687 = vmatprep.subr.bf16.mxu0 0
        %2688 = vmatpush1.bf16.msra.mxu0 0
        %2689 = vmatprep.mubr.bf16.mxu0 0
        %2690 = vmatmul.mubr.bf16.gmra.mrb[0].mxu0 %v2574
        %v2691 = vpop.f32.mrb[0].mxu0
        %v2692 = vadd.f32 0.0, %v2691
        %v2693 = vpop.f32.mrb[0].mxu0
        %v2694 = vpop.f32.mrb[0].mxu0
        %v2695 = vadd.f32 0.0, %v2694
        %v2696 = vpop.f32.mrb[0].mxu0
        %2697 = vmatprep.mubr.bf16.mxu0 0
        %2698 = vmatmul.mubr.bf16.gmra.mrb[0].mxu0 %v2575
        %v2699 = vpop.f32.mrb[0].mxu0
        %v2700 = vadd.f32 0.0, %v2699
        %v2701 = vpop.f32.mrb[0].mxu0
        %v2702 = vpop.f32.mrb[0].mxu0
        %v2703 = vadd.f32 0.0, %v2702
        %v2704 = vpop.f32.mrb[0].mxu0
        %2705 = vmatprep.mubr.bf16.mxu0 0
        %2706 = vmatmul.mubr.bf16.gmra.mrb[0].mxu0 %v2576
        %v2707 = vpop.f32.mrb[0].mxu0
        %v2708 = vadd.f32 0.0, %v2707
        %v2709 = vpop.f32.mrb[0].mxu0
        %v2710 = vpop.f32.mrb[0].mxu0
        %v2711 = vadd.f32 0.0, %v2710
        %v2712 = vpop.f32.mrb[0].mxu0
        %2713 = vmatprep.mubr.bf16.mxu0 0
        %2714 = vmatmul.mubr.bf16.gmra.mrb[0].mxu0 %v2577
        %v2715 = vpop.f32.mrb[0].mxu0
        %v2716 = vadd.f32 0.0, %v2715
        %v2717 = vpop.f32.mrb[0].mxu0
        %v2718 = vpop.f32.mrb[0].mxu0
        %v2719 = vadd.f32 0.0, %v2718
        %v2720 = vpop.f32.mrb[0].mxu0
        %2721 = vmatprep.mubr.bf16.mxu0 0
        %2722 = vmatmul.mubr.bf16.gmra.mrb[0].mxu0 %v2578
        %v2723 = vpop.f32.mrb[0].mxu0
        %v2724 = vadd.f32 0.0, %v2723
        %v2725 = vpop.f32.mrb[0].mxu0
        %v2726 = vpop.f32.mrb[0].mxu0
        %v2727 = vadd.f32 0.0, %v2726
        %v2728 = vpop.f32.mrb[0].mxu0
        %2729 = vmatprep.mubr.bf16.mxu0 0
        %2730 = vmatmul.mubr.bf16.gmra.mrb[0].mxu0 %v2579
        %v2731 = vpop.f32.mrb[0].mxu0
        %v2732 = vadd.f32 0.0, %v2731
        %v2733 = vpop.f32.mrb[0].mxu0
        %v2734 = vpop.f32.mrb[0].mxu0
        %v2735 = vadd.f32 0.0, %v2734
        %v2736 = vpop.f32.mrb[0].mxu0
        %2737 = vmatprep.mubr.bf16.mxu0 0
        %2738 = vmatmul.mubr.bf16.gmra.mrb[0].mxu0 %v2580
        %v2739 = vpop.f32.mrb[0].mxu0
        %v2740 = vadd.f32 0.0, %v2739
        %v2741 = vpop.f32.mrb[0].mxu0
        %v2742 = vpop.f32.mrb[0].mxu0
        %v2743 = vadd.f32 0.0, %v2742
        %v2744 = vpop.f32.mrb[0].mxu0
        %2745 = vmatprep.mubr.bf16.mxu0 0
        %2746 = vmatmul.mubr.bf16.gmra.mrb[0].mxu0 %v2581
        %v2747 = vpop.f32.mrb[0].mxu0
        %v2748 = vadd.f32 0.0, %v2747
        %v2749 = vpop.f32.mrb[0].mxu0
        %v2750 = vpop.f32.mrb[0].mxu0
        %v2751 = vadd.f32 0.0, %v2750
        %v2752 = vpop.f32.mrb[0].mxu0
        %2753 = vmatprep.mubr.bf16.mxu0 0
        %2754 = vmatmul.mubr.bf16.gmra.mrb[0].mxu0 %v2582
        %v2755 = vpop.f32.mrb[0].mxu0
        %v2756 = vadd.f32 0.0, %v2755
        %v2757 = vpop.f32.mrb[0].mxu0
        %v2758 = vpop.f32.mrb[0].mxu0
        %v2759 = vadd.f32 0.0, %v2758
        %v2760 = vpop.f32.mrb[0].mxu0
        %2761 = vmatprep.mubr.bf16.mxu0 0
        %2762 = vmatmul.mubr.bf16.gmra.mrb[0].mxu0 %v2583
        %v2763 = vpop.f32.mrb[0].mxu0
        %v2764 = vadd.f32 0.0, %v2763
        %v2765 = vpop.f32.mrb[0].mxu0
        %v2766 = vpop.f32.mrb[0].mxu0
        %v2767 = vadd.f32 0.0, %v2766
        %v2768 = vpop.f32.mrb[0].mxu0
        %2769 = vmatprep.mubr.bf16.mxu0 0
        %2770 = vmatmul.mubr.bf16.gmra.mrb[0].mxu0 %v2584
        %v2771 = vpop.f32.mrb[0].mxu0
        %v2772 = vadd.f32 0.0, %v2771
        %v2773 = vpop.f32.mrb[0].mxu0
        %v2774 = vpop.f32.mrb[0].mxu0
        %v2775 = vadd.f32 0.0, %v2774
        %v2776 = vpop.f32.mrb[0].mxu0
        %2777 = vmatprep.mubr.bf16.mxu0 0
        %2778 = vmatmul.mubr.bf16.gmra.mrb[0].mxu0 %v2585
        %v2779 = vpop.f32.mrb[0].mxu0
        %v2780 = vadd.f32 0.0, %v2779
        %v2781 = vpop.f32.mrb[0].mxu0
        %v2782 = vpop.f32.mrb[0].mxu0
        %v2783 = vadd.f32 0.0, %v2782
        %v2784 = vpop.f32.mrb[0].mxu0
        %2785 = vmatprep.mubr.bf16.mxu0 0
        %2786 = vmatmul.mubr.bf16.gmra.mrb[0].mxu0 %v2586
        %v2787 = vpop.f32.mrb[0].mxu0
        %v2788 = vadd.f32 0.0, %v2787
        %v2789 = vpop.f32.mrb[0].mxu0
        %v2790 = vpop.f32.mrb[0].mxu0
        %v2791 = vadd.f32 0.0, %v2790
        %v2792 = vpop.f32.mrb[0].mxu0
        %2793 = vmatprep.mubr.bf16.mxu0 0
        %2794 = vmatmul.mubr.bf16.gmra.mrb[0].mxu0 %v2587
        %v2795 = vpop.f32.mrb[0].mxu0
        %v2796 = vadd.f32 0.0, %v2795
        %v2797 = vpop.f32.mrb[0].mxu0
        %v2798 = vpop.f32.mrb[0].mxu0
        %v2799 = vadd.f32 0.0, %v2798
        %v2800 = vpop.f32.mrb[0].mxu0
        %2801 = vmatprep.mubr.bf16.mxu0 0
        %2802 = vmatmul.mubr.bf16.gmra.mrb[0].mxu0 %v2588
        %v2803 = vpop.f32.mrb[0].mxu0
        %v2804 = vadd.f32 0.0, %v2803
        %v2805 = vpop.f32.mrb[0].mxu0
        %v2806 = vpop.f32.mrb[0].mxu0
        %v2807 = vadd.f32 0.0, %v2806
        %v2808 = vpop.f32.mrb[0].mxu0
        %2809 = vmatprep.mubr.bf16.mxu0 0
        %2810 = vmatmul.mubr.bf16.gmra.mrb[0].mxu0 %v2589
        %v2811 = vpop.f32.mrb[0].mxu0
        %v2812 = vadd.f32 0.0, %v2811
        %v2813 = vpop.f32.mrb[0].mxu0
        %v2814 = vpop.f32.mrb[0].mxu0
        %v2815 = vadd.f32 0.0, %v2814
        %v2816 = vpop.f32.mrb[0].mxu0
        %2817 = vmatprep.mubr.bf16.mxu0 0
        %2818 = vmatmul.mubr.bf16.gmra.mrb[0].mxu0 %v2590
        %v2819 = vpop.f32.mrb[0].mxu0
        %v2820 = vadd.f32 0.0, %v2819
        %v2821 = vpop.f32.mrb[0].mxu0
        %v2822 = vpop.f32.mrb[0].mxu0
        %v2823 = vadd.f32 0.0, %v2822
        %v2824 = vpop.f32.mrb[0].mxu0
        %2825 = vmatprep.mubr.bf16.mxu0 0
        %2826 = vmatmul.mubr.bf16.gmra.mrb[0].mxu0 %v2591
        %v2827 = vpop.f32.mrb[0].mxu0
        %v2828 = vadd.f32 0.0, %v2827
        %v2829 = vpop.f32.mrb[0].mxu0
        %v2830 = vpop.f32.mrb[0].mxu0
        %v2831 = vadd.f32 0.0, %v2830
        %v2832 = vpop.f32.mrb[0].mxu0
        %2833 = vdwg.mxu0
        %v2834 = vadd.f32 %v2502, %v2692
        %v2835 = vadd.f32 %v2503, %v2695
        %v2836 = vadd.f32 %v2504, %v2700
        %v2837 = vadd.f32 %v2505, %v2703
        %v2838 = vadd.f32 %v2506, %v2708
        %v2839 = vadd.f32 %v2507, %v2711
        %v2840 = vadd.f32 %v2508, %v2716
        %v2841 = vadd.f32 %v2509, %v2719
        %v2842 = vadd.f32 %v2510, %v2724
        %v2843 = vadd.f32 %v2511, %v2727
        %v2844 = vadd.f32 %v2512, %v2732
        %v2845 = vadd.f32 %v2513, %v2735
        %v2846 = vadd.f32 %v2514, %v2740
        %v2847 = vadd.f32 %v2515, %v2743
        %v2848 = vadd.f32 %v2516, %v2748
        %v2849 = vadd.f32 %v2517, %v2751
        %v2850 = vadd.f32 %v2518, %v2756
        %v2851 = vadd.f32 %v2519, %v2759
        %v2852 = vadd.f32 %v2520, %v2764
        %v2853 = vadd.f32 %v2521, %v2767
        %v2854 = vadd.f32 %v2522, %v2772
        %v2855 = vadd.f32 %v2523, %v2775
        %v2856 = vadd.f32 %v2524, %v2780
        %v2857 = vadd.f32 %v2525, %v2783
        %v2858 = vadd.f32 %v2526, %v2788
        %v2859 = vadd.f32 %v2527, %v2791
        %v2860 = vadd.f32 %v2528, %v2796
        %v2861 = vadd.f32 %v2529, %v2799
        %v2862 = vadd.f32 %v2530, %v2804
        %v2863 = vadd.f32 %v2531, %v2807
        %v2864 = vadd.f32 %v2532, %v2812
        %v2865 = vadd.f32 %v2533, %v2815
        %v2866 = vadd.f32 %v2534, %v2820
        %v2867 = vadd.f32 %v2535, %v2823
        %v2868 = vadd.f32 %v2536, %v2828
        %v2869 = vadd.f32 %v2537, %v2831
        %v2870 = vld [vmem:[#allocation2 + $0x24] sm:$0xff]
        %v2871 = vld [vmem:[#allocation2 + $0x2c] sm:$0xff]
        %v2872 = vld [vmem:[#allocation2 + $0x34] sm:$0xff]
        %v2873 = vld [vmem:[#allocation2 + $0x3c] sm:$0xff]
        %v2874 = vld [vmem:[#allocation2 + $0x44] sm:$0xff]
        %v2875 = vld [vmem:[#allocation2 + $0x4c] sm:$0xff]
        %v2876 = vld [vmem:[#allocation2 + $0x54] sm:$0xff]
        %v2877 = vld [vmem:[#allocation2 + $0x5c] sm:$0xff]
        %v2878 = vld [vmem:[#allocation2 + $0x64] sm:$0xff]
        %v2879 = vld [vmem:[#allocation2 + $0x6c] sm:$0xff]
        %v2880 = vld [vmem:[#allocation2 + $0x74] sm:$0xff]
        %v2881 = vld [vmem:[#allocation2 + $0x7c] sm:$0xff]
        %v2882 = vld [vmem:[#allocation2 + $0x84] sm:$0xff]
        %v2883 = vld [vmem:[#allocation2 + $0x8c] sm:$0xff]
        %v2884 = vld [vmem:[#allocation2 + $0x94] sm:$0xff]
        %v2885 = vld [vmem:[#allocation2 + $0x9c] sm:$0xff]
        %v2886 = vld [vmem:[#allocation2 + $0xa4] sm:$0xff]
        %v2887 = vld [vmem:[#allocation2 + $0xac] sm:$0xff]
        %v2888 = vld [vmem:[#allocation2 + $0xb4] sm:$0xff]
        %v2889 = vld [vmem:[#allocation2 + $0xbc] sm:$0xff]
        %v2890 = vld [vmem:[#allocation2 + $0xc4] sm:$0xff]
        %v2891 = vld [vmem:[#allocation2 + $0xcc] sm:$0xff]
        %v2892 = vld [vmem:[#allocation2 + $0xd4] sm:$0xff]
        %v2893 = vld [vmem:[#allocation2 + $0xdc] sm:$0xff]
        %v2894 = vld [vmem:[#allocation2 + $0xe4] sm:$0xff]
        %v2895 = vld [vmem:[#allocation2 + $0xec] sm:$0xff]
        %v2896 = vld [vmem:[#allocation2 + $0xf4] sm:$0xff]
        %v2897 = vld [vmem:[#allocation2 + $0xfc] sm:$0xff]
        %v2898 = vld [vmem:[#allocation2 + $0x104] sm:$0xff]
        %v2899 = vld [vmem:[#allocation2 + $0x10c] sm:$0xff]
        %v2900 = vld [vmem:[#allocation2 + $0x114] sm:$0xff]
        %v2901 = vld [vmem:[#allocation2 + $0x11c] sm:$0xff]
        %v2902 = vld [vmem:[#allocation2 + $0x124] sm:$0xff]
        %v2903 = vld [vmem:[#allocation2 + $0x12c] sm:$0xff]
        %v2904 = vld [vmem:[#allocation2 + $0x134] sm:$0xff]
        %v2905 = vld [vmem:[#allocation2 + $0x13c] sm:$0xff]
        %v2906 = vpack.c.bf16 %v2871, %v2870
        %v2907 = vpack.c.bf16 %v2873, %v2872
        %v2908 = vpack.c.bf16 %v2875, %v2874
        %v2909 = vpack.c.bf16 %v2877, %v2876
        %v2910 = vpack.c.bf16 %v2879, %v2878
        %v2911 = vpack.c.bf16 %v2881, %v2880
        %v2912 = vpack.c.bf16 %v2883, %v2882
        %v2913 = vpack.c.bf16 %v2885, %v2884
        %v2914 = vpack.c.bf16 %v2887, %v2886
        %v2915 = vpack.c.bf16 %v2889, %v2888
        %v2916 = vpack.c.bf16 %v2891, %v2890
        %v2917 = vpack.c.bf16 %v2893, %v2892
        %v2918 = vpack.c.bf16 %v2895, %v2894
        %v2919 = vpack.c.bf16 %v2897, %v2896
        %v2920 = vpack.c.bf16 %v2899, %v2898
        %v2921 = vpack.c.bf16 %v2901, %v2900
        %v2922 = vpack.c.bf16 %v2903, %v2902
        %v2923 = vpack.c.bf16 %v2905, %v2904
        %s2924 = scalar_lea.vmem [#allocation9], 384
        %v2925 = vld [vmem:[%s2924] sm:$0xf]
        %v2926 = vld [vmem:[%s2924 + $0x4] sm:$0xf]
        %v2927 = vld [vmem:[%s2924 + $0x8] sm:$0xf]
        %v2928 = vld [vmem:[%s2924 + $0xc] sm:$0xf]
        %v2929 = vld [vmem:[%s2924 + $0x10] sm:$0xf]
        %v2930 = vld [vmem:[%s2924 + $0x14] sm:$0xf]
        %v2931 = vld [vmem:[%s2924 + $0x18] sm:$0xf]
        %v2932 = vld [vmem:[%s2924 + $0x1c] sm:$0xf]
        %v2933 = vld [vmem:[%s2924 + $0x20] sm:$0xf]
        %v2934 = vld [vmem:[%s2924 + $0x24] sm:$0xf]
        %v2935 = vld [vmem:[%s2924 + $0x28] sm:$0xf]
        %v2936 = vld [vmem:[%s2924 + $0x2c] sm:$0xf]
        %v2937 = vld [vmem:[%s2924 + $0x30] sm:$0xf]
        %v2938 = vld [vmem:[%s2924 + $0x34] sm:$0xf]
        %v2939 = vld [vmem:[%s2924 + $0x38] sm:$0xf]
        %v2940 = vld [vmem:[%s2924 + $0x3c] sm:$0xf]
        %v2957 = vunpack.c.l.b16 %v2925
        %v2958 = vunpack.c.l.b16 %v2926
        %v2959 = vunpack.c.l.b16 %v2927
        %v2960 = vunpack.c.l.b16 %v2928
        %v2961 = vunpack.c.l.b16 %v2929
        %v2962 = vunpack.c.l.b16 %v2930
        %v2963 = vunpack.c.l.b16 %v2931
        %v2964 = vunpack.c.l.b16 %v2932
        %v2965 = vunpack.c.l.b16 %v2933
        %v2966 = vunpack.c.l.b16 %v2934
        %v2967 = vunpack.c.l.b16 %v2935
        %v2968 = vunpack.c.l.b16 %v2936
        %v2969 = vunpack.c.l.b16 %v2937
        %v2970 = vunpack.c.l.b16 %v2938
        %v2971 = vunpack.c.l.b16 %v2939
        %v2972 = vunpack.c.l.b16 %v2940
        %v2973 = vpack.c.b16 %v2958, %v2957
        %v2974 = vpack.c.b16 %v2960, %v2959
        %v2975 = vpack.c.b16 %v2962, %v2961
        %v2976 = vpack.c.b16 %v2964, %v2963
        %v2977 = vpack.c.b16 %v2966, %v2965
        %v2978 = vpack.c.b16 %v2968, %v2967
        %v2979 = vpack.c.b16 %v2970, %v2969
        %v2980 = vpack.c.b16 %v2972, %v2971
        %2989 = vmatprep.subr.bf16.mxu0 0
        %2990 = vmatpush1.bf16.msra.mxu0 %v2973
        %2991 = vmatprep.subr.bf16.mxu0 0
        %2992 = vmatpush1.bf16.msra.mxu0 %v2974
        %2993 = vmatprep.subr.bf16.mxu0 0
        %2994 = vmatpush1.bf16.msra.mxu0 %v2975
        %2995 = vmatprep.subr.bf16.mxu0 0
        %2996 = vmatpush1.bf16.msra.mxu0 %v2976
        %2997 = vmatprep.subr.bf16.mxu0 0
        %2998 = vmatpush1.bf16.msra.mxu0 %v2977
        %2999 = vmatprep.subr.bf16.mxu0 0
        %3000 = vmatpush1.bf16.msra.mxu0 %v2978
        %3001 = vmatprep.subr.bf16.mxu0 0
        %3002 = vmatpush1.bf16.msra.mxu0 %v2979
        %3003 = vmatprep.subr.bf16.mxu0 0
        %3004 = vmatpush1.bf16.msra.mxu0 %v2980
        %3005 = vmatprep.subr.bf16.mxu0 0
        %3006 = vmatpush1.bf16.msra.mxu0 0
        %3007 = vmatprep.subr.bf16.mxu0 0
        %3008 = vmatpush1.bf16.msra.mxu0 0
        %3009 = vmatprep.subr.bf16.mxu0 0
        %3010 = vmatpush1.bf16.msra.mxu0 0
        %3011 = vmatprep.subr.bf16.mxu0 0
        %3012 = vmatpush1.bf16.msra.mxu0 0
        %3013 = vmatprep.subr.bf16.mxu0 0
        %3014 = vmatpush1.bf16.msra.mxu0 0
        %3015 = vmatprep.subr.bf16.mxu0 0
        %3016 = vmatpush1.bf16.msra.mxu0 0
        %3017 = vmatprep.subr.bf16.mxu0 0
        %3018 = vmatpush1.bf16.msra.mxu0 0
        %3019 = vmatprep.subr.bf16.mxu0 0
        %3020 = vmatpush1.bf16.msra.mxu0 0
        %3021 = vmatprep.mubr.bf16.mxu0 0
        %3022 = vmatmul.mubr.bf16.gmra.mrb[0].mxu0 %v2906
        %v3023 = vpop.f32.mrb[0].mxu0
        %v3024 = vadd.f32 0.0, %v3023
        %v3025 = vpop.f32.mrb[0].mxu0
        %v3026 = vpop.f32.mrb[0].mxu0
        %v3027 = vadd.f32 0.0, %v3026
        %v3028 = vpop.f32.mrb[0].mxu0
        %3029 = vmatprep.mubr.bf16.mxu0 0
        %3030 = vmatmul.mubr.bf16.gmra.mrb[0].mxu0 %v2907
        %v3031 = vpop.f32.mrb[0].mxu0
        %v3032 = vadd.f32 0.0, %v3031
        %v3033 = vpop.f32.mrb[0].mxu0
        %v3034 = vpop.f32.mrb[0].mxu0
        %v3035 = vadd.f32 0.0, %v3034
        %v3036 = vpop.f32.mrb[0].mxu0
        %3037 = vmatprep.mubr.bf16.mxu0 0
        %3038 = vmatmul.mubr.bf16.gmra.mrb[0].mxu0 %v2908
        %v3039 = vpop.f32.mrb[0].mxu0
        %v3040 = vadd.f32 0.0, %v3039
        %v3041 = vpop.f32.mrb[0].mxu0
        %v3042 = vpop.f32.mrb[0].mxu0
        %v3043 = vadd.f32 0.0, %v3042
        %v3044 = vpop.f32.mrb[0].mxu0
        %3045 = vmatprep.mubr.bf16.mxu0 0
        %3046 = vmatmul.mubr.bf16.gmra.mrb[0].mxu0 %v2909
        %v3047 = vpop.f32.mrb[0].mxu0
        %v3048 = vadd.f32 0.0, %v3047
        %v3049 = vpop.f32.mrb[0].mxu0
        %v3050 = vpop.f32.mrb[0].mxu0
        %v3051 = vadd.f32 0.0, %v3050
        %v3052 = vpop.f32.mrb[0].mxu0
        %3053 = vmatprep.mubr.bf16.mxu0 0
        %3054 = vmatmul.mubr.bf16.gmra.mrb[0].mxu0 %v2910
        %v3055 = vpop.f32.mrb[0].mxu0
        %v3056 = vadd.f32 0.0, %v3055
        %v3057 = vpop.f32.mrb[0].mxu0
        %v3058 = vpop.f32.mrb[0].mxu0
        %v3059 = vadd.f32 0.0, %v3058
        %v3060 = vpop.f32.mrb[0].mxu0
        %3061 = vmatprep.mubr.bf16.mxu0 0
        %3062 = vmatmul.mubr.bf16.gmra.mrb[0].mxu0 %v2911
        %v3063 = vpop.f32.mrb[0].mxu0
        %v3064 = vadd.f32 0.0, %v3063
        %v3065 = vpop.f32.mrb[0].mxu0
        %v3066 = vpop.f32.mrb[0].mxu0
        %v3067 = vadd.f32 0.0, %v3066
        %v3068 = vpop.f32.mrb[0].mxu0
        %3069 = vmatprep.mubr.bf16.mxu0 0
        %3070 = vmatmul.mubr.bf16.gmra.mrb[0].mxu0 %v2912
        %v3071 = vpop.f32.mrb[0].mxu0
        %v3072 = vadd.f32 0.0, %v3071
        %v3073 = vpop.f32.mrb[0].mxu0
        %v3074 = vpop.f32.mrb[0].mxu0
        %v3075 = vadd.f32 0.0, %v3074
        %v3076 = vpop.f32.mrb[0].mxu0
        %3077 = vmatprep.mubr.bf16.mxu0 0
        %3078 = vmatmul.mubr.bf16.gmra.mrb[0].mxu0 %v2913
        %v3079 = vpop.f32.mrb[0].mxu0
        %v3080 = vadd.f32 0.0, %v3079
        %v3081 = vpop.f32.mrb[0].mxu0
        %v3082 = vpop.f32.mrb[0].mxu0
        %v3083 = vadd.f32 0.0, %v3082
        %v3084 = vpop.f32.mrb[0].mxu0
        %3085 = vmatprep.mubr.bf16.mxu0 0
        %3086 = vmatmul.mubr.bf16.gmra.mrb[0].mxu0 %v2914
        %v3087 = vpop.f32.mrb[0].mxu0
        %v3088 = vadd.f32 0.0, %v3087
        %v3089 = vpop.f32.mrb[0].mxu0
        %v3090 = vpop.f32.mrb[0].mxu0
        %v3091 = vadd.f32 0.0, %v3090
        %v3092 = vpop.f32.mrb[0].mxu0
        %3093 = vmatprep.mubr.bf16.mxu0 0
        %3094 = vmatmul.mubr.bf16.gmra.mrb[0].mxu0 %v2915
        %v3095 = vpop.f32.mrb[0].mxu0
        %v3096 = vadd.f32 0.0, %v3095
        %v3097 = vpop.f32.mrb[0].mxu0
        %v3098 = vpop.f32.mrb[0].mxu0
        %v3099 = vadd.f32 0.0, %v3098
        %v3100 = vpop.f32.mrb[0].mxu0
        %3101 = vmatprep.mubr.bf16.mxu0 0
        %3102 = vmatmul.mubr.bf16.gmra.mrb[0].mxu0 %v2916
        %v3103 = vpop.f32.mrb[0].mxu0
        %v3104 = vadd.f32 0.0, %v3103
        %v3105 = vpop.f32.mrb[0].mxu0
        %v3106 = vpop.f32.mrb[0].mxu0
        %v3107 = vadd.f32 0.0, %v3106
        %v3108 = vpop.f32.mrb[0].mxu0
        %3109 = vmatprep.mubr.bf16.mxu0 0
        %3110 = vmatmul.mubr.bf16.gmra.mrb[0].mxu0 %v2917
        %v3111 = vpop.f32.mrb[0].mxu0
        %v3112 = vadd.f32 0.0, %v3111
        %v3113 = vpop.f32.mrb[0].mxu0
        %v3114 = vpop.f32.mrb[0].mxu0
        %v3115 = vadd.f32 0.0, %v3114
        %v3116 = vpop.f32.mrb[0].mxu0
        %3117 = vmatprep.mubr.bf16.mxu0 0
        %3118 = vmatmul.mubr.bf16.gmra.mrb[0].mxu0 %v2918
        %v3119 = vpop.f32.mrb[0].mxu0
        %v3120 = vadd.f32 0.0, %v3119
        %v3121 = vpop.f32.mrb[0].mxu0
        %v3122 = vpop.f32.mrb[0].mxu0
        %v3123 = vadd.f32 0.0, %v3122
        %v3124 = vpop.f32.mrb[0].mxu0
        %3125 = vmatprep.mubr.bf16.mxu0 0
        %3126 = vmatmul.mubr.bf16.gmra.mrb[0].mxu0 %v2919
        %v3127 = vpop.f32.mrb[0].mxu0
        %v3128 = vadd.f32 0.0, %v3127
        %v3129 = vpop.f32.mrb[0].mxu0
        %v3130 = vpop.f32.mrb[0].mxu0
        %v3131 = vadd.f32 0.0, %v3130
        %v3132 = vpop.f32.mrb[0].mxu0
        %3133 = vmatprep.mubr.bf16.mxu0 0
        %3134 = vmatmul.mubr.bf16.gmra.mrb[0].mxu0 %v2920
        %v3135 = vpop.f32.mrb[0].mxu0
        %v3136 = vadd.f32 0.0, %v3135
        %v3137 = vpop.f32.mrb[0].mxu0
        %v3138 = vpop.f32.mrb[0].mxu0
        %v3139 = vadd.f32 0.0, %v3138
        %v3140 = vpop.f32.mrb[0].mxu0
        %3141 = vmatprep.mubr.bf16.mxu0 0
        %3142 = vmatmul.mubr.bf16.gmra.mrb[0].mxu0 %v2921
        %v3143 = vpop.f32.mrb[0].mxu0
        %v3144 = vadd.f32 0.0, %v3143
        %v3145 = vpop.f32.mrb[0].mxu0
        %v3146 = vpop.f32.mrb[0].mxu0
        %v3147 = vadd.f32 0.0, %v3146
        %v3148 = vpop.f32.mrb[0].mxu0
        %3149 = vmatprep.mubr.bf16.mxu0 0
        %3150 = vmatmul.mubr.bf16.gmra.mrb[0].mxu0 %v2922
        %v3151 = vpop.f32.mrb[0].mxu0
        %v3152 = vadd.f32 0.0, %v3151
        %v3153 = vpop.f32.mrb[0].mxu0
        %v3154 = vpop.f32.mrb[0].mxu0
        %v3155 = vadd.f32 0.0, %v3154
        %v3156 = vpop.f32.mrb[0].mxu0
        %3157 = vmatprep.mubr.bf16.mxu0 0
        %3158 = vmatmul.mubr.bf16.gmra.mrb[0].mxu0 %v2923
        %v3159 = vpop.f32.mrb[0].mxu0
        %v3160 = vadd.f32 0.0, %v3159
        %v3161 = vpop.f32.mrb[0].mxu0
        %v3162 = vpop.f32.mrb[0].mxu0
        %v3163 = vadd.f32 0.0, %v3162
        %v3164 = vpop.f32.mrb[0].mxu0
        %3165 = vdwg.mxu0
        %v3166 = vadd.f32 %v2834, %v3024
        %v3167 = vadd.f32 %v2835, %v3027
        %v3168 = vadd.f32 %v2836, %v3032
        %v3169 = vadd.f32 %v2837, %v3035
        %v3170 = vadd.f32 %v2838, %v3040
        %v3171 = vadd.f32 %v2839, %v3043
        %v3172 = vadd.f32 %v2840, %v3048
        %v3173 = vadd.f32 %v2841, %v3051
        %v3174 = vadd.f32 %v2842, %v3056
        %v3175 = vadd.f32 %v2843, %v3059
        %v3176 = vadd.f32 %v2844, %v3064
        %v3177 = vadd.f32 %v2845, %v3067
        %v3178 = vadd.f32 %v2846, %v3072
        %v3179 = vadd.f32 %v2847, %v3075
        %v3180 = vadd.f32 %v2848, %v3080
        %v3181 = vadd.f32 %v2849, %v3083
        %v3182 = vadd.f32 %v2850, %v3088
        %v3183 = vadd.f32 %v2851, %v3091
        %v3184 = vadd.f32 %v2852, %v3096
        %v3185 = vadd.f32 %v2853, %v3099
        %v3186 = vadd.f32 %v2854, %v3104
        %v3187 = vadd.f32 %v2855, %v3107
        %v3188 = vadd.f32 %v2856, %v3112
        %v3189 = vadd.f32 %v2857, %v3115
        %v3190 = vadd.f32 %v2858, %v3120
        %v3191 = vadd.f32 %v2859, %v3123
        %v3192 = vadd.f32 %v2860, %v3128
        %v3193 = vadd.f32 %v2861, %v3131
        %v3194 = vadd.f32 %v2862, %v3136
        %v3195 = vadd.f32 %v2863, %v3139
        %v3196 = vadd.f32 %v2864, %v3144
        %v3197 = vadd.f32 %v2865, %v3147
        %v3198 = vadd.f32 %v2866, %v3152
        %v3199 = vadd.f32 %v2867, %v3155
        %v3200 = vadd.f32 %v2868, %v3160
        %v3201 = vadd.f32 %v2869, %v3163
        %v3202 = vld [vmem:[#allocation2 + $0x25] sm:$0xff]
        %v3203 = vld [vmem:[#allocation2 + $0x2d] sm:$0xff]
        %v3204 = vld [vmem:[#allocation2 + $0x35] sm:$0xff]
        %v3205 = vld [vmem:[#allocation2 + $0x3d] sm:$0xff]
        %v3206 = vld [vmem:[#allocation2 + $0x45] sm:$0xff]
        %v3207 = vld [vmem:[#allocation2 + $0x4d] sm:$0xff]
        %v3208 = vld [vmem:[#allocation2 + $0x55] sm:$0xff]
        %v3209 = vld [vmem:[#allocation2 + $0x5d] sm:$0xff]
        %v3210 = vld [vmem:[#allocation2 + $0x65] sm:$0xff]
        %v3211 = vld [vmem:[#allocation2 + $0x6d] sm:$0xff]
        %v3212 = vld [vmem:[#allocation2 + $0x75] sm:$0xff]
        %v3213 = vld [vmem:[#allocation2 + $0x7d] sm:$0xff]
        %v3214 = vld [vmem:[#allocation2 + $0x85] sm:$0xff]
        %v3215 = vld [vmem:[#allocation2 + $0x8d] sm:$0xff]
        %v3216 = vld [vmem:[#allocation2 + $0x95] sm:$0xff]
        %v3217 = vld [vmem:[#allocation2 + $0x9d] sm:$0xff]
        %v3218 = vld [vmem:[#allocation2 + $0xa5] sm:$0xff]
        %v3219 = vld [vmem:[#allocation2 + $0xad] sm:$0xff]
        %v3220 = vld [vmem:[#allocation2 + $0xb5] sm:$0xff]
        %v3221 = vld [vmem:[#allocation2 + $0xbd] sm:$0xff]
        %v3222 = vld [vmem:[#allocation2 + $0xc5] sm:$0xff]
        %v3223 = vld [vmem:[#allocation2 + $0xcd] sm:$0xff]
        %v3224 = vld [vmem:[#allocation2 + $0xd5] sm:$0xff]
        %v3225 = vld [vmem:[#allocation2 + $0xdd] sm:$0xff]
        %v3226 = vld [vmem:[#allocation2 + $0xe5] sm:$0xff]
        %v3227 = vld [vmem:[#allocation2 + $0xed] sm:$0xff]
        %v3228 = vld [vmem:[#allocation2 + $0xf5] sm:$0xff]
        %v3229 = vld [vmem:[#allocation2 + $0xfd] sm:$0xff]
        %v3230 = vld [vmem:[#allocation2 + $0x105] sm:$0xff]
        %v3231 = vld [vmem:[#allocation2 + $0x10d] sm:$0xff]
        %v3232 = vld [vmem:[#allocation2 + $0x115] sm:$0xff]
        %v3233 = vld [vmem:[#allocation2 + $0x11d] sm:$0xff]
        %v3234 = vld [vmem:[#allocation2 + $0x125] sm:$0xff]
        %v3235 = vld [vmem:[#allocation2 + $0x12d] sm:$0xff]
        %v3236 = vld [vmem:[#allocation2 + $0x135] sm:$0xff]
        %v3237 = vld [vmem:[#allocation2 + $0x13d] sm:$0xff]
        %v3238 = vpack.c.bf16 %v3203, %v3202
        %v3239 = vpack.c.bf16 %v3205, %v3204
        %v3240 = vpack.c.bf16 %v3207, %v3206
        %v3241 = vpack.c.bf16 %v3209, %v3208
        %v3242 = vpack.c.bf16 %v3211, %v3210
        %v3243 = vpack.c.bf16 %v3213, %v3212
        %v3244 = vpack.c.bf16 %v3215, %v3214
        %v3245 = vpack.c.bf16 %v3217, %v3216
        %v3246 = vpack.c.bf16 %v3219, %v3218
        %v3247 = vpack.c.bf16 %v3221, %v3220
        %v3248 = vpack.c.bf16 %v3223, %v3222
        %v3249 = vpack.c.bf16 %v3225, %v3224
        %v3250 = vpack.c.bf16 %v3227, %v3226
        %v3251 = vpack.c.bf16 %v3229, %v3228
        %v3252 = vpack.c.bf16 %v3231, %v3230
        %v3253 = vpack.c.bf16 %v3233, %v3232
        %v3254 = vpack.c.bf16 %v3235, %v3234
        %v3255 = vpack.c.bf16 %v3237, %v3236
        %s3256 = scalar_lea.vmem [#allocation9], 448
        %v3257 = vld [vmem:[%s3256] sm:$0xf]
        %v3258 = vld [vmem:[%s3256 + $0x4] sm:$0xf]
        %v3259 = vld [vmem:[%s3256 + $0x8] sm:$0xf]
        %v3260 = vld [vmem:[%s3256 + $0xc] sm:$0xf]
        %v3261 = vld [vmem:[%s3256 + $0x10] sm:$0xf]
        %v3262 = vld [vmem:[%s3256 + $0x14] sm:$0xf]
        %v3263 = vld [vmem:[%s3256 + $0x18] sm:$0xf]
        %v3264 = vld [vmem:[%s3256 + $0x1c] sm:$0xf]
        %v3265 = vld [vmem:[%s3256 + $0x20] sm:$0xf]
        %v3266 = vld [vmem:[%s3256 + $0x24] sm:$0xf]
        %v3267 = vld [vmem:[%s3256 + $0x28] sm:$0xf]
        %v3268 = vld [vmem:[%s3256 + $0x2c] sm:$0xf]
        %v3269 = vld [vmem:[%s3256 + $0x30] sm:$0xf]
        %v3270 = vld [vmem:[%s3256 + $0x34] sm:$0xf]
        %v3271 = vld [vmem:[%s3256 + $0x38] sm:$0xf]
        %v3272 = vld [vmem:[%s3256 + $0x3c] sm:$0xf]
        %v3289 = vunpack.c.l.b16 %v3257
        %v3290 = vunpack.c.l.b16 %v3258
        %v3291 = vunpack.c.l.b16 %v3259
        %v3292 = vunpack.c.l.b16 %v3260
        %v3293 = vunpack.c.l.b16 %v3261
        %v3294 = vunpack.c.l.b16 %v3262
        %v3295 = vunpack.c.l.b16 %v3263
        %v3296 = vunpack.c.l.b16 %v3264
        %v3297 = vunpack.c.l.b16 %v3265
        %v3298 = vunpack.c.l.b16 %v3266
        %v3299 = vunpack.c.l.b16 %v3267
        %v3300 = vunpack.c.l.b16 %v3268
        %v3301 = vunpack.c.l.b16 %v3269
        %v3302 = vunpack.c.l.b16 %v3270
        %v3303 = vunpack.c.l.b16 %v3271
        %v3304 = vunpack.c.l.b16 %v3272
        %v3305 = vpack.c.b16 %v3290, %v3289
        %v3306 = vpack.c.b16 %v3292, %v3291
        %v3307 = vpack.c.b16 %v3294, %v3293
        %v3308 = vpack.c.b16 %v3296, %v3295
        %v3309 = vpack.c.b16 %v3298, %v3297
        %v3310 = vpack.c.b16 %v3300, %v3299
        %v3311 = vpack.c.b16 %v3302, %v3301
        %v3312 = vpack.c.b16 %v3304, %v3303
        %3321 = vmatprep.subr.bf16.mxu0 0
        %3322 = vmatpush1.bf16.msra.mxu0 %v3305
        %3323 = vmatprep.subr.bf16.mxu0 0
        %3324 = vmatpush1.bf16.msra.mxu0 %v3306
        %3325 = vmatprep.subr.bf16.mxu0 0
        %3326 = vmatpush1.bf16.msra.mxu0 %v3307
        %3327 = vmatprep.subr.bf16.mxu0 0
        %3328 = vmatpush1.bf16.msra.mxu0 %v3308
        %3329 = vmatprep.subr.bf16.mxu0 0
        %3330 = vmatpush1.bf16.msra.mxu0 %v3309
        %3331 = vmatprep.subr.bf16.mxu0 0
        %3332 = vmatpush1.bf16.msra.mxu0 %v3310
        %3333 = vmatprep.subr.bf16.mxu0 0
        %3334 = vmatpush1.bf16.msra.mxu0 %v3311
        %3335 = vmatprep.subr.bf16.mxu0 0
        %3336 = vmatpush1.bf16.msra.mxu0 %v3312
        %3337 = vmatprep.subr.bf16.mxu0 0
        %3338 = vmatpush1.bf16.msra.mxu0 0
        %3339 = vmatprep.subr.bf16.mxu0 0
        %3340 = vmatpush1.bf16.msra.mxu0 0
        %3341 = vmatprep.subr.bf16.mxu0 0
        %3342 = vmatpush1.bf16.msra.mxu0 0
        %3343 = vmatprep.subr.bf16.mxu0 0
        %3344 = vmatpush1.bf16.msra.mxu0 0
        %3345 = vmatprep.subr.bf16.mxu0 0
        %3346 = vmatpush1.bf16.msra.mxu0 0
        %3347 = vmatprep.subr.bf16.mxu0 0
        %3348 = vmatpush1.bf16.msra.mxu0 0
        %3349 = vmatprep.subr.bf16.mxu0 0
        %3350 = vmatpush1.bf16.msra.mxu0 0
        %3351 = vmatprep.subr.bf16.mxu0 0
        %3352 = vmatpush1.bf16.msra.mxu0 0
        %3353 = vmatprep.mubr.bf16.mxu0 0
        %3354 = vmatmul.mubr.bf16.gmra.mrb[0].mxu0 %v3238
        %v3355 = vpop.f32.mrb[0].mxu0
        %v3356 = vadd.f32 0.0, %v3355
        %v3357 = vpop.f32.mrb[0].mxu0
        %v3358 = vpop.f32.mrb[0].mxu0
        %v3359 = vadd.f32 0.0, %v3358
        %v3360 = vpop.f32.mrb[0].mxu0
        %3361 = vmatprep.mubr.bf16.mxu0 0
        %3362 = vmatmul.mubr.bf16.gmra.mrb[0].mxu0 %v3239
        %v3363 = vpop.f32.mrb[0].mxu0
        %v3364 = vadd.f32 0.0, %v3363
        %v3365 = vpop.f32.mrb[0].mxu0
        %v3366 = vpop.f32.mrb[0].mxu0
        %v3367 = vadd.f32 0.0, %v3366
        %v3368 = vpop.f32.mrb[0].mxu0
        %3369 = vmatprep.mubr.bf16.mxu0 0
        %3370 = vmatmul.mubr.bf16.gmra.mrb[0].mxu0 %v3240
        %v3371 = vpop.f32.mrb[0].mxu0
        %v3372 = vadd.f32 0.0, %v3371
        %v3373 = vpop.f32.mrb[0].mxu0
        %v3374 = vpop.f32.mrb[0].mxu0
        %v3375 = vadd.f32 0.0, %v3374
        %v3376 = vpop.f32.mrb[0].mxu0
        %3377 = vmatprep.mubr.bf16.mxu0 0
        %3378 = vmatmul.mubr.bf16.gmra.mrb[0].mxu0 %v3241
        %v3379 = vpop.f32.mrb[0].mxu0
        %v3380 = vadd.f32 0.0, %v3379
        %v3381 = vpop.f32.mrb[0].mxu0
        %v3382 = vpop.f32.mrb[0].mxu0
        %v3383 = vadd.f32 0.0, %v3382
        %v3384 = vpop.f32.mrb[0].mxu0
        %3385 = vmatprep.mubr.bf16.mxu0 0
        %3386 = vmatmul.mubr.bf16.gmra.mrb[0].mxu0 %v3242
        %v3387 = vpop.f32.mrb[0].mxu0
        %v3388 = vadd.f32 0.0, %v3387
        %v3389 = vpop.f32.mrb[0].mxu0
        %v3390 = vpop.f32.mrb[0].mxu0
        %v3391 = vadd.f32 0.0, %v3390
        %v3392 = vpop.f32.mrb[0].mxu0
        %3393 = vmatprep.mubr.bf16.mxu0 0
        %3394 = vmatmul.mubr.bf16.gmra.mrb[0].mxu0 %v3243
        %v3395 = vpop.f32.mrb[0].mxu0
        %v3396 = vadd.f32 0.0, %v3395
        %v3397 = vpop.f32.mrb[0].mxu0
        %v3398 = vpop.f32.mrb[0].mxu0
        %v3399 = vadd.f32 0.0, %v3398
        %v3400 = vpop.f32.mrb[0].mxu0
        %3401 = vmatprep.mubr.bf16.mxu0 0
        %3402 = vmatmul.mubr.bf16.gmra.mrb[0].mxu0 %v3244
        %v3403 = vpop.f32.mrb[0].mxu0
        %v3404 = vadd.f32 0.0, %v3403
        %v3405 = vpop.f32.mrb[0].mxu0
        %v3406 = vpop.f32.mrb[0].mxu0
        %v3407 = vadd.f32 0.0, %v3406
        %v3408 = vpop.f32.mrb[0].mxu0
        %3409 = vmatprep.mubr.bf16.mxu0 0
        %3410 = vmatmul.mubr.bf16.gmra.mrb[0].mxu0 %v3245
        %v3411 = vpop.f32.mrb[0].mxu0
        %v3412 = vadd.f32 0.0, %v3411
        %v3413 = vpop.f32.mrb[0].mxu0
        %v3414 = vpop.f32.mrb[0].mxu0
        %v3415 = vadd.f32 0.0, %v3414
        %v3416 = vpop.f32.mrb[0].mxu0
        %3417 = vmatprep.mubr.bf16.mxu0 0
        %3418 = vmatmul.mubr.bf16.gmra.mrb[0].mxu0 %v3246
        %v3419 = vpop.f32.mrb[0].mxu0
        %v3420 = vadd.f32 0.0, %v3419
        %v3421 = vpop.f32.mrb[0].mxu0
        %v3422 = vpop.f32.mrb[0].mxu0
        %v3423 = vadd.f32 0.0, %v3422
        %v3424 = vpop.f32.mrb[0].mxu0
        %3425 = vmatprep.mubr.bf16.mxu0 0
        %3426 = vmatmul.mubr.bf16.gmra.mrb[0].mxu0 %v3247
        %v3427 = vpop.f32.mrb[0].mxu0
        %v3428 = vadd.f32 0.0, %v3427
        %v3429 = vpop.f32.mrb[0].mxu0
        %v3430 = vpop.f32.mrb[0].mxu0
        %v3431 = vadd.f32 0.0, %v3430
        %v3432 = vpop.f32.mrb[0].mxu0
        %3433 = vmatprep.mubr.bf16.mxu0 0
        %3434 = vmatmul.mubr.bf16.gmra.mrb[0].mxu0 %v3248
        %v3435 = vpop.f32.mrb[0].mxu0
        %v3436 = vadd.f32 0.0, %v3435
        %v3437 = vpop.f32.mrb[0].mxu0
        %v3438 = vpop.f32.mrb[0].mxu0
        %v3439 = vadd.f32 0.0, %v3438
        %v3440 = vpop.f32.mrb[0].mxu0
        %3441 = vmatprep.mubr.bf16.mxu0 0
        %3442 = vmatmul.mubr.bf16.gmra.mrb[0].mxu0 %v3249
        %v3443 = vpop.f32.mrb[0].mxu0
        %v3444 = vadd.f32 0.0, %v3443
        %v3445 = vpop.f32.mrb[0].mxu0
        %v3446 = vpop.f32.mrb[0].mxu0
        %v3447 = vadd.f32 0.0, %v3446
        %v3448 = vpop.f32.mrb[0].mxu0
        %3449 = vmatprep.mubr.bf16.mxu0 0
        %3450 = vmatmul.mubr.bf16.gmra.mrb[0].mxu0 %v3250
        %v3451 = vpop.f32.mrb[0].mxu0
        %v3452 = vadd.f32 0.0, %v3451
        %v3453 = vpop.f32.mrb[0].mxu0
        %v3454 = vpop.f32.mrb[0].mxu0
        %v3455 = vadd.f32 0.0, %v3454
        %v3456 = vpop.f32.mrb[0].mxu0
        %3457 = vmatprep.mubr.bf16.mxu0 0
        %3458 = vmatmul.mubr.bf16.gmra.mrb[0].mxu0 %v3251
        %v3459 = vpop.f32.mrb[0].mxu0
        %v3460 = vadd.f32 0.0, %v3459
        %v3461 = vpop.f32.mrb[0].mxu0
        %v3462 = vpop.f32.mrb[0].mxu0
        %v3463 = vadd.f32 0.0, %v3462
        %v3464 = vpop.f32.mrb[0].mxu0
        %3465 = vmatprep.mubr.bf16.mxu0 0
        %3466 = vmatmul.mubr.bf16.gmra.mrb[0].mxu0 %v3252
        %v3467 = vpop.f32.mrb[0].mxu0
        %v3468 = vadd.f32 0.0, %v3467
        %v3469 = vpop.f32.mrb[0].mxu0
        %v3470 = vpop.f32.mrb[0].mxu0
        %v3471 = vadd.f32 0.0, %v3470
        %v3472 = vpop.f32.mrb[0].mxu0
        %3473 = vmatprep.mubr.bf16.mxu0 0
        %3474 = vmatmul.mubr.bf16.gmra.mrb[0].mxu0 %v3253
        %v3475 = vpop.f32.mrb[0].mxu0
        %v3476 = vadd.f32 0.0, %v3475
        %v3477 = vpop.f32.mrb[0].mxu0
        %v3478 = vpop.f32.mrb[0].mxu0
        %v3479 = vadd.f32 0.0, %v3478
        %v3480 = vpop.f32.mrb[0].mxu0
        %3481 = vmatprep.mubr.bf16.mxu0 0
        %3482 = vmatmul.mubr.bf16.gmra.mrb[0].mxu0 %v3254
        %v3483 = vpop.f32.mrb[0].mxu0
        %v3484 = vadd.f32 0.0, %v3483
        %v3485 = vpop.f32.mrb[0].mxu0
        %v3486 = vpop.f32.mrb[0].mxu0
        %v3487 = vadd.f32 0.0, %v3486
        %v3488 = vpop.f32.mrb[0].mxu0
        %3489 = vmatprep.mubr.bf16.mxu0 0
        %3490 = vmatmul.mubr.bf16.gmra.mrb[0].mxu0 %v3255
        %v3491 = vpop.f32.mrb[0].mxu0
        %v3492 = vadd.f32 0.0, %v3491
        %v3493 = vpop.f32.mrb[0].mxu0
        %v3494 = vpop.f32.mrb[0].mxu0
        %v3495 = vadd.f32 0.0, %v3494
        %v3496 = vpop.f32.mrb[0].mxu0
        %3497 = vdwg.mxu0
        %v3498 = vadd.f32 %v3166, %v3356
        %v3499 = vadd.f32 %v3167, %v3359
        %v3500 = vadd.f32 %v3168, %v3364
        %v3501 = vadd.f32 %v3169, %v3367
        %v3502 = vadd.f32 %v3170, %v3372
        %v3503 = vadd.f32 %v3171, %v3375
        %v3504 = vadd.f32 %v3172, %v3380
        %v3505 = vadd.f32 %v3173, %v3383
        %v3506 = vadd.f32 %v3174, %v3388
        %v3507 = vadd.f32 %v3175, %v3391
        %v3508 = vadd.f32 %v3176, %v3396
        %v3509 = vadd.f32 %v3177, %v3399
        %v3510 = vadd.f32 %v3178, %v3404
        %v3511 = vadd.f32 %v3179, %v3407
        %v3512 = vadd.f32 %v3180, %v3412
        %v3513 = vadd.f32 %v3181, %v3415
        %v3514 = vadd.f32 %v3182, %v3420
        %v3515 = vadd.f32 %v3183, %v3423
        %v3516 = vadd.f32 %v3184, %v3428
        %v3517 = vadd.f32 %v3185, %v3431
        %v3518 = vadd.f32 %v3186, %v3436
        %v3519 = vadd.f32 %v3187, %v3439
        %v3520 = vadd.f32 %v3188, %v3444
        %v3521 = vadd.f32 %v3189, %v3447
        %v3522 = vadd.f32 %v3190, %v3452
        %v3523 = vadd.f32 %v3191, %v3455
        %v3524 = vadd.f32 %v3192, %v3460
        %v3525 = vadd.f32 %v3193, %v3463
        %v3526 = vadd.f32 %v3194, %v3468
        %v3527 = vadd.f32 %v3195, %v3471
        %v3528 = vadd.f32 %v3196, %v3476
        %v3529 = vadd.f32 %v3197, %v3479
        %v3530 = vadd.f32 %v3198, %v3484
        %v3531 = vadd.f32 %v3199, %v3487
        %v3532 = vadd.f32 %v3200, %v3492
        %v3533 = vadd.f32 %v3201, %v3495
        %v3534 = vld [vmem:[#allocation2 + $0x26] sm:$0xff]
        %v3535 = vld [vmem:[#allocation2 + $0x2e] sm:$0xff]
        %v3536 = vld [vmem:[#allocation2 + $0x36] sm:$0xff]
        %v3537 = vld [vmem:[#allocation2 + $0x3e] sm:$0xff]
        %v3538 = vld [vmem:[#allocation2 + $0x46] sm:$0xff]
        %v3539 = vld [vmem:[#allocation2 + $0x4e] sm:$0xff]
        %v3540 = vld [vmem:[#allocation2 + $0x56] sm:$0xff]
        %v3541 = vld [vmem:[#allocation2 + $0x5e] sm:$0xff]
        %v3542 = vld [vmem:[#allocation2 + $0x66] sm:$0xff]
        %v3543 = vld [vmem:[#allocation2 + $0x6e] sm:$0xff]
        %v3544 = vld [vmem:[#allocation2 + $0x76] sm:$0xff]
        %v3545 = vld [vmem:[#allocation2 + $0x7e] sm:$0xff]
        %v3546 = vld [vmem:[#allocation2 + $0x86] sm:$0xff]
        %v3547 = vld [vmem:[#allocation2 + $0x8e] sm:$0xff]
        %v3548 = vld [vmem:[#allocation2 + $0x96] sm:$0xff]
        %v3549 = vld [vmem:[#allocation2 + $0x9e] sm:$0xff]
        %v3550 = vld [vmem:[#allocation2 + $0xa6] sm:$0xff]
        %v3551 = vld [vmem:[#allocation2 + $0xae] sm:$0xff]
        %v3552 = vld [vmem:[#allocation2 + $0xb6] sm:$0xff]
        %v3553 = vld [vmem:[#allocation2 + $0xbe] sm:$0xff]
        %v3554 = vld [vmem:[#allocation2 + $0xc6] sm:$0xff]
        %v3555 = vld [vmem:[#allocation2 + $0xce] sm:$0xff]
        %v3556 = vld [vmem:[#allocation2 + $0xd6] sm:$0xff]
        %v3557 = vld [vmem:[#allocation2 + $0xde] sm:$0xff]
        %v3558 = vld [vmem:[#allocation2 + $0xe6] sm:$0xff]
        %v3559 = vld [vmem:[#allocation2 + $0xee] sm:$0xff]
        %v3560 = vld [vmem:[#allocation2 + $0xf6] sm:$0xff]
        %v3561 = vld [vmem:[#allocation2 + $0xfe] sm:$0xff]
        %v3562 = vld [vmem:[#allocation2 + $0x106] sm:$0xff]
        %v3563 = vld [vmem:[#allocation2 + $0x10e] sm:$0xff]
        %v3564 = vld [vmem:[#allocation2 + $0x116] sm:$0xff]
        %v3565 = vld [vmem:[#allocation2 + $0x11e] sm:$0xff]
        %v3566 = vld [vmem:[#allocation2 + $0x126] sm:$0xff]
        %v3567 = vld [vmem:[#allocation2 + $0x12e] sm:$0xff]
        %v3568 = vld [vmem:[#allocation2 + $0x136] sm:$0xff]
        %v3569 = vld [vmem:[#allocation2 + $0x13e] sm:$0xff]
        %v3570 = vpack.c.bf16 %v3535, %v3534
        %v3571 = vpack.c.bf16 %v3537, %v3536
        %v3572 = vpack.c.bf16 %v3539, %v3538
        %v3573 = vpack.c.bf16 %v3541, %v3540
        %v3574 = vpack.c.bf16 %v3543, %v3542
        %v3575 = vpack.c.bf16 %v3545, %v3544
        %v3576 = vpack.c.bf16 %v3547, %v3546
        %v3577 = vpack.c.bf16 %v3549, %v3548
        %v3578 = vpack.c.bf16 %v3551, %v3550
        %v3579 = vpack.c.bf16 %v3553, %v3552
        %v3580 = vpack.c.bf16 %v3555, %v3554
        %v3581 = vpack.c.bf16 %v3557, %v3556
        %v3582 = vpack.c.bf16 %v3559, %v3558
        %v3583 = vpack.c.bf16 %v3561, %v3560
        %v3584 = vpack.c.bf16 %v3563, %v3562
        %v3585 = vpack.c.bf16 %v3565, %v3564
        %v3586 = vpack.c.bf16 %v3567, %v3566
        %v3587 = vpack.c.bf16 %v3569, %v3568
        %s3588 = scalar_lea.vmem [#allocation9], 512
        %v3589 = vld [vmem:[%s3588] sm:$0xf]
        %v3590 = vld [vmem:[%s3588 + $0x4] sm:$0xf]
        %v3591 = vld [vmem:[%s3588 + $0x8] sm:$0xf]
        %v3592 = vld [vmem:[%s3588 + $0xc] sm:$0xf]
        %v3593 = vld [vmem:[%s3588 + $0x10] sm:$0xf]
        %v3594 = vld [vmem:[%s3588 + $0x14] sm:$0xf]
        %v3595 = vld [vmem:[%s3588 + $0x18] sm:$0xf]
        %v3596 = vld [vmem:[%s3588 + $0x1c] sm:$0xf]
        %v3597 = vld [vmem:[%s3588 + $0x20] sm:$0xf]
        %v3598 = vld [vmem:[%s3588 + $0x24] sm:$0xf]
        %v3599 = vld [vmem:[%s3588 + $0x28] sm:$0xf]
        %v3600 = vld [vmem:[%s3588 + $0x2c] sm:$0xf]
        %v3601 = vld [vmem:[%s3588 + $0x30] sm:$0xf]
        %v3602 = vld [vmem:[%s3588 + $0x34] sm:$0xf]
        %v3603 = vld [vmem:[%s3588 + $0x38] sm:$0xf]
        %v3604 = vld [vmem:[%s3588 + $0x3c] sm:$0xf]
        %v3621 = vunpack.c.l.b16 %v3589
        %v3622 = vunpack.c.l.b16 %v3590
        %v3623 = vunpack.c.l.b16 %v3591
        %v3624 = vunpack.c.l.b16 %v3592
        %v3625 = vunpack.c.l.b16 %v3593
        %v3626 = vunpack.c.l.b16 %v3594
        %v3627 = vunpack.c.l.b16 %v3595
        %v3628 = vunpack.c.l.b16 %v3596
        %v3629 = vunpack.c.l.b16 %v3597
        %v3630 = vunpack.c.l.b16 %v3598
        %v3631 = vunpack.c.l.b16 %v3599
        %v3632 = vunpack.c.l.b16 %v3600
        %v3633 = vunpack.c.l.b16 %v3601
        %v3634 = vunpack.c.l.b16 %v3602
        %v3635 = vunpack.c.l.b16 %v3603
        %v3636 = vunpack.c.l.b16 %v3604
        %v3637 = vpack.c.b16 %v3622, %v3621
        %v3638 = vpack.c.b16 %v3624, %v3623
        %v3639 = vpack.c.b16 %v3626, %v3625
        %v3640 = vpack.c.b16 %v3628, %v3627
        %v3641 = vpack.c.b16 %v3630, %v3629
        %v3642 = vpack.c.b16 %v3632, %v3631
        %v3643 = vpack.c.b16 %v3634, %v3633
        %v3644 = vpack.c.b16 %v3636, %v3635
        %3653 = vmatprep.subr.bf16.mxu0 0
        %3654 = vmatpush1.bf16.msra.mxu0 %v3637
        %3655 = vmatprep.subr.bf16.mxu0 0
        %3656 = vmatpush1.bf16.msra.mxu0 %v3638
        %3657 = vmatprep.subr.bf16.mxu0 0
        %3658 = vmatpush1.bf16.msra.mxu0 %v3639
        %3659 = vmatprep.subr.bf16.mxu0 0
        %3660 = vmatpush1.bf16.msra.mxu0 %v3640
        %3661 = vmatprep.subr.bf16.mxu0 0
        %3662 = vmatpush1.bf16.msra.mxu0 %v3641
        %3663 = vmatprep.subr.bf16.mxu0 0
        %3664 = vmatpush1.bf16.msra.mxu0 %v3642
        %3665 = vmatprep.subr.bf16.mxu0 0
        %3666 = vmatpush1.bf16.msra.mxu0 %v3643
        %3667 = vmatprep.subr.bf16.mxu0 0
        %3668 = vmatpush1.bf16.msra.mxu0 %v3644
        %3669 = vmatprep.subr.bf16.mxu0 0
        %3670 = vmatpush1.bf16.msra.mxu0 0
        %3671 = vmatprep.subr.bf16.mxu0 0
        %3672 = vmatpush1.bf16.msra.mxu0 0
        %3673 = vmatprep.subr.bf16.mxu0 0
        %3674 = vmatpush1.bf16.msra.mxu0 0
        %3675 = vmatprep.subr.bf16.mxu0 0
        %3676 = vmatpush1.bf16.msra.mxu0 0
        %3677 = vmatprep.subr.bf16.mxu0 0
        %3678 = vmatpush1.bf16.msra.mxu0 0
        %3679 = vmatprep.subr.bf16.mxu0 0
        %3680 = vmatpush1.bf16.msra.mxu0 0
        %3681 = vmatprep.subr.bf16.mxu0 0
        %3682 = vmatpush1.bf16.msra.mxu0 0
        %3683 = vmatprep.subr.bf16.mxu0 0
        %3684 = vmatpush1.bf16.msra.mxu0 0
        %3685 = vmatprep.mubr.bf16.mxu0 0
        %3686 = vmatmul.mubr.bf16.gmra.mrb[0].mxu0 %v3570
        %v3687 = vpop.f32.mrb[0].mxu0
        %v3688 = vadd.f32 0.0, %v3687
        %v3689 = vpop.f32.mrb[0].mxu0
        %v3690 = vpop.f32.mrb[0].mxu0
        %v3691 = vadd.f32 0.0, %v3690
        %v3692 = vpop.f32.mrb[0].mxu0
        %3693 = vmatprep.mubr.bf16.mxu0 0
        %3694 = vmatmul.mubr.bf16.gmra.mrb[0].mxu0 %v3571
        %v3695 = vpop.f32.mrb[0].mxu0
        %v3696 = vadd.f32 0.0, %v3695
        %v3697 = vpop.f32.mrb[0].mxu0
        %v3698 = vpop.f32.mrb[0].mxu0
        %v3699 = vadd.f32 0.0, %v3698
        %v3700 = vpop.f32.mrb[0].mxu0
        %3701 = vmatprep.mubr.bf16.mxu0 0
        %3702 = vmatmul.mubr.bf16.gmra.mrb[0].mxu0 %v3572
        %v3703 = vpop.f32.mrb[0].mxu0
        %v3704 = vadd.f32 0.0, %v3703
        %v3705 = vpop.f32.mrb[0].mxu0
        %v3706 = vpop.f32.mrb[0].mxu0
        %v3707 = vadd.f32 0.0, %v3706
        %v3708 = vpop.f32.mrb[0].mxu0
        %3709 = vmatprep.mubr.bf16.mxu0 0
        %3710 = vmatmul.mubr.bf16.gmra.mrb[0].mxu0 %v3573
        %v3711 = vpop.f32.mrb[0].mxu0
        %v3712 = vadd.f32 0.0, %v3711
        %v3713 = vpop.f32.mrb[0].mxu0
        %v3714 = vpop.f32.mrb[0].mxu0
        %v3715 = vadd.f32 0.0, %v3714
        %v3716 = vpop.f32.mrb[0].mxu0
        %3717 = vmatprep.mubr.bf16.mxu0 0
        %3718 = vmatmul.mubr.bf16.gmra.mrb[0].mxu0 %v3574
        %v3719 = vpop.f32.mrb[0].mxu0
        %v3720 = vadd.f32 0.0, %v3719
        %v3721 = vpop.f32.mrb[0].mxu0
        %v3722 = vpop.f32.mrb[0].mxu0
        %v3723 = vadd.f32 0.0, %v3722
        %v3724 = vpop.f32.mrb[0].mxu0
        %3725 = vmatprep.mubr.bf16.mxu0 0
        %3726 = vmatmul.mubr.bf16.gmra.mrb[0].mxu0 %v3575
        %v3727 = vpop.f32.mrb[0].mxu0
        %v3728 = vadd.f32 0.0, %v3727
        %v3729 = vpop.f32.mrb[0].mxu0
        %v3730 = vpop.f32.mrb[0].mxu0
        %v3731 = vadd.f32 0.0, %v3730
        %v3732 = vpop.f32.mrb[0].mxu0
        %3733 = vmatprep.mubr.bf16.mxu0 0
        %3734 = vmatmul.mubr.bf16.gmra.mrb[0].mxu0 %v3576
        %v3735 = vpop.f32.mrb[0].mxu0
        %v3736 = vadd.f32 0.0, %v3735
        %v3737 = vpop.f32.mrb[0].mxu0
        %v3738 = vpop.f32.mrb[0].mxu0
        %v3739 = vadd.f32 0.0, %v3738
        %v3740 = vpop.f32.mrb[0].mxu0
        %3741 = vmatprep.mubr.bf16.mxu0 0
        %3742 = vmatmul.mubr.bf16.gmra.mrb[0].mxu0 %v3577
        %v3743 = vpop.f32.mrb[0].mxu0
        %v3744 = vadd.f32 0.0, %v3743
        %v3745 = vpop.f32.mrb[0].mxu0
        %v3746 = vpop.f32.mrb[0].mxu0
        %v3747 = vadd.f32 0.0, %v3746
        %v3748 = vpop.f32.mrb[0].mxu0
        %3749 = vmatprep.mubr.bf16.mxu0 0
        %3750 = vmatmul.mubr.bf16.gmra.mrb[0].mxu0 %v3578
        %v3751 = vpop.f32.mrb[0].mxu0
        %v3752 = vadd.f32 0.0, %v3751
        %v3753 = vpop.f32.mrb[0].mxu0
        %v3754 = vpop.f32.mrb[0].mxu0
        %v3755 = vadd.f32 0.0, %v3754
        %v3756 = vpop.f32.mrb[0].mxu0
        %3757 = vmatprep.mubr.bf16.mxu0 0
        %3758 = vmatmul.mubr.bf16.gmra.mrb[0].mxu0 %v3579
        %v3759 = vpop.f32.mrb[0].mxu0
        %v3760 = vadd.f32 0.0, %v3759
        %v3761 = vpop.f32.mrb[0].mxu0
        %v3762 = vpop.f32.mrb[0].mxu0
        %v3763 = vadd.f32 0.0, %v3762
        %v3764 = vpop.f32.mrb[0].mxu0
        %3765 = vmatprep.mubr.bf16.mxu0 0
        %3766 = vmatmul.mubr.bf16.gmra.mrb[0].mxu0 %v3580
        %v3767 = vpop.f32.mrb[0].mxu0
        %v3768 = vadd.f32 0.0, %v3767
        %v3769 = vpop.f32.mrb[0].mxu0
        %v3770 = vpop.f32.mrb[0].mxu0
        %v3771 = vadd.f32 0.0, %v3770
        %v3772 = vpop.f32.mrb[0].mxu0
        %3773 = vmatprep.mubr.bf16.mxu0 0
        %3774 = vmatmul.mubr.bf16.gmra.mrb[0].mxu0 %v3581
        %v3775 = vpop.f32.mrb[0].mxu0
        %v3776 = vadd.f32 0.0, %v3775
        %v3777 = vpop.f32.mrb[0].mxu0
        %v3778 = vpop.f32.mrb[0].mxu0
        %v3779 = vadd.f32 0.0, %v3778
        %v3780 = vpop.f32.mrb[0].mxu0
        %3781 = vmatprep.mubr.bf16.mxu0 0
        %3782 = vmatmul.mubr.bf16.gmra.mrb[0].mxu0 %v3582
        %v3783 = vpop.f32.mrb[0].mxu0
        %v3784 = vadd.f32 0.0, %v3783
        %v3785 = vpop.f32.mrb[0].mxu0
        %v3786 = vpop.f32.mrb[0].mxu0
        %v3787 = vadd.f32 0.0, %v3786
        %v3788 = vpop.f32.mrb[0].mxu0
        %3789 = vmatprep.mubr.bf16.mxu0 0
        %3790 = vmatmul.mubr.bf16.gmra.mrb[0].mxu0 %v3583
        %v3791 = vpop.f32.mrb[0].mxu0
        %v3792 = vadd.f32 0.0, %v3791
        %v3793 = vpop.f32.mrb[0].mxu0
        %v3794 = vpop.f32.mrb[0].mxu0
        %v3795 = vadd.f32 0.0, %v3794
        %v3796 = vpop.f32.mrb[0].mxu0
        %3797 = vmatprep.mubr.bf16.mxu0 0
        %3798 = vmatmul.mubr.bf16.gmra.mrb[0].mxu0 %v3584
        %v3799 = vpop.f32.mrb[0].mxu0
        %v3800 = vadd.f32 0.0, %v3799
        %v3801 = vpop.f32.mrb[0].mxu0
        %v3802 = vpop.f32.mrb[0].mxu0
        %v3803 = vadd.f32 0.0, %v3802
        %v3804 = vpop.f32.mrb[0].mxu0
        %3805 = vmatprep.mubr.bf16.mxu0 0
        %3806 = vmatmul.mubr.bf16.gmra.mrb[0].mxu0 %v3585
        %v3807 = vpop.f32.mrb[0].mxu0
        %v3808 = vadd.f32 0.0, %v3807
        %v3809 = vpop.f32.mrb[0].mxu0
        %v3810 = vpop.f32.mrb[0].mxu0
        %v3811 = vadd.f32 0.0, %v3810
        %v3812 = vpop.f32.mrb[0].mxu0
        %3813 = vmatprep.mubr.bf16.mxu0 0
        %3814 = vmatmul.mubr.bf16.gmra.mrb[0].mxu0 %v3586
        %v3815 = vpop.f32.mrb[0].mxu0
        %v3816 = vadd.f32 0.0, %v3815
        %v3817 = vpop.f32.mrb[0].mxu0
        %v3818 = vpop.f32.mrb[0].mxu0
        %v3819 = vadd.f32 0.0, %v3818
        %v3820 = vpop.f32.mrb[0].mxu0
        %3821 = vmatprep.mubr.bf16.mxu0 0
        %3822 = vmatmul.mubr.bf16.gmra.mrb[0].mxu0 %v3587
        %v3823 = vpop.f32.mrb[0].mxu0
        %v3824 = vadd.f32 0.0, %v3823
        %v3825 = vpop.f32.mrb[0].mxu0
        %v3826 = vpop.f32.mrb[0].mxu0
        %v3827 = vadd.f32 0.0, %v3826
        %v3828 = vpop.f32.mrb[0].mxu0
        %3829 = vdwg.mxu0
        %v3830 = vadd.f32 %v3498, %v3688
        %v3831 = vadd.f32 %v3499, %v3691
        %v3832 = vadd.f32 %v3500, %v3696
        %v3833 = vadd.f32 %v3501, %v3699
        %v3834 = vadd.f32 %v3502, %v3704
        %v3835 = vadd.f32 %v3503, %v3707
        %v3836 = vadd.f32 %v3504, %v3712
        %v3837 = vadd.f32 %v3505, %v3715
        %v3838 = vadd.f32 %v3506, %v3720
        %v3839 = vadd.f32 %v3507, %v3723
        %v3840 = vadd.f32 %v3508, %v3728
        %v3841 = vadd.f32 %v3509, %v3731
        %v3842 = vadd.f32 %v3510, %v3736
        %v3843 = vadd.f32 %v3511, %v3739
        %v3844 = vadd.f32 %v3512, %v3744
        %v3845 = vadd.f32 %v3513, %v3747
        %v3846 = vadd.f32 %v3514, %v3752
        %v3847 = vadd.f32 %v3515, %v3755
        %v3848 = vadd.f32 %v3516, %v3760
        %v3849 = vadd.f32 %v3517, %v3763
        %v3850 = vadd.f32 %v3518, %v3768
        %v3851 = vadd.f32 %v3519, %v3771
        %v3852 = vadd.f32 %v3520, %v3776
        %v3853 = vadd.f32 %v3521, %v3779
        %v3854 = vadd.f32 %v3522, %v3784
        %v3855 = vadd.f32 %v3523, %v3787
        %v3856 = vadd.f32 %v3524, %v3792
        %v3857 = vadd.f32 %v3525, %v3795
        %v3858 = vadd.f32 %v3526, %v3800
        %v3859 = vadd.f32 %v3527, %v3803
        %v3860 = vadd.f32 %v3528, %v3808
        %v3861 = vadd.f32 %v3529, %v3811
        %v3862 = vadd.f32 %v3530, %v3816
        %v3863 = vadd.f32 %v3531, %v3819
        %v3864 = vadd.f32 %v3532, %v3824
        %v3865 = vadd.f32 %v3533, %v3827
        %v3866 = vpack.c.bf16 %v3831, %v3830
        %v3867 = vpack.c.bf16 %v3833, %v3832
        %v3868 = vpack.c.bf16 %v3835, %v3834
        %v3869 = vpack.c.bf16 %v3837, %v3836
        %v3870 = vpack.c.bf16 %v3839, %v3838
        %v3871 = vpack.c.bf16 %v3841, %v3840
        %v3872 = vpack.c.bf16 %v3843, %v3842
        %v3873 = vpack.c.bf16 %v3845, %v3844
        %v3874 = vpack.c.bf16 %v3847, %v3846
        %v3875 = vpack.c.bf16 %v3849, %v3848
        %v3876 = vpack.c.bf16 %v3851, %v3850
        %v3877 = vpack.c.bf16 %v3853, %v3852
        %v3878 = vpack.c.bf16 %v3855, %v3854
        %v3879 = vpack.c.bf16 %v3857, %v3856
        %v3880 = vpack.c.bf16 %v3859, %v3858
        %v3881 = vpack.c.bf16 %v3861, %v3860
        %v3882 = vpack.c.bf16 %v3863, %v3862
        %v3883 = vpack.c.bf16 %v3865, %v3864
        %v3902 = vunpack.c.l.b16 %v3866
        %v3903 = vunpack.c.h.b16 %v3866
        %v3904 = vunpack.c.l.b16 %v3867
        %v3905 = vunpack.c.h.b16 %v3867
        %v3906 = vunpack.c.l.b16 %v3868
        %v3907 = vunpack.c.h.b16 %v3868
        %v3908 = vunpack.c.l.b16 %v3869
        %v3909 = vunpack.c.h.b16 %v3869
        %v3910 = vunpack.c.l.b16 %v3870
        %v3911 = vunpack.c.h.b16 %v3870
        %v3912 = vunpack.c.l.b16 %v3871
        %v3913 = vunpack.c.h.b16 %v3871
        %v3914 = vunpack.c.l.b16 %v3872
        %v3915 = vunpack.c.h.b16 %v3872
        %v3916 = vunpack.c.l.b16 %v3873
        %v3917 = vunpack.c.h.b16 %v3873
        %v3918 = vunpack.c.l.b16 %v3874
        %v3919 = vunpack.c.h.b16 %v3874
        %v3920 = vunpack.c.l.b16 %v3875
        %v3921 = vunpack.c.h.b16 %v3875
        %v3922 = vunpack.c.l.b16 %v3876
        %v3923 = vunpack.c.h.b16 %v3876
        %v3924 = vunpack.c.l.b16 %v3877
        %v3925 = vunpack.c.h.b16 %v3877
        %v3926 = vunpack.c.l.b16 %v3878
        %v3927 = vunpack.c.h.b16 %v3878
        %v3928 = vunpack.c.l.b16 %v3879
        %v3929 = vunpack.c.h.b16 %v3879
        %v3930 = vunpack.c.l.b16 %v3880
        %v3931 = vunpack.c.h.b16 %v3880
        %v3932 = vunpack.c.l.b16 %v3881
        %v3933 = vunpack.c.h.b16 %v3881
        %v3934 = vunpack.c.l.b16 %v3882
        %v3935 = vunpack.c.h.b16 %v3882
        %v3936 = vunpack.c.l.b16 %v3883
        %v3937 = vunpack.c.h.b16 %v3883
        %v3938 = vpack.c.b16 %v3902, %v3902
        %v3939 = vpack.c.b16 %v3903, %v3903
        %v3940 = vpack.c.b16 %v3904, %v3904
        %v3941 = vpack.c.b16 %v3905, %v3905
        %v3942 = vpack.c.b16 %v3906, %v3906
        %v3943 = vpack.c.b16 %v3907, %v3907
        %v3944 = vpack.c.b16 %v3908, %v3908
        %v3945 = vpack.c.b16 %v3909, %v3909
        %v3946 = vpack.c.b16 %v3910, %v3910
        %v3947 = vpack.c.b16 %v3911, %v3911
        %v3948 = vpack.c.b16 %v3912, %v3912
        %v3949 = vpack.c.b16 %v3913, %v3913
        %v3950 = vpack.c.b16 %v3914, %v3914
        %v3951 = vpack.c.b16 %v3915, %v3915
        %v3952 = vpack.c.b16 %v3916, %v3916
        %v3953 = vpack.c.b16 %v3917, %v3917
        %v3954 = vpack.c.b16 %v3918, %v3918
        %v3955 = vpack.c.b16 %v3919, %v3919
        %v3956 = vpack.c.b16 %v3920, %v3920
        %v3957 = vpack.c.b16 %v3921, %v3921
        %v3958 = vpack.c.b16 %v3922, %v3922
        %v3959 = vpack.c.b16 %v3923, %v3923
        %v3960 = vpack.c.b16 %v3924, %v3924
        %v3961 = vpack.c.b16 %v3925, %v3925
        %v3962 = vpack.c.b16 %v3926, %v3926
        %v3963 = vpack.c.b16 %v3927, %v3927
        %v3964 = vpack.c.b16 %v3928, %v3928
        %v3965 = vpack.c.b16 %v3929, %v3929
        %v3966 = vpack.c.b16 %v3930, %v3930
        %v3967 = vpack.c.b16 %v3931, %v3931
        %v3968 = vpack.c.b16 %v3932, %v3932
        %v3969 = vpack.c.b16 %v3933, %v3933
        %v3970 = vpack.c.b16 %v3934, %v3934
        %v3971 = vpack.c.b16 %v3935, %v3935
        %v3972 = vpack.c.b16 %v3936, %v3936
        %v3973 = vpack.c.b16 %v3937, %v3937
        %4010 = vst [vmem:[%s369] sm:$0xf] %v3938
        %4011 = vst [vmem:[%s369 + $0x4] sm:$0xf] %v3939
        %4012 = vst [vmem:[%s369 + $0x8] sm:$0xf] %v3940
        %4013 = vst [vmem:[%s369 + $0xc] sm:$0xf] %v3941
        %4014 = vst [vmem:[%s369 + $0x10] sm:$0xf] %v3942
        %4015 = vst [vmem:[%s369 + $0x14] sm:$0xf] %v3943
        %4016 = vst [vmem:[%s369 + $0x18] sm:$0xf] %v3944
        %4017 = vst [vmem:[%s369 + $0x1c] sm:$0xf] %v3945
        %4018 = vst [vmem:[%s369 + $0x20] sm:$0xf] %v3946
        %4019 = vst [vmem:[%s369 + $0x24] sm:$0xf] %v3947
        %4020 = vst [vmem:[%s369 + $0x28] sm:$0xf] %v3948
        %4021 = vst [vmem:[%s369 + $0x2c] sm:$0xf] %v3949
        %4022 = vst [vmem:[%s369 + $0x30] sm:$0xf] %v3950
        %4023 = vst [vmem:[%s369 + $0x34] sm:$0xf] %v3951
        %4024 = vst [vmem:[%s369 + $0x38] sm:$0xf] %v3952
        %4025 = vst [vmem:[%s369 + $0x3c] sm:$0xf] %v3953
        %4026 = vst [vmem:[%s369 + $0x40] sm:$0xf] %v3954
        %4027 = vst [vmem:[%s369 + $0x44] sm:$0xf] %v3955
        %4028 = vst [vmem:[%s369 + $0x48] sm:$0xf] %v3956
        %4029 = vst [vmem:[%s369 + $0x4c] sm:$0xf] %v3957
        %4030 = vst [vmem:[%s369 + $0x50] sm:$0xf] %v3958
        %4031 = vst [vmem:[%s369 + $0x54] sm:$0xf] %v3959
        %4032 = vst [vmem:[%s369 + $0x58] sm:$0xf] %v3960
        %4033 = vst [vmem:[%s369 + $0x5c] sm:$0xf] %v3961
        %4034 = vst [vmem:[%s369 + $0x60] sm:$0xf] %v3962
        %4035 = vst [vmem:[%s369 + $0x64] sm:$0xf] %v3963
        %4036 = vst [vmem:[%s369 + $0x68] sm:$0xf] %v3964
        %4037 = vst [vmem:[%s369 + $0x6c] sm:$0xf] %v3965
        %4038 = vst [vmem:[%s369 + $0x70] sm:$0xf] %v3966
        %4039 = vst [vmem:[%s369 + $0x74] sm:$0xf] %v3967
        %4040 = vst [vmem:[%s369 + $0x78] sm:$0xf] %v3968
        %4041 = vst [vmem:[%s369 + $0x7c] sm:$0xf] %v3969
        %4042 = vst [vmem:[%s369 + $0x80] sm:$0xf] %v3970
        %4043 = vst [vmem:[%s369 + $0x84] sm:$0xf] %v3971
        %4044 = vst [vmem:[%s369 + $0x88] sm:$0xf] %v3972
        %4045 = vst [vmem:[%s369 + $0x8c] sm:$0xf] %v3973
        %v4046 = vld [vmem:[#allocation12] sm:$0xff]
        %v4047 = vld [vmem:[#allocation12 + $0x8] sm:$0xff]
        %v4048 = vld [vmem:[#allocation12 + $0x10] sm:$0xff]
        %v4049 = vld [vmem:[#allocation12 + $0x18] sm:$0xff]
        %v4050 = vld [vmem:[#allocation12 + $0x20] sm:$0xff]
        %v4051 = vld [vmem:[#allocation12 + $0x28] sm:$0xff]
        %v4052 = vld [vmem:[#allocation12 + $0x30] sm:$0xff]
        %v4053 = vld [vmem:[#allocation12 + $0x38] sm:$0xff]
        %v4054 = vld [vmem:[#allocation12 + $0x40] sm:$0xff]
        %v4055 = vld [vmem:[#allocation12 + $0x48] sm:$0xff]
        %v4056 = vld [vmem:[#allocation12 + $0x50] sm:$0xff]
        %v4057 = vld [vmem:[#allocation12 + $0x58] sm:$0xff]
        %v4058 = vld [vmem:[#allocation12 + $0x60] sm:$0xff]
        %v4059 = vld [vmem:[#allocation12 + $0x68] sm:$0xff]
        %v4060 = vld [vmem:[#allocation12 + $0x70] sm:$0xff]
        %v4061 = vld [vmem:[#allocation12 + $0x78] sm:$0xff]
        %v4062 = vld [vmem:[#allocation12 + $0x80] sm:$0xff]
        %v4063 = vld [vmem:[#allocation12 + $0x88] sm:$0xff]
        %v4064 = vld [vmem:[#allocation12 + $0x90] sm:$0xff]
        %v4065 = vld [vmem:[#allocation12 + $0x98] sm:$0xff]
        %v4066 = vld [vmem:[#allocation12 + $0xa0] sm:$0xff]
        %v4067 = vld [vmem:[#allocation12 + $0xa8] sm:$0xff]
        %v4068 = vld [vmem:[#allocation12 + $0xb0] sm:$0xff]
        %v4069 = vld [vmem:[#allocation12 + $0xb8] sm:$0xff]
        %v4070 = vld [vmem:[#allocation12 + $0xc0] sm:$0xff]
        %v4071 = vld [vmem:[#allocation12 + $0xc8] sm:$0xff]
        %v4072 = vld [vmem:[#allocation12 + $0xd0] sm:$0xff]
        %v4073 = vld [vmem:[#allocation12 + $0xd8] sm:$0xff]
        %v4074 = vld [vmem:[#allocation12 + $0xe0] sm:$0xff]
        %v4075 = vld [vmem:[#allocation12 + $0xe8] sm:$0xff]
        %v4076 = vld [vmem:[#allocation12 + $0xf0] sm:$0xff]
        %v4077 = vld [vmem:[#allocation12 + $0xf8] sm:$0xff]
        %v4078 = vld [vmem:[#allocation12 + $0x100] sm:$0xff]
        %v4079 = vld [vmem:[#allocation12 + $0x108] sm:$0xff]
        %v4080 = vld [vmem:[#allocation12 + $0x110] sm:$0xff]
        %v4081 = vld [vmem:[#allocation12 + $0x118] sm:$0xff]
        %4083 = vset.pattern.permute.xlu0 0
        %4084 = vperm.xlu0 %4083, %v4046
        %v4085 = vpop.permute.xlu0 %4084
        %4088 = vset.pattern.permute.xlu0 0
        %4089 = vperm.xlu0 %4088, %v4047
        %v4090 = vpop.permute.xlu0 %4089
        %4093 = vset.pattern.permute.xlu0 0
        %4094 = vperm.xlu0 %4093, %v4048
        %v4095 = vpop.permute.xlu0 %4094
        %4098 = vset.pattern.permute.xlu0 0
        %4099 = vperm.xlu0 %4098, %v4049
        %v4100 = vpop.permute.xlu0 %4099
        %4103 = vset.pattern.permute.xlu0 0
        %4104 = vperm.xlu0 %4103, %v4050
        %v4105 = vpop.permute.xlu0 %4104
        %4108 = vset.pattern.permute.xlu0 0
        %4109 = vperm.xlu0 %4108, %v4051
        %v4110 = vpop.permute.xlu0 %4109
        %4113 = vset.pattern.permute.xlu0 0
        %4114 = vperm.xlu0 %4113, %v4052
        %v4115 = vpop.permute.xlu0 %4114
        %4118 = vset.pattern.permute.xlu0 0
        %4119 = vperm.xlu0 %4118, %v4053
        %v4120 = vpop.permute.xlu0 %4119
        %4123 = vset.pattern.permute.xlu0 0
        %4124 = vperm.xlu0 %4123, %v4054
        %v4125 = vpop.permute.xlu0 %4124
        %4128 = vset.pattern.permute.xlu0 0
        %4129 = vperm.xlu0 %4128, %v4055
        %v4130 = vpop.permute.xlu0 %4129
        %4133 = vset.pattern.permute.xlu0 0
        %4134 = vperm.xlu0 %4133, %v4056
        %v4135 = vpop.permute.xlu0 %4134
        %4138 = vset.pattern.permute.xlu0 0
        %4139 = vperm.xlu0 %4138, %v4057
        %v4140 = vpop.permute.xlu0 %4139
        %4143 = vset.pattern.permute.xlu0 0
        %4144 = vperm.xlu0 %4143, %v4058
        %v4145 = vpop.permute.xlu0 %4144
        %4148 = vset.pattern.permute.xlu0 0
        %4149 = vperm.xlu0 %4148, %v4059
        %v4150 = vpop.permute.xlu0 %4149
        %4153 = vset.pattern.permute.xlu0 0
        %4154 = vperm.xlu0 %4153, %v4060
        %v4155 = vpop.permute.xlu0 %4154
        %4158 = vset.pattern.permute.xlu0 0
        %4159 = vperm.xlu0 %4158, %v4061
        %v4160 = vpop.permute.xlu0 %4159
        %4163 = vset.pattern.permute.xlu0 0
        %4164 = vperm.xlu0 %4163, %v4062
        %v4165 = vpop.permute.xlu0 %4164
        %4168 = vset.pattern.permute.xlu0 0
        %4169 = vperm.xlu0 %4168, %v4063
        %v4170 = vpop.permute.xlu0 %4169
        %4173 = vset.pattern.permute.xlu0 0
        %4174 = vperm.xlu0 %4173, %v4064
        %v4175 = vpop.permute.xlu0 %4174
        %4178 = vset.pattern.permute.xlu0 0
        %4179 = vperm.xlu0 %4178, %v4065
        %v4180 = vpop.permute.xlu0 %4179
        %4183 = vset.pattern.permute.xlu0 0
        %4184 = vperm.xlu0 %4183, %v4066
        %v4185 = vpop.permute.xlu0 %4184
        %4188 = vset.pattern.permute.xlu0 0
        %4189 = vperm.xlu0 %4188, %v4067
        %v4190 = vpop.permute.xlu0 %4189
        %4193 = vset.pattern.permute.xlu0 0
        %4194 = vperm.xlu0 %4193, %v4068
        %v4195 = vpop.permute.xlu0 %4194
        %4198 = vset.pattern.permute.xlu0 0
        %4199 = vperm.xlu0 %4198, %v4069
        %v4200 = vpop.permute.xlu0 %4199
        %4203 = vset.pattern.permute.xlu0 0
        %4204 = vperm.xlu0 %4203, %v4070
        %v4205 = vpop.permute.xlu0 %4204
        %4208 = vset.pattern.permute.xlu0 0
        %4209 = vperm.xlu0 %4208, %v4071
        %v4210 = vpop.permute.xlu0 %4209
        %4213 = vset.pattern.permute.xlu0 0
        %4214 = vperm.xlu0 %4213, %v4072
        %v4215 = vpop.permute.xlu0 %4214
        %4218 = vset.pattern.permute.xlu0 0
        %4219 = vperm.xlu0 %4218, %v4073
        %v4220 = vpop.permute.xlu0 %4219
        %4223 = vset.pattern.permute.xlu0 0
        %4224 = vperm.xlu0 %4223, %v4074
        %v4225 = vpop.permute.xlu0 %4224
        %4228 = vset.pattern.permute.xlu0 0
        %4229 = vperm.xlu0 %4228, %v4075
        %v4230 = vpop.permute.xlu0 %4229
        %4233 = vset.pattern.permute.xlu0 0
        %4234 = vperm.xlu0 %4233, %v4076
        %v4235 = vpop.permute.xlu0 %4234
        %4238 = vset.pattern.permute.xlu0 0
        %4239 = vperm.xlu0 %4238, %v4077
        %v4240 = vpop.permute.xlu0 %4239
        %4243 = vset.pattern.permute.xlu0 0
        %4244 = vperm.xlu0 %4243, %v4078
        %v4245 = vpop.permute.xlu0 %4244
        %4248 = vset.pattern.permute.xlu0 0
        %4249 = vperm.xlu0 %4248, %v4079
        %v4250 = vpop.permute.xlu0 %4249
        %4253 = vset.pattern.permute.xlu0 0
        %4254 = vperm.xlu0 %4253, %v4080
        %v4255 = vpop.permute.xlu0 %4254
        %4258 = vset.pattern.permute.xlu0 0
        %4259 = vperm.xlu0 %4258, %v4081
        %v4260 = vpop.permute.xlu0 %4259
        %v4262 = vmul.f32 %v3830, %v4085
        %v4263 = vmul.f32 %v3831, %v4090
        %v4264 = vmul.f32 %v3832, %v4095
        %v4265 = vmul.f32 %v3833, %v4100
        %v4266 = vmul.f32 %v3834, %v4105
        %v4267 = vmul.f32 %v3835, %v4110
        %v4268 = vmul.f32 %v3836, %v4115
        %v4269 = vmul.f32 %v3837, %v4120
        %v4270 = vmul.f32 %v3838, %v4125
        %v4271 = vmul.f32 %v3839, %v4130
        %v4272 = vmul.f32 %v3840, %v4135
        %v4273 = vmul.f32 %v3841, %v4140
        %v4274 = vmul.f32 %v3842, %v4145
        %v4275 = vmul.f32 %v3843, %v4150
        %v4276 = vmul.f32 %v3844, %v4155
        %v4277 = vmul.f32 %v3845, %v4160
        %v4278 = vmul.f32 %v3846, %v4165
        %v4279 = vmul.f32 %v3847, %v4170
        %v4280 = vmul.f32 %v3848, %v4175
        %v4281 = vmul.f32 %v3849, %v4180
        %v4282 = vmul.f32 %v3850, %v4185
        %v4283 = vmul.f32 %v3851, %v4190
        %v4284 = vmul.f32 %v3852, %v4195
        %v4285 = vmul.f32 %v3853, %v4200
        %v4286 = vmul.f32 %v3854, %v4205
        %v4287 = vmul.f32 %v3855, %v4210
        %v4288 = vmul.f32 %v3856, %v4215
        %v4289 = vmul.f32 %v3857, %v4220
        %v4290 = vmul.f32 %v3858, %v4225
        %v4291 = vmul.f32 %v3859, %v4230
        %v4292 = vmul.f32 %v3860, %v4235
        %v4293 = vmul.f32 %v3861, %v4240
        %v4294 = vmul.f32 %v3862, %v4245
        %v4295 = vmul.f32 %v3863, %v4250
        %v4296 = vmul.f32 %v3864, %v4255
        %v4297 = vmul.f32 %v3865, %v4260
        %v4298 = vadd.f32 %v4262, %v4263
        %v4299 = vadd.f32 %v4298, %v4264
        %v4300 = vadd.f32 %v4299, %v4265
        %v4301 = vadd.f32 %v4300, %v4266
        %v4302 = vadd.f32 %v4301, %v4267
        %v4303 = vadd.f32 %v4302, %v4268
        %v4304 = vadd.f32 %v4303, %v4269
        %v4305 = vadd.f32 %v4304, %v4270
        %v4306 = vadd.f32 %v4305, %v4271
        %v4307 = vadd.f32 %v4306, %v4272
        %v4308 = vadd.f32 %v4307, %v4273
        %v4309 = vadd.f32 %v4308, %v4274
        %v4310 = vadd.f32 %v4309, %v4275
        %v4311 = vadd.f32 %v4310, %v4276
        %v4312 = vadd.f32 %v4311, %v4277
        %v4313 = vadd.f32 %v4312, %v4278
        %v4314 = vadd.f32 %v4313, %v4279
        %v4315 = vadd.f32 %v4314, %v4280
        %v4316 = vadd.f32 %v4315, %v4281
        %v4317 = vadd.f32 %v4316, %v4282
        %v4318 = vadd.f32 %v4317, %v4283
        %v4319 = vadd.f32 %v4318, %v4284
        %v4320 = vadd.f32 %v4319, %v4285
        %v4321 = vadd.f32 %v4320, %v4286
        %v4322 = vadd.f32 %v4321, %v4287
        %v4323 = vadd.f32 %v4322, %v4288
        %v4324 = vadd.f32 %v4323, %v4289
        %v4325 = vadd.f32 %v4324, %v4290
        %v4326 = vadd.f32 %v4325, %v4291
        %v4327 = vadd.f32 %v4326, %v4292
        %v4328 = vadd.f32 %v4327, %v4293
        %v4329 = vadd.f32 %v4328, %v4294
        %v4330 = vadd.f32 %v4329, %v4295
        %v4331 = vadd.f32 %v4330, %v4296
        %v4332 = vadd.f32 %v4331, %v4297
        %v4333 = vrot.slane %v4332, 4
        %v4334 = vadd.f32 %v4332, %v4333
        %v4335 = vrot.slane %v4334, 2
        %v4336 = vadd.f32 %v4334, %v4335
        %v4337 = vrot.slane %v4336, 1
        %v4338 = vadd.f32 %v4336, %v4337
        %4339 = vst [vmem:[%s376] sm:$0x1] %v4338
        %v4340 = vmul.f32 %v4262, %v4262
        %v4341 = vmul.f32 %v4263, %v4263
        %v4342 = vmul.f32 %v4264, %v4264
        %v4343 = vmul.f32 %v4265, %v4265
        %v4344 = vmul.f32 %v4266, %v4266
        %v4345 = vmul.f32 %v4267, %v4267
        %v4346 = vmul.f32 %v4268, %v4268
        %v4347 = vmul.f32 %v4269, %v4269
        %v4348 = vmul.f32 %v4270, %v4270
        %v4349 = vmul.f32 %v4271, %v4271
        %v4350 = vmul.f32 %v4272, %v4272
        %v4351 = vmul.f32 %v4273, %v4273
        %v4352 = vmul.f32 %v4274, %v4274
        %v4353 = vmul.f32 %v4275, %v4275
        %v4354 = vmul.f32 %v4276, %v4276
        %v4355 = vmul.f32 %v4277, %v4277
        %v4356 = vmul.f32 %v4278, %v4278
        %v4357 = vmul.f32 %v4279, %v4279
        %v4358 = vmul.f32 %v4280, %v4280
        %v4359 = vmul.f32 %v4281, %v4281
        %v4360 = vmul.f32 %v4282, %v4282
        %v4361 = vmul.f32 %v4283, %v4283
        %v4362 = vmul.f32 %v4284, %v4284
        %v4363 = vmul.f32 %v4285, %v4285
        %v4364 = vmul.f32 %v4286, %v4286
        %v4365 = vmul.f32 %v4287, %v4287
        %v4366 = vmul.f32 %v4288, %v4288
        %v4367 = vmul.f32 %v4289, %v4289
        %v4368 = vmul.f32 %v4290, %v4290
        %v4369 = vmul.f32 %v4291, %v4291
        %v4370 = vmul.f32 %v4292, %v4292
        %v4371 = vmul.f32 %v4293, %v4293
        %v4372 = vmul.f32 %v4294, %v4294
        %v4373 = vmul.f32 %v4295, %v4295
        %v4374 = vmul.f32 %v4296, %v4296
        %v4375 = vmul.f32 %v4297, %v4297
        %v4376 = vadd.f32 %v4340, %v4341
        %v4377 = vadd.f32 %v4376, %v4342
        %v4378 = vadd.f32 %v4377, %v4343
        %v4379 = vadd.f32 %v4378, %v4344
        %v4380 = vadd.f32 %v4379, %v4345
        %v4381 = vadd.f32 %v4380, %v4346
        %v4382 = vadd.f32 %v4381, %v4347
        %v4383 = vadd.f32 %v4382, %v4348
        %v4384 = vadd.f32 %v4383, %v4349
        %v4385 = vadd.f32 %v4384, %v4350
        %v4386 = vadd.f32 %v4385, %v4351
        %v4387 = vadd.f32 %v4386, %v4352
        %v4388 = vadd.f32 %v4387, %v4353
        %v4389 = vadd.f32 %v4388, %v4354
        %v4390 = vadd.f32 %v4389, %v4355
        %v4391 = vadd.f32 %v4390, %v4356
        %v4392 = vadd.f32 %v4391, %v4357
        %v4393 = vadd.f32 %v4392, %v4358
        %v4394 = vadd.f32 %v4393, %v4359
        %v4395 = vadd.f32 %v4394, %v4360
        %v4396 = vadd.f32 %v4395, %v4361
        %v4397 = vadd.f32 %v4396, %v4362
        %v4398 = vadd.f32 %v4397, %v4363
        %v4399 = vadd.f32 %v4398, %v4364
        %v4400 = vadd.f32 %v4399, %v4365
        %v4401 = vadd.f32 %v4400, %v4366
        %v4402 = vadd.f32 %v4401, %v4367
        %v4403 = vadd.f32 %v4402, %v4368
        %v4404 = vadd.f32 %v4403, %v4369
        %v4405 = vadd.f32 %v4404, %v4370
        %v4406 = vadd.f32 %v4405, %v4371
        %v4407 = vadd.f32 %v4406, %v4372
        %v4408 = vadd.f32 %v4407, %v4373
        %v4409 = vadd.f32 %v4408, %v4374
        %v4410 = vadd.f32 %v4409, %v4375
        %v4411 = vrot.slane %v4410, 4
        %v4412 = vadd.f32 %v4410, %v4411
        %v4413 = vrot.slane %v4412, 2
        %v4414 = vadd.f32 %v4412, %v4413
        %v4415 = vrot.slane %v4414, 1
        %v4416 = vadd.f32 %v4414, %v4415
        %4417 = vst [vmem:[%s376 + $0x1] sm:$0x1] %v4416
        %s4418 = sand.u32 %s170, 1
        %s4419 = scalar_lea.sflag [#allocation5], %s4418
        %s4420 = sand.u32 %s170, 1
        %s4421 = smul.addr %s4420, 144
        %s4422 = scalar_lea.vmem [#allocation14], %s4421
        %s4423 = sand.u32 %s196, 1
        %s4424 = scalar_lea.sflag [#allocation16], %s4423
        %s4425 = sand.u32 %s196, 1
        %s4426 = smul.addr %s4425, 2
        %s4427 = scalar_lea.vmem [#allocation15], %s4426
        // Predicated region
        $region69: #{bottleneck_with_batchnorm.5} parent=43 // pred_check
          %p4428 = pneg %p180
        $region70: #{bottleneck_with_batchnorm.5} parent=43 // pred_check_branch
          %4430 = sbr.rel (%p4428) target = $region72
        $region71: #{bottleneck_with_batchnorm.5} parent=43 // pred_region
          %s4432 = ssub.s32 2304, 2304
          %4433 = vsyncadd %s4419, %s4432
          %s4434 = smul.addr %s31, 36
          %s4435 = smul.addr %s4434, 64
          %s4436 = scalar_lea.hbm %s6, %s4435
          %s4437 = sshll.u32 %s4422, 4
          %s4438 = int_to_ptr.vmem [resolvable:$true] %s4437
          %4443 = dma.vmem_to_hbm [thread:$0]  %s4438, 2304, %s4436, %s4419, 64, 64, 4
        $region72: #{bottleneck_with_batchnorm.5} parent=43 // pred_fallthru
          _
        // Predicated region
        $region73: #{bottleneck_with_batchnorm.5} parent=43 // pred_check
          %p4444 = pneg %p206
        $region74: #{bottleneck_with_batchnorm.5} parent=43 // pred_check_branch
          %4446 = sbr.rel (%p4444) target = $region76
        $region75: #{bottleneck_with_batchnorm.5} parent=43 // pred_region
          %s4448 = ssub.s32 32, 32
          %4449 = vsyncadd %s4424, %s4448
          %s4450 = smul.addr %s31, 32
          %s4451 = scalar_lea.hbm %s7, %s4450
          %s4453 = sshll.u32 %s4427, 4
          %s4454 = int_to_ptr.vmem [resolvable:$true] %s4453
          %4456 = dma.vmem_to_hbm [thread:$0]  %s4454, 32, %s4451, %s4424
        $region76: #{bottleneck_with_batchnorm.5} parent=43 // pred_fallthru
          _
      $region44: #{bottleneck_with_batchnorm.5} parent=5 // pred_fallthru
        _
      %p4457 = scmp.le.s32.totalorder 2, %s26
      // Predicated region
      $region77: #{bottleneck_with_batchnorm.5} parent=5 // pred_check
        %p4458 = pneg %p4457
      $region78: #{bottleneck_with_batchnorm.5} parent=5 // pred_check_branch
        %4460 = sbr.rel (%p4458) target = $region80
      $region79: #{bottleneck_with_batchnorm.5} parent=5 // pred_region
        %s4461 = ssub.s32 %s26, 2
        // Predicated region
        $region81: #{bottleneck_with_batchnorm.5} parent=79 // pred_check
          %p4462 = pneg %p186
        $region82: #{bottleneck_with_batchnorm.5} parent=79 // pred_check_branch
          %4464 = sbr.rel (%p4462) target = $region84
        $region83: #{bottleneck_with_batchnorm.5} parent=79 // pred_region
          %s4465 = sand.u32 %s171, 1
          %s4466 = scalar_lea.sflag [#allocation5], %s4465
          %s4467 = sand.u32 %s171, 1
          %s4468 = smul.addr %s4467, 144
          %s4469 = scalar_lea.vmem [#allocation14], %s4468
          %4470 = dma.done %s4466, 2304
        $region84: #{bottleneck_with_batchnorm.5} parent=79 // pred_fallthru
          _
        // Predicated region
        $region85: #{bottleneck_with_batchnorm.5} parent=79 // pred_check
          %p4471 = pneg %p212
        $region86: #{bottleneck_with_batchnorm.5} parent=79 // pred_check_branch
          %4473 = sbr.rel (%p4471) target = $region88
        $region87: #{bottleneck_with_batchnorm.5} parent=79 // pred_region
          %s4474 = sand.u32 %s197, 1
          %s4475 = scalar_lea.sflag [#allocation16], %s4474
          %s4476 = sand.u32 %s197, 1
          %s4477 = smul.addr %s4476, 2
          %s4478 = scalar_lea.vmem [#allocation15], %s4477
          %4479 = dma.done %s4475, 32
        $region88: #{bottleneck_with_batchnorm.5} parent=79 // pred_fallthru
          _
      $region80: #{bottleneck_with_batchnorm.5} parent=5 // pred_fallthru
        _
    $region6: #{bottleneck_with_batchnorm.5} parent=1 // loop_footer
      %s30 = sadd.s32 1, %s26
    $region7: #{bottleneck_with_batchnorm.5} parent=1 // loop_footer_branch
      %25 = sbr.rel target = $region3
    $region8: #{bottleneck_with_batchnorm.5} parent=1 // loop_exit
      _
    %4480 = vsyncpa [#allocation4], 1
    %s4481 = scalar_lea.sflag [#allocation4], 1
    %4482 = vsyncpa %s4481, 1
    %4483 = vsyncpa [#allocation7], 1
    %4484 = vsyncpa [#allocation10], 1
    %4485 = vsyncpa [#allocation13], 1
    %4486 = vsyncpa [#allocation5], 1
    %s4487 = scalar_lea.sflag [#allocation5], 1
    %4488 = vsyncpa %s4487, 1
    %4489 = vsyncpa [#allocation16], 1
    %s4490 = scalar_lea.sflag [#allocation16], 1
    %4491 = vsyncpa %s4490, 1

// kernel: bottleneck_with_batchnorm.6
$region0: #{bottleneck_with_batchnorm.6}
  #allocation0 [shape = 'u32[]', space=smem, size = 0x4, offset = 0x4, fixed_abs, tag = 'smem constant byte address 0x4 - core index']
  #allocation1 [shape = 'u32[144,128]{1,0:T(1,128)}', space=vmem, size = 0x12000, scoped, tag = 'internal scratch']
  %s0 = inlined_call_operand.hbm [shape: bf16[512,128], index: 0, kind: input, shape index: {}]
  %s1 = inlined_call_operand.hbm [shape: f32[1,128], index: 1, kind: input, shape index: {}]
  %s2 = inlined_call_operand.hbm [shape: f32[1,128], index: 2, kind: input, shape index: {}]
  %s3 = inlined_call_operand.hbm [shape: bf16[128,128], index: 3, kind: input, shape index: {}]
  %s4 = inlined_call_operand.hbm [shape: bf16[512,128], index: 4, kind: input, shape index: {}]
  %s5 = inlined_call_operand.hbm [shape: bf16[128,128], index: 5, kind: input, shape index: {}]
  %s6 = inlined_call_operand.hbm [shape: bf16[512,128], index: 6, kind: output, shape index: {0}]
  %s7 = inlined_call_operand.hbm [shape: bf16[512,128], index: 7, kind: output, shape index: {1}]
  %s8 = inlined_call_operand.hbm [shape: f32[1,2,128], index: 8, kind: output, shape index: {2}]
  %s9 = inlined_call_operand.hbm [shape: f32[1,2,128], index: 9, kind: output, shape index: {3}]
  %10 = xla_tuple %s6, %s7, %s8, %s9
  %s11 = sld [smem:[#allocation0]]
  $region82: #{bottleneck_with_batchnorm.6} parent=0
    _
  %s13 = ssub.s32 1, %s11
  %s14 = scalar_select 0, %s13, %s11
  $region1: #{bottleneck_with_batchnorm.6} parent=0
    #allocation2 [shape = 'u8[131072]{0}', space=vmem, size = 0x20000, scoped, tag = 'input window, operand 0, single buffered']
    #allocation3 [shape = 's32[1]{0}', space=sflag, size = 0x4, scoped, tag = 'scoped memory for bottleneck_with_batchnorm.6']
    #allocation4 [shape = 's32[1]{0}', space=sflag, size = 0x4, scoped, tag = 'scoped memory for bottleneck_with_batchnorm.6']
    #allocation5 [shape = 'u8[512]{0}', space=vmem, size = 0x400, scoped, tag = 'input window, operand 1, single buffered']
    #allocation6 [shape = 's32[1]{0}', space=sflag, size = 0x4, scoped, tag = 'scoped memory for bottleneck_with_batchnorm.6']
    #allocation7 [shape = 'u8[512]{0}', space=vmem, size = 0x400, scoped, tag = 'input window, operand 2, single buffered']
    #allocation8 [shape = 'u8[32768]{0}', space=vmem, size = 0x8000, scoped, tag = 'input window, operand 3, single buffered']
    #allocation9 [shape = 's32[1]{0}', space=sflag, size = 0x4, scoped, tag = 'scoped memory for bottleneck_with_batchnorm.6']
    #allocation10 [shape = 'u8[131072]{0}', space=vmem, size = 0x20000, scoped, tag = 'input window, operand 4, single buffered']
    #allocation11 [shape = 'u8[32768]{0}', space=vmem, size = 0x8000, scoped, tag = 'input window, operand 5, single buffered']
    #allocation12 [shape = 's32[1]{0}', space=sflag, size = 0x4, scoped, tag = 'scoped memory for bottleneck_with_batchnorm.6']
    #allocation13 [shape = 'u8[131072]{0}', space=vmem, size = 0x20000, scoped, tag = 'output window, operand 0, single buffered']
    #allocation14 [shape = 'u8[131072]{0}', space=vmem, size = 0x20000, scoped, tag = 'output window, operand 1, single buffered']
    #allocation15 [shape = 's32[1]{0}', space=sflag, size = 0x4, scoped, tag = 'scoped memory for bottleneck_with_batchnorm.6']
    #allocation16 [shape = 'u8[1024]{0}', space=vmem, size = 0x400, scoped, tag = 'output window, operand 2, single buffered']
    #allocation17 [shape = 'u8[1024]{0}', space=vmem, size = 0x400, scoped, tag = 'output window, operand 3, single buffered']
    #allocation18 [shape = 's32[1]{0}', space=sflag, size = 0x4, scoped, tag = 'scoped memory for bottleneck_with_batchnorm.6']
    %15 = vsyncpa [#allocation3], 0
    %16 = vsyncpa [#allocation6], 0
    %17 = vsyncpa [#allocation9], 0
    %18 = vsyncpa [#allocation12], 0
    %19 = vsyncpa [#allocation4], 0
    %20 = vsyncpa [#allocation15], 0
    %21 = vsyncpa [#allocation18], 0
    // Predicated region
    $region2: #{bottleneck_with_batchnorm.6} parent=1 // pred_check
      _
    $region3: #{bottleneck_with_batchnorm.6} parent=1 // pred_check_branch
      %23 = sbr.rel (0) target = $region5
    $region4: #{bottleneck_with_batchnorm.6} parent=1 // pred_region
      %s25 = ssub.s32 4096, 4096
      %26 = vsyncadd [#allocation3], %s25
      %s27 = sshll.u32 [#allocation2], 4
      %s28 = int_to_ptr.vmem [resolvable:$true] %s27
      %33 = dma.hbm_to_vmem [thread:$0]  %s0, 4096, %s28, [#allocation3], 64, 64, 4
    $region5: #{bottleneck_with_batchnorm.6} parent=1 // pred_fallthru
      _
    // Predicated region
    $region6: #{bottleneck_with_batchnorm.6} parent=1 // pred_check
      _
    $region7: #{bottleneck_with_batchnorm.6} parent=1 // pred_check_branch
      %35 = sbr.rel (0) target = $region9
    $region8: #{bottleneck_with_batchnorm.6} parent=1 // pred_region
      %s37 = ssub.s32 16, 16
      %38 = vsyncadd [#allocation6], %s37
      %s40 = sshll.u32 [#allocation5], 4
      %s41 = int_to_ptr.vmem [resolvable:$true] %s40
      %43 = dma.hbm_to_vmem [thread:$0]  %s1, 16, %s41, [#allocation6]
    $region9: #{bottleneck_with_batchnorm.6} parent=1 // pred_fallthru
      _
    // Predicated region
    $region10: #{bottleneck_with_batchnorm.6} parent=1 // pred_check
      _
    $region11: #{bottleneck_with_batchnorm.6} parent=1 // pred_check_branch
      %45 = sbr.rel (0) target = $region13
    $region12: #{bottleneck_with_batchnorm.6} parent=1 // pred_region
      %s47 = ssub.s32 16, 16
      %48 = vsyncadd [#allocation6], %s47
      %s50 = sshll.u32 [#allocation7], 4
      %s51 = int_to_ptr.vmem [resolvable:$true] %s50
      %53 = dma.hbm_to_vmem [thread:$0]  %s2, 16, %s51, [#allocation6]
    $region13: #{bottleneck_with_batchnorm.6} parent=1 // pred_fallthru
      _
    // Predicated region
    $region14: #{bottleneck_with_batchnorm.6} parent=1 // pred_check
      _
    $region15: #{bottleneck_with_batchnorm.6} parent=1 // pred_check_branch
      %55 = sbr.rel (0) target = $region17
    $region16: #{bottleneck_with_batchnorm.6} parent=1 // pred_region
      %s57 = ssub.s32 1024, 1024
      %58 = vsyncadd [#allocation9], %s57
      %s59 = sshll.u32 [#allocation8], 4
      %s60 = int_to_ptr.vmem [resolvable:$true] %s59
      %65 = dma.hbm_to_vmem [thread:$0]  %s3, 1024, %s60, [#allocation9], 64, 64, 4
    $region17: #{bottleneck_with_batchnorm.6} parent=1 // pred_fallthru
      _
    // Predicated region
    $region18: #{bottleneck_with_batchnorm.6} parent=1 // pred_check
      _
    $region19: #{bottleneck_with_batchnorm.6} parent=1 // pred_check_branch
      %67 = sbr.rel (0) target = $region21
    $region20: #{bottleneck_with_batchnorm.6} parent=1 // pred_region
      %s69 = ssub.s32 4096, 4096
      %70 = vsyncadd [#allocation9], %s69
      %s71 = sshll.u32 [#allocation10], 4
      %s72 = int_to_ptr.vmem [resolvable:$true] %s71
      %77 = dma.hbm_to_vmem [thread:$0]  %s4, 4096, %s72, [#allocation9], 64, 64, 4
    $region21: #{bottleneck_with_batchnorm.6} parent=1 // pred_fallthru
      _
    // Predicated region
    $region22: #{bottleneck_with_batchnorm.6} parent=1 // pred_check
      _
    $region23: #{bottleneck_with_batchnorm.6} parent=1 // pred_check_branch
      %79 = sbr.rel (0) target = $region25
    $region24: #{bottleneck_with_batchnorm.6} parent=1 // pred_region
      %s81 = ssub.s32 1024, 1024
      %82 = vsyncadd [#allocation12], %s81
      %s83 = sshll.u32 [#allocation11], 4
      %s84 = int_to_ptr.vmem [resolvable:$true] %s83
      %89 = dma.hbm_to_vmem [thread:$0]  %s5, 1024, %s84, [#allocation12], 64, 64, 4
    $region25: #{bottleneck_with_batchnorm.6} parent=1 // pred_fallthru
      _
    // Predicated region
    $region26: #{bottleneck_with_batchnorm.6} parent=1 // pred_check
      _
    $region27: #{bottleneck_with_batchnorm.6} parent=1 // pred_check_branch
      %91 = sbr.rel (0) target = $region29
    $region28: #{bottleneck_with_batchnorm.6} parent=1 // pred_region
      %92 = dma.done [#allocation3], 4096
    $region29: #{bottleneck_with_batchnorm.6} parent=1 // pred_fallthru
      _
    // Predicated region
    $region30: #{bottleneck_with_batchnorm.6} parent=1 // pred_check
      _
    $region31: #{bottleneck_with_batchnorm.6} parent=1 // pred_check_branch
      %94 = sbr.rel (0) target = $region33
    $region32: #{bottleneck_with_batchnorm.6} parent=1 // pred_region
      %95 = dma.done [#allocation6], 16
    $region33: #{bottleneck_with_batchnorm.6} parent=1 // pred_fallthru
      _
    // Predicated region
    $region34: #{bottleneck_with_batchnorm.6} parent=1 // pred_check
      _
    $region35: #{bottleneck_with_batchnorm.6} parent=1 // pred_check_branch
      %97 = sbr.rel (0) target = $region37
    $region36: #{bottleneck_with_batchnorm.6} parent=1 // pred_region
      %98 = dma.done [#allocation6], 16
    $region37: #{bottleneck_with_batchnorm.6} parent=1 // pred_fallthru
      _
    // Predicated region
    $region38: #{bottleneck_with_batchnorm.6} parent=1 // pred_check
      _
    $region39: #{bottleneck_with_batchnorm.6} parent=1 // pred_check_branch
      %100 = sbr.rel (0) target = $region41
    $region40: #{bottleneck_with_batchnorm.6} parent=1 // pred_region
      %101 = dma.done [#allocation9], 1024
    $region41: #{bottleneck_with_batchnorm.6} parent=1 // pred_fallthru
      _
    // Predicated region
    $region42: #{bottleneck_with_batchnorm.6} parent=1 // pred_check
      _
    $region43: #{bottleneck_with_batchnorm.6} parent=1 // pred_check_branch
      %103 = sbr.rel (0) target = $region45
    $region44: #{bottleneck_with_batchnorm.6} parent=1 // pred_region
      %104 = dma.done [#allocation9], 4096
    $region45: #{bottleneck_with_batchnorm.6} parent=1 // pred_fallthru
      _
    // Predicated region
    $region46: #{bottleneck_with_batchnorm.6} parent=1 // pred_check
      _
    $region47: #{bottleneck_with_batchnorm.6} parent=1 // pred_check_branch
      %106 = sbr.rel (0) target = $region49
    $region48: #{bottleneck_with_batchnorm.6} parent=1 // pred_region
      %107 = dma.done [#allocation12], 1024
    $region49: #{bottleneck_with_batchnorm.6} parent=1 // pred_fallthru
      _
    %v109 = vlaneseq
    %v110 = vshrl.u32 %v109, 7
    %v111 = vadd.s32 %v110, 8
    %v112 = vadd.s32 %v110, 16
    %v113 = vadd.s32 %v110, 24
    %v114 = vadd.s32 %v110, 32
    %v115 = vadd.s32 %v110, 40
    %v116 = vadd.s32 %v110, 48
    %v117 = vadd.s32 %v110, 56
    %v118 = vadd.s32 %v110, 64
    %v119 = vadd.s32 %v110, 72
    %v120 = vadd.s32 %v110, 80
    %v121 = vadd.s32 %v110, 88
    %v122 = vadd.s32 %v110, 96
    %v123 = vadd.s32 %v110, 104
    %v124 = vadd.s32 %v110, 112
    %v125 = vadd.s32 %v110, 120
    %v126 = vadd.s32 %v110, 128
    %v127 = vadd.s32 %v110, 136
    %v128 = vadd.s32 %v110, 144
    %v129 = vadd.s32 %v110, 152
    %v130 = vadd.s32 %v110, 160
    %v131 = vadd.s32 %v110, 168
    %v132 = vadd.s32 %v110, 176
    %v133 = vadd.s32 %v110, 184
    %v134 = vadd.s32 %v110, 192
    %v135 = vadd.s32 %v110, 200
    %v136 = vadd.s32 %v110, 208
    %v137 = vadd.s32 %v110, 216
    %v138 = vadd.s32 %v110, 224
    %v139 = vadd.s32 %v110, 232
    %v140 = vadd.s32 %v110, 240
    %v141 = vadd.s32 %v110, 248
    %v142 = vadd.s32 %v110, 256
    %v143 = vadd.s32 %v110, 264
    %v144 = vadd.s32 %v110, 272
    %v145 = vadd.s32 %v110, 280
    %v146 = vadd.s32 %v110, 288
    %v147 = vadd.s32 %v110, 296
    %v148 = vadd.s32 %v110, 304
    %v149 = vadd.s32 %v110, 312
    %v150 = vadd.s32 %v110, 320
    %v151 = vadd.s32 %v110, 328
    %v152 = vadd.s32 %v110, 336
    %v153 = vadd.s32 %v110, 344
    %v154 = vadd.s32 %v110, 352
    %v155 = vadd.s32 %v110, 360
    %v156 = vadd.s32 %v110, 368
    %v157 = vadd.s32 %v110, 376
    %v158 = vadd.s32 %v110, 384
    %v159 = vadd.s32 %v110, 392
    %v160 = vadd.s32 %v110, 400
    %v161 = vadd.s32 %v110, 408
    %v162 = vadd.s32 %v110, 416
    %v163 = vadd.s32 %v110, 424
    %v164 = vadd.s32 %v110, 432
    %v165 = vadd.s32 %v110, 440
    %v166 = vadd.s32 %v110, 448
    %v167 = vadd.s32 %v110, 456
    %v168 = vadd.s32 %v110, 464
    %v169 = vadd.s32 %v110, 472
    %v170 = vadd.s32 %v110, 480
    %v171 = vadd.s32 %v110, 488
    %v172 = vadd.s32 %v110, 496
    %v173 = vadd.s32 %v110, 504
    %s174 = smul.u32 0, 512
    %v175 = vstv %s174
    %v176 = vadd.s32 %v110, %v175
    %v177 = vadd.s32 %v111, %v175
    %v178 = vadd.s32 %v112, %v175
    %v179 = vadd.s32 %v113, %v175
    %v180 = vadd.s32 %v114, %v175
    %v181 = vadd.s32 %v115, %v175
    %v182 = vadd.s32 %v116, %v175
    %v183 = vadd.s32 %v117, %v175
    %v184 = vadd.s32 %v118, %v175
    %v185 = vadd.s32 %v119, %v175
    %v186 = vadd.s32 %v120, %v175
    %v187 = vadd.s32 %v121, %v175
    %v188 = vadd.s32 %v122, %v175
    %v189 = vadd.s32 %v123, %v175
    %v190 = vadd.s32 %v124, %v175
    %v191 = vadd.s32 %v125, %v175
    %v192 = vadd.s32 %v126, %v175
    %v193 = vadd.s32 %v127, %v175
    %v194 = vadd.s32 %v128, %v175
    %v195 = vadd.s32 %v129, %v175
    %v196 = vadd.s32 %v130, %v175
    %v197 = vadd.s32 %v131, %v175
    %v198 = vadd.s32 %v132, %v175
    %v199 = vadd.s32 %v133, %v175
    %v200 = vadd.s32 %v134, %v175
    %v201 = vadd.s32 %v135, %v175
    %v202 = vadd.s32 %v136, %v175
    %v203 = vadd.s32 %v137, %v175
    %v204 = vadd.s32 %v138, %v175
    %v205 = vadd.s32 %v139, %v175
    %v206 = vadd.s32 %v140, %v175
    %v207 = vadd.s32 %v141, %v175
    %v208 = vadd.s32 %v142, %v175
    %v209 = vadd.s32 %v143, %v175
    %v210 = vadd.s32 %v144, %v175
    %v211 = vadd.s32 %v145, %v175
    %v212 = vadd.s32 %v146, %v175
    %v213 = vadd.s32 %v147, %v175
    %v214 = vadd.s32 %v148, %v175
    %v215 = vadd.s32 %v149, %v175
    %v216 = vadd.s32 %v150, %v175
    %v217 = vadd.s32 %v151, %v175
    %v218 = vadd.s32 %v152, %v175
    %v219 = vadd.s32 %v153, %v175
    %v220 = vadd.s32 %v154, %v175
    %v221 = vadd.s32 %v155, %v175
    %v222 = vadd.s32 %v156, %v175
    %v223 = vadd.s32 %v157, %v175
    %v224 = vadd.s32 %v158, %v175
    %v225 = vadd.s32 %v159, %v175
    %v226 = vadd.s32 %v160, %v175
    %v227 = vadd.s32 %v161, %v175
    %v228 = vadd.s32 %v162, %v175
    %v229 = vadd.s32 %v163, %v175
    %v230 = vadd.s32 %v164, %v175
    %v231 = vadd.s32 %v165, %v175
    %v232 = vadd.s32 %v166, %v175
    %v233 = vadd.s32 %v167, %v175
    %v234 = vadd.s32 %v168, %v175
    %v235 = vadd.s32 %v169, %v175
    %v236 = vadd.s32 %v170, %v175
    %v237 = vadd.s32 %v171, %v175
    %v238 = vadd.s32 %v172, %v175
    %v239 = vadd.s32 %v173, %v175
    %vm240 = vcmp.lt.s32.totalorder %v176, 512
    %vm241 = vcmp.lt.s32.totalorder %v177, 512
    %vm242 = vcmp.lt.s32.totalorder %v178, 512
    %vm243 = vcmp.lt.s32.totalorder %v179, 512
    %vm244 = vcmp.lt.s32.totalorder %v180, 512
    %vm245 = vcmp.lt.s32.totalorder %v181, 512
    %vm246 = vcmp.lt.s32.totalorder %v182, 512
    %vm247 = vcmp.lt.s32.totalorder %v183, 512
    %vm248 = vcmp.lt.s32.totalorder %v184, 512
    %vm249 = vcmp.lt.s32.totalorder %v185, 512
    %vm250 = vcmp.lt.s32.totalorder %v186, 512
    %vm251 = vcmp.lt.s32.totalorder %v187, 512
    %vm252 = vcmp.lt.s32.totalorder %v188, 512
    %vm253 = vcmp.lt.s32.totalorder %v189, 512
    %vm254 = vcmp.lt.s32.totalorder %v190, 512
    %vm255 = vcmp.lt.s32.totalorder %v191, 512
    %vm256 = vcmp.lt.s32.totalorder %v192, 512
    %vm257 = vcmp.lt.s32.totalorder %v193, 512
    %vm258 = vcmp.lt.s32.totalorder %v194, 512
    %vm259 = vcmp.lt.s32.totalorder %v195, 512
    %vm260 = vcmp.lt.s32.totalorder %v196, 512
    %vm261 = vcmp.lt.s32.totalorder %v197, 512
    %vm262 = vcmp.lt.s32.totalorder %v198, 512
    %vm263 = vcmp.lt.s32.totalorder %v199, 512
    %vm264 = vcmp.lt.s32.totalorder %v200, 512
    %vm265 = vcmp.lt.s32.totalorder %v201, 512
    %vm266 = vcmp.lt.s32.totalorder %v202, 512
    %vm267 = vcmp.lt.s32.totalorder %v203, 512
    %vm268 = vcmp.lt.s32.totalorder %v204, 512
    %vm269 = vcmp.lt.s32.totalorder %v205, 512
    %vm270 = vcmp.lt.s32.totalorder %v206, 512
    %vm271 = vcmp.lt.s32.totalorder %v207, 512
    %vm272 = vcmp.lt.s32.totalorder %v208, 512
    %vm273 = vcmp.lt.s32.totalorder %v209, 512
    %vm274 = vcmp.lt.s32.totalorder %v210, 512
    %vm275 = vcmp.lt.s32.totalorder %v211, 512
    %vm276 = vcmp.lt.s32.totalorder %v212, 512
    %vm277 = vcmp.lt.s32.totalorder %v213, 512
    %vm278 = vcmp.lt.s32.totalorder %v214, 512
    %vm279 = vcmp.lt.s32.totalorder %v215, 512
    %vm280 = vcmp.lt.s32.totalorder %v216, 512
    %vm281 = vcmp.lt.s32.totalorder %v217, 512
    %vm282 = vcmp.lt.s32.totalorder %v218, 512
    %vm283 = vcmp.lt.s32.totalorder %v219, 512
    %vm284 = vcmp.lt.s32.totalorder %v220, 512
    %vm285 = vcmp.lt.s32.totalorder %v221, 512
    %vm286 = vcmp.lt.s32.totalorder %v222, 512
    %vm287 = vcmp.lt.s32.totalorder %v223, 512
    %vm288 = vcmp.lt.s32.totalorder %v224, 512
    %vm289 = vcmp.lt.s32.totalorder %v225, 512
    %vm290 = vcmp.lt.s32.totalorder %v226, 512
    %vm291 = vcmp.lt.s32.totalorder %v227, 512
    %vm292 = vcmp.lt.s32.totalorder %v228, 512
    %vm293 = vcmp.lt.s32.totalorder %v229, 512
    %vm294 = vcmp.lt.s32.totalorder %v230, 512
    %vm295 = vcmp.lt.s32.totalorder %v231, 512
    %vm296 = vcmp.lt.s32.totalorder %v232, 512
    %vm297 = vcmp.lt.s32.totalorder %v233, 512
    %vm298 = vcmp.lt.s32.totalorder %v234, 512
    %vm299 = vcmp.lt.s32.totalorder %v235, 512
    %vm300 = vcmp.lt.s32.totalorder %v236, 512
    %vm301 = vcmp.lt.s32.totalorder %v237, 512
    %vm302 = vcmp.lt.s32.totalorder %v238, 512
    %vm303 = vcmp.lt.s32.totalorder %v239, 512
    %v304 = vld [vmem:[#allocation2] sm:$0xf]
    %v305 = vld [vmem:[#allocation2 + $0x4] sm:$0xf]
    %v306 = vld [vmem:[#allocation2 + $0x8] sm:$0xf]
    %v307 = vld [vmem:[#allocation2 + $0xc] sm:$0xf]
    %v308 = vld [vmem:[#allocation2 + $0x10] sm:$0xf]
    %v309 = vld [vmem:[#allocation2 + $0x14] sm:$0xf]
    %v310 = vld [vmem:[#allocation2 + $0x18] sm:$0xf]
    %v311 = vld [vmem:[#allocation2 + $0x1c] sm:$0xf]
    %v312 = vld [vmem:[#allocation2 + $0x20] sm:$0xf]
    %v313 = vld [vmem:[#allocation2 + $0x24] sm:$0xf]
    %v314 = vld [vmem:[#allocation2 + $0x28] sm:$0xf]
    %v315 = vld [vmem:[#allocation2 + $0x2c] sm:$0xf]
    %v316 = vld [vmem:[#allocation2 + $0x30] sm:$0xf]
    %v317 = vld [vmem:[#allocation2 + $0x34] sm:$0xf]
    %v318 = vld [vmem:[#allocation2 + $0x38] sm:$0xf]
    %v319 = vld [vmem:[#allocation2 + $0x3c] sm:$0xf]
    %v320 = vld [vmem:[#allocation2 + $0x40] sm:$0xf]
    %v321 = vld [vmem:[#allocation2 + $0x44] sm:$0xf]
    %v322 = vld [vmem:[#allocation2 + $0x48] sm:$0xf]
    %v323 = vld [vmem:[#allocation2 + $0x4c] sm:$0xf]
    %v324 = vld [vmem:[#allocation2 + $0x50] sm:$0xf]
    %v325 = vld [vmem:[#allocation2 + $0x54] sm:$0xf]
    %v326 = vld [vmem:[#allocation2 + $0x58] sm:$0xf]
    %v327 = vld [vmem:[#allocation2 + $0x5c] sm:$0xf]
    %v328 = vld [vmem:[#allocation2 + $0x60] sm:$0xf]
    %v329 = vld [vmem:[#allocation2 + $0x64] sm:$0xf]
    %v330 = vld [vmem:[#allocation2 + $0x68] sm:$0xf]
    %v331 = vld [vmem:[#allocation2 + $0x6c] sm:$0xf]
    %v332 = vld [vmem:[#allocation2 + $0x70] sm:$0xf]
    %v333 = vld [vmem:[#allocation2 + $0x74] sm:$0xf]
    %v334 = vld [vmem:[#allocation2 + $0x78] sm:$0xf]
    %v335 = vld [vmem:[#allocation2 + $0x7c] sm:$0xf]
    %v336 = vld [vmem:[#allocation2 + $0x80] sm:$0xf]
    %v337 = vld [vmem:[#allocation2 + $0x84] sm:$0xf]
    %v338 = vld [vmem:[#allocation2 + $0x88] sm:$0xf]
    %v339 = vld [vmem:[#allocation2 + $0x8c] sm:$0xf]
    %v340 = vld [vmem:[#allocation2 + $0x90] sm:$0xf]
    %v341 = vld [vmem:[#allocation2 + $0x94] sm:$0xf]
    %v342 = vld [vmem:[#allocation2 + $0x98] sm:$0xf]
    %v343 = vld [vmem:[#allocation2 + $0x9c] sm:$0xf]
    %v344 = vld [vmem:[#allocation2 + $0xa0] sm:$0xf]
    %v345 = vld [vmem:[#allocation2 + $0xa4] sm:$0xf]
    %v346 = vld [vmem:[#allocation2 + $0xa8] sm:$0xf]
    %v347 = vld [vmem:[#allocation2 + $0xac] sm:$0xf]
    %v348 = vld [vmem:[#allocation2 + $0xb0] sm:$0xf]
    %v349 = vld [vmem:[#allocation2 + $0xb4] sm:$0xf]
    %v350 = vld [vmem:[#allocation2 + $0xb8] sm:$0xf]
    %v351 = vld [vmem:[#allocation2 + $0xbc] sm:$0xf]
    %v352 = vld [vmem:[#allocation2 + $0xc0] sm:$0xf]
    %v353 = vld [vmem:[#allocation2 + $0xc4] sm:$0xf]
    %v354 = vld [vmem:[#allocation2 + $0xc8] sm:$0xf]
    %v355 = vld [vmem:[#allocation2 + $0xcc] sm:$0xf]
    %v356 = vld [vmem:[#allocation2 + $0xd0] sm:$0xf]
    %v357 = vld [vmem:[#allocation2 + $0xd4] sm:$0xf]
    %v358 = vld [vmem:[#allocation2 + $0xd8] sm:$0xf]
    %v359 = vld [vmem:[#allocation2 + $0xdc] sm:$0xf]
    %v360 = vld [vmem:[#allocation2 + $0xe0] sm:$0xf]
    %v361 = vld [vmem:[#allocation2 + $0xe4] sm:$0xf]
    %v362 = vld [vmem:[#allocation2 + $0xe8] sm:$0xf]
    %v363 = vld [vmem:[#allocation2 + $0xec] sm:$0xf]
    %v364 = vld [vmem:[#allocation2 + $0xf0] sm:$0xf]
    %v365 = vld [vmem:[#allocation2 + $0xf4] sm:$0xf]
    %v366 = vld [vmem:[#allocation2 + $0xf8] sm:$0xf]
    %v367 = vld [vmem:[#allocation2 + $0xfc] sm:$0xf]
    %v368 = vunpack.c.l.bf16 %v304
    %v369 = vunpack.c.l.bf16 %v305
    %v370 = vunpack.c.l.bf16 %v306
    %v371 = vunpack.c.l.bf16 %v307
    %v372 = vunpack.c.l.bf16 %v308
    %v373 = vunpack.c.l.bf16 %v309
    %v374 = vunpack.c.l.bf16 %v310
    %v375 = vunpack.c.l.bf16 %v311
    %v376 = vunpack.c.l.bf16 %v312
    %v377 = vunpack.c.l.bf16 %v313
    %v378 = vunpack.c.l.bf16 %v314
    %v379 = vunpack.c.l.bf16 %v315
    %v380 = vunpack.c.l.bf16 %v316
    %v381 = vunpack.c.l.bf16 %v317
    %v382 = vunpack.c.l.bf16 %v318
    %v383 = vunpack.c.l.bf16 %v319
    %v384 = vunpack.c.l.bf16 %v320
    %v385 = vunpack.c.l.bf16 %v321
    %v386 = vunpack.c.l.bf16 %v322
    %v387 = vunpack.c.l.bf16 %v323
    %v388 = vunpack.c.l.bf16 %v324
    %v389 = vunpack.c.l.bf16 %v325
    %v390 = vunpack.c.l.bf16 %v326
    %v391 = vunpack.c.l.bf16 %v327
    %v392 = vunpack.c.l.bf16 %v328
    %v393 = vunpack.c.l.bf16 %v329
    %v394 = vunpack.c.l.bf16 %v330
    %v395 = vunpack.c.l.bf16 %v331
    %v396 = vunpack.c.l.bf16 %v332
    %v397 = vunpack.c.l.bf16 %v333
    %v398 = vunpack.c.l.bf16 %v334
    %v399 = vunpack.c.l.bf16 %v335
    %v400 = vunpack.c.l.bf16 %v336
    %v401 = vunpack.c.l.bf16 %v337
    %v402 = vunpack.c.l.bf16 %v338
    %v403 = vunpack.c.l.bf16 %v339
    %v404 = vunpack.c.l.bf16 %v340
    %v405 = vunpack.c.l.bf16 %v341
    %v406 = vunpack.c.l.bf16 %v342
    %v407 = vunpack.c.l.bf16 %v343
    %v408 = vunpack.c.l.bf16 %v344
    %v409 = vunpack.c.l.bf16 %v345
    %v410 = vunpack.c.l.bf16 %v346
    %v411 = vunpack.c.l.bf16 %v347
    %v412 = vunpack.c.l.bf16 %v348
    %v413 = vunpack.c.l.bf16 %v349
    %v414 = vunpack.c.l.bf16 %v350
    %v415 = vunpack.c.l.bf16 %v351
    %v416 = vunpack.c.l.bf16 %v352
    %v417 = vunpack.c.l.bf16 %v353
    %v418 = vunpack.c.l.bf16 %v354
    %v419 = vunpack.c.l.bf16 %v355
    %v420 = vunpack.c.l.bf16 %v356
    %v421 = vunpack.c.l.bf16 %v357
    %v422 = vunpack.c.l.bf16 %v358
    %v423 = vunpack.c.l.bf16 %v359
    %v424 = vunpack.c.l.bf16 %v360
    %v425 = vunpack.c.l.bf16 %v361
    %v426 = vunpack.c.l.bf16 %v362
    %v427 = vunpack.c.l.bf16 %v363
    %v428 = vunpack.c.l.bf16 %v364
    %v429 = vunpack.c.l.bf16 %v365
    %v430 = vunpack.c.l.bf16 %v366
    %v431 = vunpack.c.l.bf16 %v367
    %v432 = vld [vmem:[#allocation5] sm:$0x1]
    %v434 = vlaneseq
    %v435 = vshrl.u32 %v434, 7
    %v436 = vsub.s32 0, %v435
    %v437 = vrot.slane %v432, %v436
    %v439 = vmul.f32 %v368, %v437
    %v440 = vmul.f32 %v369, %v437
    %v441 = vmul.f32 %v370, %v437
    %v442 = vmul.f32 %v371, %v437
    %v443 = vmul.f32 %v372, %v437
    %v444 = vmul.f32 %v373, %v437
    %v445 = vmul.f32 %v374, %v437
    %v446 = vmul.f32 %v375, %v437
    %v447 = vmul.f32 %v376, %v437
    %v448 = vmul.f32 %v377, %v437
    %v449 = vmul.f32 %v378, %v437
    %v450 = vmul.f32 %v379, %v437
    %v451 = vmul.f32 %v380, %v437
    %v452 = vmul.f32 %v381, %v437
    %v453 = vmul.f32 %v382, %v437
    %v454 = vmul.f32 %v383, %v437
    %v455 = vmul.f32 %v384, %v437
    %v456 = vmul.f32 %v385, %v437
    %v457 = vmul.f32 %v386, %v437
    %v458 = vmul.f32 %v387, %v437
    %v459 = vmul.f32 %v388, %v437
    %v460 = vmul.f32 %v389, %v437
    %v461 = vmul.f32 %v390, %v437
    %v462 = vmul.f32 %v391, %v437
    %v463 = vmul.f32 %v392, %v437
    %v464 = vmul.f32 %v393, %v437
    %v465 = vmul.f32 %v394, %v437
    %v466 = vmul.f32 %v395, %v437
    %v467 = vmul.f32 %v396, %v437
    %v468 = vmul.f32 %v397, %v437
    %v469 = vmul.f32 %v398, %v437
    %v470 = vmul.f32 %v399, %v437
    %v471 = vmul.f32 %v400, %v437
    %v472 = vmul.f32 %v401, %v437
    %v473 = vmul.f32 %v402, %v437
    %v474 = vmul.f32 %v403, %v437
    %v475 = vmul.f32 %v404, %v437
    %v476 = vmul.f32 %v405, %v437
    %v477 = vmul.f32 %v406, %v437
    %v478 = vmul.f32 %v407, %v437
    %v479 = vmul.f32 %v408, %v437
    %v480 = vmul.f32 %v409, %v437
    %v481 = vmul.f32 %v410, %v437
    %v482 = vmul.f32 %v411, %v437
    %v483 = vmul.f32 %v412, %v437
    %v484 = vmul.f32 %v413, %v437
    %v485 = vmul.f32 %v414, %v437
    %v486 = vmul.f32 %v415, %v437
    %v487 = vmul.f32 %v416, %v437
    %v488 = vmul.f32 %v417, %v437
    %v489 = vmul.f32 %v418, %v437
    %v490 = vmul.f32 %v419, %v437
    %v491 = vmul.f32 %v420, %v437
    %v492 = vmul.f32 %v421, %v437
    %v493 = vmul.f32 %v422, %v437
    %v494 = vmul.f32 %v423, %v437
    %v495 = vmul.f32 %v424, %v437
    %v496 = vmul.f32 %v425, %v437
    %v497 = vmul.f32 %v426, %v437
    %v498 = vmul.f32 %v427, %v437
    %v499 = vmul.f32 %v428, %v437
    %v500 = vmul.f32 %v429, %v437
    %v501 = vmul.f32 %v430, %v437
    %v502 = vmul.f32 %v431, %v437
    %v503 = vld [vmem:[#allocation7] sm:$0x1]
    %v505 = vlaneseq
    %v506 = vshrl.u32 %v505, 7
    %v507 = vsub.s32 0, %v506
    %v508 = vrot.slane %v503, %v507
    %v510 = vadd.f32 %v439, %v508
    %v511 = vadd.f32 %v440, %v508
    %v512 = vadd.f32 %v441, %v508
    %v513 = vadd.f32 %v442, %v508
    %v514 = vadd.f32 %v443, %v508
    %v515 = vadd.f32 %v444, %v508
    %v516 = vadd.f32 %v445, %v508
    %v517 = vadd.f32 %v446, %v508
    %v518 = vadd.f32 %v447, %v508
    %v519 = vadd.f32 %v448, %v508
    %v520 = vadd.f32 %v449, %v508
    %v521 = vadd.f32 %v450, %v508
    %v522 = vadd.f32 %v451, %v508
    %v523 = vadd.f32 %v452, %v508
    %v524 = vadd.f32 %v453, %v508
    %v525 = vadd.f32 %v454, %v508
    %v526 = vadd.f32 %v455, %v508
    %v527 = vadd.f32 %v456, %v508
    %v528 = vadd.f32 %v457, %v508
    %v529 = vadd.f32 %v458, %v508
    %v530 = vadd.f32 %v459, %v508
    %v531 = vadd.f32 %v460, %v508
    %v532 = vadd.f32 %v461, %v508
    %v533 = vadd.f32 %v462, %v508
    %v534 = vadd.f32 %v463, %v508
    %v535 = vadd.f32 %v464, %v508
    %v536 = vadd.f32 %v465, %v508
    %v537 = vadd.f32 %v466, %v508
    %v538 = vadd.f32 %v467, %v508
    %v539 = vadd.f32 %v468, %v508
    %v540 = vadd.f32 %v469, %v508
    %v541 = vadd.f32 %v470, %v508
    %v542 = vadd.f32 %v471, %v508
    %v543 = vadd.f32 %v472, %v508
    %v544 = vadd.f32 %v473, %v508
    %v545 = vadd.f32 %v474, %v508
    %v546 = vadd.f32 %v475, %v508
    %v547 = vadd.f32 %v476, %v508
    %v548 = vadd.f32 %v477, %v508
    %v549 = vadd.f32 %v478, %v508
    %v550 = vadd.f32 %v479, %v508
    %v551 = vadd.f32 %v480, %v508
    %v552 = vadd.f32 %v481, %v508
    %v553 = vadd.f32 %v482, %v508
    %v554 = vadd.f32 %v483, %v508
    %v555 = vadd.f32 %v484, %v508
    %v556 = vadd.f32 %v485, %v508
    %v557 = vadd.f32 %v486, %v508
    %v558 = vadd.f32 %v487, %v508
    %v559 = vadd.f32 %v488, %v508
    %v560 = vadd.f32 %v489, %v508
    %v561 = vadd.f32 %v490, %v508
    %v562 = vadd.f32 %v491, %v508
    %v563 = vadd.f32 %v492, %v508
    %v564 = vadd.f32 %v493, %v508
    %v565 = vadd.f32 %v494, %v508
    %v566 = vadd.f32 %v495, %v508
    %v567 = vadd.f32 %v496, %v508
    %v568 = vadd.f32 %v497, %v508
    %v569 = vadd.f32 %v498, %v508
    %v570 = vadd.f32 %v499, %v508
    %v571 = vadd.f32 %v500, %v508
    %v572 = vadd.f32 %v501, %v508
    %v573 = vadd.f32 %v502, %v508
    %v574 = vmax.f32 %v510, 0.0
    %v575 = vmax.f32 %v511, 0.0
    %v576 = vmax.f32 %v512, 0.0
    %v577 = vmax.f32 %v513, 0.0
    %v578 = vmax.f32 %v514, 0.0
    %v579 = vmax.f32 %v515, 0.0
    %v580 = vmax.f32 %v516, 0.0
    %v581 = vmax.f32 %v517, 0.0
    %v582 = vmax.f32 %v518, 0.0
    %v583 = vmax.f32 %v519, 0.0
    %v584 = vmax.f32 %v520, 0.0
    %v585 = vmax.f32 %v521, 0.0
    %v586 = vmax.f32 %v522, 0.0
    %v587 = vmax.f32 %v523, 0.0
    %v588 = vmax.f32 %v524, 0.0
    %v589 = vmax.f32 %v525, 0.0
    %v590 = vmax.f32 %v526, 0.0
    %v591 = vmax.f32 %v527, 0.0
    %v592 = vmax.f32 %v528, 0.0
    %v593 = vmax.f32 %v529, 0.0
    %v594 = vmax.f32 %v530, 0.0
    %v595 = vmax.f32 %v531, 0.0
    %v596 = vmax.f32 %v532, 0.0
    %v597 = vmax.f32 %v533, 0.0
    %v598 = vmax.f32 %v534, 0.0
    %v599 = vmax.f32 %v535, 0.0
    %v600 = vmax.f32 %v536, 0.0
    %v601 = vmax.f32 %v537, 0.0
    %v602 = vmax.f32 %v538, 0.0
    %v603 = vmax.f32 %v539, 0.0
    %v604 = vmax.f32 %v540, 0.0
    %v605 = vmax.f32 %v541, 0.0
    %v606 = vmax.f32 %v542, 0.0
    %v607 = vmax.f32 %v543, 0.0
    %v608 = vmax.f32 %v544, 0.0
    %v609 = vmax.f32 %v545, 0.0
    %v610 = vmax.f32 %v546, 0.0
    %v611 = vmax.f32 %v547, 0.0
    %v612 = vmax.f32 %v548, 0.0
    %v613 = vmax.f32 %v549, 0.0
    %v614 = vmax.f32 %v550, 0.0
    %v615 = vmax.f32 %v551, 0.0
    %v616 = vmax.f32 %v552, 0.0
    %v617 = vmax.f32 %v553, 0.0
    %v618 = vmax.f32 %v554, 0.0
    %v619 = vmax.f32 %v555, 0.0
    %v620 = vmax.f32 %v556, 0.0
    %v621 = vmax.f32 %v557, 0.0
    %v622 = vmax.f32 %v558, 0.0
    %v623 = vmax.f32 %v559, 0.0
    %v624 = vmax.f32 %v560, 0.0
    %v625 = vmax.f32 %v561, 0.0
    %v626 = vmax.f32 %v562, 0.0
    %v627 = vmax.f32 %v563, 0.0
    %v628 = vmax.f32 %v564, 0.0
    %v629 = vmax.f32 %v565, 0.0
    %v630 = vmax.f32 %v566, 0.0
    %v631 = vmax.f32 %v567, 0.0
    %v632 = vmax.f32 %v568, 0.0
    %v633 = vmax.f32 %v569, 0.0
    %v634 = vmax.f32 %v570, 0.0
    %v635 = vmax.f32 %v571, 0.0
    %v636 = vmax.f32 %v572, 0.0
    %v637 = vmax.f32 %v573, 0.0
    %v638 = vpack.c.bf16 %v575, %v574
    %v639 = vpack.c.bf16 %v577, %v576
    %v640 = vpack.c.bf16 %v579, %v578
    %v641 = vpack.c.bf16 %v581, %v580
    %v642 = vpack.c.bf16 %v583, %v582
    %v643 = vpack.c.bf16 %v585, %v584
    %v644 = vpack.c.bf16 %v587, %v586
    %v645 = vpack.c.bf16 %v589, %v588
    %v646 = vpack.c.bf16 %v591, %v590
    %v647 = vpack.c.bf16 %v593, %v592
    %v648 = vpack.c.bf16 %v595, %v594
    %v649 = vpack.c.bf16 %v597, %v596
    %v650 = vpack.c.bf16 %v599, %v598
    %v651 = vpack.c.bf16 %v601, %v600
    %v652 = vpack.c.bf16 %v603, %v602
    %v653 = vpack.c.bf16 %v605, %v604
    %v654 = vpack.c.bf16 %v607, %v606
    %v655 = vpack.c.bf16 %v609, %v608
    %v656 = vpack.c.bf16 %v611, %v610
    %v657 = vpack.c.bf16 %v613, %v612
    %v658 = vpack.c.bf16 %v615, %v614
    %v659 = vpack.c.bf16 %v617, %v616
    %v660 = vpack.c.bf16 %v619, %v618
    %v661 = vpack.c.bf16 %v621, %v620
    %v662 = vpack.c.bf16 %v623, %v622
    %v663 = vpack.c.bf16 %v625, %v624
    %v664 = vpack.c.bf16 %v627, %v626
    %v665 = vpack.c.bf16 %v629, %v628
    %v666 = vpack.c.bf16 %v631, %v630
    %v667 = vpack.c.bf16 %v633, %v632
    %v668 = vpack.c.bf16 %v635, %v634
    %v669 = vpack.c.bf16 %v637, %v636
    %v670 = vld [vmem:[#allocation8] sm:$0xf]
    %v671 = vld [vmem:[#allocation8 + $0x4] sm:$0xf]
    %v672 = vld [vmem:[#allocation8 + $0x8] sm:$0xf]
    %v673 = vld [vmem:[#allocation8 + $0xc] sm:$0xf]
    %v674 = vld [vmem:[#allocation8 + $0x10] sm:$0xf]
    %v675 = vld [vmem:[#allocation8 + $0x14] sm:$0xf]
    %v676 = vld [vmem:[#allocation8 + $0x18] sm:$0xf]
    %v677 = vld [vmem:[#allocation8 + $0x1c] sm:$0xf]
    %v678 = vld [vmem:[#allocation8 + $0x20] sm:$0xf]
    %v679 = vld [vmem:[#allocation8 + $0x24] sm:$0xf]
    %v680 = vld [vmem:[#allocation8 + $0x28] sm:$0xf]
    %v681 = vld [vmem:[#allocation8 + $0x2c] sm:$0xf]
    %v682 = vld [vmem:[#allocation8 + $0x30] sm:$0xf]
    %v683 = vld [vmem:[#allocation8 + $0x34] sm:$0xf]
    %v684 = vld [vmem:[#allocation8 + $0x38] sm:$0xf]
    %v685 = vld [vmem:[#allocation8 + $0x3c] sm:$0xf]
    %v702 = vunpack.c.l.b16 %v670
    %v703 = vunpack.c.l.b16 %v671
    %v704 = vunpack.c.l.b16 %v672
    %v705 = vunpack.c.l.b16 %v673
    %v706 = vunpack.c.l.b16 %v674
    %v707 = vunpack.c.l.b16 %v675
    %v708 = vunpack.c.l.b16 %v676
    %v709 = vunpack.c.l.b16 %v677
    %v710 = vunpack.c.l.b16 %v678
    %v711 = vunpack.c.l.b16 %v679
    %v712 = vunpack.c.l.b16 %v680
    %v713 = vunpack.c.l.b16 %v681
    %v714 = vunpack.c.l.b16 %v682
    %v715 = vunpack.c.l.b16 %v683
    %v716 = vunpack.c.l.b16 %v684
    %v717 = vunpack.c.l.b16 %v685
    %v718 = vpack.c.b16 %v703, %v702
    %v719 = vpack.c.b16 %v705, %v704
    %v720 = vpack.c.b16 %v707, %v706
    %v721 = vpack.c.b16 %v709, %v708
    %v722 = vpack.c.b16 %v711, %v710
    %v723 = vpack.c.b16 %v713, %v712
    %v724 = vpack.c.b16 %v715, %v714
    %v725 = vpack.c.b16 %v717, %v716
    %734 = vmatprep.subr.bf16.mxu0 0
    %735 = vmatpush1.bf16.msra.mxu0 %v718
    %736 = vmatprep.subr.bf16.mxu0 0
    %737 = vmatpush1.bf16.msra.mxu0 %v719
    %738 = vmatprep.subr.bf16.mxu0 0
    %739 = vmatpush1.bf16.msra.mxu0 %v720
    %740 = vmatprep.subr.bf16.mxu0 0
    %741 = vmatpush1.bf16.msra.mxu0 %v721
    %742 = vmatprep.subr.bf16.mxu0 0
    %743 = vmatpush1.bf16.msra.mxu0 %v722
    %744 = vmatprep.subr.bf16.mxu0 0
    %745 = vmatpush1.bf16.msra.mxu0 %v723
    %746 = vmatprep.subr.bf16.mxu0 0
    %747 = vmatpush1.bf16.msra.mxu0 %v724
    %748 = vmatprep.subr.bf16.mxu0 0
    %749 = vmatpush1.bf16.msra.mxu0 %v725
    %750 = vmatprep.subr.bf16.mxu0 0
    %751 = vmatpush1.bf16.msra.mxu0 0
    %752 = vmatprep.subr.bf16.mxu0 0
    %753 = vmatpush1.bf16.msra.mxu0 0
    %754 = vmatprep.subr.bf16.mxu0 0
    %755 = vmatpush1.bf16.msra.mxu0 0
    %756 = vmatprep.subr.bf16.mxu0 0
    %757 = vmatpush1.bf16.msra.mxu0 0
    %758 = vmatprep.subr.bf16.mxu0 0
    %759 = vmatpush1.bf16.msra.mxu0 0
    %760 = vmatprep.subr.bf16.mxu0 0
    %761 = vmatpush1.bf16.msra.mxu0 0
    %762 = vmatprep.subr.bf16.mxu0 0
    %763 = vmatpush1.bf16.msra.mxu0 0
    %764 = vmatprep.subr.bf16.mxu0 0
    %765 = vmatpush1.bf16.msra.mxu0 0
    %766 = vmatprep.mubr.bf16.mxu0 0
    %767 = vmatmul.mubr.bf16.gmra.mrb[0].mxu0 %v638
    %v768 = vpop.f32.mrb[0].mxu0
    %v769 = vadd.f32 0.0, %v768
    %v770 = vpop.f32.mrb[0].mxu0
    %v771 = vpop.f32.mrb[0].mxu0
    %v772 = vadd.f32 0.0, %v771
    %v773 = vpop.f32.mrb[0].mxu0
    %774 = vmatprep.mubr.bf16.mxu0 0
    %775 = vmatmul.mubr.bf16.gmra.mrb[0].mxu0 %v639
    %v776 = vpop.f32.mrb[0].mxu0
    %v777 = vadd.f32 0.0, %v776
    %v778 = vpop.f32.mrb[0].mxu0
    %v779 = vpop.f32.mrb[0].mxu0
    %v780 = vadd.f32 0.0, %v779
    %v781 = vpop.f32.mrb[0].mxu0
    %782 = vmatprep.mubr.bf16.mxu0 0
    %783 = vmatmul.mubr.bf16.gmra.mrb[0].mxu0 %v640
    %v784 = vpop.f32.mrb[0].mxu0
    %v785 = vadd.f32 0.0, %v784
    %v786 = vpop.f32.mrb[0].mxu0
    %v787 = vpop.f32.mrb[0].mxu0
    %v788 = vadd.f32 0.0, %v787
    %v789 = vpop.f32.mrb[0].mxu0
    %790 = vmatprep.mubr.bf16.mxu0 0
    %791 = vmatmul.mubr.bf16.gmra.mrb[0].mxu0 %v641
    %v792 = vpop.f32.mrb[0].mxu0
    %v793 = vadd.f32 0.0, %v792
    %v794 = vpop.f32.mrb[0].mxu0
    %v795 = vpop.f32.mrb[0].mxu0
    %v796 = vadd.f32 0.0, %v795
    %v797 = vpop.f32.mrb[0].mxu0
    %798 = vmatprep.mubr.bf16.mxu0 0
    %799 = vmatmul.mubr.bf16.gmra.mrb[0].mxu0 %v642
    %v800 = vpop.f32.mrb[0].mxu0
    %v801 = vadd.f32 0.0, %v800
    %v802 = vpop.f32.mrb[0].mxu0
    %v803 = vpop.f32.mrb[0].mxu0
    %v804 = vadd.f32 0.0, %v803
    %v805 = vpop.f32.mrb[0].mxu0
    %806 = vmatprep.mubr.bf16.mxu0 0
    %807 = vmatmul.mubr.bf16.gmra.mrb[0].mxu0 %v643
    %v808 = vpop.f32.mrb[0].mxu0
    %v809 = vadd.f32 0.0, %v808
    %v810 = vpop.f32.mrb[0].mxu0
    %v811 = vpop.f32.mrb[0].mxu0
    %v812 = vadd.f32 0.0, %v811
    %v813 = vpop.f32.mrb[0].mxu0
    %814 = vmatprep.mubr.bf16.mxu0 0
    %815 = vmatmul.mubr.bf16.gmra.mrb[0].mxu0 %v644
    %v816 = vpop.f32.mrb[0].mxu0
    %v817 = vadd.f32 0.0, %v816
    %v818 = vpop.f32.mrb[0].mxu0
    %v819 = vpop.f32.mrb[0].mxu0
    %v820 = vadd.f32 0.0, %v819
    %v821 = vpop.f32.mrb[0].mxu0
    %822 = vmatprep.mubr.bf16.mxu0 0
    %823 = vmatmul.mubr.bf16.gmra.mrb[0].mxu0 %v645
    %v824 = vpop.f32.mrb[0].mxu0
    %v825 = vadd.f32 0.0, %v824
    %v826 = vpop.f32.mrb[0].mxu0
    %v827 = vpop.f32.mrb[0].mxu0
    %v828 = vadd.f32 0.0, %v827
    %v829 = vpop.f32.mrb[0].mxu0
    %830 = vmatprep.mubr.bf16.mxu0 0
    %831 = vmatmul.mubr.bf16.gmra.mrb[0].mxu0 %v646
    %v832 = vpop.f32.mrb[0].mxu0
    %v833 = vadd.f32 0.0, %v832
    %v834 = vpop.f32.mrb[0].mxu0
    %v835 = vpop.f32.mrb[0].mxu0
    %v836 = vadd.f32 0.0, %v835
    %v837 = vpop.f32.mrb[0].mxu0
    %838 = vmatprep.mubr.bf16.mxu0 0
    %839 = vmatmul.mubr.bf16.gmra.mrb[0].mxu0 %v647
    %v840 = vpop.f32.mrb[0].mxu0
    %v841 = vadd.f32 0.0, %v840
    %v842 = vpop.f32.mrb[0].mxu0
    %v843 = vpop.f32.mrb[0].mxu0
    %v844 = vadd.f32 0.0, %v843
    %v845 = vpop.f32.mrb[0].mxu0
    %846 = vmatprep.mubr.bf16.mxu0 0
    %847 = vmatmul.mubr.bf16.gmra.mrb[0].mxu0 %v648
    %v848 = vpop.f32.mrb[0].mxu0
    %v849 = vadd.f32 0.0, %v848
    %v850 = vpop.f32.mrb[0].mxu0
    %v851 = vpop.f32.mrb[0].mxu0
    %v852 = vadd.f32 0.0, %v851
    %v853 = vpop.f32.mrb[0].mxu0
    %854 = vmatprep.mubr.bf16.mxu0 0
    %855 = vmatmul.mubr.bf16.gmra.mrb[0].mxu0 %v649
    %v856 = vpop.f32.mrb[0].mxu0
    %v857 = vadd.f32 0.0, %v856
    %v858 = vpop.f32.mrb[0].mxu0
    %v859 = vpop.f32.mrb[0].mxu0
    %v860 = vadd.f32 0.0, %v859
    %v861 = vpop.f32.mrb[0].mxu0
    %862 = vmatprep.mubr.bf16.mxu0 0
    %863 = vmatmul.mubr.bf16.gmra.mrb[0].mxu0 %v650
    %v864 = vpop.f32.mrb[0].mxu0
    %v865 = vadd.f32 0.0, %v864
    %v866 = vpop.f32.mrb[0].mxu0
    %v867 = vpop.f32.mrb[0].mxu0
    %v868 = vadd.f32 0.0, %v867
    %v869 = vpop.f32.mrb[0].mxu0
    %870 = vmatprep.mubr.bf16.mxu0 0
    %871 = vmatmul.mubr.bf16.gmra.mrb[0].mxu0 %v651
    %v872 = vpop.f32.mrb[0].mxu0
    %v873 = vadd.f32 0.0, %v872
    %v874 = vpop.f32.mrb[0].mxu0
    %v875 = vpop.f32.mrb[0].mxu0
    %v876 = vadd.f32 0.0, %v875
    %v877 = vpop.f32.mrb[0].mxu0
    %878 = vmatprep.mubr.bf16.mxu0 0
    %879 = vmatmul.mubr.bf16.gmra.mrb[0].mxu0 %v652
    %v880 = vpop.f32.mrb[0].mxu0
    %v881 = vadd.f32 0.0, %v880
    %v882 = vpop.f32.mrb[0].mxu0
    %v883 = vpop.f32.mrb[0].mxu0
    %v884 = vadd.f32 0.0, %v883
    %v885 = vpop.f32.mrb[0].mxu0
    %886 = vmatprep.mubr.bf16.mxu0 0
    %887 = vmatmul.mubr.bf16.gmra.mrb[0].mxu0 %v653
    %v888 = vpop.f32.mrb[0].mxu0
    %v889 = vadd.f32 0.0, %v888
    %v890 = vpop.f32.mrb[0].mxu0
    %v891 = vpop.f32.mrb[0].mxu0
    %v892 = vadd.f32 0.0, %v891
    %v893 = vpop.f32.mrb[0].mxu0
    %894 = vmatprep.mubr.bf16.mxu0 0
    %895 = vmatmul.mubr.bf16.gmra.mrb[0].mxu0 %v654
    %v896 = vpop.f32.mrb[0].mxu0
    %v897 = vadd.f32 0.0, %v896
    %v898 = vpop.f32.mrb[0].mxu0
    %v899 = vpop.f32.mrb[0].mxu0
    %v900 = vadd.f32 0.0, %v899
    %v901 = vpop.f32.mrb[0].mxu0
    %902 = vmatprep.mubr.bf16.mxu0 0
    %903 = vmatmul.mubr.bf16.gmra.mrb[0].mxu0 %v655
    %v904 = vpop.f32.mrb[0].mxu0
    %v905 = vadd.f32 0.0, %v904
    %v906 = vpop.f32.mrb[0].mxu0
    %v907 = vpop.f32.mrb[0].mxu0
    %v908 = vadd.f32 0.0, %v907
    %v909 = vpop.f32.mrb[0].mxu0
    %910 = vmatprep.mubr.bf16.mxu0 0
    %911 = vmatmul.mubr.bf16.gmra.mrb[0].mxu0 %v656
    %v912 = vpop.f32.mrb[0].mxu0
    %v913 = vadd.f32 0.0, %v912
    %v914 = vpop.f32.mrb[0].mxu0
    %v915 = vpop.f32.mrb[0].mxu0
    %v916 = vadd.f32 0.0, %v915
    %v917 = vpop.f32.mrb[0].mxu0
    %918 = vmatprep.mubr.bf16.mxu0 0
    %919 = vmatmul.mubr.bf16.gmra.mrb[0].mxu0 %v657
    %v920 = vpop.f32.mrb[0].mxu0
    %v921 = vadd.f32 0.0, %v920
    %v922 = vpop.f32.mrb[0].mxu0
    %v923 = vpop.f32.mrb[0].mxu0
    %v924 = vadd.f32 0.0, %v923
    %v925 = vpop.f32.mrb[0].mxu0
    %926 = vmatprep.mubr.bf16.mxu0 0
    %927 = vmatmul.mubr.bf16.gmra.mrb[0].mxu0 %v658
    %v928 = vpop.f32.mrb[0].mxu0
    %v929 = vadd.f32 0.0, %v928
    %v930 = vpop.f32.mrb[0].mxu0
    %v931 = vpop.f32.mrb[0].mxu0
    %v932 = vadd.f32 0.0, %v931
    %v933 = vpop.f32.mrb[0].mxu0
    %934 = vmatprep.mubr.bf16.mxu0 0
    %935 = vmatmul.mubr.bf16.gmra.mrb[0].mxu0 %v659
    %v936 = vpop.f32.mrb[0].mxu0
    %v937 = vadd.f32 0.0, %v936
    %v938 = vpop.f32.mrb[0].mxu0
    %v939 = vpop.f32.mrb[0].mxu0
    %v940 = vadd.f32 0.0, %v939
    %v941 = vpop.f32.mrb[0].mxu0
    %942 = vmatprep.mubr.bf16.mxu0 0
    %943 = vmatmul.mubr.bf16.gmra.mrb[0].mxu0 %v660
    %v944 = vpop.f32.mrb[0].mxu0
    %v945 = vadd.f32 0.0, %v944
    %v946 = vpop.f32.mrb[0].mxu0
    %v947 = vpop.f32.mrb[0].mxu0
    %v948 = vadd.f32 0.0, %v947
    %v949 = vpop.f32.mrb[0].mxu0
    %950 = vmatprep.mubr.bf16.mxu0 0
    %951 = vmatmul.mubr.bf16.gmra.mrb[0].mxu0 %v661
    %v952 = vpop.f32.mrb[0].mxu0
    %v953 = vadd.f32 0.0, %v952
    %v954 = vpop.f32.mrb[0].mxu0
    %v955 = vpop.f32.mrb[0].mxu0
    %v956 = vadd.f32 0.0, %v955
    %v957 = vpop.f32.mrb[0].mxu0
    %958 = vmatprep.mubr.bf16.mxu0 0
    %959 = vmatmul.mubr.bf16.gmra.mrb[0].mxu0 %v662
    %v960 = vpop.f32.mrb[0].mxu0
    %v961 = vadd.f32 0.0, %v960
    %v962 = vpop.f32.mrb[0].mxu0
    %v963 = vpop.f32.mrb[0].mxu0
    %v964 = vadd.f32 0.0, %v963
    %v965 = vpop.f32.mrb[0].mxu0
    %966 = vmatprep.mubr.bf16.mxu0 0
    %967 = vmatmul.mubr.bf16.gmra.mrb[0].mxu0 %v663
    %v968 = vpop.f32.mrb[0].mxu0
    %v969 = vadd.f32 0.0, %v968
    %v970 = vpop.f32.mrb[0].mxu0
    %v971 = vpop.f32.mrb[0].mxu0
    %v972 = vadd.f32 0.0, %v971
    %v973 = vpop.f32.mrb[0].mxu0
    %974 = vmatprep.mubr.bf16.mxu0 0
    %975 = vmatmul.mubr.bf16.gmra.mrb[0].mxu0 %v664
    %v976 = vpop.f32.mrb[0].mxu0
    %v977 = vadd.f32 0.0, %v976
    %v978 = vpop.f32.mrb[0].mxu0
    %v979 = vpop.f32.mrb[0].mxu0
    %v980 = vadd.f32 0.0, %v979
    %v981 = vpop.f32.mrb[0].mxu0
    %982 = vmatprep.mubr.bf16.mxu0 0
    %983 = vmatmul.mubr.bf16.gmra.mrb[0].mxu0 %v665
    %v984 = vpop.f32.mrb[0].mxu0
    %v985 = vadd.f32 0.0, %v984
    %v986 = vpop.f32.mrb[0].mxu0
    %v987 = vpop.f32.mrb[0].mxu0
    %v988 = vadd.f32 0.0, %v987
    %v989 = vpop.f32.mrb[0].mxu0
    %990 = vmatprep.mubr.bf16.mxu0 0
    %991 = vmatmul.mubr.bf16.gmra.mrb[0].mxu0 %v666
    %v992 = vpop.f32.mrb[0].mxu0
    %v993 = vadd.f32 0.0, %v992
    %v994 = vpop.f32.mrb[0].mxu0
    %v995 = vpop.f32.mrb[0].mxu0
    %v996 = vadd.f32 0.0, %v995
    %v997 = vpop.f32.mrb[0].mxu0
    %998 = vmatprep.mubr.bf16.mxu0 0
    %999 = vmatmul.mubr.bf16.gmra.mrb[0].mxu0 %v667
    %v1000 = vpop.f32.mrb[0].mxu0
    %v1001 = vadd.f32 0.0, %v1000
    %v1002 = vpop.f32.mrb[0].mxu0
    %v1003 = vpop.f32.mrb[0].mxu0
    %v1004 = vadd.f32 0.0, %v1003
    %v1005 = vpop.f32.mrb[0].mxu0
    %1006 = vmatprep.mubr.bf16.mxu0 0
    %1007 = vmatmul.mubr.bf16.gmra.mrb[0].mxu0 %v668
    %v1008 = vpop.f32.mrb[0].mxu0
    %v1009 = vadd.f32 0.0, %v1008
    %v1010 = vpop.f32.mrb[0].mxu0
    %v1011 = vpop.f32.mrb[0].mxu0
    %v1012 = vadd.f32 0.0, %v1011
    %v1013 = vpop.f32.mrb[0].mxu0
    %1014 = vmatprep.mubr.bf16.mxu0 0
    %1015 = vmatmul.mubr.bf16.gmra.mrb[0].mxu0 %v669
    %v1016 = vpop.f32.mrb[0].mxu0
    %v1017 = vadd.f32 0.0, %v1016
    %v1018 = vpop.f32.mrb[0].mxu0
    %v1019 = vpop.f32.mrb[0].mxu0
    %v1020 = vadd.f32 0.0, %v1019
    %v1021 = vpop.f32.mrb[0].mxu0
    %1022 = vdwg.mxu0
    %v1023 = vsel %vm240, 1, 0
    %v1024 = vsel %vm241, 1, 0
    %v1025 = vsel %vm242, 1, 0
    %v1026 = vsel %vm243, 1, 0
    %v1027 = vsel %vm244, 1, 0
    %v1028 = vsel %vm245, 1, 0
    %v1029 = vsel %vm246, 1, 0
    %v1030 = vsel %vm247, 1, 0
    %v1031 = vsel %vm248, 1, 0
    %v1032 = vsel %vm249, 1, 0
    %v1033 = vsel %vm250, 1, 0
    %v1034 = vsel %vm251, 1, 0
    %v1035 = vsel %vm252, 1, 0
    %v1036 = vsel %vm253, 1, 0
    %v1037 = vsel %vm254, 1, 0
    %v1038 = vsel %vm255, 1, 0
    %v1039 = vsel %vm256, 1, 0
    %v1040 = vsel %vm257, 1, 0
    %v1041 = vsel %vm258, 1, 0
    %v1042 = vsel %vm259, 1, 0
    %v1043 = vsel %vm260, 1, 0
    %v1044 = vsel %vm261, 1, 0
    %v1045 = vsel %vm262, 1, 0
    %v1046 = vsel %vm263, 1, 0
    %v1047 = vsel %vm264, 1, 0
    %v1048 = vsel %vm265, 1, 0
    %v1049 = vsel %vm266, 1, 0
    %v1050 = vsel %vm267, 1, 0
    %v1051 = vsel %vm268, 1, 0
    %v1052 = vsel %vm269, 1, 0
    %v1053 = vsel %vm270, 1, 0
    %v1054 = vsel %vm271, 1, 0
    %v1055 = vsel %vm272, 1, 0
    %v1056 = vsel %vm273, 1, 0
    %v1057 = vsel %vm274, 1, 0
    %v1058 = vsel %vm275, 1, 0
    %v1059 = vsel %vm276, 1, 0
    %v1060 = vsel %vm277, 1, 0
    %v1061 = vsel %vm278, 1, 0
    %v1062 = vsel %vm279, 1, 0
    %v1063 = vsel %vm280, 1, 0
    %v1064 = vsel %vm281, 1, 0
    %v1065 = vsel %vm282, 1, 0
    %v1066 = vsel %vm283, 1, 0
    %v1067 = vsel %vm284, 1, 0
    %v1068 = vsel %vm285, 1, 0
    %v1069 = vsel %vm286, 1, 0
    %v1070 = vsel %vm287, 1, 0
    %v1071 = vsel %vm288, 1, 0
    %v1072 = vsel %vm289, 1, 0
    %v1073 = vsel %vm290, 1, 0
    %v1074 = vsel %vm291, 1, 0
    %v1075 = vsel %vm292, 1, 0
    %v1076 = vsel %vm293, 1, 0
    %v1077 = vsel %vm294, 1, 0
    %v1078 = vsel %vm295, 1, 0
    %v1079 = vsel %vm296, 1, 0
    %v1080 = vsel %vm297, 1, 0
    %v1081 = vsel %vm298, 1, 0
    %v1082 = vsel %vm299, 1, 0
    %v1083 = vsel %vm300, 1, 0
    %v1084 = vsel %vm301, 1, 0
    %v1085 = vsel %vm302, 1, 0
    %v1086 = vsel %vm303, 1, 0
    %vm1087 = vcmp.eq.s32.totalorder %v1023, 1
    %vm1088 = vcmp.eq.s32.totalorder %v1024, 1
    %vm1089 = vcmp.eq.s32.totalorder %v1025, 1
    %vm1090 = vcmp.eq.s32.totalorder %v1026, 1
    %vm1091 = vcmp.eq.s32.totalorder %v1027, 1
    %vm1092 = vcmp.eq.s32.totalorder %v1028, 1
    %vm1093 = vcmp.eq.s32.totalorder %v1029, 1
    %vm1094 = vcmp.eq.s32.totalorder %v1030, 1
    %vm1095 = vcmp.eq.s32.totalorder %v1031, 1
    %vm1096 = vcmp.eq.s32.totalorder %v1032, 1
    %vm1097 = vcmp.eq.s32.totalorder %v1033, 1
    %vm1098 = vcmp.eq.s32.totalorder %v1034, 1
    %vm1099 = vcmp.eq.s32.totalorder %v1035, 1
    %vm1100 = vcmp.eq.s32.totalorder %v1036, 1
    %vm1101 = vcmp.eq.s32.totalorder %v1037, 1
    %vm1102 = vcmp.eq.s32.totalorder %v1038, 1
    %vm1103 = vcmp.eq.s32.totalorder %v1039, 1
    %vm1104 = vcmp.eq.s32.totalorder %v1040, 1
    %vm1105 = vcmp.eq.s32.totalorder %v1041, 1
    %vm1106 = vcmp.eq.s32.totalorder %v1042, 1
    %vm1107 = vcmp.eq.s32.totalorder %v1043, 1
    %vm1108 = vcmp.eq.s32.totalorder %v1044, 1
    %vm1109 = vcmp.eq.s32.totalorder %v1045, 1
    %vm1110 = vcmp.eq.s32.totalorder %v1046, 1
    %vm1111 = vcmp.eq.s32.totalorder %v1047, 1
    %vm1112 = vcmp.eq.s32.totalorder %v1048, 1
    %vm1113 = vcmp.eq.s32.totalorder %v1049, 1
    %vm1114 = vcmp.eq.s32.totalorder %v1050, 1
    %vm1115 = vcmp.eq.s32.totalorder %v1051, 1
    %vm1116 = vcmp.eq.s32.totalorder %v1052, 1
    %vm1117 = vcmp.eq.s32.totalorder %v1053, 1
    %vm1118 = vcmp.eq.s32.totalorder %v1054, 1
    %vm1119 = vcmp.eq.s32.totalorder %v1055, 1
    %vm1120 = vcmp.eq.s32.totalorder %v1056, 1
    %vm1121 = vcmp.eq.s32.totalorder %v1057, 1
    %vm1122 = vcmp.eq.s32.totalorder %v1058, 1
    %vm1123 = vcmp.eq.s32.totalorder %v1059, 1
    %vm1124 = vcmp.eq.s32.totalorder %v1060, 1
    %vm1125 = vcmp.eq.s32.totalorder %v1061, 1
    %vm1126 = vcmp.eq.s32.totalorder %v1062, 1
    %vm1127 = vcmp.eq.s32.totalorder %v1063, 1
    %vm1128 = vcmp.eq.s32.totalorder %v1064, 1
    %vm1129 = vcmp.eq.s32.totalorder %v1065, 1
    %vm1130 = vcmp.eq.s32.totalorder %v1066, 1
    %vm1131 = vcmp.eq.s32.totalorder %v1067, 1
    %vm1132 = vcmp.eq.s32.totalorder %v1068, 1
    %vm1133 = vcmp.eq.s32.totalorder %v1069, 1
    %vm1134 = vcmp.eq.s32.totalorder %v1070, 1
    %vm1135 = vcmp.eq.s32.totalorder %v1071, 1
    %vm1136 = vcmp.eq.s32.totalorder %v1072, 1
    %vm1137 = vcmp.eq.s32.totalorder %v1073, 1
    %vm1138 = vcmp.eq.s32.totalorder %v1074, 1
    %vm1139 = vcmp.eq.s32.totalorder %v1075, 1
    %vm1140 = vcmp.eq.s32.totalorder %v1076, 1
    %vm1141 = vcmp.eq.s32.totalorder %v1077, 1
    %vm1142 = vcmp.eq.s32.totalorder %v1078, 1
    %vm1143 = vcmp.eq.s32.totalorder %v1079, 1
    %vm1144 = vcmp.eq.s32.totalorder %v1080, 1
    %vm1145 = vcmp.eq.s32.totalorder %v1081, 1
    %vm1146 = vcmp.eq.s32.totalorder %v1082, 1
    %vm1147 = vcmp.eq.s32.totalorder %v1083, 1
    %vm1148 = vcmp.eq.s32.totalorder %v1084, 1
    %vm1149 = vcmp.eq.s32.totalorder %v1085, 1
    %vm1150 = vcmp.eq.s32.totalorder %v1086, 1
    %v1151 = vsel %vm1087, %v769, 0.0
    %v1152 = vsel %vm1088, %v772, 0.0
    %v1153 = vsel %vm1089, %v777, 0.0
    %v1154 = vsel %vm1090, %v780, 0.0
    %v1155 = vsel %vm1091, %v785, 0.0
    %v1156 = vsel %vm1092, %v788, 0.0
    %v1157 = vsel %vm1093, %v793, 0.0
    %v1158 = vsel %vm1094, %v796, 0.0
    %v1159 = vsel %vm1095, %v801, 0.0
    %v1160 = vsel %vm1096, %v804, 0.0
    %v1161 = vsel %vm1097, %v809, 0.0
    %v1162 = vsel %vm1098, %v812, 0.0
    %v1163 = vsel %vm1099, %v817, 0.0
    %v1164 = vsel %vm1100, %v820, 0.0
    %v1165 = vsel %vm1101, %v825, 0.0
    %v1166 = vsel %vm1102, %v828, 0.0
    %v1167 = vsel %vm1103, %v833, 0.0
    %v1168 = vsel %vm1104, %v836, 0.0
    %v1169 = vsel %vm1105, %v841, 0.0
    %v1170 = vsel %vm1106, %v844, 0.0
    %v1171 = vsel %vm1107, %v849, 0.0
    %v1172 = vsel %vm1108, %v852, 0.0
    %v1173 = vsel %vm1109, %v857, 0.0
    %v1174 = vsel %vm1110, %v860, 0.0
    %v1175 = vsel %vm1111, %v865, 0.0
    %v1176 = vsel %vm1112, %v868, 0.0
    %v1177 = vsel %vm1113, %v873, 0.0
    %v1178 = vsel %vm1114, %v876, 0.0
    %v1179 = vsel %vm1115, %v881, 0.0
    %v1180 = vsel %vm1116, %v884, 0.0
    %v1181 = vsel %vm1117, %v889, 0.0
    %v1182 = vsel %vm1118, %v892, 0.0
    %v1183 = vsel %vm1119, %v897, 0.0
    %v1184 = vsel %vm1120, %v900, 0.0
    %v1185 = vsel %vm1121, %v905, 0.0
    %v1186 = vsel %vm1122, %v908, 0.0
    %v1187 = vsel %vm1123, %v913, 0.0
    %v1188 = vsel %vm1124, %v916, 0.0
    %v1189 = vsel %vm1125, %v921, 0.0
    %v1190 = vsel %vm1126, %v924, 0.0
    %v1191 = vsel %vm1127, %v929, 0.0
    %v1192 = vsel %vm1128, %v932, 0.0
    %v1193 = vsel %vm1129, %v937, 0.0
    %v1194 = vsel %vm1130, %v940, 0.0
    %v1195 = vsel %vm1131, %v945, 0.0
    %v1196 = vsel %vm1132, %v948, 0.0
    %v1197 = vsel %vm1133, %v953, 0.0
    %v1198 = vsel %vm1134, %v956, 0.0
    %v1199 = vsel %vm1135, %v961, 0.0
    %v1200 = vsel %vm1136, %v964, 0.0
    %v1201 = vsel %vm1137, %v969, 0.0
    %v1202 = vsel %vm1138, %v972, 0.0
    %v1203 = vsel %vm1139, %v977, 0.0
    %v1204 = vsel %vm1140, %v980, 0.0
    %v1205 = vsel %vm1141, %v985, 0.0
    %v1206 = vsel %vm1142, %v988, 0.0
    %v1207 = vsel %vm1143, %v993, 0.0
    %v1208 = vsel %vm1144, %v996, 0.0
    %v1209 = vsel %vm1145, %v1001, 0.0
    %v1210 = vsel %vm1146, %v1004, 0.0
    %v1211 = vsel %vm1147, %v1009, 0.0
    %v1212 = vsel %vm1148, %v1012, 0.0
    %v1213 = vsel %vm1149, %v1017, 0.0
    %v1214 = vsel %vm1150, %v1020, 0.0
    %v1215 = vpack.c.bf16 %v1152, %v1151
    %v1216 = vpack.c.bf16 %v1154, %v1153
    %v1217 = vpack.c.bf16 %v1156, %v1155
    %v1218 = vpack.c.bf16 %v1158, %v1157
    %v1219 = vpack.c.bf16 %v1160, %v1159
    %v1220 = vpack.c.bf16 %v1162, %v1161
    %v1221 = vpack.c.bf16 %v1164, %v1163
    %v1222 = vpack.c.bf16 %v1166, %v1165
    %v1223 = vpack.c.bf16 %v1168, %v1167
    %v1224 = vpack.c.bf16 %v1170, %v1169
    %v1225 = vpack.c.bf16 %v1172, %v1171
    %v1226 = vpack.c.bf16 %v1174, %v1173
    %v1227 = vpack.c.bf16 %v1176, %v1175
    %v1228 = vpack.c.bf16 %v1178, %v1177
    %v1229 = vpack.c.bf16 %v1180, %v1179
    %v1230 = vpack.c.bf16 %v1182, %v1181
    %v1231 = vpack.c.bf16 %v1184, %v1183
    %v1232 = vpack.c.bf16 %v1186, %v1185
    %v1233 = vpack.c.bf16 %v1188, %v1187
    %v1234 = vpack.c.bf16 %v1190, %v1189
    %v1235 = vpack.c.bf16 %v1192, %v1191
    %v1236 = vpack.c.bf16 %v1194, %v1193
    %v1237 = vpack.c.bf16 %v1196, %v1195
    %v1238 = vpack.c.bf16 %v1198, %v1197
    %v1239 = vpack.c.bf16 %v1200, %v1199
    %v1240 = vpack.c.bf16 %v1202, %v1201
    %v1241 = vpack.c.bf16 %v1204, %v1203
    %v1242 = vpack.c.bf16 %v1206, %v1205
    %v1243 = vpack.c.bf16 %v1208, %v1207
    %v1244 = vpack.c.bf16 %v1210, %v1209
    %v1245 = vpack.c.bf16 %v1212, %v1211
    %v1246 = vpack.c.bf16 %v1214, %v1213
    %v1279 = vunpack.c.l.b16 %v1215
    %v1280 = vunpack.c.h.b16 %v1215
    %v1281 = vunpack.c.l.b16 %v1216
    %v1282 = vunpack.c.h.b16 %v1216
    %v1283 = vunpack.c.l.b16 %v1217
    %v1284 = vunpack.c.h.b16 %v1217
    %v1285 = vunpack.c.l.b16 %v1218
    %v1286 = vunpack.c.h.b16 %v1218
    %v1287 = vunpack.c.l.b16 %v1219
    %v1288 = vunpack.c.h.b16 %v1219
    %v1289 = vunpack.c.l.b16 %v1220
    %v1290 = vunpack.c.h.b16 %v1220
    %v1291 = vunpack.c.l.b16 %v1221
    %v1292 = vunpack.c.h.b16 %v1221
    %v1293 = vunpack.c.l.b16 %v1222
    %v1294 = vunpack.c.h.b16 %v1222
    %v1295 = vunpack.c.l.b16 %v1223
    %v1296 = vunpack.c.h.b16 %v1223
    %v1297 = vunpack.c.l.b16 %v1224
    %v1298 = vunpack.c.h.b16 %v1224
    %v1299 = vunpack.c.l.b16 %v1225
    %v1300 = vunpack.c.h.b16 %v1225
    %v1301 = vunpack.c.l.b16 %v1226
    %v1302 = vunpack.c.h.b16 %v1226
    %v1303 = vunpack.c.l.b16 %v1227
    %v1304 = vunpack.c.h.b16 %v1227
    %v1305 = vunpack.c.l.b16 %v1228
    %v1306 = vunpack.c.h.b16 %v1228
    %v1307 = vunpack.c.l.b16 %v1229
    %v1308 = vunpack.c.h.b16 %v1229
    %v1309 = vunpack.c.l.b16 %v1230
    %v1310 = vunpack.c.h.b16 %v1230
    %v1311 = vunpack.c.l.b16 %v1231
    %v1312 = vunpack.c.h.b16 %v1231
    %v1313 = vunpack.c.l.b16 %v1232
    %v1314 = vunpack.c.h.b16 %v1232
    %v1315 = vunpack.c.l.b16 %v1233
    %v1316 = vunpack.c.h.b16 %v1233
    %v1317 = vunpack.c.l.b16 %v1234
    %v1318 = vunpack.c.h.b16 %v1234
    %v1319 = vunpack.c.l.b16 %v1235
    %v1320 = vunpack.c.h.b16 %v1235
    %v1321 = vunpack.c.l.b16 %v1236
    %v1322 = vunpack.c.h.b16 %v1236
    %v1323 = vunpack.c.l.b16 %v1237
    %v1324 = vunpack.c.h.b16 %v1237
    %v1325 = vunpack.c.l.b16 %v1238
    %v1326 = vunpack.c.h.b16 %v1238
    %v1327 = vunpack.c.l.b16 %v1239
    %v1328 = vunpack.c.h.b16 %v1239
    %v1329 = vunpack.c.l.b16 %v1240
    %v1330 = vunpack.c.h.b16 %v1240
    %v1331 = vunpack.c.l.b16 %v1241
    %v1332 = vunpack.c.h.b16 %v1241
    %v1333 = vunpack.c.l.b16 %v1242
    %v1334 = vunpack.c.h.b16 %v1242
    %v1335 = vunpack.c.l.b16 %v1243
    %v1336 = vunpack.c.h.b16 %v1243
    %v1337 = vunpack.c.l.b16 %v1244
    %v1338 = vunpack.c.h.b16 %v1244
    %v1339 = vunpack.c.l.b16 %v1245
    %v1340 = vunpack.c.h.b16 %v1245
    %v1341 = vunpack.c.l.b16 %v1246
    %v1342 = vunpack.c.h.b16 %v1246
    %v1343 = vpack.c.b16 %v1279, %v1279
    %v1344 = vpack.c.b16 %v1280, %v1280
    %v1345 = vpack.c.b16 %v1281, %v1281
    %v1346 = vpack.c.b16 %v1282, %v1282
    %v1347 = vpack.c.b16 %v1283, %v1283
    %v1348 = vpack.c.b16 %v1284, %v1284
    %v1349 = vpack.c.b16 %v1285, %v1285
    %v1350 = vpack.c.b16 %v1286, %v1286
    %v1351 = vpack.c.b16 %v1287, %v1287
    %v1352 = vpack.c.b16 %v1288, %v1288
    %v1353 = vpack.c.b16 %v1289, %v1289
    %v1354 = vpack.c.b16 %v1290, %v1290
    %v1355 = vpack.c.b16 %v1291, %v1291
    %v1356 = vpack.c.b16 %v1292, %v1292
    %v1357 = vpack.c.b16 %v1293, %v1293
    %v1358 = vpack.c.b16 %v1294, %v1294
    %v1359 = vpack.c.b16 %v1295, %v1295
    %v1360 = vpack.c.b16 %v1296, %v1296
    %v1361 = vpack.c.b16 %v1297, %v1297
    %v1362 = vpack.c.b16 %v1298, %v1298
    %v1363 = vpack.c.b16 %v1299, %v1299
    %v1364 = vpack.c.b16 %v1300, %v1300
    %v1365 = vpack.c.b16 %v1301, %v1301
    %v1366 = vpack.c.b16 %v1302, %v1302
    %v1367 = vpack.c.b16 %v1303, %v1303
    %v1368 = vpack.c.b16 %v1304, %v1304
    %v1369 = vpack.c.b16 %v1305, %v1305
    %v1370 = vpack.c.b16 %v1306, %v1306
    %v1371 = vpack.c.b16 %v1307, %v1307
    %v1372 = vpack.c.b16 %v1308, %v1308
    %v1373 = vpack.c.b16 %v1309, %v1309
    %v1374 = vpack.c.b16 %v1310, %v1310
    %v1375 = vpack.c.b16 %v1311, %v1311
    %v1376 = vpack.c.b16 %v1312, %v1312
    %v1377 = vpack.c.b16 %v1313, %v1313
    %v1378 = vpack.c.b16 %v1314, %v1314
    %v1379 = vpack.c.b16 %v1315, %v1315
    %v1380 = vpack.c.b16 %v1316, %v1316
    %v1381 = vpack.c.b16 %v1317, %v1317
    %v1382 = vpack.c.b16 %v1318, %v1318
    %v1383 = vpack.c.b16 %v1319, %v1319
    %v1384 = vpack.c.b16 %v1320, %v1320
    %v1385 = vpack.c.b16 %v1321, %v1321
    %v1386 = vpack.c.b16 %v1322, %v1322
    %v1387 = vpack.c.b16 %v1323, %v1323
    %v1388 = vpack.c.b16 %v1324, %v1324
    %v1389 = vpack.c.b16 %v1325, %v1325
    %v1390 = vpack.c.b16 %v1326, %v1326
    %v1391 = vpack.c.b16 %v1327, %v1327
    %v1392 = vpack.c.b16 %v1328, %v1328
    %v1393 = vpack.c.b16 %v1329, %v1329
    %v1394 = vpack.c.b16 %v1330, %v1330
    %v1395 = vpack.c.b16 %v1331, %v1331
    %v1396 = vpack.c.b16 %v1332, %v1332
    %v1397 = vpack.c.b16 %v1333, %v1333
    %v1398 = vpack.c.b16 %v1334, %v1334
    %v1399 = vpack.c.b16 %v1335, %v1335
    %v1400 = vpack.c.b16 %v1336, %v1336
    %v1401 = vpack.c.b16 %v1337, %v1337
    %v1402 = vpack.c.b16 %v1338, %v1338
    %v1403 = vpack.c.b16 %v1339, %v1339
    %v1404 = vpack.c.b16 %v1340, %v1340
    %v1405 = vpack.c.b16 %v1341, %v1341
    %v1406 = vpack.c.b16 %v1342, %v1342
    %1471 = vst [vmem:[#allocation13] sm:$0xf] %v1343
    %1472 = vst [vmem:[#allocation13 + $0x4] sm:$0xf] %v1344
    %1473 = vst [vmem:[#allocation13 + $0x8] sm:$0xf] %v1345
    %1474 = vst [vmem:[#allocation13 + $0xc] sm:$0xf] %v1346
    %1475 = vst [vmem:[#allocation13 + $0x10] sm:$0xf] %v1347
    %1476 = vst [vmem:[#allocation13 + $0x14] sm:$0xf] %v1348
    %1477 = vst [vmem:[#allocation13 + $0x18] sm:$0xf] %v1349
    %1478 = vst [vmem:[#allocation13 + $0x1c] sm:$0xf] %v1350
    %1479 = vst [vmem:[#allocation13 + $0x20] sm:$0xf] %v1351
    %1480 = vst [vmem:[#allocation13 + $0x24] sm:$0xf] %v1352
    %1481 = vst [vmem:[#allocation13 + $0x28] sm:$0xf] %v1353
    %1482 = vst [vmem:[#allocation13 + $0x2c] sm:$0xf] %v1354
    %1483 = vst [vmem:[#allocation13 + $0x30] sm:$0xf] %v1355
    %1484 = vst [vmem:[#allocation13 + $0x34] sm:$0xf] %v1356
    %1485 = vst [vmem:[#allocation13 + $0x38] sm:$0xf] %v1357
    %1486 = vst [vmem:[#allocation13 + $0x3c] sm:$0xf] %v1358
    %1487 = vst [vmem:[#allocation13 + $0x40] sm:$0xf] %v1359
    %1488 = vst [vmem:[#allocation13 + $0x44] sm:$0xf] %v1360
    %1489 = vst [vmem:[#allocation13 + $0x48] sm:$0xf] %v1361
    %1490 = vst [vmem:[#allocation13 + $0x4c] sm:$0xf] %v1362
    %1491 = vst [vmem:[#allocation13 + $0x50] sm:$0xf] %v1363
    %1492 = vst [vmem:[#allocation13 + $0x54] sm:$0xf] %v1364
    %1493 = vst [vmem:[#allocation13 + $0x58] sm:$0xf] %v1365
    %1494 = vst [vmem:[#allocation13 + $0x5c] sm:$0xf] %v1366
    %1495 = vst [vmem:[#allocation13 + $0x60] sm:$0xf] %v1367
    %1496 = vst [vmem:[#allocation13 + $0x64] sm:$0xf] %v1368
    %1497 = vst [vmem:[#allocation13 + $0x68] sm:$0xf] %v1369
    %1498 = vst [vmem:[#allocation13 + $0x6c] sm:$0xf] %v1370
    %1499 = vst [vmem:[#allocation13 + $0x70] sm:$0xf] %v1371
    %1500 = vst [vmem:[#allocation13 + $0x74] sm:$0xf] %v1372
    %1501 = vst [vmem:[#allocation13 + $0x78] sm:$0xf] %v1373
    %1502 = vst [vmem:[#allocation13 + $0x7c] sm:$0xf] %v1374
    %1503 = vst [vmem:[#allocation13 + $0x80] sm:$0xf] %v1375
    %1504 = vst [vmem:[#allocation13 + $0x84] sm:$0xf] %v1376
    %1505 = vst [vmem:[#allocation13 + $0x88] sm:$0xf] %v1377
    %1506 = vst [vmem:[#allocation13 + $0x8c] sm:$0xf] %v1378
    %1507 = vst [vmem:[#allocation13 + $0x90] sm:$0xf] %v1379
    %1508 = vst [vmem:[#allocation13 + $0x94] sm:$0xf] %v1380
    %1509 = vst [vmem:[#allocation13 + $0x98] sm:$0xf] %v1381
    %1510 = vst [vmem:[#allocation13 + $0x9c] sm:$0xf] %v1382
    %1511 = vst [vmem:[#allocation13 + $0xa0] sm:$0xf] %v1383
    %1512 = vst [vmem:[#allocation13 + $0xa4] sm:$0xf] %v1384
    %1513 = vst [vmem:[#allocation13 + $0xa8] sm:$0xf] %v1385
    %1514 = vst [vmem:[#allocation13 + $0xac] sm:$0xf] %v1386
    %1515 = vst [vmem:[#allocation13 + $0xb0] sm:$0xf] %v1387
    %1516 = vst [vmem:[#allocation13 + $0xb4] sm:$0xf] %v1388
    %1517 = vst [vmem:[#allocation13 + $0xb8] sm:$0xf] %v1389
    %1518 = vst [vmem:[#allocation13 + $0xbc] sm:$0xf] %v1390
    %1519 = vst [vmem:[#allocation13 + $0xc0] sm:$0xf] %v1391
    %1520 = vst [vmem:[#allocation13 + $0xc4] sm:$0xf] %v1392
    %1521 = vst [vmem:[#allocation13 + $0xc8] sm:$0xf] %v1393
    %1522 = vst [vmem:[#allocation13 + $0xcc] sm:$0xf] %v1394
    %1523 = vst [vmem:[#allocation13 + $0xd0] sm:$0xf] %v1395
    %1524 = vst [vmem:[#allocation13 + $0xd4] sm:$0xf] %v1396
    %1525 = vst [vmem:[#allocation13 + $0xd8] sm:$0xf] %v1397
    %1526 = vst [vmem:[#allocation13 + $0xdc] sm:$0xf] %v1398
    %1527 = vst [vmem:[#allocation13 + $0xe0] sm:$0xf] %v1399
    %1528 = vst [vmem:[#allocation13 + $0xe4] sm:$0xf] %v1400
    %1529 = vst [vmem:[#allocation13 + $0xe8] sm:$0xf] %v1401
    %1530 = vst [vmem:[#allocation13 + $0xec] sm:$0xf] %v1402
    %1531 = vst [vmem:[#allocation13 + $0xf0] sm:$0xf] %v1403
    %1532 = vst [vmem:[#allocation13 + $0xf4] sm:$0xf] %v1404
    %1533 = vst [vmem:[#allocation13 + $0xf8] sm:$0xf] %v1405
    %1534 = vst [vmem:[#allocation13 + $0xfc] sm:$0xf] %v1406
    %v1535 = vadd.f32 %v1151, %v1152
    %v1536 = vadd.f32 %v1535, %v1153
    %v1537 = vadd.f32 %v1536, %v1154
    %v1538 = vadd.f32 %v1537, %v1155
    %v1539 = vadd.f32 %v1538, %v1156
    %v1540 = vadd.f32 %v1539, %v1157
    %v1541 = vadd.f32 %v1540, %v1158
    %v1542 = vadd.f32 %v1541, %v1159
    %v1543 = vadd.f32 %v1542, %v1160
    %v1544 = vadd.f32 %v1543, %v1161
    %v1545 = vadd.f32 %v1544, %v1162
    %v1546 = vadd.f32 %v1545, %v1163
    %v1547 = vadd.f32 %v1546, %v1164
    %v1548 = vadd.f32 %v1547, %v1165
    %v1549 = vadd.f32 %v1548, %v1166
    %v1550 = vadd.f32 %v1549, %v1167
    %v1551 = vadd.f32 %v1550, %v1168
    %v1552 = vadd.f32 %v1551, %v1169
    %v1553 = vadd.f32 %v1552, %v1170
    %v1554 = vadd.f32 %v1553, %v1171
    %v1555 = vadd.f32 %v1554, %v1172
    %v1556 = vadd.f32 %v1555, %v1173
    %v1557 = vadd.f32 %v1556, %v1174
    %v1558 = vadd.f32 %v1557, %v1175
    %v1559 = vadd.f32 %v1558, %v1176
    %v1560 = vadd.f32 %v1559, %v1177
    %v1561 = vadd.f32 %v1560, %v1178
    %v1562 = vadd.f32 %v1561, %v1179
    %v1563 = vadd.f32 %v1562, %v1180
    %v1564 = vadd.f32 %v1563, %v1181
    %v1565 = vadd.f32 %v1564, %v1182
    %v1566 = vadd.f32 %v1565, %v1183
    %v1567 = vadd.f32 %v1566, %v1184
    %v1568 = vadd.f32 %v1567, %v1185
    %v1569 = vadd.f32 %v1568, %v1186
    %v1570 = vadd.f32 %v1569, %v1187
    %v1571 = vadd.f32 %v1570, %v1188
    %v1572 = vadd.f32 %v1571, %v1189
    %v1573 = vadd.f32 %v1572, %v1190
    %v1574 = vadd.f32 %v1573, %v1191
    %v1575 = vadd.f32 %v1574, %v1192
    %v1576 = vadd.f32 %v1575, %v1193
    %v1577 = vadd.f32 %v1576, %v1194
    %v1578 = vadd.f32 %v1577, %v1195
    %v1579 = vadd.f32 %v1578, %v1196
    %v1580 = vadd.f32 %v1579, %v1197
    %v1581 = vadd.f32 %v1580, %v1198
    %v1582 = vadd.f32 %v1581, %v1199
    %v1583 = vadd.f32 %v1582, %v1200
    %v1584 = vadd.f32 %v1583, %v1201
    %v1585 = vadd.f32 %v1584, %v1202
    %v1586 = vadd.f32 %v1585, %v1203
    %v1587 = vadd.f32 %v1586, %v1204
    %v1588 = vadd.f32 %v1587, %v1205
    %v1589 = vadd.f32 %v1588, %v1206
    %v1590 = vadd.f32 %v1589, %v1207
    %v1591 = vadd.f32 %v1590, %v1208
    %v1592 = vadd.f32 %v1591, %v1209
    %v1593 = vadd.f32 %v1592, %v1210
    %v1594 = vadd.f32 %v1593, %v1211
    %v1595 = vadd.f32 %v1594, %v1212
    %v1596 = vadd.f32 %v1595, %v1213
    %v1597 = vadd.f32 %v1596, %v1214
    %v1598 = vrot.slane %v1597, 4
    %v1599 = vadd.f32 %v1597, %v1598
    %v1600 = vrot.slane %v1599, 2
    %v1601 = vadd.f32 %v1599, %v1600
    %v1602 = vrot.slane %v1601, 1
    %v1603 = vadd.f32 %v1601, %v1602
    %1604 = vst [vmem:[#allocation16] sm:$0x1] %v1603
    %v1605 = vmul.f32 %v1151, %v1151
    %v1606 = vmul.f32 %v1152, %v1152
    %v1607 = vmul.f32 %v1153, %v1153
    %v1608 = vmul.f32 %v1154, %v1154
    %v1609 = vmul.f32 %v1155, %v1155
    %v1610 = vmul.f32 %v1156, %v1156
    %v1611 = vmul.f32 %v1157, %v1157
    %v1612 = vmul.f32 %v1158, %v1158
    %v1613 = vmul.f32 %v1159, %v1159
    %v1614 = vmul.f32 %v1160, %v1160
    %v1615 = vmul.f32 %v1161, %v1161
    %v1616 = vmul.f32 %v1162, %v1162
    %v1617 = vmul.f32 %v1163, %v1163
    %v1618 = vmul.f32 %v1164, %v1164
    %v1619 = vmul.f32 %v1165, %v1165
    %v1620 = vmul.f32 %v1166, %v1166
    %v1621 = vmul.f32 %v1167, %v1167
    %v1622 = vmul.f32 %v1168, %v1168
    %v1623 = vmul.f32 %v1169, %v1169
    %v1624 = vmul.f32 %v1170, %v1170
    %v1625 = vmul.f32 %v1171, %v1171
    %v1626 = vmul.f32 %v1172, %v1172
    %v1627 = vmul.f32 %v1173, %v1173
    %v1628 = vmul.f32 %v1174, %v1174
    %v1629 = vmul.f32 %v1175, %v1175
    %v1630 = vmul.f32 %v1176, %v1176
    %v1631 = vmul.f32 %v1177, %v1177
    %v1632 = vmul.f32 %v1178, %v1178
    %v1633 = vmul.f32 %v1179, %v1179
    %v1634 = vmul.f32 %v1180, %v1180
    %v1635 = vmul.f32 %v1181, %v1181
    %v1636 = vmul.f32 %v1182, %v1182
    %v1637 = vmul.f32 %v1183, %v1183
    %v1638 = vmul.f32 %v1184, %v1184
    %v1639 = vmul.f32 %v1185, %v1185
    %v1640 = vmul.f32 %v1186, %v1186
    %v1641 = vmul.f32 %v1187, %v1187
    %v1642 = vmul.f32 %v1188, %v1188
    %v1643 = vmul.f32 %v1189, %v1189
    %v1644 = vmul.f32 %v1190, %v1190
    %v1645 = vmul.f32 %v1191, %v1191
    %v1646 = vmul.f32 %v1192, %v1192
    %v1647 = vmul.f32 %v1193, %v1193
    %v1648 = vmul.f32 %v1194, %v1194
    %v1649 = vmul.f32 %v1195, %v1195
    %v1650 = vmul.f32 %v1196, %v1196
    %v1651 = vmul.f32 %v1197, %v1197
    %v1652 = vmul.f32 %v1198, %v1198
    %v1653 = vmul.f32 %v1199, %v1199
    %v1654 = vmul.f32 %v1200, %v1200
    %v1655 = vmul.f32 %v1201, %v1201
    %v1656 = vmul.f32 %v1202, %v1202
    %v1657 = vmul.f32 %v1203, %v1203
    %v1658 = vmul.f32 %v1204, %v1204
    %v1659 = vmul.f32 %v1205, %v1205
    %v1660 = vmul.f32 %v1206, %v1206
    %v1661 = vmul.f32 %v1207, %v1207
    %v1662 = vmul.f32 %v1208, %v1208
    %v1663 = vmul.f32 %v1209, %v1209
    %v1664 = vmul.f32 %v1210, %v1210
    %v1665 = vmul.f32 %v1211, %v1211
    %v1666 = vmul.f32 %v1212, %v1212
    %v1667 = vmul.f32 %v1213, %v1213
    %v1668 = vmul.f32 %v1214, %v1214
    %v1669 = vadd.f32 %v1605, %v1606
    %v1670 = vadd.f32 %v1669, %v1607
    %v1671 = vadd.f32 %v1670, %v1608
    %v1672 = vadd.f32 %v1671, %v1609
    %v1673 = vadd.f32 %v1672, %v1610
    %v1674 = vadd.f32 %v1673, %v1611
    %v1675 = vadd.f32 %v1674, %v1612
    %v1676 = vadd.f32 %v1675, %v1613
    %v1677 = vadd.f32 %v1676, %v1614
    %v1678 = vadd.f32 %v1677, %v1615
    %v1679 = vadd.f32 %v1678, %v1616
    %v1680 = vadd.f32 %v1679, %v1617
    %v1681 = vadd.f32 %v1680, %v1618
    %v1682 = vadd.f32 %v1681, %v1619
    %v1683 = vadd.f32 %v1682, %v1620
    %v1684 = vadd.f32 %v1683, %v1621
    %v1685 = vadd.f32 %v1684, %v1622
    %v1686 = vadd.f32 %v1685, %v1623
    %v1687 = vadd.f32 %v1686, %v1624
    %v1688 = vadd.f32 %v1687, %v1625
    %v1689 = vadd.f32 %v1688, %v1626
    %v1690 = vadd.f32 %v1689, %v1627
    %v1691 = vadd.f32 %v1690, %v1628
    %v1692 = vadd.f32 %v1691, %v1629
    %v1693 = vadd.f32 %v1692, %v1630
    %v1694 = vadd.f32 %v1693, %v1631
    %v1695 = vadd.f32 %v1694, %v1632
    %v1696 = vadd.f32 %v1695, %v1633
    %v1697 = vadd.f32 %v1696, %v1634
    %v1698 = vadd.f32 %v1697, %v1635
    %v1699 = vadd.f32 %v1698, %v1636
    %v1700 = vadd.f32 %v1699, %v1637
    %v1701 = vadd.f32 %v1700, %v1638
    %v1702 = vadd.f32 %v1701, %v1639
    %v1703 = vadd.f32 %v1702, %v1640
    %v1704 = vadd.f32 %v1703, %v1641
    %v1705 = vadd.f32 %v1704, %v1642
    %v1706 = vadd.f32 %v1705, %v1643
    %v1707 = vadd.f32 %v1706, %v1644
    %v1708 = vadd.f32 %v1707, %v1645
    %v1709 = vadd.f32 %v1708, %v1646
    %v1710 = vadd.f32 %v1709, %v1647
    %v1711 = vadd.f32 %v1710, %v1648
    %v1712 = vadd.f32 %v1711, %v1649
    %v1713 = vadd.f32 %v1712, %v1650
    %v1714 = vadd.f32 %v1713, %v1651
    %v1715 = vadd.f32 %v1714, %v1652
    %v1716 = vadd.f32 %v1715, %v1653
    %v1717 = vadd.f32 %v1716, %v1654
    %v1718 = vadd.f32 %v1717, %v1655
    %v1719 = vadd.f32 %v1718, %v1656
    %v1720 = vadd.f32 %v1719, %v1657
    %v1721 = vadd.f32 %v1720, %v1658
    %v1722 = vadd.f32 %v1721, %v1659
    %v1723 = vadd.f32 %v1722, %v1660
    %v1724 = vadd.f32 %v1723, %v1661
    %v1725 = vadd.f32 %v1724, %v1662
    %v1726 = vadd.f32 %v1725, %v1663
    %v1727 = vadd.f32 %v1726, %v1664
    %v1728 = vadd.f32 %v1727, %v1665
    %v1729 = vadd.f32 %v1728, %v1666
    %v1730 = vadd.f32 %v1729, %v1667
    %v1731 = vadd.f32 %v1730, %v1668
    %v1732 = vrot.slane %v1731, 4
    %v1733 = vadd.f32 %v1731, %v1732
    %v1734 = vrot.slane %v1733, 2
    %v1735 = vadd.f32 %v1733, %v1734
    %v1736 = vrot.slane %v1735, 1
    %v1737 = vadd.f32 %v1735, %v1736
    %1738 = vst [vmem:[#allocation16 + $0x1] sm:$0x1] %v1737
    %v1739 = vld [vmem:[#allocation10] sm:$0xf]
    %v1740 = vld [vmem:[#allocation10 + $0x4] sm:$0xf]
    %v1741 = vld [vmem:[#allocation10 + $0x8] sm:$0xf]
    %v1742 = vld [vmem:[#allocation10 + $0xc] sm:$0xf]
    %v1743 = vld [vmem:[#allocation10 + $0x10] sm:$0xf]
    %v1744 = vld [vmem:[#allocation10 + $0x14] sm:$0xf]
    %v1745 = vld [vmem:[#allocation10 + $0x18] sm:$0xf]
    %v1746 = vld [vmem:[#allocation10 + $0x1c] sm:$0xf]
    %v1747 = vld [vmem:[#allocation10 + $0x20] sm:$0xf]
    %v1748 = vld [vmem:[#allocation10 + $0x24] sm:$0xf]
    %v1749 = vld [vmem:[#allocation10 + $0x28] sm:$0xf]
    %v1750 = vld [vmem:[#allocation10 + $0x2c] sm:$0xf]
    %v1751 = vld [vmem:[#allocation10 + $0x30] sm:$0xf]
    %v1752 = vld [vmem:[#allocation10 + $0x34] sm:$0xf]
    %v1753 = vld [vmem:[#allocation10 + $0x38] sm:$0xf]
    %v1754 = vld [vmem:[#allocation10 + $0x3c] sm:$0xf]
    %v1755 = vld [vmem:[#allocation10 + $0x40] sm:$0xf]
    %v1756 = vld [vmem:[#allocation10 + $0x44] sm:$0xf]
    %v1757 = vld [vmem:[#allocation10 + $0x48] sm:$0xf]
    %v1758 = vld [vmem:[#allocation10 + $0x4c] sm:$0xf]
    %v1759 = vld [vmem:[#allocation10 + $0x50] sm:$0xf]
    %v1760 = vld [vmem:[#allocation10 + $0x54] sm:$0xf]
    %v1761 = vld [vmem:[#allocation10 + $0x58] sm:$0xf]
    %v1762 = vld [vmem:[#allocation10 + $0x5c] sm:$0xf]
    %v1763 = vld [vmem:[#allocation10 + $0x60] sm:$0xf]
    %v1764 = vld [vmem:[#allocation10 + $0x64] sm:$0xf]
    %v1765 = vld [vmem:[#allocation10 + $0x68] sm:$0xf]
    %v1766 = vld [vmem:[#allocation10 + $0x6c] sm:$0xf]
    %v1767 = vld [vmem:[#allocation10 + $0x70] sm:$0xf]
    %v1768 = vld [vmem:[#allocation10 + $0x74] sm:$0xf]
    %v1769 = vld [vmem:[#allocation10 + $0x78] sm:$0xf]
    %v1770 = vld [vmem:[#allocation10 + $0x7c] sm:$0xf]
    %v1771 = vld [vmem:[#allocation10 + $0x80] sm:$0xf]
    %v1772 = vld [vmem:[#allocation10 + $0x84] sm:$0xf]
    %v1773 = vld [vmem:[#allocation10 + $0x88] sm:$0xf]
    %v1774 = vld [vmem:[#allocation10 + $0x8c] sm:$0xf]
    %v1775 = vld [vmem:[#allocation10 + $0x90] sm:$0xf]
    %v1776 = vld [vmem:[#allocation10 + $0x94] sm:$0xf]
    %v1777 = vld [vmem:[#allocation10 + $0x98] sm:$0xf]
    %v1778 = vld [vmem:[#allocation10 + $0x9c] sm:$0xf]
    %v1779 = vld [vmem:[#allocation10 + $0xa0] sm:$0xf]
    %v1780 = vld [vmem:[#allocation10 + $0xa4] sm:$0xf]
    %v1781 = vld [vmem:[#allocation10 + $0xa8] sm:$0xf]
    %v1782 = vld [vmem:[#allocation10 + $0xac] sm:$0xf]
    %v1783 = vld [vmem:[#allocation10 + $0xb0] sm:$0xf]
    %v1784 = vld [vmem:[#allocation10 + $0xb4] sm:$0xf]
    %v1785 = vld [vmem:[#allocation10 + $0xb8] sm:$0xf]
    %v1786 = vld [vmem:[#allocation10 + $0xbc] sm:$0xf]
    %v1787 = vld [vmem:[#allocation10 + $0xc0] sm:$0xf]
    %v1788 = vld [vmem:[#allocation10 + $0xc4] sm:$0xf]
    %v1789 = vld [vmem:[#allocation10 + $0xc8] sm:$0xf]
    %v1790 = vld [vmem:[#allocation10 + $0xcc] sm:$0xf]
    %v1791 = vld [vmem:[#allocation10 + $0xd0] sm:$0xf]
    %v1792 = vld [vmem:[#allocation10 + $0xd4] sm:$0xf]
    %v1793 = vld [vmem:[#allocation10 + $0xd8] sm:$0xf]
    %v1794 = vld [vmem:[#allocation10 + $0xdc] sm:$0xf]
    %v1795 = vld [vmem:[#allocation10 + $0xe0] sm:$0xf]
    %v1796 = vld [vmem:[#allocation10 + $0xe4] sm:$0xf]
    %v1797 = vld [vmem:[#allocation10 + $0xe8] sm:$0xf]
    %v1798 = vld [vmem:[#allocation10 + $0xec] sm:$0xf]
    %v1799 = vld [vmem:[#allocation10 + $0xf0] sm:$0xf]
    %v1800 = vld [vmem:[#allocation10 + $0xf4] sm:$0xf]
    %v1801 = vld [vmem:[#allocation10 + $0xf8] sm:$0xf]
    %v1802 = vld [vmem:[#allocation10 + $0xfc] sm:$0xf]
    %v1803 = vld [vmem:[#allocation11] sm:$0xf]
    %v1804 = vld [vmem:[#allocation11 + $0x4] sm:$0xf]
    %v1805 = vld [vmem:[#allocation11 + $0x8] sm:$0xf]
    %v1806 = vld [vmem:[#allocation11 + $0xc] sm:$0xf]
    %v1807 = vld [vmem:[#allocation11 + $0x10] sm:$0xf]
    %v1808 = vld [vmem:[#allocation11 + $0x14] sm:$0xf]
    %v1809 = vld [vmem:[#allocation11 + $0x18] sm:$0xf]
    %v1810 = vld [vmem:[#allocation11 + $0x1c] sm:$0xf]
    %v1811 = vld [vmem:[#allocation11 + $0x20] sm:$0xf]
    %v1812 = vld [vmem:[#allocation11 + $0x24] sm:$0xf]
    %v1813 = vld [vmem:[#allocation11 + $0x28] sm:$0xf]
    %v1814 = vld [vmem:[#allocation11 + $0x2c] sm:$0xf]
    %v1815 = vld [vmem:[#allocation11 + $0x30] sm:$0xf]
    %v1816 = vld [vmem:[#allocation11 + $0x34] sm:$0xf]
    %v1817 = vld [vmem:[#allocation11 + $0x38] sm:$0xf]
    %v1818 = vld [vmem:[#allocation11 + $0x3c] sm:$0xf]
    %v1883 = vunpack.c.l.b16 %v1739
    %v1884 = vunpack.c.l.b16 %v1740
    %v1885 = vunpack.c.l.b16 %v1741
    %v1886 = vunpack.c.l.b16 %v1742
    %v1887 = vunpack.c.l.b16 %v1743
    %v1888 = vunpack.c.l.b16 %v1744
    %v1889 = vunpack.c.l.b16 %v1745
    %v1890 = vunpack.c.l.b16 %v1746
    %v1891 = vunpack.c.l.b16 %v1747
    %v1892 = vunpack.c.l.b16 %v1748
    %v1893 = vunpack.c.l.b16 %v1749
    %v1894 = vunpack.c.l.b16 %v1750
    %v1895 = vunpack.c.l.b16 %v1751
    %v1896 = vunpack.c.l.b16 %v1752
    %v1897 = vunpack.c.l.b16 %v1753
    %v1898 = vunpack.c.l.b16 %v1754
    %v1899 = vunpack.c.l.b16 %v1755
    %v1900 = vunpack.c.l.b16 %v1756
    %v1901 = vunpack.c.l.b16 %v1757
    %v1902 = vunpack.c.l.b16 %v1758
    %v1903 = vunpack.c.l.b16 %v1759
    %v1904 = vunpack.c.l.b16 %v1760
    %v1905 = vunpack.c.l.b16 %v1761
    %v1906 = vunpack.c.l.b16 %v1762
    %v1907 = vunpack.c.l.b16 %v1763
    %v1908 = vunpack.c.l.b16 %v1764
    %v1909 = vunpack.c.l.b16 %v1765
    %v1910 = vunpack.c.l.b16 %v1766
    %v1911 = vunpack.c.l.b16 %v1767
    %v1912 = vunpack.c.l.b16 %v1768
    %v1913 = vunpack.c.l.b16 %v1769
    %v1914 = vunpack.c.l.b16 %v1770
    %v1915 = vunpack.c.l.b16 %v1771
    %v1916 = vunpack.c.l.b16 %v1772
    %v1917 = vunpack.c.l.b16 %v1773
    %v1918 = vunpack.c.l.b16 %v1774
    %v1919 = vunpack.c.l.b16 %v1775
    %v1920 = vunpack.c.l.b16 %v1776
    %v1921 = vunpack.c.l.b16 %v1777
    %v1922 = vunpack.c.l.b16 %v1778
    %v1923 = vunpack.c.l.b16 %v1779
    %v1924 = vunpack.c.l.b16 %v1780
    %v1925 = vunpack.c.l.b16 %v1781
    %v1926 = vunpack.c.l.b16 %v1782
    %v1927 = vunpack.c.l.b16 %v1783
    %v1928 = vunpack.c.l.b16 %v1784
    %v1929 = vunpack.c.l.b16 %v1785
    %v1930 = vunpack.c.l.b16 %v1786
    %v1931 = vunpack.c.l.b16 %v1787
    %v1932 = vunpack.c.l.b16 %v1788
    %v1933 = vunpack.c.l.b16 %v1789
    %v1934 = vunpack.c.l.b16 %v1790
    %v1935 = vunpack.c.l.b16 %v1791
    %v1936 = vunpack.c.l.b16 %v1792
    %v1937 = vunpack.c.l.b16 %v1793
    %v1938 = vunpack.c.l.b16 %v1794
    %v1939 = vunpack.c.l.b16 %v1795
    %v1940 = vunpack.c.l.b16 %v1796
    %v1941 = vunpack.c.l.b16 %v1797
    %v1942 = vunpack.c.l.b16 %v1798
    %v1943 = vunpack.c.l.b16 %v1799
    %v1944 = vunpack.c.l.b16 %v1800
    %v1945 = vunpack.c.l.b16 %v1801
    %v1946 = vunpack.c.l.b16 %v1802
    %v1947 = vpack.c.b16 %v1884, %v1883
    %v1948 = vpack.c.b16 %v1886, %v1885
    %v1949 = vpack.c.b16 %v1888, %v1887
    %v1950 = vpack.c.b16 %v1890, %v1889
    %v1951 = vpack.c.b16 %v1892, %v1891
    %v1952 = vpack.c.b16 %v1894, %v1893
    %v1953 = vpack.c.b16 %v1896, %v1895
    %v1954 = vpack.c.b16 %v1898, %v1897
    %v1955 = vpack.c.b16 %v1900, %v1899
    %v1956 = vpack.c.b16 %v1902, %v1901
    %v1957 = vpack.c.b16 %v1904, %v1903
    %v1958 = vpack.c.b16 %v1906, %v1905
    %v1959 = vpack.c.b16 %v1908, %v1907
    %v1960 = vpack.c.b16 %v1910, %v1909
    %v1961 = vpack.c.b16 %v1912, %v1911
    %v1962 = vpack.c.b16 %v1914, %v1913
    %v1963 = vpack.c.b16 %v1916, %v1915
    %v1964 = vpack.c.b16 %v1918, %v1917
    %v1965 = vpack.c.b16 %v1920, %v1919
    %v1966 = vpack.c.b16 %v1922, %v1921
    %v1967 = vpack.c.b16 %v1924, %v1923
    %v1968 = vpack.c.b16 %v1926, %v1925
    %v1969 = vpack.c.b16 %v1928, %v1927
    %v1970 = vpack.c.b16 %v1930, %v1929
    %v1971 = vpack.c.b16 %v1932, %v1931
    %v1972 = vpack.c.b16 %v1934, %v1933
    %v1973 = vpack.c.b16 %v1936, %v1935
    %v1974 = vpack.c.b16 %v1938, %v1937
    %v1975 = vpack.c.b16 %v1940, %v1939
    %v1976 = vpack.c.b16 %v1942, %v1941
    %v1977 = vpack.c.b16 %v1944, %v1943
    %v1978 = vpack.c.b16 %v1946, %v1945
    %v2027 = vunpack.c.l.b16 %v1803
    %v2028 = vunpack.c.l.b16 %v1804
    %v2029 = vunpack.c.l.b16 %v1805
    %v2030 = vunpack.c.l.b16 %v1806
    %v2031 = vunpack.c.l.b16 %v1807
    %v2032 = vunpack.c.l.b16 %v1808
    %v2033 = vunpack.c.l.b16 %v1809
    %v2034 = vunpack.c.l.b16 %v1810
    %v2035 = vunpack.c.l.b16 %v1811
    %v2036 = vunpack.c.l.b16 %v1812
    %v2037 = vunpack.c.l.b16 %v1813
    %v2038 = vunpack.c.l.b16 %v1814
    %v2039 = vunpack.c.l.b16 %v1815
    %v2040 = vunpack.c.l.b16 %v1816
    %v2041 = vunpack.c.l.b16 %v1817
    %v2042 = vunpack.c.l.b16 %v1818
    %v2043 = vpack.c.b16 %v2028, %v2027
    %v2044 = vpack.c.b16 %v2030, %v2029
    %v2045 = vpack.c.b16 %v2032, %v2031
    %v2046 = vpack.c.b16 %v2034, %v2033
    %v2047 = vpack.c.b16 %v2036, %v2035
    %v2048 = vpack.c.b16 %v2038, %v2037
    %v2049 = vpack.c.b16 %v2040, %v2039
    %v2050 = vpack.c.b16 %v2042, %v2041
    %2059 = vmatprep.subr.bf16.mxu0 0
    %2060 = vmatpush1.bf16.msra.mxu0 %v2043
    %2061 = vmatprep.subr.bf16.mxu0 0
    %2062 = vmatpush1.bf16.msra.mxu0 %v2044
    %2063 = vmatprep.subr.bf16.mxu0 0
    %2064 = vmatpush1.bf16.msra.mxu0 %v2045
    %2065 = vmatprep.subr.bf16.mxu0 0
    %2066 = vmatpush1.bf16.msra.mxu0 %v2046
    %2067 = vmatprep.subr.bf16.mxu0 0
    %2068 = vmatpush1.bf16.msra.mxu0 %v2047
    %2069 = vmatprep.subr.bf16.mxu0 0
    %2070 = vmatpush1.bf16.msra.mxu0 %v2048
    %2071 = vmatprep.subr.bf16.mxu0 0
    %2072 = vmatpush1.bf16.msra.mxu0 %v2049
    %2073 = vmatprep.subr.bf16.mxu0 0
    %2074 = vmatpush1.bf16.msra.mxu0 %v2050
    %2075 = vmatprep.subr.bf16.mxu0 0
    %2076 = vmatpush1.bf16.msra.mxu0 0
    %2077 = vmatprep.subr.bf16.mxu0 0
    %2078 = vmatpush1.bf16.msra.mxu0 0
    %2079 = vmatprep.subr.bf16.mxu0 0
    %2080 = vmatpush1.bf16.msra.mxu0 0
    %2081 = vmatprep.subr.bf16.mxu0 0
    %2082 = vmatpush1.bf16.msra.mxu0 0
    %2083 = vmatprep.subr.bf16.mxu0 0
    %2084 = vmatpush1.bf16.msra.mxu0 0
    %2085 = vmatprep.subr.bf16.mxu0 0
    %2086 = vmatpush1.bf16.msra.mxu0 0
    %2087 = vmatprep.subr.bf16.mxu0 0
    %2088 = vmatpush1.bf16.msra.mxu0 0
    %2089 = vmatprep.subr.bf16.mxu0 0
    %2090 = vmatpush1.bf16.msra.mxu0 0
    %2091 = vmatprep.mubr.bf16.mxu0 0
    %2092 = vmatmul.mubr.bf16.gmra.mrb[0].mxu0 %v1947
    %v2093 = vpop.f32.mrb[0].mxu0
    %v2094 = vadd.f32 0.0, %v2093
    %v2095 = vpop.f32.mrb[0].mxu0
    %v2096 = vpop.f32.mrb[0].mxu0
    %v2097 = vadd.f32 0.0, %v2096
    %v2098 = vpop.f32.mrb[0].mxu0
    %2099 = vmatprep.mubr.bf16.mxu0 0
    %2100 = vmatmul.mubr.bf16.gmra.mrb[0].mxu0 %v1948
    %v2101 = vpop.f32.mrb[0].mxu0
    %v2102 = vadd.f32 0.0, %v2101
    %v2103 = vpop.f32.mrb[0].mxu0
    %v2104 = vpop.f32.mrb[0].mxu0
    %v2105 = vadd.f32 0.0, %v2104
    %v2106 = vpop.f32.mrb[0].mxu0
    %2107 = vmatprep.mubr.bf16.mxu0 0
    %2108 = vmatmul.mubr.bf16.gmra.mrb[0].mxu0 %v1949
    %v2109 = vpop.f32.mrb[0].mxu0
    %v2110 = vadd.f32 0.0, %v2109
    %v2111 = vpop.f32.mrb[0].mxu0
    %v2112 = vpop.f32.mrb[0].mxu0
    %v2113 = vadd.f32 0.0, %v2112
    %v2114 = vpop.f32.mrb[0].mxu0
    %2115 = vmatprep.mubr.bf16.mxu0 0
    %2116 = vmatmul.mubr.bf16.gmra.mrb[0].mxu0 %v1950
    %v2117 = vpop.f32.mrb[0].mxu0
    %v2118 = vadd.f32 0.0, %v2117
    %v2119 = vpop.f32.mrb[0].mxu0
    %v2120 = vpop.f32.mrb[0].mxu0
    %v2121 = vadd.f32 0.0, %v2120
    %v2122 = vpop.f32.mrb[0].mxu0
    %2123 = vmatprep.mubr.bf16.mxu0 0
    %2124 = vmatmul.mubr.bf16.gmra.mrb[0].mxu0 %v1951
    %v2125 = vpop.f32.mrb[0].mxu0
    %v2126 = vadd.f32 0.0, %v2125
    %v2127 = vpop.f32.mrb[0].mxu0
    %v2128 = vpop.f32.mrb[0].mxu0
    %v2129 = vadd.f32 0.0, %v2128
    %v2130 = vpop.f32.mrb[0].mxu0
    %2131 = vmatprep.mubr.bf16.mxu0 0
    %2132 = vmatmul.mubr.bf16.gmra.mrb[0].mxu0 %v1952
    %v2133 = vpop.f32.mrb[0].mxu0
    %v2134 = vadd.f32 0.0, %v2133
    %v2135 = vpop.f32.mrb[0].mxu0
    %v2136 = vpop.f32.mrb[0].mxu0
    %v2137 = vadd.f32 0.0, %v2136
    %v2138 = vpop.f32.mrb[0].mxu0
    %2139 = vmatprep.mubr.bf16.mxu0 0
    %2140 = vmatmul.mubr.bf16.gmra.mrb[0].mxu0 %v1953
    %v2141 = vpop.f32.mrb[0].mxu0
    %v2142 = vadd.f32 0.0, %v2141
    %v2143 = vpop.f32.mrb[0].mxu0
    %v2144 = vpop.f32.mrb[0].mxu0
    %v2145 = vadd.f32 0.0, %v2144
    %v2146 = vpop.f32.mrb[0].mxu0
    %2147 = vmatprep.mubr.bf16.mxu0 0
    %2148 = vmatmul.mubr.bf16.gmra.mrb[0].mxu0 %v1954
    %v2149 = vpop.f32.mrb[0].mxu0
    %v2150 = vadd.f32 0.0, %v2149
    %v2151 = vpop.f32.mrb[0].mxu0
    %v2152 = vpop.f32.mrb[0].mxu0
    %v2153 = vadd.f32 0.0, %v2152
    %v2154 = vpop.f32.mrb[0].mxu0
    %2155 = vmatprep.mubr.bf16.mxu0 0
    %2156 = vmatmul.mubr.bf16.gmra.mrb[0].mxu0 %v1955
    %v2157 = vpop.f32.mrb[0].mxu0
    %v2158 = vadd.f32 0.0, %v2157
    %v2159 = vpop.f32.mrb[0].mxu0
    %v2160 = vpop.f32.mrb[0].mxu0
    %v2161 = vadd.f32 0.0, %v2160
    %v2162 = vpop.f32.mrb[0].mxu0
    %2163 = vmatprep.mubr.bf16.mxu0 0
    %2164 = vmatmul.mubr.bf16.gmra.mrb[0].mxu0 %v1956
    %v2165 = vpop.f32.mrb[0].mxu0
    %v2166 = vadd.f32 0.0, %v2165
    %v2167 = vpop.f32.mrb[0].mxu0
    %v2168 = vpop.f32.mrb[0].mxu0
    %v2169 = vadd.f32 0.0, %v2168
    %v2170 = vpop.f32.mrb[0].mxu0
    %2171 = vmatprep.mubr.bf16.mxu0 0
    %2172 = vmatmul.mubr.bf16.gmra.mrb[0].mxu0 %v1957
    %v2173 = vpop.f32.mrb[0].mxu0
    %v2174 = vadd.f32 0.0, %v2173
    %v2175 = vpop.f32.mrb[0].mxu0
    %v2176 = vpop.f32.mrb[0].mxu0
    %v2177 = vadd.f32 0.0, %v2176
    %v2178 = vpop.f32.mrb[0].mxu0
    %2179 = vmatprep.mubr.bf16.mxu0 0
    %2180 = vmatmul.mubr.bf16.gmra.mrb[0].mxu0 %v1958
    %v2181 = vpop.f32.mrb[0].mxu0
    %v2182 = vadd.f32 0.0, %v2181
    %v2183 = vpop.f32.mrb[0].mxu0
    %v2184 = vpop.f32.mrb[0].mxu0
    %v2185 = vadd.f32 0.0, %v2184
    %v2186 = vpop.f32.mrb[0].mxu0
    %2187 = vmatprep.mubr.bf16.mxu0 0
    %2188 = vmatmul.mubr.bf16.gmra.mrb[0].mxu0 %v1959
    %v2189 = vpop.f32.mrb[0].mxu0
    %v2190 = vadd.f32 0.0, %v2189
    %v2191 = vpop.f32.mrb[0].mxu0
    %v2192 = vpop.f32.mrb[0].mxu0
    %v2193 = vadd.f32 0.0, %v2192
    %v2194 = vpop.f32.mrb[0].mxu0
    %2195 = vmatprep.mubr.bf16.mxu0 0
    %2196 = vmatmul.mubr.bf16.gmra.mrb[0].mxu0 %v1960
    %v2197 = vpop.f32.mrb[0].mxu0
    %v2198 = vadd.f32 0.0, %v2197
    %v2199 = vpop.f32.mrb[0].mxu0
    %v2200 = vpop.f32.mrb[0].mxu0
    %v2201 = vadd.f32 0.0, %v2200
    %v2202 = vpop.f32.mrb[0].mxu0
    %2203 = vmatprep.mubr.bf16.mxu0 0
    %2204 = vmatmul.mubr.bf16.gmra.mrb[0].mxu0 %v1961
    %v2205 = vpop.f32.mrb[0].mxu0
    %v2206 = vadd.f32 0.0, %v2205
    %v2207 = vpop.f32.mrb[0].mxu0
    %v2208 = vpop.f32.mrb[0].mxu0
    %v2209 = vadd.f32 0.0, %v2208
    %v2210 = vpop.f32.mrb[0].mxu0
    %2211 = vmatprep.mubr.bf16.mxu0 0
    %2212 = vmatmul.mubr.bf16.gmra.mrb[0].mxu0 %v1962
    %v2213 = vpop.f32.mrb[0].mxu0
    %v2214 = vadd.f32 0.0, %v2213
    %v2215 = vpop.f32.mrb[0].mxu0
    %v2216 = vpop.f32.mrb[0].mxu0
    %v2217 = vadd.f32 0.0, %v2216
    %v2218 = vpop.f32.mrb[0].mxu0
    %2219 = vmatprep.mubr.bf16.mxu0 0
    %2220 = vmatmul.mubr.bf16.gmra.mrb[0].mxu0 %v1963
    %v2221 = vpop.f32.mrb[0].mxu0
    %v2222 = vadd.f32 0.0, %v2221
    %v2223 = vpop.f32.mrb[0].mxu0
    %v2224 = vpop.f32.mrb[0].mxu0
    %v2225 = vadd.f32 0.0, %v2224
    %v2226 = vpop.f32.mrb[0].mxu0
    %2227 = vmatprep.mubr.bf16.mxu0 0
    %2228 = vmatmul.mubr.bf16.gmra.mrb[0].mxu0 %v1964
    %v2229 = vpop.f32.mrb[0].mxu0
    %v2230 = vadd.f32 0.0, %v2229
    %v2231 = vpop.f32.mrb[0].mxu0
    %v2232 = vpop.f32.mrb[0].mxu0
    %v2233 = vadd.f32 0.0, %v2232
    %v2234 = vpop.f32.mrb[0].mxu0
    %2235 = vmatprep.mubr.bf16.mxu0 0
    %2236 = vmatmul.mubr.bf16.gmra.mrb[0].mxu0 %v1965
    %v2237 = vpop.f32.mrb[0].mxu0
    %v2238 = vadd.f32 0.0, %v2237
    %v2239 = vpop.f32.mrb[0].mxu0
    %v2240 = vpop.f32.mrb[0].mxu0
    %v2241 = vadd.f32 0.0, %v2240
    %v2242 = vpop.f32.mrb[0].mxu0
    %2243 = vmatprep.mubr.bf16.mxu0 0
    %2244 = vmatmul.mubr.bf16.gmra.mrb[0].mxu0 %v1966
    %v2245 = vpop.f32.mrb[0].mxu0
    %v2246 = vadd.f32 0.0, %v2245
    %v2247 = vpop.f32.mrb[0].mxu0
    %v2248 = vpop.f32.mrb[0].mxu0
    %v2249 = vadd.f32 0.0, %v2248
    %v2250 = vpop.f32.mrb[0].mxu0
    %2251 = vmatprep.mubr.bf16.mxu0 0
    %2252 = vmatmul.mubr.bf16.gmra.mrb[0].mxu0 %v1967
    %v2253 = vpop.f32.mrb[0].mxu0
    %v2254 = vadd.f32 0.0, %v2253
    %v2255 = vpop.f32.mrb[0].mxu0
    %v2256 = vpop.f32.mrb[0].mxu0
    %v2257 = vadd.f32 0.0, %v2256
    %v2258 = vpop.f32.mrb[0].mxu0
    %2259 = vmatprep.mubr.bf16.mxu0 0
    %2260 = vmatmul.mubr.bf16.gmra.mrb[0].mxu0 %v1968
    %v2261 = vpop.f32.mrb[0].mxu0
    %v2262 = vadd.f32 0.0, %v2261
    %v2263 = vpop.f32.mrb[0].mxu0
    %v2264 = vpop.f32.mrb[0].mxu0
    %v2265 = vadd.f32 0.0, %v2264
    %v2266 = vpop.f32.mrb[0].mxu0
    %2267 = vmatprep.mubr.bf16.mxu0 0
    %2268 = vmatmul.mubr.bf16.gmra.mrb[0].mxu0 %v1969
    %v2269 = vpop.f32.mrb[0].mxu0
    %v2270 = vadd.f32 0.0, %v2269
    %v2271 = vpop.f32.mrb[0].mxu0
    %v2272 = vpop.f32.mrb[0].mxu0
    %v2273 = vadd.f32 0.0, %v2272
    %v2274 = vpop.f32.mrb[0].mxu0
    %2275 = vmatprep.mubr.bf16.mxu0 0
    %2276 = vmatmul.mubr.bf16.gmra.mrb[0].mxu0 %v1970
    %v2277 = vpop.f32.mrb[0].mxu0
    %v2278 = vadd.f32 0.0, %v2277
    %v2279 = vpop.f32.mrb[0].mxu0
    %v2280 = vpop.f32.mrb[0].mxu0
    %v2281 = vadd.f32 0.0, %v2280
    %v2282 = vpop.f32.mrb[0].mxu0
    %2283 = vmatprep.mubr.bf16.mxu0 0
    %2284 = vmatmul.mubr.bf16.gmra.mrb[0].mxu0 %v1971
    %v2285 = vpop.f32.mrb[0].mxu0
    %v2286 = vadd.f32 0.0, %v2285
    %v2287 = vpop.f32.mrb[0].mxu0
    %v2288 = vpop.f32.mrb[0].mxu0
    %v2289 = vadd.f32 0.0, %v2288
    %v2290 = vpop.f32.mrb[0].mxu0
    %2291 = vmatprep.mubr.bf16.mxu0 0
    %2292 = vmatmul.mubr.bf16.gmra.mrb[0].mxu0 %v1972
    %v2293 = vpop.f32.mrb[0].mxu0
    %v2294 = vadd.f32 0.0, %v2293
    %v2295 = vpop.f32.mrb[0].mxu0
    %v2296 = vpop.f32.mrb[0].mxu0
    %v2297 = vadd.f32 0.0, %v2296
    %v2298 = vpop.f32.mrb[0].mxu0
    %2299 = vmatprep.mubr.bf16.mxu0 0
    %2300 = vmatmul.mubr.bf16.gmra.mrb[0].mxu0 %v1973
    %v2301 = vpop.f32.mrb[0].mxu0
    %v2302 = vadd.f32 0.0, %v2301
    %v2303 = vpop.f32.mrb[0].mxu0
    %v2304 = vpop.f32.mrb[0].mxu0
    %v2305 = vadd.f32 0.0, %v2304
    %v2306 = vpop.f32.mrb[0].mxu0
    %2307 = vmatprep.mubr.bf16.mxu0 0
    %2308 = vmatmul.mubr.bf16.gmra.mrb[0].mxu0 %v1974
    %v2309 = vpop.f32.mrb[0].mxu0
    %v2310 = vadd.f32 0.0, %v2309
    %v2311 = vpop.f32.mrb[0].mxu0
    %v2312 = vpop.f32.mrb[0].mxu0
    %v2313 = vadd.f32 0.0, %v2312
    %v2314 = vpop.f32.mrb[0].mxu0
    %2315 = vmatprep.mubr.bf16.mxu0 0
    %2316 = vmatmul.mubr.bf16.gmra.mrb[0].mxu0 %v1975
    %v2317 = vpop.f32.mrb[0].mxu0
    %v2318 = vadd.f32 0.0, %v2317
    %v2319 = vpop.f32.mrb[0].mxu0
    %v2320 = vpop.f32.mrb[0].mxu0
    %v2321 = vadd.f32 0.0, %v2320
    %v2322 = vpop.f32.mrb[0].mxu0
    %2323 = vmatprep.mubr.bf16.mxu0 0
    %2324 = vmatmul.mubr.bf16.gmra.mrb[0].mxu0 %v1976
    %v2325 = vpop.f32.mrb[0].mxu0
    %v2326 = vadd.f32 0.0, %v2325
    %v2327 = vpop.f32.mrb[0].mxu0
    %v2328 = vpop.f32.mrb[0].mxu0
    %v2329 = vadd.f32 0.0, %v2328
    %v2330 = vpop.f32.mrb[0].mxu0
    %2331 = vmatprep.mubr.bf16.mxu0 0
    %2332 = vmatmul.mubr.bf16.gmra.mrb[0].mxu0 %v1977
    %v2333 = vpop.f32.mrb[0].mxu0
    %v2334 = vadd.f32 0.0, %v2333
    %v2335 = vpop.f32.mrb[0].mxu0
    %v2336 = vpop.f32.mrb[0].mxu0
    %v2337 = vadd.f32 0.0, %v2336
    %v2338 = vpop.f32.mrb[0].mxu0
    %2339 = vmatprep.mubr.bf16.mxu0 0
    %2340 = vmatmul.mubr.bf16.gmra.mrb[0].mxu0 %v1978
    %v2341 = vpop.f32.mrb[0].mxu0
    %v2342 = vadd.f32 0.0, %v2341
    %v2343 = vpop.f32.mrb[0].mxu0
    %v2344 = vpop.f32.mrb[0].mxu0
    %v2345 = vadd.f32 0.0, %v2344
    %v2346 = vpop.f32.mrb[0].mxu0
    %2347 = vdwg.mxu0
    %v2348 = vsel %vm1087, %v2094, 0.0
    %v2349 = vsel %vm1088, %v2097, 0.0
    %v2350 = vsel %vm1089, %v2102, 0.0
    %v2351 = vsel %vm1090, %v2105, 0.0
    %v2352 = vsel %vm1091, %v2110, 0.0
    %v2353 = vsel %vm1092, %v2113, 0.0
    %v2354 = vsel %vm1093, %v2118, 0.0
    %v2355 = vsel %vm1094, %v2121, 0.0
    %v2356 = vsel %vm1095, %v2126, 0.0
    %v2357 = vsel %vm1096, %v2129, 0.0
    %v2358 = vsel %vm1097, %v2134, 0.0
    %v2359 = vsel %vm1098, %v2137, 0.0
    %v2360 = vsel %vm1099, %v2142, 0.0
    %v2361 = vsel %vm1100, %v2145, 0.0
    %v2362 = vsel %vm1101, %v2150, 0.0
    %v2363 = vsel %vm1102, %v2153, 0.0
    %v2364 = vsel %vm1103, %v2158, 0.0
    %v2365 = vsel %vm1104, %v2161, 0.0
    %v2366 = vsel %vm1105, %v2166, 0.0
    %v2367 = vsel %vm1106, %v2169, 0.0
    %v2368 = vsel %vm1107, %v2174, 0.0
    %v2369 = vsel %vm1108, %v2177, 0.0
    %v2370 = vsel %vm1109, %v2182, 0.0
    %v2371 = vsel %vm1110, %v2185, 0.0
    %v2372 = vsel %vm1111, %v2190, 0.0
    %v2373 = vsel %vm1112, %v2193, 0.0
    %v2374 = vsel %vm1113, %v2198, 0.0
    %v2375 = vsel %vm1114, %v2201, 0.0
    %v2376 = vsel %vm1115, %v2206, 0.0
    %v2377 = vsel %vm1116, %v2209, 0.0
    %v2378 = vsel %vm1117, %v2214, 0.0
    %v2379 = vsel %vm1118, %v2217, 0.0
    %v2380 = vsel %vm1119, %v2222, 0.0
    %v2381 = vsel %vm1120, %v2225, 0.0
    %v2382 = vsel %vm1121, %v2230, 0.0
    %v2383 = vsel %vm1122, %v2233, 0.0
    %v2384 = vsel %vm1123, %v2238, 0.0
    %v2385 = vsel %vm1124, %v2241, 0.0
    %v2386 = vsel %vm1125, %v2246, 0.0
    %v2387 = vsel %vm1126, %v2249, 0.0
    %v2388 = vsel %vm1127, %v2254, 0.0
    %v2389 = vsel %vm1128, %v2257, 0.0
    %v2390 = vsel %vm1129, %v2262, 0.0
    %v2391 = vsel %vm1130, %v2265, 0.0
    %v2392 = vsel %vm1131, %v2270, 0.0
    %v2393 = vsel %vm1132, %v2273, 0.0
    %v2394 = vsel %vm1133, %v2278, 0.0
    %v2395 = vsel %vm1134, %v2281, 0.0
    %v2396 = vsel %vm1135, %v2286, 0.0
    %v2397 = vsel %vm1136, %v2289, 0.0
    %v2398 = vsel %vm1137, %v2294, 0.0
    %v2399 = vsel %vm1138, %v2297, 0.0
    %v2400 = vsel %vm1139, %v2302, 0.0
    %v2401 = vsel %vm1140, %v2305, 0.0
    %v2402 = vsel %vm1141, %v2310, 0.0
    %v2403 = vsel %vm1142, %v2313, 0.0
    %v2404 = vsel %vm1143, %v2318, 0.0
    %v2405 = vsel %vm1144, %v2321, 0.0
    %v2406 = vsel %vm1145, %v2326, 0.0
    %v2407 = vsel %vm1146, %v2329, 0.0
    %v2408 = vsel %vm1147, %v2334, 0.0
    %v2409 = vsel %vm1148, %v2337, 0.0
    %v2410 = vsel %vm1149, %v2342, 0.0
    %v2411 = vsel %vm1150, %v2345, 0.0
    %v2412 = vpack.c.bf16 %v2349, %v2348
    %v2413 = vpack.c.bf16 %v2351, %v2350
    %v2414 = vpack.c.bf16 %v2353, %v2352
    %v2415 = vpack.c.bf16 %v2355, %v2354
    %v2416 = vpack.c.bf16 %v2357, %v2356
    %v2417 = vpack.c.bf16 %v2359, %v2358
    %v2418 = vpack.c.bf16 %v2361, %v2360
    %v2419 = vpack.c.bf16 %v2363, %v2362
    %v2420 = vpack.c.bf16 %v2365, %v2364
    %v2421 = vpack.c.bf16 %v2367, %v2366
    %v2422 = vpack.c.bf16 %v2369, %v2368
    %v2423 = vpack.c.bf16 %v2371, %v2370
    %v2424 = vpack.c.bf16 %v2373, %v2372
    %v2425 = vpack.c.bf16 %v2375, %v2374
    %v2426 = vpack.c.bf16 %v2377, %v2376
    %v2427 = vpack.c.bf16 %v2379, %v2378
    %v2428 = vpack.c.bf16 %v2381, %v2380
    %v2429 = vpack.c.bf16 %v2383, %v2382
    %v2430 = vpack.c.bf16 %v2385, %v2384
    %v2431 = vpack.c.bf16 %v2387, %v2386
    %v2432 = vpack.c.bf16 %v2389, %v2388
    %v2433 = vpack.c.bf16 %v2391, %v2390
    %v2434 = vpack.c.bf16 %v2393, %v2392
    %v2435 = vpack.c.bf16 %v2395, %v2394
    %v2436 = vpack.c.bf16 %v2397, %v2396
    %v2437 = vpack.c.bf16 %v2399, %v2398
    %v2438 = vpack.c.bf16 %v2401, %v2400
    %v2439 = vpack.c.bf16 %v2403, %v2402
    %v2440 = vpack.c.bf16 %v2405, %v2404
    %v2441 = vpack.c.bf16 %v2407, %v2406
    %v2442 = vpack.c.bf16 %v2409, %v2408
    %v2443 = vpack.c.bf16 %v2411, %v2410
    %v2476 = vunpack.c.l.b16 %v2412
    %v2477 = vunpack.c.h.b16 %v2412
    %v2478 = vunpack.c.l.b16 %v2413
    %v2479 = vunpack.c.h.b16 %v2413
    %v2480 = vunpack.c.l.b16 %v2414
    %v2481 = vunpack.c.h.b16 %v2414
    %v2482 = vunpack.c.l.b16 %v2415
    %v2483 = vunpack.c.h.b16 %v2415
    %v2484 = vunpack.c.l.b16 %v2416
    %v2485 = vunpack.c.h.b16 %v2416
    %v2486 = vunpack.c.l.b16 %v2417
    %v2487 = vunpack.c.h.b16 %v2417
    %v2488 = vunpack.c.l.b16 %v2418
    %v2489 = vunpack.c.h.b16 %v2418
    %v2490 = vunpack.c.l.b16 %v2419
    %v2491 = vunpack.c.h.b16 %v2419
    %v2492 = vunpack.c.l.b16 %v2420
    %v2493 = vunpack.c.h.b16 %v2420
    %v2494 = vunpack.c.l.b16 %v2421
    %v2495 = vunpack.c.h.b16 %v2421
    %v2496 = vunpack.c.l.b16 %v2422
    %v2497 = vunpack.c.h.b16 %v2422
    %v2498 = vunpack.c.l.b16 %v2423
    %v2499 = vunpack.c.h.b16 %v2423
    %v2500 = vunpack.c.l.b16 %v2424
    %v2501 = vunpack.c.h.b16 %v2424
    %v2502 = vunpack.c.l.b16 %v2425
    %v2503 = vunpack.c.h.b16 %v2425
    %v2504 = vunpack.c.l.b16 %v2426
    %v2505 = vunpack.c.h.b16 %v2426
    %v2506 = vunpack.c.l.b16 %v2427
    %v2507 = vunpack.c.h.b16 %v2427
    %v2508 = vunpack.c.l.b16 %v2428
    %v2509 = vunpack.c.h.b16 %v2428
    %v2510 = vunpack.c.l.b16 %v2429
    %v2511 = vunpack.c.h.b16 %v2429
    %v2512 = vunpack.c.l.b16 %v2430
    %v2513 = vunpack.c.h.b16 %v2430
    %v2514 = vunpack.c.l.b16 %v2431
    %v2515 = vunpack.c.h.b16 %v2431
    %v2516 = vunpack.c.l.b16 %v2432
    %v2517 = vunpack.c.h.b16 %v2432
    %v2518 = vunpack.c.l.b16 %v2433
    %v2519 = vunpack.c.h.b16 %v2433
    %v2520 = vunpack.c.l.b16 %v2434
    %v2521 = vunpack.c.h.b16 %v2434
    %v2522 = vunpack.c.l.b16 %v2435
    %v2523 = vunpack.c.h.b16 %v2435
    %v2524 = vunpack.c.l.b16 %v2436
    %v2525 = vunpack.c.h.b16 %v2436
    %v2526 = vunpack.c.l.b16 %v2437
    %v2527 = vunpack.c.h.b16 %v2437
    %v2528 = vunpack.c.l.b16 %v2438
    %v2529 = vunpack.c.h.b16 %v2438
    %v2530 = vunpack.c.l.b16 %v2439
    %v2531 = vunpack.c.h.b16 %v2439
    %v2532 = vunpack.c.l.b16 %v2440
    %v2533 = vunpack.c.h.b16 %v2440
    %v2534 = vunpack.c.l.b16 %v2441
    %v2535 = vunpack.c.h.b16 %v2441
    %v2536 = vunpack.c.l.b16 %v2442
    %v2537 = vunpack.c.h.b16 %v2442
    %v2538 = vunpack.c.l.b16 %v2443
    %v2539 = vunpack.c.h.b16 %v2443
    %v2540 = vpack.c.b16 %v2476, %v2476
    %v2541 = vpack.c.b16 %v2477, %v2477
    %v2542 = vpack.c.b16 %v2478, %v2478
    %v2543 = vpack.c.b16 %v2479, %v2479
    %v2544 = vpack.c.b16 %v2480, %v2480
    %v2545 = vpack.c.b16 %v2481, %v2481
    %v2546 = vpack.c.b16 %v2482, %v2482
    %v2547 = vpack.c.b16 %v2483, %v2483
    %v2548 = vpack.c.b16 %v2484, %v2484
    %v2549 = vpack.c.b16 %v2485, %v2485
    %v2550 = vpack.c.b16 %v2486, %v2486
    %v2551 = vpack.c.b16 %v2487, %v2487
    %v2552 = vpack.c.b16 %v2488, %v2488
    %v2553 = vpack.c.b16 %v2489, %v2489
    %v2554 = vpack.c.b16 %v2490, %v2490
    %v2555 = vpack.c.b16 %v2491, %v2491
    %v2556 = vpack.c.b16 %v2492, %v2492
    %v2557 = vpack.c.b16 %v2493, %v2493
    %v2558 = vpack.c.b16 %v2494, %v2494
    %v2559 = vpack.c.b16 %v2495, %v2495
    %v2560 = vpack.c.b16 %v2496, %v2496
    %v2561 = vpack.c.b16 %v2497, %v2497
    %v2562 = vpack.c.b16 %v2498, %v2498
    %v2563 = vpack.c.b16 %v2499, %v2499
    %v2564 = vpack.c.b16 %v2500, %v2500
    %v2565 = vpack.c.b16 %v2501, %v2501
    %v2566 = vpack.c.b16 %v2502, %v2502
    %v2567 = vpack.c.b16 %v2503, %v2503
    %v2568 = vpack.c.b16 %v2504, %v2504
    %v2569 = vpack.c.b16 %v2505, %v2505
    %v2570 = vpack.c.b16 %v2506, %v2506
    %v2571 = vpack.c.b16 %v2507, %v2507
    %v2572 = vpack.c.b16 %v2508, %v2508
    %v2573 = vpack.c.b16 %v2509, %v2509
    %v2574 = vpack.c.b16 %v2510, %v2510
    %v2575 = vpack.c.b16 %v2511, %v2511
    %v2576 = vpack.c.b16 %v2512, %v2512
    %v2577 = vpack.c.b16 %v2513, %v2513
    %v2578 = vpack.c.b16 %v2514, %v2514
    %v2579 = vpack.c.b16 %v2515, %v2515
    %v2580 = vpack.c.b16 %v2516, %v2516
    %v2581 = vpack.c.b16 %v2517, %v2517
    %v2582 = vpack.c.b16 %v2518, %v2518
    %v2583 = vpack.c.b16 %v2519, %v2519
    %v2584 = vpack.c.b16 %v2520, %v2520
    %v2585 = vpack.c.b16 %v2521, %v2521
    %v2586 = vpack.c.b16 %v2522, %v2522
    %v2587 = vpack.c.b16 %v2523, %v2523
    %v2588 = vpack.c.b16 %v2524, %v2524
    %v2589 = vpack.c.b16 %v2525, %v2525
    %v2590 = vpack.c.b16 %v2526, %v2526
    %v2591 = vpack.c.b16 %v2527, %v2527
    %v2592 = vpack.c.b16 %v2528, %v2528
    %v2593 = vpack.c.b16 %v2529, %v2529
    %v2594 = vpack.c.b16 %v2530, %v2530
    %v2595 = vpack.c.b16 %v2531, %v2531
    %v2596 = vpack.c.b16 %v2532, %v2532
    %v2597 = vpack.c.b16 %v2533, %v2533
    %v2598 = vpack.c.b16 %v2534, %v2534
    %v2599 = vpack.c.b16 %v2535, %v2535
    %v2600 = vpack.c.b16 %v2536, %v2536
    %v2601 = vpack.c.b16 %v2537, %v2537
    %v2602 = vpack.c.b16 %v2538, %v2538
    %v2603 = vpack.c.b16 %v2539, %v2539
    %2668 = vst [vmem:[#allocation14] sm:$0xf] %v2540
    %2669 = vst [vmem:[#allocation14 + $0x4] sm:$0xf] %v2541
    %2670 = vst [vmem:[#allocation14 + $0x8] sm:$0xf] %v2542
    %2671 = vst [vmem:[#allocation14 + $0xc] sm:$0xf] %v2543
    %2672 = vst [vmem:[#allocation14 + $0x10] sm:$0xf] %v2544
    %2673 = vst [vmem:[#allocation14 + $0x14] sm:$0xf] %v2545
    %2674 = vst [vmem:[#allocation14 + $0x18] sm:$0xf] %v2546
    %2675 = vst [vmem:[#allocation14 + $0x1c] sm:$0xf] %v2547
    %2676 = vst [vmem:[#allocation14 + $0x20] sm:$0xf] %v2548
    %2677 = vst [vmem:[#allocation14 + $0x24] sm:$0xf] %v2549
    %2678 = vst [vmem:[#allocation14 + $0x28] sm:$0xf] %v2550
    %2679 = vst [vmem:[#allocation14 + $0x2c] sm:$0xf] %v2551
    %2680 = vst [vmem:[#allocation14 + $0x30] sm:$0xf] %v2552
    %2681 = vst [vmem:[#allocation14 + $0x34] sm:$0xf] %v2553
    %2682 = vst [vmem:[#allocation14 + $0x38] sm:$0xf] %v2554
    %2683 = vst [vmem:[#allocation14 + $0x3c] sm:$0xf] %v2555
    %2684 = vst [vmem:[#allocation14 + $0x40] sm:$0xf] %v2556
    %2685 = vst [vmem:[#allocation14 + $0x44] sm:$0xf] %v2557
    %2686 = vst [vmem:[#allocation14 + $0x48] sm:$0xf] %v2558
    %2687 = vst [vmem:[#allocation14 + $0x4c] sm:$0xf] %v2559
    %2688 = vst [vmem:[#allocation14 + $0x50] sm:$0xf] %v2560
    %2689 = vst [vmem:[#allocation14 + $0x54] sm:$0xf] %v2561
    %2690 = vst [vmem:[#allocation14 + $0x58] sm:$0xf] %v2562
    %2691 = vst [vmem:[#allocation14 + $0x5c] sm:$0xf] %v2563
    %2692 = vst [vmem:[#allocation14 + $0x60] sm:$0xf] %v2564
    %2693 = vst [vmem:[#allocation14 + $0x64] sm:$0xf] %v2565
    %2694 = vst [vmem:[#allocation14 + $0x68] sm:$0xf] %v2566
    %2695 = vst [vmem:[#allocation14 + $0x6c] sm:$0xf] %v2567
    %2696 = vst [vmem:[#allocation14 + $0x70] sm:$0xf] %v2568
    %2697 = vst [vmem:[#allocation14 + $0x74] sm:$0xf] %v2569
    %2698 = vst [vmem:[#allocation14 + $0x78] sm:$0xf] %v2570
    %2699 = vst [vmem:[#allocation14 + $0x7c] sm:$0xf] %v2571
    %2700 = vst [vmem:[#allocation14 + $0x80] sm:$0xf] %v2572
    %2701 = vst [vmem:[#allocation14 + $0x84] sm:$0xf] %v2573
    %2702 = vst [vmem:[#allocation14 + $0x88] sm:$0xf] %v2574
    %2703 = vst [vmem:[#allocation14 + $0x8c] sm:$0xf] %v2575
    %2704 = vst [vmem:[#allocation14 + $0x90] sm:$0xf] %v2576
    %2705 = vst [vmem:[#allocation14 + $0x94] sm:$0xf] %v2577
    %2706 = vst [vmem:[#allocation14 + $0x98] sm:$0xf] %v2578
    %2707 = vst [vmem:[#allocation14 + $0x9c] sm:$0xf] %v2579
    %2708 = vst [vmem:[#allocation14 + $0xa0] sm:$0xf] %v2580
    %2709 = vst [vmem:[#allocation14 + $0xa4] sm:$0xf] %v2581
    %2710 = vst [vmem:[#allocation14 + $0xa8] sm:$0xf] %v2582
    %2711 = vst [vmem:[#allocation14 + $0xac] sm:$0xf] %v2583
    %2712 = vst [vmem:[#allocation14 + $0xb0] sm:$0xf] %v2584
    %2713 = vst [vmem:[#allocation14 + $0xb4] sm:$0xf] %v2585
    %2714 = vst [vmem:[#allocation14 + $0xb8] sm:$0xf] %v2586
    %2715 = vst [vmem:[#allocation14 + $0xbc] sm:$0xf] %v2587
    %2716 = vst [vmem:[#allocation14 + $0xc0] sm:$0xf] %v2588
    %2717 = vst [vmem:[#allocation14 + $0xc4] sm:$0xf] %v2589
    %2718 = vst [vmem:[#allocation14 + $0xc8] sm:$0xf] %v2590
    %2719 = vst [vmem:[#allocation14 + $0xcc] sm:$0xf] %v2591
    %2720 = vst [vmem:[#allocation14 + $0xd0] sm:$0xf] %v2592
    %2721 = vst [vmem:[#allocation14 + $0xd4] sm:$0xf] %v2593
    %2722 = vst [vmem:[#allocation14 + $0xd8] sm:$0xf] %v2594
    %2723 = vst [vmem:[#allocation14 + $0xdc] sm:$0xf] %v2595
    %2724 = vst [vmem:[#allocation14 + $0xe0] sm:$0xf] %v2596
    %2725 = vst [vmem:[#allocation14 + $0xe4] sm:$0xf] %v2597
    %2726 = vst [vmem:[#allocation14 + $0xe8] sm:$0xf] %v2598
    %2727 = vst [vmem:[#allocation14 + $0xec] sm:$0xf] %v2599
    %2728 = vst [vmem:[#allocation14 + $0xf0] sm:$0xf] %v2600
    %2729 = vst [vmem:[#allocation14 + $0xf4] sm:$0xf] %v2601
    %2730 = vst [vmem:[#allocation14 + $0xf8] sm:$0xf] %v2602
    %2731 = vst [vmem:[#allocation14 + $0xfc] sm:$0xf] %v2603
    %v2732 = vadd.f32 %v2348, %v2349
    %v2733 = vadd.f32 %v2732, %v2350
    %v2734 = vadd.f32 %v2733, %v2351
    %v2735 = vadd.f32 %v2734, %v2352
    %v2736 = vadd.f32 %v2735, %v2353
    %v2737 = vadd.f32 %v2736, %v2354
    %v2738 = vadd.f32 %v2737, %v2355
    %v2739 = vadd.f32 %v2738, %v2356
    %v2740 = vadd.f32 %v2739, %v2357
    %v2741 = vadd.f32 %v2740, %v2358
    %v2742 = vadd.f32 %v2741, %v2359
    %v2743 = vadd.f32 %v2742, %v2360
    %v2744 = vadd.f32 %v2743, %v2361
    %v2745 = vadd.f32 %v2744, %v2362
    %v2746 = vadd.f32 %v2745, %v2363
    %v2747 = vadd.f32 %v2746, %v2364
    %v2748 = vadd.f32 %v2747, %v2365
    %v2749 = vadd.f32 %v2748, %v2366
    %v2750 = vadd.f32 %v2749, %v2367
    %v2751 = vadd.f32 %v2750, %v2368
    %v2752 = vadd.f32 %v2751, %v2369
    %v2753 = vadd.f32 %v2752, %v2370
    %v2754 = vadd.f32 %v2753, %v2371
    %v2755 = vadd.f32 %v2754, %v2372
    %v2756 = vadd.f32 %v2755, %v2373
    %v2757 = vadd.f32 %v2756, %v2374
    %v2758 = vadd.f32 %v2757, %v2375
    %v2759 = vadd.f32 %v2758, %v2376
    %v2760 = vadd.f32 %v2759, %v2377
    %v2761 = vadd.f32 %v2760, %v2378
    %v2762 = vadd.f32 %v2761, %v2379
    %v2763 = vadd.f32 %v2762, %v2380
    %v2764 = vadd.f32 %v2763, %v2381
    %v2765 = vadd.f32 %v2764, %v2382
    %v2766 = vadd.f32 %v2765, %v2383
    %v2767 = vadd.f32 %v2766, %v2384
    %v2768 = vadd.f32 %v2767, %v2385
    %v2769 = vadd.f32 %v2768, %v2386
    %v2770 = vadd.f32 %v2769, %v2387
    %v2771 = vadd.f32 %v2770, %v2388
    %v2772 = vadd.f32 %v2771, %v2389
    %v2773 = vadd.f32 %v2772, %v2390
    %v2774 = vadd.f32 %v2773, %v2391
    %v2775 = vadd.f32 %v2774, %v2392
    %v2776 = vadd.f32 %v2775, %v2393
    %v2777 = vadd.f32 %v2776, %v2394
    %v2778 = vadd.f32 %v2777, %v2395
    %v2779 = vadd.f32 %v2778, %v2396
    %v2780 = vadd.f32 %v2779, %v2397
    %v2781 = vadd.f32 %v2780, %v2398
    %v2782 = vadd.f32 %v2781, %v2399
    %v2783 = vadd.f32 %v2782, %v2400
    %v2784 = vadd.f32 %v2783, %v2401
    %v2785 = vadd.f32 %v2784, %v2402
    %v2786 = vadd.f32 %v2785, %v2403
    %v2787 = vadd.f32 %v2786, %v2404
    %v2788 = vadd.f32 %v2787, %v2405
    %v2789 = vadd.f32 %v2788, %v2406
    %v2790 = vadd.f32 %v2789, %v2407
    %v2791 = vadd.f32 %v2790, %v2408
    %v2792 = vadd.f32 %v2791, %v2409
    %v2793 = vadd.f32 %v2792, %v2410
    %v2794 = vadd.f32 %v2793, %v2411
    %v2795 = vrot.slane %v2794, 4
    %v2796 = vadd.f32 %v2794, %v2795
    %v2797 = vrot.slane %v2796, 2
    %v2798 = vadd.f32 %v2796, %v2797
    %v2799 = vrot.slane %v2798, 1
    %v2800 = vadd.f32 %v2798, %v2799
    %2801 = vst [vmem:[#allocation17] sm:$0x1] %v2800
    %v2802 = vmul.f32 %v2348, %v2348
    %v2803 = vmul.f32 %v2349, %v2349
    %v2804 = vmul.f32 %v2350, %v2350
    %v2805 = vmul.f32 %v2351, %v2351
    %v2806 = vmul.f32 %v2352, %v2352
    %v2807 = vmul.f32 %v2353, %v2353
    %v2808 = vmul.f32 %v2354, %v2354
    %v2809 = vmul.f32 %v2355, %v2355
    %v2810 = vmul.f32 %v2356, %v2356
    %v2811 = vmul.f32 %v2357, %v2357
    %v2812 = vmul.f32 %v2358, %v2358
    %v2813 = vmul.f32 %v2359, %v2359
    %v2814 = vmul.f32 %v2360, %v2360
    %v2815 = vmul.f32 %v2361, %v2361
    %v2816 = vmul.f32 %v2362, %v2362
    %v2817 = vmul.f32 %v2363, %v2363
    %v2818 = vmul.f32 %v2364, %v2364
    %v2819 = vmul.f32 %v2365, %v2365
    %v2820 = vmul.f32 %v2366, %v2366
    %v2821 = vmul.f32 %v2367, %v2367
    %v2822 = vmul.f32 %v2368, %v2368
    %v2823 = vmul.f32 %v2369, %v2369
    %v2824 = vmul.f32 %v2370, %v2370
    %v2825 = vmul.f32 %v2371, %v2371
    %v2826 = vmul.f32 %v2372, %v2372
    %v2827 = vmul.f32 %v2373, %v2373
    %v2828 = vmul.f32 %v2374, %v2374
    %v2829 = vmul.f32 %v2375, %v2375
    %v2830 = vmul.f32 %v2376, %v2376
    %v2831 = vmul.f32 %v2377, %v2377
    %v2832 = vmul.f32 %v2378, %v2378
    %v2833 = vmul.f32 %v2379, %v2379
    %v2834 = vmul.f32 %v2380, %v2380
    %v2835 = vmul.f32 %v2381, %v2381
    %v2836 = vmul.f32 %v2382, %v2382
    %v2837 = vmul.f32 %v2383, %v2383
    %v2838 = vmul.f32 %v2384, %v2384
    %v2839 = vmul.f32 %v2385, %v2385
    %v2840 = vmul.f32 %v2386, %v2386
    %v2841 = vmul.f32 %v2387, %v2387
    %v2842 = vmul.f32 %v2388, %v2388
    %v2843 = vmul.f32 %v2389, %v2389
    %v2844 = vmul.f32 %v2390, %v2390
    %v2845 = vmul.f32 %v2391, %v2391
    %v2846 = vmul.f32 %v2392, %v2392
    %v2847 = vmul.f32 %v2393, %v2393
    %v2848 = vmul.f32 %v2394, %v2394
    %v2849 = vmul.f32 %v2395, %v2395
    %v2850 = vmul.f32 %v2396, %v2396
    %v2851 = vmul.f32 %v2397, %v2397
    %v2852 = vmul.f32 %v2398, %v2398
    %v2853 = vmul.f32 %v2399, %v2399
    %v2854 = vmul.f32 %v2400, %v2400
    %v2855 = vmul.f32 %v2401, %v2401
    %v2856 = vmul.f32 %v2402, %v2402
    %v2857 = vmul.f32 %v2403, %v2403
    %v2858 = vmul.f32 %v2404, %v2404
    %v2859 = vmul.f32 %v2405, %v2405
    %v2860 = vmul.f32 %v2406, %v2406
    %v2861 = vmul.f32 %v2407, %v2407
    %v2862 = vmul.f32 %v2408, %v2408
    %v2863 = vmul.f32 %v2409, %v2409
    %v2864 = vmul.f32 %v2410, %v2410
    %v2865 = vmul.f32 %v2411, %v2411
    %v2866 = vadd.f32 %v2802, %v2803
    %v2867 = vadd.f32 %v2866, %v2804
    %v2868 = vadd.f32 %v2867, %v2805
    %v2869 = vadd.f32 %v2868, %v2806
    %v2870 = vadd.f32 %v2869, %v2807
    %v2871 = vadd.f32 %v2870, %v2808
    %v2872 = vadd.f32 %v2871, %v2809
    %v2873 = vadd.f32 %v2872, %v2810
    %v2874 = vadd.f32 %v2873, %v2811
    %v2875 = vadd.f32 %v2874, %v2812
    %v2876 = vadd.f32 %v2875, %v2813
    %v2877 = vadd.f32 %v2876, %v2814
    %v2878 = vadd.f32 %v2877, %v2815
    %v2879 = vadd.f32 %v2878, %v2816
    %v2880 = vadd.f32 %v2879, %v2817
    %v2881 = vadd.f32 %v2880, %v2818
    %v2882 = vadd.f32 %v2881, %v2819
    %v2883 = vadd.f32 %v2882, %v2820
    %v2884 = vadd.f32 %v2883, %v2821
    %v2885 = vadd.f32 %v2884, %v2822
    %v2886 = vadd.f32 %v2885, %v2823
    %v2887 = vadd.f32 %v2886, %v2824
    %v2888 = vadd.f32 %v2887, %v2825
    %v2889 = vadd.f32 %v2888, %v2826
    %v2890 = vadd.f32 %v2889, %v2827
    %v2891 = vadd.f32 %v2890, %v2828
    %v2892 = vadd.f32 %v2891, %v2829
    %v2893 = vadd.f32 %v2892, %v2830
    %v2894 = vadd.f32 %v2893, %v2831
    %v2895 = vadd.f32 %v2894, %v2832
    %v2896 = vadd.f32 %v2895, %v2833
    %v2897 = vadd.f32 %v2896, %v2834
    %v2898 = vadd.f32 %v2897, %v2835
    %v2899 = vadd.f32 %v2898, %v2836
    %v2900 = vadd.f32 %v2899, %v2837
    %v2901 = vadd.f32 %v2900, %v2838
    %v2902 = vadd.f32 %v2901, %v2839
    %v2903 = vadd.f32 %v2902, %v2840
    %v2904 = vadd.f32 %v2903, %v2841
    %v2905 = vadd.f32 %v2904, %v2842
    %v2906 = vadd.f32 %v2905, %v2843
    %v2907 = vadd.f32 %v2906, %v2844
    %v2908 = vadd.f32 %v2907, %v2845
    %v2909 = vadd.f32 %v2908, %v2846
    %v2910 = vadd.f32 %v2909, %v2847
    %v2911 = vadd.f32 %v2910, %v2848
    %v2912 = vadd.f32 %v2911, %v2849
    %v2913 = vadd.f32 %v2912, %v2850
    %v2914 = vadd.f32 %v2913, %v2851
    %v2915 = vadd.f32 %v2914, %v2852
    %v2916 = vadd.f32 %v2915, %v2853
    %v2917 = vadd.f32 %v2916, %v2854
    %v2918 = vadd.f32 %v2917, %v2855
    %v2919 = vadd.f32 %v2918, %v2856
    %v2920 = vadd.f32 %v2919, %v2857
    %v2921 = vadd.f32 %v2920, %v2858
    %v2922 = vadd.f32 %v2921, %v2859
    %v2923 = vadd.f32 %v2922, %v2860
    %v2924 = vadd.f32 %v2923, %v2861
    %v2925 = vadd.f32 %v2924, %v2862
    %v2926 = vadd.f32 %v2925, %v2863
    %v2927 = vadd.f32 %v2926, %v2864
    %v2928 = vadd.f32 %v2927, %v2865
    %v2929 = vrot.slane %v2928, 4
    %v2930 = vadd.f32 %v2928, %v2929
    %v2931 = vrot.slane %v2930, 2
    %v2932 = vadd.f32 %v2930, %v2931
    %v2933 = vrot.slane %v2932, 1
    %v2934 = vadd.f32 %v2932, %v2933
    %2935 = vst [vmem:[#allocation17 + $0x1] sm:$0x1] %v2934
    // Predicated region
    $region50: #{bottleneck_with_batchnorm.6} parent=1 // pred_check
      _
    $region51: #{bottleneck_with_batchnorm.6} parent=1 // pred_check_branch
      %2937 = sbr.rel (0) target = $region53
    $region52: #{bottleneck_with_batchnorm.6} parent=1 // pred_region
      %s2939 = ssub.s32 4096, 4096
      %2940 = vsyncadd [#allocation4], %s2939
      %s2941 = sshll.u32 [#allocation13], 4
      %s2942 = int_to_ptr.vmem [resolvable:$true] %s2941
      %2947 = dma.vmem_to_hbm [thread:$0]  %s2942, 4096, %s6, [#allocation4], 64, 64, 4
    $region53: #{bottleneck_with_batchnorm.6} parent=1 // pred_fallthru
      _
    // Predicated region
    $region54: #{bottleneck_with_batchnorm.6} parent=1 // pred_check
      _
    $region55: #{bottleneck_with_batchnorm.6} parent=1 // pred_check_branch
      %2949 = sbr.rel (0) target = $region57
    $region56: #{bottleneck_with_batchnorm.6} parent=1 // pred_region
      %s2951 = ssub.s32 4096, 4096
      %2952 = vsyncadd [#allocation15], %s2951
      %s2953 = sshll.u32 [#allocation14], 4
      %s2954 = int_to_ptr.vmem [resolvable:$true] %s2953
      %2959 = dma.vmem_to_hbm [thread:$0]  %s2954, 4096, %s7, [#allocation15], 64, 64, 4
    $region57: #{bottleneck_with_batchnorm.6} parent=1 // pred_fallthru
      _
    // Predicated region
    $region58: #{bottleneck_with_batchnorm.6} parent=1 // pred_check
      _
    $region59: #{bottleneck_with_batchnorm.6} parent=1 // pred_check_branch
      %2961 = sbr.rel (0) target = $region61
    $region60: #{bottleneck_with_batchnorm.6} parent=1 // pred_region
      %s2963 = ssub.s32 32, 32
      %2964 = vsyncadd [#allocation15], %s2963
      %s2966 = sshll.u32 [#allocation16], 4
      %s2967 = int_to_ptr.vmem [resolvable:$true] %s2966
      %2969 = dma.vmem_to_hbm [thread:$0]  %s2967, 32, %s8, [#allocation15]
    $region61: #{bottleneck_with_batchnorm.6} parent=1 // pred_fallthru
      _
    // Predicated region
    $region62: #{bottleneck_with_batchnorm.6} parent=1 // pred_check
      _
    $region63: #{bottleneck_with_batchnorm.6} parent=1 // pred_check_branch
      %2971 = sbr.rel (0) target = $region65
    $region64: #{bottleneck_with_batchnorm.6} parent=1 // pred_region
      %s2973 = ssub.s32 32, 32
      %2974 = vsyncadd [#allocation18], %s2973
      %s2976 = sshll.u32 [#allocation17], 4
      %s2977 = int_to_ptr.vmem [resolvable:$true] %s2976
      %2979 = dma.vmem_to_hbm [thread:$0]  %s2977, 32, %s9, [#allocation18]
    $region65: #{bottleneck_with_batchnorm.6} parent=1 // pred_fallthru
      _
    // Predicated region
    $region66: #{bottleneck_with_batchnorm.6} parent=1 // pred_check
      _
    $region67: #{bottleneck_with_batchnorm.6} parent=1 // pred_check_branch
      %2981 = sbr.rel (0) target = $region69
    $region68: #{bottleneck_with_batchnorm.6} parent=1 // pred_region
      %2982 = dma.done [#allocation4], 4096
    $region69: #{bottleneck_with_batchnorm.6} parent=1 // pred_fallthru
      _
    // Predicated region
    $region70: #{bottleneck_with_batchnorm.6} parent=1 // pred_check
      _
    $region71: #{bottleneck_with_batchnorm.6} parent=1 // pred_check_branch
      %2984 = sbr.rel (0) target = $region73
    $region72: #{bottleneck_with_batchnorm.6} parent=1 // pred_region
      %2985 = dma.done [#allocation15], 4096
    $region73: #{bottleneck_with_batchnorm.6} parent=1 // pred_fallthru
      _
    // Predicated region
    $region74: #{bottleneck_with_batchnorm.6} parent=1 // pred_check
      _
    $region75: #{bottleneck_with_batchnorm.6} parent=1 // pred_check_branch
      %2987 = sbr.rel (0) target = $region77
    $region76: #{bottleneck_with_batchnorm.6} parent=1 // pred_region
      %2988 = dma.done [#allocation15], 32
    $region77: #{bottleneck_with_batchnorm.6} parent=1 // pred_fallthru
      _
    // Predicated region
    $region78: #{bottleneck_with_batchnorm.6} parent=1 // pred_check
      _
    $region79: #{bottleneck_with_batchnorm.6} parent=1 // pred_check_branch
      %2990 = sbr.rel (0) target = $region81
    $region80: #{bottleneck_with_batchnorm.6} parent=1 // pred_region
      %2991 = dma.done [#allocation18], 32
    $region81: #{bottleneck_with_batchnorm.6} parent=1 // pred_fallthru
      _
    %2992 = vsyncpa [#allocation3], 1
    %2993 = vsyncpa [#allocation6], 1
    %2994 = vsyncpa [#allocation9], 1
    %2995 = vsyncpa [#allocation12], 1
    %2996 = vsyncpa [#allocation4], 1
    %2997 = vsyncpa [#allocation15], 1
    %2998 = vsyncpa [#allocation18], 1

</llo_original>
